<compile_context>
chip_gen: v7x
topology: tpu7x:2x2x1
jax: 0.10.0
libtpu: 0.0.40
codegen_flags: <defaults>
</compile_context>

<pallas_src>
import math

import jax
import jax.numpy as jnp
from jax import lax
from jax.experimental import pallas as pl
from jax.experimental.pallas import tpu as pltpu

EPS = 1e-5


# ------------------------------ fused kernel --------------------------------

def _make_fused_kernel(N, H, W, layer_cfgs, n_enc):
    """Builds the fused forward kernel body.

    layer_cfgs: [(cin, cout, act)] for encoder layers then decoder layers.
    MaxPool(2,2) + Upsample(x2 nearest) sit between encoder and decoder.
    All convs are k=3 / stride=1 / pad=1 (ConvTranspose already rewritten as a
    flipped Conv by the wrapper), so every conv runs at the same (H, W).

    Layout: every activation is a channel-major (C, M) slab with
    M = N*H*W on lanes, columns ordered (n, h, w).
    """
    assert H % 2 == 0 and W % 2 == 0
    assert (H & (H - 1)) == 0 and (W & (W - 1)) == 0, "H, W: powers of two"
    M = N * H * W
    log2w = int(math.log2(W))
    inv_m = 1.0 / M
    n_layers = len(layer_cfgs)

    def kernel(*refs):
        x_ref = refs[0]
        layer_refs = refs[1:1 + 2 * n_layers]        # (w9, pgb) per layer
        enc_ref = refs[1 + 2 * n_layers]             # (C_enc, M) upsampled pooled map
        dec_ref = refs[2 + 2 * n_layers]             # (C_out, M)

        # Column-coordinate helpers (columns/lanes are ordered (n, h, w)).
        m_idx = lax.broadcasted_iota(jnp.int32, (1, M), 1)
        w_id = m_idx & (W - 1)
        h_id = (m_idx >> log2w) & (H - 1)
        ones = jnp.ones((1, M), jnp.float32)
        mh = {-1: (h_id >= 1).astype(jnp.float32), 0: ones,
              1: (h_id <= H - 2).astype(jnp.float32)}
        mw = {-1: (w_id >= 1).astype(jnp.float32), 0: ones,
              1: (w_id <= W - 2).astype(jnp.float32)}
        # Hoisted, layer-invariant border masks for the 8 off-center taps.
        mhw = {(dh, dw): mh[dh] * mw[dw]
               for dh in (-1, 0, 1) for dw in (-1, 0, 1) if (dh, dw) != (0, 0)}
        w_odd = (w_id & 1) == 1                      # (1, M) bool
        h_odd = (h_id & 1) == 1
        ones_m = jnp.ones((M, 1), jnp.float32)       # MXU reduction vector

        def shift_cols(x, s):
            # xs[:, m] = x[:, m + s]; out-of-image taps masked by the caller.
            return x if s == 0 else pltpu.roll(x, (-s) % M, axis=1)

        def row_mean(t, cout):
            # (cout, M) -> (cout, 1).  MXU dot for cout > 1 (free-slot
            # offload); trivial single-row lane reduction otherwise.
            if cout == 1:
                return jnp.sum(t, axis=1, keepdims=True) * inv_m
            return jnp.dot(t, ones_m, preferred_element_type=jnp.float32) * inv_m

        def conv3x3_bn_act(x, w_ref, p_ref, cin, cout, act):
            """3x3/s1/p1 conv + bias + training-mode BatchNorm + activation."""
            p = p_ref[...]                           # (cout, 3): bias/gamma/beta
            bias, gamma, beta = p[:, 0:1], p[:, 1:2], p[:, 2:3]
            acc = jnp.zeros((cout, M), jnp.float32)
            for dh in (-1, 0, 1):
                for dw in (-1, 0, 1):
                    k = (dh + 1) * 3 + (dw + 1)
                    xs = shift_cols(x, dh * W + dw)
                    if (dh, dw) != (0, 0):
                        xs = xs * mhw[(dh, dw)]      # zero out-of-image taps
                    wk = w_ref[k]                    # (cout, cin)
                    if cin == 1:
                        acc = acc + wk * xs          # (cout,1)*(1,M) VPU bcast
                    else:
                        acc = acc + jnp.dot(         # chained MXU accumulate
                            wk, xs, preferred_element_type=jnp.float32)
            y = acc + bias
            # Centered two-pass moments (no E[y^2]-E[y]^2 cancellation).
            mean = row_mean(y, cout)
            d = y - mean
            var = row_mean(d * d, cout)
            scale = gamma * lax.rsqrt(var + EPS)
            z = d * scale + beta
            return jnp.maximum(z, 0.0) if act == "relu" else jnp.tanh(z)

        def maxpool2_upsample2(x):
            # Returns the *upsampled* pooled map: every column holds the max
            # of its 2x2 block.  Partner selection via parity jnp.where.
            nxt = pltpu.roll(x, M - 1, axis=1)       # nxt[:, m] = x[:, m + 1]
            prv = pltpu.roll(x, 1, axis=1)           # prv[:, m] = x[:, m - 1]
            hm = jnp.maximum(x, jnp.where(w_odd, prv, nxt))
            nxt = pltpu.roll(hm, M - W, axis=1)      # [:, m] = hm[:, m + W]
            prv = pltpu.roll(hm, W, axis=1)          # [:, m] = hm[:, m - W]
            return jnp.maximum(hm, jnp.where(h_odd, prv, nxt))

        # ----- encoder: [Conv -> BN -> ReLU] * layer -------------------------
        h = x_ref[...]                               # (1, M)
        for li in range(n_enc):
            cin, cout, act = layer_cfgs[li]
            h = conv3x3_bn_act(h, layer_refs[2 * li], layer_refs[2 * li + 1],
                               cin, cout, act)

        # ----- MaxPool(2,2) fused with Upsample(x2, nearest) -----------------
        up = maxpool2_upsample2(h)                   # decoder input (C_enc, M)
        enc_ref[...] = up                            # lane-dense store; wrapper
                                                     # subsamples stride-2 in XLA

        # ----- decoder: [ConvT -> BN -> act] * layer -------------------------
        dec = up
        for li in range(n_enc, n_layers):
            cin, cout, act = layer_cfgs[li]
            dec = conv3x3_bn_act(dec, layer_refs[2 * li], layer_refs[2 * li + 1],
                                 cin, cout, act)
        dec_ref[...] = dec                           # (1, M), lane-dense

    return kernel


# ------------------------------ Pallas wrapper -------------------------------

def _fused_forward(x_1m, kernel_params, *, N, H, W, layer_cfgs, n_enc):
    M = N * H * W
    c_enc = layer_cfgs[n_enc - 1][1]
    c_out = layer_cfgs[-1][1]

    kernel = _make_fused_kernel(N, H, W, layer_cfgs, n_enc)

    flat = [x_1m]
    in_specs = [pl.BlockSpec((1, M), lambda i: (0, 0))]
    for w9, pgb in kernel_params:
        flat += [w9, pgb]
        in_specs += [pl.BlockSpec(w9.shape, lambda i: (0, 0, 0)),
                     pl.BlockSpec(pgb.shape, lambda i: (0, 0))]

    return pl.pallas_call(
        kernel,
        out_shape=(jax.ShapeDtypeStruct((c_enc, M), jnp.float32),
                   jax.ShapeDtypeStruct((c_out, M), jnp.float32)),
        grid_spec=pltpu.PrefetchScalarGridSpec(
            num_scalar_prefetch=0,
            grid=(1,),                               # single step, all-resident
            in_specs=in_specs,
            out_specs=[pl.BlockSpec((c_enc, M), lambda i: (0, 0)),
                       pl.BlockSpec((c_out, M), lambda i: (0, 0))]),
        compiler_params=pltpu.CompilerParams(
            dimension_semantics=("arbitrary",)),
    )(*flat)


def autoencode_cnn_forward(x_nchw, prepared):
    """x: (N, 1, H, W) NCHW. Returns (encode, decode) in NCHW like PyTorch."""
    N, cin, H, W = x_nchw.shape
    assert cin == 1
    layer_cfgs, n_enc = prepared["cfgs"], prepared["n_enc"]
    # Lane-dense input: one channel row, M = N*H*W lanes ordered (n, h, w).
    x_1m = x_nchw.astype(jnp.float32).reshape(1, N * H * W)
    enc_full, dec_full = _fused_forward(
        x_1m, prepared["kernel_params"],
        N=N, H=H, W=W, layer_cfgs=layer_cfgs, n_enc=n_enc)
    c_enc = layer_cfgs[n_enc - 1][1]
    c_out = layer_cfgs[-1][1]
    # enc_full is the nearest-upsampled pooled map; a stride-2 XLA slice
    # recovers the MaxPool output (review: subsample wrapper-side).
    encode = enc_full.reshape(c_enc, N, H, W)[:, :, ::2, ::2].transpose(1, 0, 2, 3)
    decode = dec_full.reshape(c_out, N, H, W).transpose(1, 0, 2, 3)
    return encode, decode


# ------------------------------ parameters -----------------------------------

def init_params(key, ndf, layer):
    """Random params mirroring a freshly-constructed AutoEncodeCnn
    (ndf, layer, ReLU inside, Tanh out, max_pool=True, n_features != 427)."""
    ch = [1] + [i * ndf for i in range(1, layer + 1)]
    keys = jax.random.split(key, 4 * layer)
    ki = 0
    raw = []
    for i in range(layer):                     # encoder Conv2d(ch[i] -> ch[i+1])
        w = jax.random.normal(keys[ki], (ch[i + 1], ch[i], 3, 3), jnp.float32) * 0.1
        ki += 1
        b = jax.random.normal(keys[ki], (ch[i + 1],), jnp.float32) * 0.1
        ki += 1
        raw.append(dict(w_oihw=w, b=b,
                        gamma=jnp.ones((ch[i + 1],), jnp.float32),
                        beta=jnp.zeros((ch[i + 1],), jnp.float32),
                        act="relu"))
    for i in reversed(range(layer)):           # decoder ConvTranspose2d(ch[i+1]->ch[i])
        wt = jax.random.normal(keys[ki], (ch[i + 1], ch[i], 3, 3), jnp.float32) * 0.1
        ki += 1
        b = jax.random.normal(keys[ki], (ch[i],), jnp.float32) * 0.1
        ki += 1
        # ConvTranspose2d(k=3, s=1, p=1) == Conv2d(k=3, s=1, p=1) with the
        # kernel spatially flipped and the in/out channel dims swapped.
        w_conv = jnp.transpose(jnp.flip(wt, axis=(2, 3)), (1, 0, 2, 3))
        raw.append(dict(w_oihw=w_conv, b=b,
                        gamma=jnp.ones((ch[i],), jnp.float32),
                        beta=jnp.zeros((ch[i],), jnp.float32),
                        act="relu" if i > 0 else "tanh"))
    return raw, layer


def prepare_kernel_params(raw):
    """(Cout,Cin,3,3) conv weights -> (9,Cout,Cin) tap weights + (Cout,3) packs."""
    cfgs, kparams = [], []
    for p in raw:
        w = p["w_oihw"]
        cout, cin = w.shape[0], w.shape[1]
        w9 = jnp.transpose(w, (2, 3, 0, 1)).reshape(9, cout, cin)  # k = kh*3+kw
        pgb = jnp.stack([p["b"], p["gamma"], p["beta"]], axis=1)   # (Cout, 3)
        cfgs.append((cin, cout, p["act"]))
        kparams.append((w9, pgb))
    return cfgs, kparams


# ------------------------------ plain-JAX reference --------------------------

def reference_forward(x_nchw, raw, n_enc):
    x = jnp.transpose(x_nchw, (0, 2, 3, 1)).astype(jnp.float32)    # NHWC

    def conv_bn_act(h, p):
        w_hwio = jnp.transpose(p["w_oihw"], (2, 3, 1, 0))
        y = lax.conv_general_dilated(
            h, w_hwio, (1, 1), ((1, 1), (1, 1)),
            dimension_numbers=("NHWC", "HWIO", "NHWC"),
            precision=lax.Precision.HIGHEST) + p["b"]
        mean = jnp.mean(y, axis=(0, 1, 2))
        var = jnp.mean(jnp.square(y - mean), axis=(0, 1, 2))
        z = (y - mean) * p["gamma"] / jnp.sqrt(var + EPS) + p["beta"]
        return jnp.maximum(z, 0.0) if p["act"] == "relu" else jnp.tanh(z)

    h = x
    for p in raw[:n_enc]:
        h = conv_bn_act(h, p)
    N, H, W, C = h.shape
    enc = h.reshape(N, H // 2, 2, W // 2, 2, C).max(axis=(2, 4))
    d = jnp.repeat(jnp.repeat(enc, 2, axis=1), 2, axis=2)
    for p in raw[n_enc:]:
        d = conv_bn_act(d, p)
    return (jnp.transpose(enc, (0, 3, 1, 2)), jnp.transpose(d, (0, 3, 1, 2)))


# ------------------------------ main ------------------------------------------

if __name__ == "__main__":
    NDF, LAYER = 8, 2
    N, H, W = 2, 16, 16

    key = jax.random.PRNGKey(0)
    kx, kp = jax.random.split(key)
    x = jax.random.normal(kx, (N, 1, H, W), jnp.float32)       # NCHW like PyTorch
    raw, n_enc = init_params(kp, NDF, LAYER)
    cfgs, kparams = prepare_kernel_params(raw)
    prepared = dict(cfgs=cfgs, n_enc=n_enc, kernel_params=kparams)

    fwd = jax.jit(lambda xx: autoencode_cnn_forward(xx, prepared))
    encode, decode = fwd(x)
    jax.block_until_ready((encode, decode))

    assert encode.shape == (N, LAYER * NDF, H // 2, W // 2), encode.shape
    assert decode.shape == (N, 1, H, W), decode.shape
    assert jnp.all(jnp.isfinite(encode)) and jnp.all(jnp.isfinite(decode))

    ref_enc, ref_dec = reference_forward(x, raw, n_enc)
    assert jnp.allclose(encode, ref_enc, atol=3e-2, rtol=3e-2), \
        float(jnp.max(jnp.abs(encode - ref_enc)))
    assert jnp.allclose(decode, ref_dec, atol=3e-2, rtol=3e-2), \
        float(jnp.max(jnp.abs(decode - ref_dec)))

    print("KERNEL_OK")
</pallas_src>

<mosaic_0001>
module attributes {stable_mosaic.version = 11 : i64} {
  func.func @kernel(%arg0: i32, %arg1: memref<1x512xf32, #tpu.memory_space<vmem>>, %arg2: memref<9x8x1xf32, #tpu.memory_space<vmem>>, %arg3: memref<8x3xf32, #tpu.memory_space<vmem>>, %arg4: memref<9x16x8xf32, #tpu.memory_space<vmem>>, %arg5: memref<16x3xf32, #tpu.memory_space<vmem>>, %arg6: memref<9x8x16xf32, #tpu.memory_space<vmem>>, %arg7: memref<8x3xf32, #tpu.memory_space<vmem>>, %arg8: memref<9x1x8xf32, #tpu.memory_space<vmem>>, %arg9: memref<1x3xf32, #tpu.memory_space<vmem>>, %arg10: memref<16x512xf32, #tpu.memory_space<vmem>>, %arg11: memref<1x512xf32, #tpu.memory_space<vmem>>) attributes {dimension_semantics = [#tpu.dimension_semantics<arbitrary>], iteration_bounds = array<i64: 1>, scalar_prefetch = 0 : i64, scratch_operands = 0 : i64, tpu.core_type = #tpu.core_type<tc>, window_params = [{pipeline_mode = #tpu.pipeline_mode<synchronous>, transform_indices = @transform_0, window_bounds = array<i64: 1, 512>}, {pipeline_mode = #tpu.pipeline_mode<synchronous>, transform_indices = @transform_1, window_bounds = array<i64: 9, 8, 1>}, {pipeline_mode = #tpu.pipeline_mode<synchronous>, transform_indices = @transform_2, window_bounds = array<i64: 8, 3>}, {pipeline_mode = #tpu.pipeline_mode<synchronous>, transform_indices = @transform_3, window_bounds = array<i64: 9, 16, 8>}, {pipeline_mode = #tpu.pipeline_mode<synchronous>, transform_indices = @transform_4, window_bounds = array<i64: 16, 3>}, {pipeline_mode = #tpu.pipeline_mode<synchronous>, transform_indices = @transform_5, window_bounds = array<i64: 9, 8, 16>}, {pipeline_mode = #tpu.pipeline_mode<synchronous>, transform_indices = @transform_6, window_bounds = array<i64: 8, 3>}, {pipeline_mode = #tpu.pipeline_mode<synchronous>, transform_indices = @transform_7, window_bounds = array<i64: 9, 1, 8>}, {pipeline_mode = #tpu.pipeline_mode<synchronous>, transform_indices = @transform_8, window_bounds = array<i64: 1, 3>}, {pipeline_mode = #tpu.pipeline_mode<synchronous>, transform_indices = @transform_9, window_bounds = array<i64: 16, 512>}, {pipeline_mode = #tpu.pipeline_mode<synchronous>, transform_indices = @transform_10, window_bounds = array<i64: 1, 512>}]} {
    %0 = tpu.iota {dimensions = array<i32: 1>} : vector<1x512xi32>
    %c15_i32 = arith.constant 15 : i32
    %1 = vector.broadcast %c15_i32 : i32 to vector<1x512xi32>
    %2 = arith.andi %0, %1 : vector<1x512xi32>
    %c4_i32 = arith.constant 4 : i32
    %3 = vector.broadcast %c4_i32 : i32 to vector<1x512xi32>
    %4 = arith.shrsi %0, %3 : vector<1x512xi32>
    %c15_i32_0 = arith.constant 15 : i32
    %5 = vector.broadcast %c15_i32_0 : i32 to vector<1x512xi32>
    %6 = arith.andi %4, %5 : vector<1x512xi32>
    %cst = arith.constant 1.000000e+00 : f32
    %7 = vector.broadcast %cst : f32 to vector<1x512xf32>
    %c1_i32 = arith.constant 1 : i32
    %8 = vector.broadcast %c1_i32 : i32 to vector<1x512xi32>
    %9 = arith.cmpi sge, %6, %8 : vector<1x512xi32>
    %10 = arith.extui %9 : vector<1x512xi1> to vector<1x512xi32>
    %11 = arith.sitofp %10 : vector<1x512xi32> to vector<1x512xf32>
    %c14_i32 = arith.constant 14 : i32
    %12 = vector.broadcast %c14_i32 : i32 to vector<1x512xi32>
    %13 = arith.cmpi sle, %6, %12 : vector<1x512xi32>
    %14 = arith.extui %13 : vector<1x512xi1> to vector<1x512xi32>
    %15 = arith.sitofp %14 : vector<1x512xi32> to vector<1x512xf32>
    %c1_i32_1 = arith.constant 1 : i32
    %16 = vector.broadcast %c1_i32_1 : i32 to vector<1x512xi32>
    %17 = arith.cmpi sge, %2, %16 : vector<1x512xi32>
    %18 = arith.extui %17 : vector<1x512xi1> to vector<1x512xi32>
    %19 = arith.sitofp %18 : vector<1x512xi32> to vector<1x512xf32>
    %c14_i32_2 = arith.constant 14 : i32
    %20 = vector.broadcast %c14_i32_2 : i32 to vector<1x512xi32>
    %21 = arith.cmpi sle, %2, %20 : vector<1x512xi32>
    %22 = arith.extui %21 : vector<1x512xi1> to vector<1x512xi32>
    %23 = arith.sitofp %22 : vector<1x512xi32> to vector<1x512xf32>
    %24 = arith.mulf %11, %19 : vector<1x512xf32>
    %25 = arith.mulf %11, %7 : vector<1x512xf32>
    %26 = arith.mulf %11, %23 : vector<1x512xf32>
    %27 = arith.mulf %7, %19 : vector<1x512xf32>
    %28 = arith.mulf %7, %23 : vector<1x512xf32>
    %29 = arith.mulf %15, %19 : vector<1x512xf32>
    %30 = arith.mulf %15, %7 : vector<1x512xf32>
    %31 = arith.mulf %15, %23 : vector<1x512xf32>
    %c1_i32_3 = arith.constant 1 : i32
    %32 = vector.broadcast %c1_i32_3 : i32 to vector<1x512xi32>
    %33 = arith.andi %2, %32 : vector<1x512xi32>
    %c1_i32_4 = arith.constant 1 : i32
    %34 = vector.broadcast %c1_i32_4 : i32 to vector<1x512xi32>
    %35 = arith.cmpi eq, %33, %34 : vector<1x512xi32>
    %c1_i32_5 = arith.constant 1 : i32
    %36 = vector.broadcast %c1_i32_5 : i32 to vector<1x512xi32>
    %37 = arith.andi %6, %36 : vector<1x512xi32>
    %c1_i32_6 = arith.constant 1 : i32
    %38 = vector.broadcast %c1_i32_6 : i32 to vector<1x512xi32>
    %39 = arith.cmpi eq, %37, %38 : vector<1x512xi32>
    %cst_7 = arith.constant 1.000000e+00 : f32
    %40 = vector.broadcast %cst_7 : f32 to vector<512x1xf32>
    %c0 = arith.constant 0 : index
    %c0_8 = arith.constant 0 : index
    %41 = vector.load %arg1[%c0, %c0_8] : memref<1x512xf32, #tpu.memory_space<vmem>>, vector<1x512xf32>
    %c0_9 = arith.constant 0 : index
    %c0_10 = arith.constant 0 : index
    %42 = vector.load %arg3[%c0_9, %c0_10] : memref<8x3xf32, #tpu.memory_space<vmem>>, vector<8x3xf32>
    %43 = vector.extract_strided_slice %42 {offsets = [0, 0], sizes = [8, 1], strides = [1, 1]} : vector<8x3xf32> to vector<8x1xf32>
    %44 = vector.extract_strided_slice %42 {offsets = [0, 1], sizes = [8, 1], strides = [1, 1]} : vector<8x3xf32> to vector<8x1xf32>
    %45 = vector.extract_strided_slice %42 {offsets = [0, 2], sizes = [8, 1], strides = [1, 1]} : vector<8x3xf32> to vector<8x1xf32>
    %cst_11 = arith.constant 0.000000e+00 : f32
    %46 = vector.broadcast %cst_11 : f32 to vector<8x512xf32>
    %c17_i32 = arith.constant 17 : i32
    %47 = tpu.dynamic_rotate %41 by %c17_i32 dim 1 : vector<1x512xf32>, i32 -> vector<1x512xf32>
    %48 = arith.mulf %47, %24 : vector<1x512xf32>
    %c0_12 = arith.constant 0 : index
    %c0_13 = arith.constant 0 : index
    %c0_14 = arith.constant 0 : index
    %49 = vector.load %arg2[%c0_12, %c0_13, %c0_14] : memref<9x8x1xf32, #tpu.memory_space<vmem>>, vector<1x8x1xf32>
    %50 = vector.shape_cast %49 : vector<1x8x1xf32> to vector<8x1xf32>
    %51 = vector.broadcast %50 : vector<8x1xf32> to vector<8x512xf32>
    %52 = vector.broadcast %48 : vector<1x512xf32> to vector<8x512xf32>
    %53 = arith.mulf %51, %52 : vector<8x512xf32>
    %54 = arith.addf %46, %53 : vector<8x512xf32>
    %c16_i32 = arith.constant 16 : i32
    %55 = tpu.dynamic_rotate %41 by %c16_i32 dim 1 : vector<1x512xf32>, i32 -> vector<1x512xf32>
    %56 = arith.mulf %55, %25 : vector<1x512xf32>
    %c1 = arith.constant 1 : index
    %c0_15 = arith.constant 0 : index
    %c0_16 = arith.constant 0 : index
    %57 = vector.load %arg2[%c1, %c0_15, %c0_16] : memref<9x8x1xf32, #tpu.memory_space<vmem>>, vector<1x8x1xf32>
    %58 = vector.shape_cast %57 : vector<1x8x1xf32> to vector<8x1xf32>
    %59 = vector.broadcast %58 : vector<8x1xf32> to vector<8x512xf32>
    %60 = vector.broadcast %56 : vector<1x512xf32> to vector<8x512xf32>
    %61 = arith.mulf %59, %60 : vector<8x512xf32>
    %62 = arith.addf %54, %61 : vector<8x512xf32>
    %c15_i32_17 = arith.constant 15 : i32
    %63 = tpu.dynamic_rotate %41 by %c15_i32_17 dim 1 : vector<1x512xf32>, i32 -> vector<1x512xf32>
    %64 = arith.mulf %63, %26 : vector<1x512xf32>
    %c2 = arith.constant 2 : index
    %c0_18 = arith.constant 0 : index
    %c0_19 = arith.constant 0 : index
    %65 = vector.load %arg2[%c2, %c0_18, %c0_19] : memref<9x8x1xf32, #tpu.memory_space<vmem>>, vector<1x8x1xf32>
    %66 = vector.shape_cast %65 : vector<1x8x1xf32> to vector<8x1xf32>
    %67 = vector.broadcast %66 : vector<8x1xf32> to vector<8x512xf32>
    %68 = vector.broadcast %64 : vector<1x512xf32> to vector<8x512xf32>
    %69 = arith.mulf %67, %68 : vector<8x512xf32>
    %70 = arith.addf %62, %69 : vector<8x512xf32>
    %c1_i32_20 = arith.constant 1 : i32
    %71 = tpu.dynamic_rotate %41 by %c1_i32_20 dim 1 : vector<1x512xf32>, i32 -> vector<1x512xf32>
    %72 = arith.mulf %71, %27 : vector<1x512xf32>
    %c3 = arith.constant 3 : index
    %c0_21 = arith.constant 0 : index
    %c0_22 = arith.constant 0 : index
    %73 = vector.load %arg2[%c3, %c0_21, %c0_22] : memref<9x8x1xf32, #tpu.memory_space<vmem>>, vector<1x8x1xf32>
    %74 = vector.shape_cast %73 : vector<1x8x1xf32> to vector<8x1xf32>
    %75 = vector.broadcast %74 : vector<8x1xf32> to vector<8x512xf32>
    %76 = vector.broadcast %72 : vector<1x512xf32> to vector<8x512xf32>
    %77 = arith.mulf %75, %76 : vector<8x512xf32>
    %78 = arith.addf %70, %77 : vector<8x512xf32>
    %c4 = arith.constant 4 : index
    %c0_23 = arith.constant 0 : index
    %c0_24 = arith.constant 0 : index
    %79 = vector.load %arg2[%c4, %c0_23, %c0_24] : memref<9x8x1xf32, #tpu.memory_space<vmem>>, vector<1x8x1xf32>
    %80 = vector.shape_cast %79 : vector<1x8x1xf32> to vector<8x1xf32>
    %81 = vector.broadcast %80 : vector<8x1xf32> to vector<8x512xf32>
    %82 = vector.broadcast %41 : vector<1x512xf32> to vector<8x512xf32>
    %83 = arith.mulf %81, %82 : vector<8x512xf32>
    %84 = arith.addf %78, %83 : vector<8x512xf32>
    %c511_i32 = arith.constant 511 : i32
    %85 = tpu.dynamic_rotate %41 by %c511_i32 dim 1 : vector<1x512xf32>, i32 -> vector<1x512xf32>
    %86 = arith.mulf %85, %28 : vector<1x512xf32>
    %c5 = arith.constant 5 : index
    %c0_25 = arith.constant 0 : index
    %c0_26 = arith.constant 0 : index
    %87 = vector.load %arg2[%c5, %c0_25, %c0_26] : memref<9x8x1xf32, #tpu.memory_space<vmem>>, vector<1x8x1xf32>
    %88 = vector.shape_cast %87 : vector<1x8x1xf32> to vector<8x1xf32>
    %89 = vector.broadcast %88 : vector<8x1xf32> to vector<8x512xf32>
    %90 = vector.broadcast %86 : vector<1x512xf32> to vector<8x512xf32>
    %91 = arith.mulf %89, %90 : vector<8x512xf32>
    %92 = arith.addf %84, %91 : vector<8x512xf32>
    %c497_i32 = arith.constant 497 : i32
    %93 = tpu.dynamic_rotate %41 by %c497_i32 dim 1 : vector<1x512xf32>, i32 -> vector<1x512xf32>
    %94 = arith.mulf %93, %29 : vector<1x512xf32>
    %c6 = arith.constant 6 : index
    %c0_27 = arith.constant 0 : index
    %c0_28 = arith.constant 0 : index
    %95 = vector.load %arg2[%c6, %c0_27, %c0_28] : memref<9x8x1xf32, #tpu.memory_space<vmem>>, vector<1x8x1xf32>
    %96 = vector.shape_cast %95 : vector<1x8x1xf32> to vector<8x1xf32>
    %97 = vector.broadcast %96 : vector<8x1xf32> to vector<8x512xf32>
    %98 = vector.broadcast %94 : vector<1x512xf32> to vector<8x512xf32>
    %99 = arith.mulf %97, %98 : vector<8x512xf32>
    %100 = arith.addf %92, %99 : vector<8x512xf32>
    %c496_i32 = arith.constant 496 : i32
    %101 = tpu.dynamic_rotate %41 by %c496_i32 dim 1 : vector<1x512xf32>, i32 -> vector<1x512xf32>
    %102 = arith.mulf %101, %30 : vector<1x512xf32>
    %c7 = arith.constant 7 : index
    %c0_29 = arith.constant 0 : index
    %c0_30 = arith.constant 0 : index
    %103 = vector.load %arg2[%c7, %c0_29, %c0_30] : memref<9x8x1xf32, #tpu.memory_space<vmem>>, vector<1x8x1xf32>
    %104 = vector.shape_cast %103 : vector<1x8x1xf32> to vector<8x1xf32>
    %105 = vector.broadcast %104 : vector<8x1xf32> to vector<8x512xf32>
    %106 = vector.broadcast %102 : vector<1x512xf32> to vector<8x512xf32>
    %107 = arith.mulf %105, %106 : vector<8x512xf32>
    %108 = arith.addf %100, %107 : vector<8x512xf32>
    %c495_i32 = arith.constant 495 : i32
    %109 = tpu.dynamic_rotate %41 by %c495_i32 dim 1 : vector<1x512xf32>, i32 -> vector<1x512xf32>
    %110 = arith.mulf %109, %31 : vector<1x512xf32>
    %c8 = arith.constant 8 : index
    %c0_31 = arith.constant 0 : index
    %c0_32 = arith.constant 0 : index
    %111 = vector.load %arg2[%c8, %c0_31, %c0_32] : memref<9x8x1xf32, #tpu.memory_space<vmem>>, vector<1x8x1xf32>
    %112 = vector.shape_cast %111 : vector<1x8x1xf32> to vector<8x1xf32>
    %113 = vector.broadcast %112 : vector<8x1xf32> to vector<8x512xf32>
    %114 = vector.broadcast %110 : vector<1x512xf32> to vector<8x512xf32>
    %115 = arith.mulf %113, %114 : vector<8x512xf32>
    %116 = arith.addf %108, %115 : vector<8x512xf32>
    %117 = vector.broadcast %43 : vector<8x1xf32> to vector<8x512xf32>
    %118 = arith.addf %116, %117 : vector<8x512xf32>
    %cst_33 = arith.constant dense<0.000000e+00> : vector<8x1xf32>
    %119 = tpu.matmul %118, %40, %cst_33 {dimension_numbers = #tpu.dot_dimension_numbers<[1], [0], [0], [1], [0, 0, 1, 1], [], []>} : vector<8x512xf32>, vector<512x1xf32>, vector<8x1xf32> -> vector<8x1xf32>
    %cst_34 = arith.constant 0.001953125 : f32
    %120 = vector.broadcast %cst_34 : f32 to vector<8x1xf32>
    %121 = arith.mulf %119, %120 : vector<8x1xf32>
    %122 = vector.broadcast %121 : vector<8x1xf32> to vector<8x512xf32>
    %123 = arith.subf %118, %122 : vector<8x512xf32>
    %124 = arith.mulf %123, %123 : vector<8x512xf32>
    %cst_35 = arith.constant dense<0.000000e+00> : vector<8x1xf32>
    %125 = tpu.matmul %124, %40, %cst_35 {dimension_numbers = #tpu.dot_dimension_numbers<[1], [0], [0], [1], [0, 0, 1, 1], [], []>} : vector<8x512xf32>, vector<512x1xf32>, vector<8x1xf32> -> vector<8x1xf32>
    %cst_36 = arith.constant 0.001953125 : f32
    %126 = vector.broadcast %cst_36 : f32 to vector<8x1xf32>
    %127 = arith.mulf %125, %126 : vector<8x1xf32>
    %cst_37 = arith.constant 9.99999974E-6 : f32
    %128 = vector.broadcast %cst_37 : f32 to vector<8x1xf32>
    %129 = arith.addf %127, %128 : vector<8x1xf32>
    %130 = math.rsqrt %129 : vector<8x1xf32>
    %131 = arith.mulf %44, %130 : vector<8x1xf32>
    %132 = vector.broadcast %131 : vector<8x1xf32> to vector<8x512xf32>
    %133 = arith.mulf %123, %132 : vector<8x512xf32>
    %134 = vector.broadcast %45 : vector<8x1xf32> to vector<8x512xf32>
    %135 = arith.addf %133, %134 : vector<8x512xf32>
    %cst_38 = arith.constant 0.000000e+00 : f32
    %136 = vector.broadcast %cst_38 : f32 to vector<8x512xf32>
    %137 = arith.maximumf %135, %136 : vector<8x512xf32>
    %c0_39 = arith.constant 0 : index
    %c0_40 = arith.constant 0 : index
    %138 = vector.load %arg5[%c0_39, %c0_40] : memref<16x3xf32, #tpu.memory_space<vmem>>, vector<16x3xf32>
    %139 = vector.extract_strided_slice %138 {offsets = [0, 0], sizes = [16, 1], strides = [1, 1]} : vector<16x3xf32> to vector<16x1xf32>
    %140 = vector.extract_strided_slice %138 {offsets = [0, 1], sizes = [16, 1], strides = [1, 1]} : vector<16x3xf32> to vector<16x1xf32>
    %141 = vector.extract_strided_slice %138 {offsets = [0, 2], sizes = [16, 1], strides = [1, 1]} : vector<16x3xf32> to vector<16x1xf32>
    %cst_41 = arith.constant 0.000000e+00 : f32
    %142 = vector.broadcast %cst_41 : f32 to vector<16x512xf32>
    %c17_i32_42 = arith.constant 17 : i32
    %143 = tpu.dynamic_rotate %137 by %c17_i32_42 dim 1 : vector<8x512xf32>, i32 -> vector<8x512xf32>
    %144 = vector.broadcast %24 : vector<1x512xf32> to vector<8x512xf32>
    %145 = arith.mulf %143, %144 : vector<8x512xf32>
    %c0_43 = arith.constant 0 : index
    %c0_44 = arith.constant 0 : index
    %c0_45 = arith.constant 0 : index
    %146 = vector.load %arg4[%c0_43, %c0_44, %c0_45] : memref<9x16x8xf32, #tpu.memory_space<vmem>>, vector<1x16x8xf32>
    %147 = vector.shape_cast %146 : vector<1x16x8xf32> to vector<16x8xf32>
    %cst_46 = arith.constant dense<0.000000e+00> : vector<16x512xf32>
    %148 = tpu.matmul %147, %145, %cst_46 {dimension_numbers = #tpu.dot_dimension_numbers<[1], [0], [0], [1], [0, 0, 1, 1], [], []>} : vector<16x8xf32>, vector<8x512xf32>, vector<16x512xf32> -> vector<16x512xf32>
    %149 = arith.addf %142, %148 : vector<16x512xf32>
    %c16_i32_47 = arith.constant 16 : i32
    %150 = tpu.dynamic_rotate %137 by %c16_i32_47 dim 1 : vector<8x512xf32>, i32 -> vector<8x512xf32>
    %151 = vector.broadcast %25 : vector<1x512xf32> to vector<8x512xf32>
    %152 = arith.mulf %150, %151 : vector<8x512xf32>
    %c1_48 = arith.constant 1 : index
    %c0_49 = arith.constant 0 : index
    %c0_50 = arith.constant 0 : index
    %153 = vector.load %arg4[%c1_48, %c0_49, %c0_50] : memref<9x16x8xf32, #tpu.memory_space<vmem>>, vector<1x16x8xf32>
    %154 = vector.shape_cast %153 : vector<1x16x8xf32> to vector<16x8xf32>
    %cst_51 = arith.constant dense<0.000000e+00> : vector<16x512xf32>
    %155 = tpu.matmul %154, %152, %cst_51 {dimension_numbers = #tpu.dot_dimension_numbers<[1], [0], [0], [1], [0, 0, 1, 1], [], []>} : vector<16x8xf32>, vector<8x512xf32>, vector<16x512xf32> -> vector<16x512xf32>
    %156 = arith.addf %149, %155 : vector<16x512xf32>
    %c15_i32_52 = arith.constant 15 : i32
    %157 = tpu.dynamic_rotate %137 by %c15_i32_52 dim 1 : vector<8x512xf32>, i32 -> vector<8x512xf32>
    %158 = vector.broadcast %26 : vector<1x512xf32> to vector<8x512xf32>
    %159 = arith.mulf %157, %158 : vector<8x512xf32>
    %c2_53 = arith.constant 2 : index
    %c0_54 = arith.constant 0 : index
    %c0_55 = arith.constant 0 : index
    %160 = vector.load %arg4[%c2_53, %c0_54, %c0_55] : memref<9x16x8xf32, #tpu.memory_space<vmem>>, vector<1x16x8xf32>
    %161 = vector.shape_cast %160 : vector<1x16x8xf32> to vector<16x8xf32>
    %cst_56 = arith.constant dense<0.000000e+00> : vector<16x512xf32>
    %162 = tpu.matmul %161, %159, %cst_56 {dimension_numbers = #tpu.dot_dimension_numbers<[1], [0], [0], [1], [0, 0, 1, 1], [], []>} : vector<16x8xf32>, vector<8x512xf32>, vector<16x512xf32> -> vector<16x512xf32>
    %163 = arith.addf %156, %162 : vector<16x512xf32>
    %c1_i32_57 = arith.constant 1 : i32
    %164 = tpu.dynamic_rotate %137 by %c1_i32_57 dim 1 : vector<8x512xf32>, i32 -> vector<8x512xf32>
    %165 = vector.broadcast %27 : vector<1x512xf32> to vector<8x512xf32>
    %166 = arith.mulf %164, %165 : vector<8x512xf32>
    %c3_58 = arith.constant 3 : index
    %c0_59 = arith.constant 0 : index
    %c0_60 = arith.constant 0 : index
    %167 = vector.load %arg4[%c3_58, %c0_59, %c0_60] : memref<9x16x8xf32, #tpu.memory_space<vmem>>, vector<1x16x8xf32>
    %168 = vector.shape_cast %167 : vector<1x16x8xf32> to vector<16x8xf32>
    %cst_61 = arith.constant dense<0.000000e+00> : vector<16x512xf32>
    %169 = tpu.matmul %168, %166, %cst_61 {dimension_numbers = #tpu.dot_dimension_numbers<[1], [0], [0], [1], [0, 0, 1, 1], [], []>} : vector<16x8xf32>, vector<8x512xf32>, vector<16x512xf32> -> vector<16x512xf32>
    %170 = arith.addf %163, %169 : vector<16x512xf32>
    %c4_62 = arith.constant 4 : index
    %c0_63 = arith.constant 0 : index
    %c0_64 = arith.constant 0 : index
    %171 = vector.load %arg4[%c4_62, %c0_63, %c0_64] : memref<9x16x8xf32, #tpu.memory_space<vmem>>, vector<1x16x8xf32>
    %172 = vector.shape_cast %171 : vector<1x16x8xf32> to vector<16x8xf32>
    %cst_65 = arith.constant dense<0.000000e+00> : vector<16x512xf32>
    %173 = tpu.matmul %172, %137, %cst_65 {dimension_numbers = #tpu.dot_dimension_numbers<[1], [0], [0], [1], [0, 0, 1, 1], [], []>} : vector<16x8xf32>, vector<8x512xf32>, vector<16x512xf32> -> vector<16x512xf32>
    %174 = arith.addf %170, %173 : vector<16x512xf32>
    %c511_i32_66 = arith.constant 511 : i32
    %175 = tpu.dynamic_rotate %137 by %c511_i32_66 dim 1 : vector<8x512xf32>, i32 -> vector<8x512xf32>
    %176 = vector.broadcast %28 : vector<1x512xf32> to vector<8x512xf32>
    %177 = arith.mulf %175, %176 : vector<8x512xf32>
    %c5_67 = arith.constant 5 : index
    %c0_68 = arith.constant 0 : index
    %c0_69 = arith.constant 0 : index
    %178 = vector.load %arg4[%c5_67, %c0_68, %c0_69] : memref<9x16x8xf32, #tpu.memory_space<vmem>>, vector<1x16x8xf32>
    %179 = vector.shape_cast %178 : vector<1x16x8xf32> to vector<16x8xf32>
    %cst_70 = arith.constant dense<0.000000e+00> : vector<16x512xf32>
    %180 = tpu.matmul %179, %177, %cst_70 {dimension_numbers = #tpu.dot_dimension_numbers<[1], [0], [0], [1], [0, 0, 1, 1], [], []>} : vector<16x8xf32>, vector<8x512xf32>, vector<16x512xf32> -> vector<16x512xf32>
    %181 = arith.addf %174, %180 : vector<16x512xf32>
    %c497_i32_71 = arith.constant 497 : i32
    %182 = tpu.dynamic_rotate %137 by %c497_i32_71 dim 1 : vector<8x512xf32>, i32 -> vector<8x512xf32>
    %183 = vector.broadcast %29 : vector<1x512xf32> to vector<8x512xf32>
    %184 = arith.mulf %182, %183 : vector<8x512xf32>
    %c6_72 = arith.constant 6 : index
    %c0_73 = arith.constant 0 : index
    %c0_74 = arith.constant 0 : index
    %185 = vector.load %arg4[%c6_72, %c0_73, %c0_74] : memref<9x16x8xf32, #tpu.memory_space<vmem>>, vector<1x16x8xf32>
    %186 = vector.shape_cast %185 : vector<1x16x8xf32> to vector<16x8xf32>
    %cst_75 = arith.constant dense<0.000000e+00> : vector<16x512xf32>
    %187 = tpu.matmul %186, %184, %cst_75 {dimension_numbers = #tpu.dot_dimension_numbers<[1], [0], [0], [1], [0, 0, 1, 1], [], []>} : vector<16x8xf32>, vector<8x512xf32>, vector<16x512xf32> -> vector<16x512xf32>
    %188 = arith.addf %181, %187 : vector<16x512xf32>
    %c496_i32_76 = arith.constant 496 : i32
    %189 = tpu.dynamic_rotate %137 by %c496_i32_76 dim 1 : vector<8x512xf32>, i32 -> vector<8x512xf32>
    %190 = vector.broadcast %30 : vector<1x512xf32> to vector<8x512xf32>
    %191 = arith.mulf %189, %190 : vector<8x512xf32>
    %c7_77 = arith.constant 7 : index
    %c0_78 = arith.constant 0 : index
    %c0_79 = arith.constant 0 : index
    %192 = vector.load %arg4[%c7_77, %c0_78, %c0_79] : memref<9x16x8xf32, #tpu.memory_space<vmem>>, vector<1x16x8xf32>
    %193 = vector.shape_cast %192 : vector<1x16x8xf32> to vector<16x8xf32>
    %cst_80 = arith.constant dense<0.000000e+00> : vector<16x512xf32>
    %194 = tpu.matmul %193, %191, %cst_80 {dimension_numbers = #tpu.dot_dimension_numbers<[1], [0], [0], [1], [0, 0, 1, 1], [], []>} : vector<16x8xf32>, vector<8x512xf32>, vector<16x512xf32> -> vector<16x512xf32>
    %195 = arith.addf %188, %194 : vector<16x512xf32>
    %c495_i32_81 = arith.constant 495 : i32
    %196 = tpu.dynamic_rotate %137 by %c495_i32_81 dim 1 : vector<8x512xf32>, i32 -> vector<8x512xf32>
    %197 = vector.broadcast %31 : vector<1x512xf32> to vector<8x512xf32>
    %198 = arith.mulf %196, %197 : vector<8x512xf32>
    %c8_82 = arith.constant 8 : index
    %c0_83 = arith.constant 0 : index
    %c0_84 = arith.constant 0 : index
    %199 = vector.load %arg4[%c8_82, %c0_83, %c0_84] : memref<9x16x8xf32, #tpu.memory_space<vmem>>, vector<1x16x8xf32>
    %200 = vector.shape_cast %199 : vector<1x16x8xf32> to vector<16x8xf32>
    %cst_85 = arith.constant dense<0.000000e+00> : vector<16x512xf32>
    %201 = tpu.matmul %200, %198, %cst_85 {dimension_numbers = #tpu.dot_dimension_numbers<[1], [0], [0], [1], [0, 0, 1, 1], [], []>} : vector<16x8xf32>, vector<8x512xf32>, vector<16x512xf32> -> vector<16x512xf32>
    %202 = arith.addf %195, %201 : vector<16x512xf32>
    %203 = vector.broadcast %139 : vector<16x1xf32> to vector<16x512xf32>
    %204 = arith.addf %202, %203 : vector<16x512xf32>
    %cst_86 = arith.constant dense<0.000000e+00> : vector<16x1xf32>
    %205 = tpu.matmul %204, %40, %cst_86 {dimension_numbers = #tpu.dot_dimension_numbers<[1], [0], [0], [1], [0, 0, 1, 1], [], []>} : vector<16x512xf32>, vector<512x1xf32>, vector<16x1xf32> -> vector<16x1xf32>
    %cst_87 = arith.constant 0.001953125 : f32
    %206 = vector.broadcast %cst_87 : f32 to vector<16x1xf32>
    %207 = arith.mulf %205, %206 : vector<16x1xf32>
    %208 = vector.broadcast %207 : vector<16x1xf32> to vector<16x512xf32>
    %209 = arith.subf %204, %208 : vector<16x512xf32>
    %210 = arith.mulf %209, %209 : vector<16x512xf32>
    %cst_88 = arith.constant dense<0.000000e+00> : vector<16x1xf32>
    %211 = tpu.matmul %210, %40, %cst_88 {dimension_numbers = #tpu.dot_dimension_numbers<[1], [0], [0], [1], [0, 0, 1, 1], [], []>} : vector<16x512xf32>, vector<512x1xf32>, vector<16x1xf32> -> vector<16x1xf32>
    %cst_89 = arith.constant 0.001953125 : f32
    %212 = vector.broadcast %cst_89 : f32 to vector<16x1xf32>
    %213 = arith.mulf %211, %212 : vector<16x1xf32>
    %cst_90 = arith.constant 9.99999974E-6 : f32
    %214 = vector.broadcast %cst_90 : f32 to vector<16x1xf32>
    %215 = arith.addf %213, %214 : vector<16x1xf32>
    %216 = math.rsqrt %215 : vector<16x1xf32>
    %217 = arith.mulf %140, %216 : vector<16x1xf32>
    %218 = vector.broadcast %217 : vector<16x1xf32> to vector<16x512xf32>
    %219 = arith.mulf %209, %218 : vector<16x512xf32>
    %220 = vector.broadcast %141 : vector<16x1xf32> to vector<16x512xf32>
    %221 = arith.addf %219, %220 : vector<16x512xf32>
    %cst_91 = arith.constant 0.000000e+00 : f32
    %222 = vector.broadcast %cst_91 : f32 to vector<16x512xf32>
    %223 = arith.maximumf %221, %222 : vector<16x512xf32>
    %c511_i32_92 = arith.constant 511 : i32
    %224 = tpu.dynamic_rotate %223 by %c511_i32_92 dim 1 : vector<16x512xf32>, i32 -> vector<16x512xf32>
    %c1_i32_93 = arith.constant 1 : i32
    %225 = tpu.dynamic_rotate %223 by %c1_i32_93 dim 1 : vector<16x512xf32>, i32 -> vector<16x512xf32>
    %226 = vector.shape_cast %35 : vector<1x512xi1> to vector<1x512xi1>
    %227 = vector.broadcast %226 : vector<1x512xi1> to vector<16x512xi1>
    %228 = arith.select %227, %225, %224 : vector<16x512xi1>, vector<16x512xf32>
    %229 = arith.maximumf %223, %228 : vector<16x512xf32>
    %c496_i32_94 = arith.constant 496 : i32
    %230 = tpu.dynamic_rotate %229 by %c496_i32_94 dim 1 : vector<16x512xf32>, i32 -> vector<16x512xf32>
    %c16_i32_95 = arith.constant 16 : i32
    %231 = tpu.dynamic_rotate %229 by %c16_i32_95 dim 1 : vector<16x512xf32>, i32 -> vector<16x512xf32>
    %232 = vector.shape_cast %39 : vector<1x512xi1> to vector<1x512xi1>
    %233 = vector.broadcast %232 : vector<1x512xi1> to vector<16x512xi1>
    %234 = arith.select %233, %231, %230 : vector<16x512xi1>, vector<16x512xf32>
    %235 = arith.maximumf %229, %234 : vector<16x512xf32>
    %c0_96 = arith.constant 0 : index
    %c0_97 = arith.constant 0 : index
    %236 = vector.load %arg10[%c0_96, %c0_97] : memref<16x512xf32, #tpu.memory_space<vmem>>, vector<16x512xf32>
    tpu.vector_store %arg10[%c0_96, %c0_97], %235 {strides = array<i32>} : memref<16x512xf32, #tpu.memory_space<vmem>>, vector<16x512xf32>,
    %c0_98 = arith.constant 0 : index
    %c0_99 = arith.constant 0 : index
    %237 = vector.load %arg7[%c0_98, %c0_99] : memref<8x3xf32, #tpu.memory_space<vmem>>, vector<8x3xf32>
    %238 = vector.extract_strided_slice %237 {offsets = [0, 0], sizes = [8, 1], strides = [1, 1]} : vector<8x3xf32> to vector<8x1xf32>
    %239 = vector.extract_strided_slice %237 {offsets = [0, 1], sizes = [8, 1], strides = [1, 1]} : vector<8x3xf32> to vector<8x1xf32>
    %240 = vector.extract_strided_slice %237 {offsets = [0, 2], sizes = [8, 1], strides = [1, 1]} : vector<8x3xf32> to vector<8x1xf32>
    %cst_100 = arith.constant 0.000000e+00 : f32
    %241 = vector.broadcast %cst_100 : f32 to vector<8x512xf32>
    %c17_i32_101 = arith.constant 17 : i32
    %242 = tpu.dynamic_rotate %235 by %c17_i32_101 dim 1 : vector<16x512xf32>, i32 -> vector<16x512xf32>
    %243 = vector.broadcast %24 : vector<1x512xf32> to vector<16x512xf32>
    %244 = arith.mulf %242, %243 : vector<16x512xf32>
    %c0_102 = arith.constant 0 : index
    %c0_103 = arith.constant 0 : index
    %c0_104 = arith.constant 0 : index
    %245 = vector.load %arg6[%c0_102, %c0_103, %c0_104] : memref<9x8x16xf32, #tpu.memory_space<vmem>>, vector<1x8x16xf32>
    %246 = vector.shape_cast %245 : vector<1x8x16xf32> to vector<8x16xf32>
    %cst_105 = arith.constant dense<0.000000e+00> : vector<8x512xf32>
    %247 = tpu.matmul %246, %244, %cst_105 {dimension_numbers = #tpu.dot_dimension_numbers<[1], [0], [0], [1], [0, 0, 1, 1], [], []>} : vector<8x16xf32>, vector<16x512xf32>, vector<8x512xf32> -> vector<8x512xf32>
    %248 = arith.addf %241, %247 : vector<8x512xf32>
    %c16_i32_106 = arith.constant 16 : i32
    %249 = tpu.dynamic_rotate %235 by %c16_i32_106 dim 1 : vector<16x512xf32>, i32 -> vector<16x512xf32>
    %250 = vector.broadcast %25 : vector<1x512xf32> to vector<16x512xf32>
    %251 = arith.mulf %249, %250 : vector<16x512xf32>
    %c1_107 = arith.constant 1 : index
    %c0_108 = arith.constant 0 : index
    %c0_109 = arith.constant 0 : index
    %252 = vector.load %arg6[%c1_107, %c0_108, %c0_109] : memref<9x8x16xf32, #tpu.memory_space<vmem>>, vector<1x8x16xf32>
    %253 = vector.shape_cast %252 : vector<1x8x16xf32> to vector<8x16xf32>
    %cst_110 = arith.constant dense<0.000000e+00> : vector<8x512xf32>
    %254 = tpu.matmul %253, %251, %cst_110 {dimension_numbers = #tpu.dot_dimension_numbers<[1], [0], [0], [1], [0, 0, 1, 1], [], []>} : vector<8x16xf32>, vector<16x512xf32>, vector<8x512xf32> -> vector<8x512xf32>
    %255 = arith.addf %248, %254 : vector<8x512xf32>
    %c15_i32_111 = arith.constant 15 : i32
    %256 = tpu.dynamic_rotate %235 by %c15_i32_111 dim 1 : vector<16x512xf32>, i32 -> vector<16x512xf32>
    %257 = vector.broadcast %26 : vector<1x512xf32> to vector<16x512xf32>
    %258 = arith.mulf %256, %257 : vector<16x512xf32>
    %c2_112 = arith.constant 2 : index
    %c0_113 = arith.constant 0 : index
    %c0_114 = arith.constant 0 : index
    %259 = vector.load %arg6[%c2_112, %c0_113, %c0_114] : memref<9x8x16xf32, #tpu.memory_space<vmem>>, vector<1x8x16xf32>
    %260 = vector.shape_cast %259 : vector<1x8x16xf32> to vector<8x16xf32>
    %cst_115 = arith.constant dense<0.000000e+00> : vector<8x512xf32>
    %261 = tpu.matmul %260, %258, %cst_115 {dimension_numbers = #tpu.dot_dimension_numbers<[1], [0], [0], [1], [0, 0, 1, 1], [], []>} : vector<8x16xf32>, vector<16x512xf32>, vector<8x512xf32> -> vector<8x512xf32>
    %262 = arith.addf %255, %261 : vector<8x512xf32>
    %c1_i32_116 = arith.constant 1 : i32
    %263 = tpu.dynamic_rotate %235 by %c1_i32_116 dim 1 : vector<16x512xf32>, i32 -> vector<16x512xf32>
    %264 = vector.broadcast %27 : vector<1x512xf32> to vector<16x512xf32>
    %265 = arith.mulf %263, %264 : vector<16x512xf32>
    %c3_117 = arith.constant 3 : index
    %c0_118 = arith.constant 0 : index
    %c0_119 = arith.constant 0 : index
    %266 = vector.load %arg6[%c3_117, %c0_118, %c0_119] : memref<9x8x16xf32, #tpu.memory_space<vmem>>, vector<1x8x16xf32>
    %267 = vector.shape_cast %266 : vector<1x8x16xf32> to vector<8x16xf32>
    %cst_120 = arith.constant dense<0.000000e+00> : vector<8x512xf32>
    %268 = tpu.matmul %267, %265, %cst_120 {dimension_numbers = #tpu.dot_dimension_numbers<[1], [0], [0], [1], [0, 0, 1, 1], [], []>} : vector<8x16xf32>, vector<16x512xf32>, vector<8x512xf32> -> vector<8x512xf32>
    %269 = arith.addf %262, %268 : vector<8x512xf32>
    %c4_121 = arith.constant 4 : index
    %c0_122 = arith.constant 0 : index
    %c0_123 = arith.constant 0 : index
    %270 = vector.load %arg6[%c4_121, %c0_122, %c0_123] : memref<9x8x16xf32, #tpu.memory_space<vmem>>, vector<1x8x16xf32>
    %271 = vector.shape_cast %270 : vector<1x8x16xf32> to vector<8x16xf32>
    %cst_124 = arith.constant dense<0.000000e+00> : vector<8x512xf32>
    %272 = tpu.matmul %271, %235, %cst_124 {dimension_numbers = #tpu.dot_dimension_numbers<[1], [0], [0], [1], [0, 0, 1, 1], [], []>} : vector<8x16xf32>, vector<16x512xf32>, vector<8x512xf32> -> vector<8x512xf32>
    %273 = arith.addf %269, %272 : vector<8x512xf32>
    %c511_i32_125 = arith.constant 511 : i32
    %274 = tpu.dynamic_rotate %235 by %c511_i32_125 dim 1 : vector<16x512xf32>, i32 -> vector<16x512xf32>
    %275 = vector.broadcast %28 : vector<1x512xf32> to vector<16x512xf32>
    %276 = arith.mulf %274, %275 : vector<16x512xf32>
    %c5_126 = arith.constant 5 : index
    %c0_127 = arith.constant 0 : index
    %c0_128 = arith.constant 0 : index
    %277 = vector.load %arg6[%c5_126, %c0_127, %c0_128] : memref<9x8x16xf32, #tpu.memory_space<vmem>>, vector<1x8x16xf32>
    %278 = vector.shape_cast %277 : vector<1x8x16xf32> to vector<8x16xf32>
    %cst_129 = arith.constant dense<0.000000e+00> : vector<8x512xf32>
    %279 = tpu.matmul %278, %276, %cst_129 {dimension_numbers = #tpu.dot_dimension_numbers<[1], [0], [0], [1], [0, 0, 1, 1], [], []>} : vector<8x16xf32>, vector<16x512xf32>, vector<8x512xf32> -> vector<8x512xf32>
    %280 = arith.addf %273, %279 : vector<8x512xf32>
    %c497_i32_130 = arith.constant 497 : i32
    %281 = tpu.dynamic_rotate %235 by %c497_i32_130 dim 1 : vector<16x512xf32>, i32 -> vector<16x512xf32>
    %282 = vector.broadcast %29 : vector<1x512xf32> to vector<16x512xf32>
    %283 = arith.mulf %281, %282 : vector<16x512xf32>
    %c6_131 = arith.constant 6 : index
    %c0_132 = arith.constant 0 : index
    %c0_133 = arith.constant 0 : index
    %284 = vector.load %arg6[%c6_131, %c0_132, %c0_133] : memref<9x8x16xf32, #tpu.memory_space<vmem>>, vector<1x8x16xf32>
    %285 = vector.shape_cast %284 : vector<1x8x16xf32> to vector<8x16xf32>
    %cst_134 = arith.constant dense<0.000000e+00> : vector<8x512xf32>
    %286 = tpu.matmul %285, %283, %cst_134 {dimension_numbers = #tpu.dot_dimension_numbers<[1], [0], [0], [1], [0, 0, 1, 1], [], []>} : vector<8x16xf32>, vector<16x512xf32>, vector<8x512xf32> -> vector<8x512xf32>
    %287 = arith.addf %280, %286 : vector<8x512xf32>
    %c496_i32_135 = arith.constant 496 : i32
    %288 = tpu.dynamic_rotate %235 by %c496_i32_135 dim 1 : vector<16x512xf32>, i32 -> vector<16x512xf32>
    %289 = vector.broadcast %30 : vector<1x512xf32> to vector<16x512xf32>
    %290 = arith.mulf %288, %289 : vector<16x512xf32>
    %c7_136 = arith.constant 7 : index
    %c0_137 = arith.constant 0 : index
    %c0_138 = arith.constant 0 : index
    %291 = vector.load %arg6[%c7_136, %c0_137, %c0_138] : memref<9x8x16xf32, #tpu.memory_space<vmem>>, vector<1x8x16xf32>
    %292 = vector.shape_cast %291 : vector<1x8x16xf32> to vector<8x16xf32>
    %cst_139 = arith.constant dense<0.000000e+00> : vector<8x512xf32>
    %293 = tpu.matmul %292, %290, %cst_139 {dimension_numbers = #tpu.dot_dimension_numbers<[1], [0], [0], [1], [0, 0, 1, 1], [], []>} : vector<8x16xf32>, vector<16x512xf32>, vector<8x512xf32> -> vector<8x512xf32>
    %294 = arith.addf %287, %293 : vector<8x512xf32>
    %c495_i32_140 = arith.constant 495 : i32
    %295 = tpu.dynamic_rotate %235 by %c495_i32_140 dim 1 : vector<16x512xf32>, i32 -> vector<16x512xf32>
    %296 = vector.broadcast %31 : vector<1x512xf32> to vector<16x512xf32>
    %297 = arith.mulf %295, %296 : vector<16x512xf32>
    %c8_141 = arith.constant 8 : index
    %c0_142 = arith.constant 0 : index
    %c0_143 = arith.constant 0 : index
    %298 = vector.load %arg6[%c8_141, %c0_142, %c0_143] : memref<9x8x16xf32, #tpu.memory_space<vmem>>, vector<1x8x16xf32>
    %299 = vector.shape_cast %298 : vector<1x8x16xf32> to vector<8x16xf32>
    %cst_144 = arith.constant dense<0.000000e+00> : vector<8x512xf32>
    %300 = tpu.matmul %299, %297, %cst_144 {dimension_numbers = #tpu.dot_dimension_numbers<[1], [0], [0], [1], [0, 0, 1, 1], [], []>} : vector<8x16xf32>, vector<16x512xf32>, vector<8x512xf32> -> vector<8x512xf32>
    %301 = arith.addf %294, %300 : vector<8x512xf32>
    %302 = vector.broadcast %238 : vector<8x1xf32> to vector<8x512xf32>
    %303 = arith.addf %301, %302 : vector<8x512xf32>
    %cst_145 = arith.constant dense<0.000000e+00> : vector<8x1xf32>
    %304 = tpu.matmul %303, %40, %cst_145 {dimension_numbers = #tpu.dot_dimension_numbers<[1], [0], [0], [1], [0, 0, 1, 1], [], []>} : vector<8x512xf32>, vector<512x1xf32>, vector<8x1xf32> -> vector<8x1xf32>
    %cst_146 = arith.constant 0.001953125 : f32
    %305 = vector.broadcast %cst_146 : f32 to vector<8x1xf32>
    %306 = arith.mulf %304, %305 : vector<8x1xf32>
    %307 = vector.broadcast %306 : vector<8x1xf32> to vector<8x512xf32>
    %308 = arith.subf %303, %307 : vector<8x512xf32>
    %309 = arith.mulf %308, %308 : vector<8x512xf32>
    %cst_147 = arith.constant dense<0.000000e+00> : vector<8x1xf32>
    %310 = tpu.matmul %309, %40, %cst_147 {dimension_numbers = #tpu.dot_dimension_numbers<[1], [0], [0], [1], [0, 0, 1, 1], [], []>} : vector<8x512xf32>, vector<512x1xf32>, vector<8x1xf32> -> vector<8x1xf32>
    %cst_148 = arith.constant 0.001953125 : f32
    %311 = vector.broadcast %cst_148 : f32 to vector<8x1xf32>
    %312 = arith.mulf %310, %311 : vector<8x1xf32>
    %cst_149 = arith.constant 9.99999974E-6 : f32
    %313 = vector.broadcast %cst_149 : f32 to vector<8x1xf32>
    %314 = arith.addf %312, %313 : vector<8x1xf32>
    %315 = math.rsqrt %314 : vector<8x1xf32>
    %316 = arith.mulf %239, %315 : vector<8x1xf32>
    %317 = vector.broadcast %316 : vector<8x1xf32> to vector<8x512xf32>
    %318 = arith.mulf %308, %317 : vector<8x512xf32>
    %319 = vector.broadcast %240 : vector<8x1xf32> to vector<8x512xf32>
    %320 = arith.addf %318, %319 : vector<8x512xf32>
    %cst_150 = arith.constant 0.000000e+00 : f32
    %321 = vector.broadcast %cst_150 : f32 to vector<8x512xf32>
    %322 = arith.maximumf %320, %321 : vector<8x512xf32>
    %c0_151 = arith.constant 0 : index
    %c0_152 = arith.constant 0 : index
    %323 = vector.load %arg9[%c0_151, %c0_152] : memref<1x3xf32, #tpu.memory_space<vmem>>, vector<1x3xf32>
    %324 = vector.extract_strided_slice %323 {offsets = [0, 0], sizes = [1, 1], strides = [1, 1]} : vector<1x3xf32> to vector<1x1xf32>
    %325 = vector.extract_strided_slice %323 {offsets = [0, 1], sizes = [1, 1], strides = [1, 1]} : vector<1x3xf32> to vector<1x1xf32>
    %326 = vector.extract_strided_slice %323 {offsets = [0, 2], sizes = [1, 1], strides = [1, 1]} : vector<1x3xf32> to vector<1x1xf32>
    %cst_153 = arith.constant 0.000000e+00 : f32
    %327 = vector.broadcast %cst_153 : f32 to vector<1x512xf32>
    %c17_i32_154 = arith.constant 17 : i32
    %328 = tpu.dynamic_rotate %322 by %c17_i32_154 dim 1 : vector<8x512xf32>, i32 -> vector<8x512xf32>
    %329 = vector.broadcast %24 : vector<1x512xf32> to vector<8x512xf32>
    %330 = arith.mulf %328, %329 : vector<8x512xf32>
    %c0_155 = arith.constant 0 : index
    %c0_156 = arith.constant 0 : index
    %c0_157 = arith.constant 0 : index
    %331 = vector.load %arg8[%c0_155, %c0_156, %c0_157] : memref<9x1x8xf32, #tpu.memory_space<vmem>>, vector<1x1x8xf32>
    %332 = vector.shape_cast %331 : vector<1x1x8xf32> to vector<1x8xf32>
    %cst_158 = arith.constant dense<0.000000e+00> : vector<1x512xf32>
    %333 = tpu.matmul %332, %330, %cst_158 {dimension_numbers = #tpu.dot_dimension_numbers<[1], [0], [0], [1], [0, 0, 1, 1], [], []>} : vector<1x8xf32>, vector<8x512xf32>, vector<1x512xf32> -> vector<1x512xf32>
    %334 = arith.addf %327, %333 : vector<1x512xf32>
    %c16_i32_159 = arith.constant 16 : i32
    %335 = tpu.dynamic_rotate %322 by %c16_i32_159 dim 1 : vector<8x512xf32>, i32 -> vector<8x512xf32>
    %336 = vector.broadcast %25 : vector<1x512xf32> to vector<8x512xf32>
    %337 = arith.mulf %335, %336 : vector<8x512xf32>
    %c1_160 = arith.constant 1 : index
    %c0_161 = arith.constant 0 : index
    %c0_162 = arith.constant 0 : index
    %338 = vector.load %arg8[%c1_160, %c0_161, %c0_162] : memref<9x1x8xf32, #tpu.memory_space<vmem>>, vector<1x1x8xf32>
    %339 = vector.shape_cast %338 : vector<1x1x8xf32> to vector<1x8xf32>
    %cst_163 = arith.constant dense<0.000000e+00> : vector<1x512xf32>
    %340 = tpu.matmul %339, %337, %cst_163 {dimension_numbers = #tpu.dot_dimension_numbers<[1], [0], [0], [1], [0, 0, 1, 1], [], []>} : vector<1x8xf32>, vector<8x512xf32>, vector<1x512xf32> -> vector<1x512xf32>
    %341 = arith.addf %334, %340 : vector<1x512xf32>
    %c15_i32_164 = arith.constant 15 : i32
    %342 = tpu.dynamic_rotate %322 by %c15_i32_164 dim 1 : vector<8x512xf32>, i32 -> vector<8x512xf32>
    %343 = vector.broadcast %26 : vector<1x512xf32> to vector<8x512xf32>
    %344 = arith.mulf %342, %343 : vector<8x512xf32>
    %c2_165 = arith.constant 2 : index
    %c0_166 = arith.constant 0 : index
    %c0_167 = arith.constant 0 : index
    %345 = vector.load %arg8[%c2_165, %c0_166, %c0_167] : memref<9x1x8xf32, #tpu.memory_space<vmem>>, vector<1x1x8xf32>
    %346 = vector.shape_cast %345 : vector<1x1x8xf32> to vector<1x8xf32>
    %cst_168 = arith.constant dense<0.000000e+00> : vector<1x512xf32>
    %347 = tpu.matmul %346, %344, %cst_168 {dimension_numbers = #tpu.dot_dimension_numbers<[1], [0], [0], [1], [0, 0, 1, 1], [], []>} : vector<1x8xf32>, vector<8x512xf32>, vector<1x512xf32> -> vector<1x512xf32>
    %348 = arith.addf %341, %347 : vector<1x512xf32>
    %c1_i32_169 = arith.constant 1 : i32
    %349 = tpu.dynamic_rotate %322 by %c1_i32_169 dim 1 : vector<8x512xf32>, i32 -> vector<8x512xf32>
    %350 = vector.broadcast %27 : vector<1x512xf32> to vector<8x512xf32>
    %351 = arith.mulf %349, %350 : vector<8x512xf32>
    %c3_170 = arith.constant 3 : index
    %c0_171 = arith.constant 0 : index
    %c0_172 = arith.constant 0 : index
    %352 = vector.load %arg8[%c3_170, %c0_171, %c0_172] : memref<9x1x8xf32, #tpu.memory_space<vmem>>, vector<1x1x8xf32>
    %353 = vector.shape_cast %352 : vector<1x1x8xf32> to vector<1x8xf32>
    %cst_173 = arith.constant dense<0.000000e+00> : vector<1x512xf32>
    %354 = tpu.matmul %353, %351, %cst_173 {dimension_numbers = #tpu.dot_dimension_numbers<[1], [0], [0], [1], [0, 0, 1, 1], [], []>} : vector<1x8xf32>, vector<8x512xf32>, vector<1x512xf32> -> vector<1x512xf32>
    %355 = arith.addf %348, %354 : vector<1x512xf32>
    %c4_174 = arith.constant 4 : index
    %c0_175 = arith.constant 0 : index
    %c0_176 = arith.constant 0 : index
    %356 = vector.load %arg8[%c4_174, %c0_175, %c0_176] : memref<9x1x8xf32, #tpu.memory_space<vmem>>, vector<1x1x8xf32>
    %357 = vector.shape_cast %356 : vector<1x1x8xf32> to vector<1x8xf32>
    %cst_177 = arith.constant dense<0.000000e+00> : vector<1x512xf32>
    %358 = tpu.matmul %357, %322, %cst_177 {dimension_numbers = #tpu.dot_dimension_numbers<[1], [0], [0], [1], [0, 0, 1, 1], [], []>} : vector<1x8xf32>, vector<8x512xf32>, vector<1x512xf32> -> vector<1x512xf32>
    %359 = arith.addf %355, %358 : vector<1x512xf32>
    %c511_i32_178 = arith.constant 511 : i32
    %360 = tpu.dynamic_rotate %322 by %c511_i32_178 dim 1 : vector<8x512xf32>, i32 -> vector<8x512xf32>
    %361 = vector.broadcast %28 : vector<1x512xf32> to vector<8x512xf32>
    %362 = arith.mulf %360, %361 : vector<8x512xf32>
    %c5_179 = arith.constant 5 : index
    %c0_180 = arith.constant 0 : index
    %c0_181 = arith.constant 0 : index
    %363 = vector.load %arg8[%c5_179, %c0_180, %c0_181] : memref<9x1x8xf32, #tpu.memory_space<vmem>>, vector<1x1x8xf32>
    %364 = vector.shape_cast %363 : vector<1x1x8xf32> to vector<1x8xf32>
    %cst_182 = arith.constant dense<0.000000e+00> : vector<1x512xf32>
    %365 = tpu.matmul %364, %362, %cst_182 {dimension_numbers = #tpu.dot_dimension_numbers<[1], [0], [0], [1], [0, 0, 1, 1], [], []>} : vector<1x8xf32>, vector<8x512xf32>, vector<1x512xf32> -> vector<1x512xf32>
    %366 = arith.addf %359, %365 : vector<1x512xf32>
    %c497_i32_183 = arith.constant 497 : i32
    %367 = tpu.dynamic_rotate %322 by %c497_i32_183 dim 1 : vector<8x512xf32>, i32 -> vector<8x512xf32>
    %368 = vector.broadcast %29 : vector<1x512xf32> to vector<8x512xf32>
    %369 = arith.mulf %367, %368 : vector<8x512xf32>
    %c6_184 = arith.constant 6 : index
    %c0_185 = arith.constant 0 : index
    %c0_186 = arith.constant 0 : index
    %370 = vector.load %arg8[%c6_184, %c0_185, %c0_186] : memref<9x1x8xf32, #tpu.memory_space<vmem>>, vector<1x1x8xf32>
    %371 = vector.shape_cast %370 : vector<1x1x8xf32> to vector<1x8xf32>
    %cst_187 = arith.constant dense<0.000000e+00> : vector<1x512xf32>
    %372 = tpu.matmul %371, %369, %cst_187 {dimension_numbers = #tpu.dot_dimension_numbers<[1], [0], [0], [1], [0, 0, 1, 1], [], []>} : vector<1x8xf32>, vector<8x512xf32>, vector<1x512xf32> -> vector<1x512xf32>
    %373 = arith.addf %366, %372 : vector<1x512xf32>
    %c496_i32_188 = arith.constant 496 : i32
    %374 = tpu.dynamic_rotate %322 by %c496_i32_188 dim 1 : vector<8x512xf32>, i32 -> vector<8x512xf32>
    %375 = vector.broadcast %30 : vector<1x512xf32> to vector<8x512xf32>
    %376 = arith.mulf %374, %375 : vector<8x512xf32>
    %c7_189 = arith.constant 7 : index
    %c0_190 = arith.constant 0 : index
    %c0_191 = arith.constant 0 : index
    %377 = vector.load %arg8[%c7_189, %c0_190, %c0_191] : memref<9x1x8xf32, #tpu.memory_space<vmem>>, vector<1x1x8xf32>
    %378 = vector.shape_cast %377 : vector<1x1x8xf32> to vector<1x8xf32>
    %cst_192 = arith.constant dense<0.000000e+00> : vector<1x512xf32>
    %379 = tpu.matmul %378, %376, %cst_192 {dimension_numbers = #tpu.dot_dimension_numbers<[1], [0], [0], [1], [0, 0, 1, 1], [], []>} : vector<1x8xf32>, vector<8x512xf32>, vector<1x512xf32> -> vector<1x512xf32>
    %380 = arith.addf %373, %379 : vector<1x512xf32>
    %c495_i32_193 = arith.constant 495 : i32
    %381 = tpu.dynamic_rotate %322 by %c495_i32_193 dim 1 : vector<8x512xf32>, i32 -> vector<8x512xf32>
    %382 = vector.broadcast %31 : vector<1x512xf32> to vector<8x512xf32>
    %383 = arith.mulf %381, %382 : vector<8x512xf32>
    %c8_194 = arith.constant 8 : index
    %c0_195 = arith.constant 0 : index
    %c0_196 = arith.constant 0 : index
    %384 = vector.load %arg8[%c8_194, %c0_195, %c0_196] : memref<9x1x8xf32, #tpu.memory_space<vmem>>, vector<1x1x8xf32>
    %385 = vector.shape_cast %384 : vector<1x1x8xf32> to vector<1x8xf32>
    %cst_197 = arith.constant dense<0.000000e+00> : vector<1x512xf32>
    %386 = tpu.matmul %385, %383, %cst_197 {dimension_numbers = #tpu.dot_dimension_numbers<[1], [0], [0], [1], [0, 0, 1, 1], [], []>} : vector<1x8xf32>, vector<8x512xf32>, vector<1x512xf32> -> vector<1x512xf32>
    %387 = arith.addf %380, %386 : vector<1x512xf32>
    %388 = vector.broadcast %324 : vector<1x1xf32> to vector<1x512xf32>
    %389 = arith.addf %387, %388 : vector<1x512xf32>
    %cst_198 = arith.constant dense<0.000000e+00> : vector<1xf32>
    %390 = vector.multi_reduction <add>, %389, %cst_198 [1] : vector<1x512xf32> to vector<1xf32>
    %391 = vector.shape_cast %390 : vector<1xf32> to vector<1x1xf32>
    %cst_199 = arith.constant 0.001953125 : f32
    %392 = vector.broadcast %cst_199 : f32 to vector<1x1xf32>
    %393 = arith.mulf %391, %392 : vector<1x1xf32>
    %394 = vector.broadcast %393 : vector<1x1xf32> to vector<1x512xf32>
    %395 = arith.subf %389, %394 : vector<1x512xf32>
    %396 = arith.mulf %395, %395 : vector<1x512xf32>
    %cst_200 = arith.constant dense<0.000000e+00> : vector<1xf32>
    %397 = vector.multi_reduction <add>, %396, %cst_200 [1] : vector<1x512xf32> to vector<1xf32>
    %398 = vector.shape_cast %397 : vector<1xf32> to vector<1x1xf32>
    %cst_201 = arith.constant 0.001953125 : f32
    %399 = vector.broadcast %cst_201 : f32 to vector<1x1xf32>
    %400 = arith.mulf %398, %399 : vector<1x1xf32>
    %cst_202 = arith.constant 9.99999974E-6 : f32
    %401 = vector.broadcast %cst_202 : f32 to vector<1x1xf32>
    %402 = arith.addf %400, %401 : vector<1x1xf32>
    %403 = math.rsqrt %402 : vector<1x1xf32>
    %404 = arith.mulf %325, %403 : vector<1x1xf32>
    %405 = vector.broadcast %404 : vector<1x1xf32> to vector<1x512xf32>
    %406 = arith.mulf %395, %405 : vector<1x512xf32>
    %407 = vector.broadcast %326 : vector<1x1xf32> to vector<1x512xf32>
    %408 = arith.addf %406, %407 : vector<1x512xf32>
    %409 = math.tanh %408 : vector<1x512xf32>
    %c0_203 = arith.constant 0 : index
    %c0_204 = arith.constant 0 : index
    %410 = vector.load %arg11[%c0_203, %c0_204] : memref<1x512xf32, #tpu.memory_space<vmem>>, vector<1x512xf32>
    tpu.vector_store %arg11[%c0_203, %c0_204], %409 {strides = array<i32>} : memref<1x512xf32, #tpu.memory_space<vmem>>, vector<1x512xf32>,
    return
  }
  func.func @transform_0(%arg0: i32) -> (i32, i32) {
    %c0_i32 = arith.constant 0 : i32
    %c0_i32_0 = arith.constant 0 : i32
    %c0_i32_1 = arith.constant 0 : i32
    return %c0_i32, %c0_i32_0 : i32, i32
  }
  func.func @transform_1(%arg0: i32) -> (i32, i32, i32) {
    %c0_i32 = arith.constant 0 : i32
    %c0_i32_0 = arith.constant 0 : i32
    %c0_i32_1 = arith.constant 0 : i32
    %c0_i32_2 = arith.constant 0 : i32
    return %c0_i32, %c0_i32_0, %c0_i32_1 : i32, i32, i32
  }
  func.func @transform_2(%arg0: i32) -> (i32, i32) {
    %c0_i32 = arith.constant 0 : i32
    %c0_i32_0 = arith.constant 0 : i32
    %c0_i32_1 = arith.constant 0 : i32
    return %c0_i32, %c0_i32_0 : i32, i32
  }
  func.func @transform_3(%arg0: i32) -> (i32, i32, i32) {
    %c0_i32 = arith.constant 0 : i32
    %c0_i32_0 = arith.constant 0 : i32
    %c0_i32_1 = arith.constant 0 : i32
    %c0_i32_2 = arith.constant 0 : i32
    return %c0_i32, %c0_i32_0, %c0_i32_1 : i32, i32, i32
  }
  func.func @transform_4(%arg0: i32) -> (i32, i32) {
    %c0_i32 = arith.constant 0 : i32
    %c0_i32_0 = arith.constant 0 : i32
    %c0_i32_1 = arith.constant 0 : i32
    return %c0_i32, %c0_i32_0 : i32, i32
  }
  func.func @transform_5(%arg0: i32) -> (i32, i32, i32) {
    %c0_i32 = arith.constant 0 : i32
    %c0_i32_0 = arith.constant 0 : i32
    %c0_i32_1 = arith.constant 0 : i32
    %c0_i32_2 = arith.constant 0 : i32
    return %c0_i32, %c0_i32_0, %c0_i32_1 : i32, i32, i32
  }
  func.func @transform_6(%arg0: i32) -> (i32, i32) {
    %c0_i32 = arith.constant 0 : i32
    %c0_i32_0 = arith.constant 0 : i32
    %c0_i32_1 = arith.constant 0 : i32
    return %c0_i32, %c0_i32_0 : i32, i32
  }
  func.func @transform_7(%arg0: i32) -> (i32, i32, i32) {
    %c0_i32 = arith.constant 0 : i32
    %c0_i32_0 = arith.constant 0 : i32
    %c0_i32_1 = arith.constant 0 : i32
    %c0_i32_2 = arith.constant 0 : i32
    return %c0_i32, %c0_i32_0, %c0_i32_1 : i32, i32, i32
  }
  func.func @transform_8(%arg0: i32) -> (i32, i32) {
    %c0_i32 = arith.constant 0 : i32
    %c0_i32_0 = arith.constant 0 : i32
    %c0_i32_1 = arith.constant 0 : i32
    return %c0_i32, %c0_i32_0 : i32, i32
  }
  func.func @transform_9(%arg0: i32) -> (i32, i32) {
    %c0_i32 = arith.constant 0 : i32
    %c0_i32_0 = arith.constant 0 : i32
    %c0_i32_1 = arith.constant 0 : i32
    return %c0_i32, %c0_i32_0 : i32, i32
  }
  func.func @transform_10(%arg0: i32) -> (i32, i32) {
    %c0_i32 = arith.constant 0 : i32
    %c0_i32_0 = arith.constant 0 : i32
    %c0_i32_1 = arith.constant 0 : i32
    return %c0_i32, %c0_i32_0 : i32, i32
  }
}

</mosaic_0001>

<llo_original>
// kernel: _lambda_.1
$region0: #{_lambda_.1}
  #allocation0 [shape = 'u32[]', space=smem, size = 0x4, offset = 0x4, fixed_abs, tag = 'smem constant byte address 0x4 - core index']
  #allocation1 [shape = 'u32[144,128]{1,0:T(1,128)}', space=vmem, size = 0x12000, scoped, tag = 'internal scratch']
  %s0 = inlined_call_operand.vmem [shape: f32[1,512], index: 0, kind: input, shape index: {}]
  %s1 = inlined_call_operand.hbm [shape: f32[9,8,1], index: 1, kind: input, shape index: {}]
  %s2 = inlined_call_operand.vmem [shape: f32[8,3], index: 2, kind: input, shape index: {}]
  %s3 = inlined_call_operand.hbm [shape: f32[9,16,8], index: 3, kind: input, shape index: {}]
  %s4 = inlined_call_operand.vmem [shape: f32[16,3], index: 4, kind: input, shape index: {}]
  %s5 = inlined_call_operand.hbm [shape: f32[9,8,16], index: 5, kind: input, shape index: {}]
  %s6 = inlined_call_operand.vmem [shape: f32[8,3], index: 6, kind: input, shape index: {}]
  %s7 = inlined_call_operand.vmem [shape: f32[9,1,8], index: 7, kind: input, shape index: {}]
  %s8 = inlined_call_operand.vmem [shape: f32[1,3], index: 8, kind: input, shape index: {}]
  %s9 = inlined_call_operand.vmem [shape: f32[16,512], index: 9, kind: output, shape index: {0}]
  %s10 = inlined_call_operand.vmem [shape: f32[1,512], index: 10, kind: output, shape index: {1}]
  %11 = xla_tuple %s9, %s10
  %s12 = sld [smem:[#allocation0]]
  $region66: #{_lambda_.1} parent=0
    _
  %s14 = ssub.s32 1, %s12
  %s15 = scalar_select 0, %s14, %s12
  $region1: #{_lambda_.1} parent=0
    #allocation2 [shape = 'u8[36864]{0}', space=vmem, size = 0x9000, scoped, tag = 'input window, operand 1, single buffered']
    #allocation3 [shape = 's32[1]{0}', space=sflag, size = 0x4, scoped, tag = 'scoped memory for _lambda_.1']
    #allocation4 [shape = 'u8[73728]{0}', space=vmem, size = 0x12000, scoped, tag = 'input window, operand 3, single buffered']
    #allocation5 [shape = 's32[1]{0}', space=sflag, size = 0x4, scoped, tag = 'scoped memory for _lambda_.1']
    #allocation6 [shape = 'u8[36864]{0}', space=vmem, size = 0x9000, scoped, tag = 'input window, operand 5, single buffered']
    %16 = vsyncpa [#allocation3], 0
    %17 = vsyncpa [#allocation5], 0
    // Predicated region
    $region2: #{_lambda_.1} parent=1 // pred_check
      _
    $region3: #{_lambda_.1} parent=1 // pred_check_branch
      %19 = sbr.rel (0) target = $region5
    $region4: #{_lambda_.1} parent=1 // pred_region
      _
    $region5: #{_lambda_.1} parent=1 // pred_fallthru
      _
    // Predicated region
    $region6: #{_lambda_.1} parent=1 // pred_check
      _
    $region7: #{_lambda_.1} parent=1 // pred_check_branch
      %21 = sbr.rel (0) target = $region9
    $region8: #{_lambda_.1} parent=1 // pred_region
      %s23 = ssub.s32 1152, 1152
      %24 = vsyncadd [#allocation3], %s23
      %s25 = sshll.u32 [#allocation2], 4
      %s26 = int_to_ptr.vmem [resolvable:$true] %s25
      %31 = dma.hbm_to_vmem [thread:$0]  %s1, 1152, %s26, [#allocation3], 128, 128, 8
    $region9: #{_lambda_.1} parent=1 // pred_fallthru
      _
    // Predicated region
    $region10: #{_lambda_.1} parent=1 // pred_check
      _
    $region11: #{_lambda_.1} parent=1 // pred_check_branch
      %33 = sbr.rel (0) target = $region13
    $region12: #{_lambda_.1} parent=1 // pred_region
      _
    $region13: #{_lambda_.1} parent=1 // pred_fallthru
      _
    // Predicated region
    $region14: #{_lambda_.1} parent=1 // pred_check
      _
    $region15: #{_lambda_.1} parent=1 // pred_check_branch
      %35 = sbr.rel (0) target = $region17
    $region16: #{_lambda_.1} parent=1 // pred_region
      %s37 = ssub.s32 2304, 2304
      %38 = vsyncadd [#allocation5], %s37
      %s39 = sshll.u32 [#allocation4], 4
      %s40 = int_to_ptr.vmem [resolvable:$true] %s39
      %45 = dma.hbm_to_vmem [thread:$0]  %s3, 2304, %s40, [#allocation5], 128, 128, 8
    $region17: #{_lambda_.1} parent=1 // pred_fallthru
      _
    // Predicated region
    $region18: #{_lambda_.1} parent=1 // pred_check
      _
    $region19: #{_lambda_.1} parent=1 // pred_check_branch
      %47 = sbr.rel (0) target = $region21
    $region20: #{_lambda_.1} parent=1 // pred_region
      _
    $region21: #{_lambda_.1} parent=1 // pred_fallthru
      _
    // Predicated region
    $region22: #{_lambda_.1} parent=1 // pred_check
      _
    $region23: #{_lambda_.1} parent=1 // pred_check_branch
      %49 = sbr.rel (0) target = $region25
    $region24: #{_lambda_.1} parent=1 // pred_region
      %s51 = ssub.s32 1152, 1152
      %52 = vsyncadd [#allocation5], %s51
      %s53 = sshll.u32 [#allocation6], 4
      %s54 = int_to_ptr.vmem [resolvable:$true] %s53
      %59 = dma.hbm_to_vmem [thread:$0]  %s5, 1152, %s54, [#allocation5], 128, 128, 8
    $region25: #{_lambda_.1} parent=1 // pred_fallthru
      _
    // Predicated region
    $region26: #{_lambda_.1} parent=1 // pred_check
      _
    $region27: #{_lambda_.1} parent=1 // pred_check_branch
      %61 = sbr.rel (0) target = $region29
    $region28: #{_lambda_.1} parent=1 // pred_region
      _
    $region29: #{_lambda_.1} parent=1 // pred_fallthru
      _
    // Predicated region
    $region30: #{_lambda_.1} parent=1 // pred_check
      _
    $region31: #{_lambda_.1} parent=1 // pred_check_branch
      %63 = sbr.rel (0) target = $region33
    $region32: #{_lambda_.1} parent=1 // pred_region
      _
    $region33: #{_lambda_.1} parent=1 // pred_fallthru
      _
    // Predicated region
    $region34: #{_lambda_.1} parent=1 // pred_check
      _
    $region35: #{_lambda_.1} parent=1 // pred_check_branch
      %65 = sbr.rel (0) target = $region37
    $region36: #{_lambda_.1} parent=1 // pred_region
      _
    $region37: #{_lambda_.1} parent=1 // pred_fallthru
      _
    // Predicated region
    $region38: #{_lambda_.1} parent=1 // pred_check
      _
    $region39: #{_lambda_.1} parent=1 // pred_check_branch
      %67 = sbr.rel (0) target = $region41
    $region40: #{_lambda_.1} parent=1 // pred_region
      %68 = dma.done [#allocation3], 1152
    $region41: #{_lambda_.1} parent=1 // pred_fallthru
      _
    // Predicated region
    $region42: #{_lambda_.1} parent=1 // pred_check
      _
    $region43: #{_lambda_.1} parent=1 // pred_check_branch
      %70 = sbr.rel (0) target = $region45
    $region44: #{_lambda_.1} parent=1 // pred_region
      %71 = dma.done [#allocation5], 2304
    $region45: #{_lambda_.1} parent=1 // pred_fallthru
      _
    // Predicated region
    $region46: #{_lambda_.1} parent=1 // pred_check
      _
    $region47: #{_lambda_.1} parent=1 // pred_check_branch
      %73 = sbr.rel (0) target = $region49
    $region48: #{_lambda_.1} parent=1 // pred_region
      %74 = dma.done [#allocation5], 1152
    $region49: #{_lambda_.1} parent=1 // pred_fallthru
      _
    %v75 = vlaneseq
    %v76 = vand.u32 %v75, 127
    %v77 = vadd.s32 %v76, 128
    %v78 = vadd.s32 %v76, 256
    %v79 = vadd.s32 %v76, 384
    %v80 = vand.u32 %v76, 15
    %v81 = vand.u32 %v77, 15
    %v82 = vand.u32 %v78, 15
    %v83 = vand.u32 %v79, 15
    %v84 = vshra.s32 %v76, 4
    %v85 = vshra.s32 %v77, 4
    %v86 = vshra.s32 %v78, 4
    %v87 = vshra.s32 %v79, 4
    %v88 = vand.u32 %v84, 15
    %v89 = vand.u32 %v85, 15
    %v90 = vand.u32 %v86, 15
    %v91 = vand.u32 %v87, 15
    %vm92 = vcmp.ge.s32.totalorder %v88, 1
    %vm93 = vcmp.ge.s32.totalorder %v89, 1
    %vm94 = vcmp.ge.s32.totalorder %v90, 1
    %vm95 = vcmp.ge.s32.totalorder %v91, 1
    %v96 = vsel %vm92, 1, 0
    %v97 = vsel %vm93, 1, 0
    %v98 = vsel %vm94, 1, 0
    %v99 = vsel %vm95, 1, 0
    %v100 = vcvt.s32.f32 %v96
    %v101 = vcvt.s32.f32 %v97
    %v102 = vcvt.s32.f32 %v98
    %v103 = vcvt.s32.f32 %v99
    %vm104 = vcmp.le.s32.totalorder %v88, 14
    %vm105 = vcmp.le.s32.totalorder %v89, 14
    %vm106 = vcmp.le.s32.totalorder %v90, 14
    %vm107 = vcmp.le.s32.totalorder %v91, 14
    %v108 = vsel %vm104, 1, 0
    %v109 = vsel %vm105, 1, 0
    %v110 = vsel %vm106, 1, 0
    %v111 = vsel %vm107, 1, 0
    %v112 = vcvt.s32.f32 %v108
    %v113 = vcvt.s32.f32 %v109
    %v114 = vcvt.s32.f32 %v110
    %v115 = vcvt.s32.f32 %v111
    %vm116 = vcmp.ge.s32.totalorder %v80, 1
    %vm117 = vcmp.ge.s32.totalorder %v81, 1
    %vm118 = vcmp.ge.s32.totalorder %v82, 1
    %vm119 = vcmp.ge.s32.totalorder %v83, 1
    %v120 = vsel %vm116, 1, 0
    %v121 = vsel %vm117, 1, 0
    %v122 = vsel %vm118, 1, 0
    %v123 = vsel %vm119, 1, 0
    %v124 = vcvt.s32.f32 %v120
    %v125 = vcvt.s32.f32 %v121
    %v126 = vcvt.s32.f32 %v122
    %v127 = vcvt.s32.f32 %v123
    %vm128 = vcmp.le.s32.totalorder %v80, 14
    %vm129 = vcmp.le.s32.totalorder %v81, 14
    %vm130 = vcmp.le.s32.totalorder %v82, 14
    %vm131 = vcmp.le.s32.totalorder %v83, 14
    %v132 = vsel %vm128, 1, 0
    %v133 = vsel %vm129, 1, 0
    %v134 = vsel %vm130, 1, 0
    %v135 = vsel %vm131, 1, 0
    %v136 = vcvt.s32.f32 %v132
    %v137 = vcvt.s32.f32 %v133
    %v138 = vcvt.s32.f32 %v134
    %v139 = vcvt.s32.f32 %v135
    %v140 = vmul.f32 %v100, %v124
    %v141 = vmul.f32 %v101, %v125
    %v142 = vmul.f32 %v102, %v126
    %v143 = vmul.f32 %v103, %v127
    %v144 = vmul.f32 %v100, %v136
    %v145 = vmul.f32 %v101, %v137
    %v146 = vmul.f32 %v102, %v138
    %v147 = vmul.f32 %v103, %v139
    %v148 = vmul.f32 %v112, %v124
    %v149 = vmul.f32 %v113, %v125
    %v150 = vmul.f32 %v114, %v126
    %v151 = vmul.f32 %v115, %v127
    %v152 = vmul.f32 %v112, %v136
    %v153 = vmul.f32 %v113, %v137
    %v154 = vmul.f32 %v114, %v138
    %v155 = vmul.f32 %v115, %v139
    %v156 = vand.u32 %v80, 1
    %v157 = vand.u32 %v81, 1
    %v158 = vand.u32 %v82, 1
    %v159 = vand.u32 %v83, 1
    %vm160 = vcmp.eq.s32.totalorder %v156, 1
    %vm161 = vcmp.eq.s32.totalorder %v157, 1
    %vm162 = vcmp.eq.s32.totalorder %v158, 1
    %vm163 = vcmp.eq.s32.totalorder %v159, 1
    %v164 = vand.u32 %v88, 1
    %v165 = vand.u32 %v89, 1
    %v166 = vand.u32 %v90, 1
    %v167 = vand.u32 %v91, 1
    %vm168 = vcmp.eq.s32.totalorder %v164, 1
    %vm169 = vcmp.eq.s32.totalorder %v165, 1
    %vm170 = vcmp.eq.s32.totalorder %v166, 1
    %vm171 = vcmp.eq.s32.totalorder %v167, 1
    %v172 = vld [vmem:[%s0] sm:$0xf]
    %v173 = vld [vmem:[%s2] sm:$0xff]
    %v175 = vlaneseq
    %v176 = vshrl.u32 %v175, 7
    %v177 = vsub.s32 0, %v176
    %v178 = vrot.slane %v172, %v177
    %v179 = vlaneseq
    %v180 = vshrl.u32 %v179, 7
    %v181 = vsub.s32 1, %v180
    %v182 = vrot.slane %v172, %v181
    %v183 = vlaneseq
    %v184 = vshrl.u32 %v183, 7
    %v185 = vsub.s32 2, %v184
    %v186 = vrot.slane %v172, %v185
    %v187 = vlaneseq
    %v188 = vshrl.u32 %v187, 7
    %v189 = vsub.s32 3, %v188
    %v190 = vrot.slane %v172, %v189
    %195 = vrot.lane.b32.xlu0 %v178, 17
    %v196 = vpop.permute.xlu0 %195
    %197 = vrot.lane.b32.xlu0 %v182, 17
    %v198 = vpop.permute.xlu0 %197
    %199 = vrot.lane.b32.xlu0 %v186, 17
    %v200 = vpop.permute.xlu0 %199
    %201 = vrot.lane.b32.xlu0 %v190, 17
    %v202 = vpop.permute.xlu0 %201
    %vm203 = vcmp.lt.s32.totalorder %v76, 17
    %v204 = vsel %vm203, %v200, %v202
    %v205 = vsel %vm203, %v198, %v200
    %v206 = vsel %vm203, %v196, %v198
    %v207 = vsel %vm203, %v202, %v196
    %v208 = vmul.f32 %v207, %v140
    %v209 = vmul.f32 %v206, %v141
    %v210 = vmul.f32 %v205, %v142
    %v211 = vmul.f32 %v204, %v143
    %v212 = vld [vmem:[#allocation2] sm:$0xff]
    %214 = vset.pattern.permute.xlu0 0
    %215 = vperm.xlu0 %214, %v212
    %v216 = vpop.permute.xlu0 %215
    %v218 = vlaneseq
    %v219 = vshrl.u32 %v218, 7
    %v220 = vsub.s32 0, %v219
    %v221 = vrot.slane %v208, %v220
    %v222 = vlaneseq
    %v223 = vshrl.u32 %v222, 7
    %v224 = vsub.s32 0, %v223
    %v225 = vrot.slane %v209, %v224
    %v226 = vlaneseq
    %v227 = vshrl.u32 %v226, 7
    %v228 = vsub.s32 0, %v227
    %v229 = vrot.slane %v210, %v228
    %v230 = vlaneseq
    %v231 = vshrl.u32 %v230, 7
    %v232 = vsub.s32 0, %v231
    %v233 = vrot.slane %v211, %v232
    %v234 = vmul.f32 %v216, %v221
    %v235 = vmul.f32 %v216, %v225
    %v236 = vmul.f32 %v216, %v229
    %v237 = vmul.f32 %v216, %v233
    %v238 = vadd.f32 %v234, 0.0
    %v239 = vadd.f32 %v235, 0.0
    %v240 = vadd.f32 %v236, 0.0
    %v241 = vadd.f32 %v237, 0.0
    %242 = vrot.lane.b32.xlu0 %v178, 16
    %v243 = vpop.permute.xlu0 %242
    %244 = vrot.lane.b32.xlu0 %v182, 16
    %v245 = vpop.permute.xlu0 %244
    %246 = vrot.lane.b32.xlu0 %v186, 16
    %v247 = vpop.permute.xlu0 %246
    %248 = vrot.lane.b32.xlu0 %v190, 16
    %v249 = vpop.permute.xlu0 %248
    %vm250 = vcmp.lt.s32.totalorder %v76, 16
    %v251 = vsel %vm250, %v247, %v249
    %v252 = vsel %vm250, %v245, %v247
    %v253 = vsel %vm250, %v243, %v245
    %v254 = vsel %vm250, %v249, %v243
    %v255 = vmul.f32 %v254, %v100
    %v256 = vmul.f32 %v253, %v101
    %v257 = vmul.f32 %v252, %v102
    %v258 = vmul.f32 %v251, %v103
    %s259 = scalar_lea.vmem [#allocation2], 8
    %v260 = vld [vmem:[%s259] sm:$0xff]
    %262 = vset.pattern.permute.xlu0 0
    %263 = vperm.xlu0 %262, %v260
    %v264 = vpop.permute.xlu0 %263
    %v266 = vlaneseq
    %v267 = vshrl.u32 %v266, 7
    %v268 = vsub.s32 0, %v267
    %v269 = vrot.slane %v255, %v268
    %v270 = vlaneseq
    %v271 = vshrl.u32 %v270, 7
    %v272 = vsub.s32 0, %v271
    %v273 = vrot.slane %v256, %v272
    %v274 = vlaneseq
    %v275 = vshrl.u32 %v274, 7
    %v276 = vsub.s32 0, %v275
    %v277 = vrot.slane %v257, %v276
    %v278 = vlaneseq
    %v279 = vshrl.u32 %v278, 7
    %v280 = vsub.s32 0, %v279
    %v281 = vrot.slane %v258, %v280
    %v282 = vmul.f32 %v264, %v269
    %v283 = vmul.f32 %v264, %v273
    %v284 = vmul.f32 %v264, %v277
    %v285 = vmul.f32 %v264, %v281
    %v286 = vadd.f32 %v238, %v282
    %v287 = vadd.f32 %v239, %v283
    %v288 = vadd.f32 %v240, %v284
    %v289 = vadd.f32 %v241, %v285
    %290 = vrot.lane.b32.xlu0 %v178, 15
    %v291 = vpop.permute.xlu0 %290
    %292 = vrot.lane.b32.xlu0 %v182, 15
    %v293 = vpop.permute.xlu0 %292
    %294 = vrot.lane.b32.xlu0 %v186, 15
    %v295 = vpop.permute.xlu0 %294
    %296 = vrot.lane.b32.xlu0 %v190, 15
    %v297 = vpop.permute.xlu0 %296
    %vm298 = vcmp.lt.s32.totalorder %v76, 15
    %v299 = vsel %vm298, %v295, %v297
    %v300 = vsel %vm298, %v293, %v295
    %v301 = vsel %vm298, %v291, %v293
    %v302 = vsel %vm298, %v297, %v291
    %v303 = vmul.f32 %v302, %v144
    %v304 = vmul.f32 %v301, %v145
    %v305 = vmul.f32 %v300, %v146
    %v306 = vmul.f32 %v299, %v147
    %s307 = scalar_lea.vmem [#allocation2], 16
    %v308 = vld [vmem:[%s307] sm:$0xff]
    %310 = vset.pattern.permute.xlu0 0
    %311 = vperm.xlu0 %310, %v308
    %v312 = vpop.permute.xlu0 %311
    %v314 = vlaneseq
    %v315 = vshrl.u32 %v314, 7
    %v316 = vsub.s32 0, %v315
    %v317 = vrot.slane %v303, %v316
    %v318 = vlaneseq
    %v319 = vshrl.u32 %v318, 7
    %v320 = vsub.s32 0, %v319
    %v321 = vrot.slane %v304, %v320
    %v322 = vlaneseq
    %v323 = vshrl.u32 %v322, 7
    %v324 = vsub.s32 0, %v323
    %v325 = vrot.slane %v305, %v324
    %v326 = vlaneseq
    %v327 = vshrl.u32 %v326, 7
    %v328 = vsub.s32 0, %v327
    %v329 = vrot.slane %v306, %v328
    %v330 = vmul.f32 %v312, %v317
    %v331 = vmul.f32 %v312, %v321
    %v332 = vmul.f32 %v312, %v325
    %v333 = vmul.f32 %v312, %v329
    %v334 = vadd.f32 %v286, %v330
    %v335 = vadd.f32 %v287, %v331
    %v336 = vadd.f32 %v288, %v332
    %v337 = vadd.f32 %v289, %v333
    %338 = vrot.lane.b32.xlu0 %v178, 1
    %v339 = vpop.permute.xlu0 %338
    %340 = vrot.lane.b32.xlu0 %v182, 1
    %v341 = vpop.permute.xlu0 %340
    %342 = vrot.lane.b32.xlu0 %v186, 1
    %v343 = vpop.permute.xlu0 %342
    %344 = vrot.lane.b32.xlu0 %v190, 1
    %v345 = vpop.permute.xlu0 %344
    %vm346 = vcmp.lt.s32.totalorder %v76, 1
    %v347 = vsel %vm346, %v343, %v345
    %v348 = vsel %vm346, %v341, %v343
    %v349 = vsel %vm346, %v339, %v341
    %v350 = vsel %vm346, %v345, %v339
    %v351 = vmul.f32 %v350, %v124
    %v352 = vmul.f32 %v349, %v125
    %v353 = vmul.f32 %v348, %v126
    %v354 = vmul.f32 %v347, %v127
    %s355 = scalar_lea.vmem [#allocation2], 24
    %v356 = vld [vmem:[%s355] sm:$0xff]
    %358 = vset.pattern.permute.xlu0 0
    %359 = vperm.xlu0 %358, %v356
    %v360 = vpop.permute.xlu0 %359
    %v362 = vlaneseq
    %v363 = vshrl.u32 %v362, 7
    %v364 = vsub.s32 0, %v363
    %v365 = vrot.slane %v351, %v364
    %v366 = vlaneseq
    %v367 = vshrl.u32 %v366, 7
    %v368 = vsub.s32 0, %v367
    %v369 = vrot.slane %v352, %v368
    %v370 = vlaneseq
    %v371 = vshrl.u32 %v370, 7
    %v372 = vsub.s32 0, %v371
    %v373 = vrot.slane %v353, %v372
    %v374 = vlaneseq
    %v375 = vshrl.u32 %v374, 7
    %v376 = vsub.s32 0, %v375
    %v377 = vrot.slane %v354, %v376
    %v378 = vmul.f32 %v360, %v365
    %v379 = vmul.f32 %v360, %v369
    %v380 = vmul.f32 %v360, %v373
    %v381 = vmul.f32 %v360, %v377
    %v382 = vadd.f32 %v334, %v378
    %v383 = vadd.f32 %v335, %v379
    %v384 = vadd.f32 %v336, %v380
    %v385 = vadd.f32 %v337, %v381
    %s386 = scalar_lea.vmem [#allocation2], 32
    %v387 = vld [vmem:[%s386] sm:$0xff]
    %389 = vset.pattern.permute.xlu0 0
    %390 = vperm.xlu0 %389, %v387
    %v391 = vpop.permute.xlu0 %390
    %v393 = vmul.f32 %v391, %v178
    %v394 = vmul.f32 %v391, %v182
    %v395 = vmul.f32 %v391, %v186
    %v396 = vmul.f32 %v391, %v190
    %v397 = vadd.f32 %v382, %v393
    %v398 = vadd.f32 %v383, %v394
    %v399 = vadd.f32 %v384, %v395
    %v400 = vadd.f32 %v385, %v396
    %401 = vrot.lane.b32.xlu0 %v178, 127
    %v402 = vpop.permute.xlu0 %401
    %403 = vrot.lane.b32.xlu0 %v182, 127
    %v404 = vpop.permute.xlu0 %403
    %405 = vrot.lane.b32.xlu0 %v186, 127
    %v406 = vpop.permute.xlu0 %405
    %407 = vrot.lane.b32.xlu0 %v190, 127
    %v408 = vpop.permute.xlu0 %407
    %vm409 = vcmp.lt.s32.totalorder %v76, 127
    %v410 = vsel %vm409, %v406, %v408
    %v411 = vsel %vm409, %v404, %v406
    %v412 = vsel %vm409, %v402, %v404
    %v413 = vsel %vm409, %v408, %v402
    %v414 = vmul.f32 %v412, %v136
    %v415 = vmul.f32 %v411, %v137
    %v416 = vmul.f32 %v410, %v138
    %v417 = vmul.f32 %v413, %v139
    %s418 = scalar_lea.vmem [#allocation2], 40
    %v419 = vld [vmem:[%s418] sm:$0xff]
    %421 = vset.pattern.permute.xlu0 0
    %422 = vperm.xlu0 %421, %v419
    %v423 = vpop.permute.xlu0 %422
    %v425 = vlaneseq
    %v426 = vshrl.u32 %v425, 7
    %v427 = vsub.s32 0, %v426
    %v428 = vrot.slane %v414, %v427
    %v429 = vlaneseq
    %v430 = vshrl.u32 %v429, 7
    %v431 = vsub.s32 0, %v430
    %v432 = vrot.slane %v415, %v431
    %v433 = vlaneseq
    %v434 = vshrl.u32 %v433, 7
    %v435 = vsub.s32 0, %v434
    %v436 = vrot.slane %v416, %v435
    %v437 = vlaneseq
    %v438 = vshrl.u32 %v437, 7
    %v439 = vsub.s32 0, %v438
    %v440 = vrot.slane %v417, %v439
    %v441 = vmul.f32 %v423, %v428
    %v442 = vmul.f32 %v423, %v432
    %v443 = vmul.f32 %v423, %v436
    %v444 = vmul.f32 %v423, %v440
    %v445 = vadd.f32 %v397, %v441
    %v446 = vadd.f32 %v398, %v442
    %v447 = vadd.f32 %v399, %v443
    %v448 = vadd.f32 %v400, %v444
    %449 = vrot.lane.b32.xlu0 %v178, 113
    %v450 = vpop.permute.xlu0 %449
    %451 = vrot.lane.b32.xlu0 %v182, 113
    %v452 = vpop.permute.xlu0 %451
    %453 = vrot.lane.b32.xlu0 %v186, 113
    %v454 = vpop.permute.xlu0 %453
    %455 = vrot.lane.b32.xlu0 %v190, 113
    %v456 = vpop.permute.xlu0 %455
    %vm457 = vcmp.lt.s32.totalorder %v76, 113
    %v458 = vsel %vm457, %v454, %v456
    %v459 = vsel %vm457, %v452, %v454
    %v460 = vsel %vm457, %v450, %v452
    %v461 = vsel %vm457, %v456, %v450
    %v462 = vmul.f32 %v460, %v148
    %v463 = vmul.f32 %v459, %v149
    %v464 = vmul.f32 %v458, %v150
    %v465 = vmul.f32 %v461, %v151
    %s466 = scalar_lea.vmem [#allocation2], 48
    %v467 = vld [vmem:[%s466] sm:$0xff]
    %469 = vset.pattern.permute.xlu0 0
    %470 = vperm.xlu0 %469, %v467
    %v471 = vpop.permute.xlu0 %470
    %v473 = vlaneseq
    %v474 = vshrl.u32 %v473, 7
    %v475 = vsub.s32 0, %v474
    %v476 = vrot.slane %v462, %v475
    %v477 = vlaneseq
    %v478 = vshrl.u32 %v477, 7
    %v479 = vsub.s32 0, %v478
    %v480 = vrot.slane %v463, %v479
    %v481 = vlaneseq
    %v482 = vshrl.u32 %v481, 7
    %v483 = vsub.s32 0, %v482
    %v484 = vrot.slane %v464, %v483
    %v485 = vlaneseq
    %v486 = vshrl.u32 %v485, 7
    %v487 = vsub.s32 0, %v486
    %v488 = vrot.slane %v465, %v487
    %v489 = vmul.f32 %v471, %v476
    %v490 = vmul.f32 %v471, %v480
    %v491 = vmul.f32 %v471, %v484
    %v492 = vmul.f32 %v471, %v488
    %v493 = vadd.f32 %v445, %v489
    %v494 = vadd.f32 %v446, %v490
    %v495 = vadd.f32 %v447, %v491
    %v496 = vadd.f32 %v448, %v492
    %497 = vrot.lane.b32.xlu0 %v178, 112
    %v498 = vpop.permute.xlu0 %497
    %499 = vrot.lane.b32.xlu0 %v182, 112
    %v500 = vpop.permute.xlu0 %499
    %501 = vrot.lane.b32.xlu0 %v186, 112
    %v502 = vpop.permute.xlu0 %501
    %503 = vrot.lane.b32.xlu0 %v190, 112
    %v504 = vpop.permute.xlu0 %503
    %vm505 = vcmp.lt.s32.totalorder %v76, 112
    %v506 = vsel %vm505, %v502, %v504
    %v507 = vsel %vm505, %v500, %v502
    %v508 = vsel %vm505, %v498, %v500
    %v509 = vsel %vm505, %v504, %v498
    %v510 = vmul.f32 %v508, %v112
    %v511 = vmul.f32 %v507, %v113
    %v512 = vmul.f32 %v506, %v114
    %v513 = vmul.f32 %v509, %v115
    %s514 = scalar_lea.vmem [#allocation2], 56
    %v515 = vld [vmem:[%s514] sm:$0xff]
    %517 = vset.pattern.permute.xlu0 0
    %518 = vperm.xlu0 %517, %v515
    %v519 = vpop.permute.xlu0 %518
    %v521 = vlaneseq
    %v522 = vshrl.u32 %v521, 7
    %v523 = vsub.s32 0, %v522
    %v524 = vrot.slane %v510, %v523
    %v525 = vlaneseq
    %v526 = vshrl.u32 %v525, 7
    %v527 = vsub.s32 0, %v526
    %v528 = vrot.slane %v511, %v527
    %v529 = vlaneseq
    %v530 = vshrl.u32 %v529, 7
    %v531 = vsub.s32 0, %v530
    %v532 = vrot.slane %v512, %v531
    %v533 = vlaneseq
    %v534 = vshrl.u32 %v533, 7
    %v535 = vsub.s32 0, %v534
    %v536 = vrot.slane %v513, %v535
    %v537 = vmul.f32 %v519, %v524
    %v538 = vmul.f32 %v519, %v528
    %v539 = vmul.f32 %v519, %v532
    %v540 = vmul.f32 %v519, %v536
    %v541 = vadd.f32 %v493, %v537
    %v542 = vadd.f32 %v494, %v538
    %v543 = vadd.f32 %v495, %v539
    %v544 = vadd.f32 %v496, %v540
    %545 = vrot.lane.b32.xlu0 %v178, 111
    %v546 = vpop.permute.xlu0 %545
    %547 = vrot.lane.b32.xlu0 %v182, 111
    %v548 = vpop.permute.xlu0 %547
    %549 = vrot.lane.b32.xlu0 %v186, 111
    %v550 = vpop.permute.xlu0 %549
    %551 = vrot.lane.b32.xlu0 %v190, 111
    %v552 = vpop.permute.xlu0 %551
    %vm553 = vcmp.lt.s32.totalorder %v76, 111
    %v554 = vsel %vm553, %v550, %v552
    %v555 = vsel %vm553, %v548, %v550
    %v556 = vsel %vm553, %v546, %v548
    %v557 = vsel %vm553, %v552, %v546
    %v558 = vmul.f32 %v556, %v152
    %v559 = vmul.f32 %v555, %v153
    %v560 = vmul.f32 %v554, %v154
    %v561 = vmul.f32 %v557, %v155
    %s562 = scalar_lea.vmem [#allocation2], 64
    %v563 = vld [vmem:[%s562] sm:$0xff]
    %565 = vset.pattern.permute.xlu0 0
    %566 = vperm.xlu0 %565, %v563
    %v567 = vpop.permute.xlu0 %566
    %v569 = vlaneseq
    %v570 = vshrl.u32 %v569, 7
    %v571 = vsub.s32 0, %v570
    %v572 = vrot.slane %v558, %v571
    %v573 = vlaneseq
    %v574 = vshrl.u32 %v573, 7
    %v575 = vsub.s32 0, %v574
    %v576 = vrot.slane %v559, %v575
    %v577 = vlaneseq
    %v578 = vshrl.u32 %v577, 7
    %v579 = vsub.s32 0, %v578
    %v580 = vrot.slane %v560, %v579
    %v581 = vlaneseq
    %v582 = vshrl.u32 %v581, 7
    %v583 = vsub.s32 0, %v582
    %v584 = vrot.slane %v561, %v583
    %v585 = vmul.f32 %v567, %v572
    %v586 = vmul.f32 %v567, %v576
    %v587 = vmul.f32 %v567, %v580
    %v588 = vmul.f32 %v567, %v584
    %v589 = vadd.f32 %v541, %v585
    %v590 = vadd.f32 %v542, %v586
    %v591 = vadd.f32 %v543, %v587
    %v592 = vadd.f32 %v544, %v588
    %594 = vset.pattern.permute.xlu0 0
    %595 = vperm.xlu0 %594, %v173
    %v596 = vpop.permute.xlu0 %595
    %v598 = vadd.f32 %v589, %v596
    %v599 = vadd.f32 %v590, %v596
    %v600 = vadd.f32 %v591, %v596
    %v601 = vadd.f32 %v592, %v596
    %602 = vmatprep.subr.mxu0 0.0
    %603 = vmatpush1.msra.mxu0 1.0
    %604 = vmatprep.subr.mxu0 0.0
    %605 = vmatpush1.msra.mxu0 1.0
    %606 = vmatprep.subr.mxu0 0.0
    %607 = vmatpush1.msra.mxu0 1.0
    %608 = vmatprep.subr.mxu0 0.0
    %609 = vmatpush1.msra.mxu0 1.0
    %610 = vmatprep.subr.mxu0 0.0
    %611 = vmatpush1.msra.mxu0 1.0
    %612 = vmatprep.subr.mxu0 0.0
    %613 = vmatpush1.msra.mxu0 1.0
    %614 = vmatprep.subr.mxu0 0.0
    %615 = vmatpush1.msra.mxu0 1.0
    %616 = vmatprep.subr.mxu0 0.0
    %617 = vmatpush1.msra.mxu0 1.0
    %618 = vmatprep.subr.mxu0 0.0
    %619 = vmatpush1.msra.mxu0 1.0
    %620 = vmatprep.subr.mxu0 0.0
    %621 = vmatpush1.msra.mxu0 1.0
    %622 = vmatprep.subr.mxu0 0.0
    %623 = vmatpush1.msra.mxu0 1.0
    %624 = vmatprep.subr.mxu0 0.0
    %625 = vmatpush1.msra.mxu0 1.0
    %626 = vmatprep.subr.mxu0 0.0
    %627 = vmatpush1.msra.mxu0 1.0
    %628 = vmatprep.subr.mxu0 0.0
    %629 = vmatpush1.msra.mxu0 1.0
    %630 = vmatprep.subr.mxu0 0.0
    %631 = vmatpush1.msra.mxu0 1.0
    %632 = vmatprep.subr.mxu0 0.0
    %633 = vmatpush1.msra.mxu0 1.0
    %634 = vmatprep.subr.mxu0 0.0
    %635 = vmatpush1.msra.mxu0 1.0
    %636 = vmatprep.subr.mxu0 0.0
    %637 = vmatpush1.msra.mxu0 1.0
    %638 = vmatprep.subr.mxu0 0.0
    %639 = vmatpush1.msra.mxu0 1.0
    %640 = vmatprep.subr.mxu0 0.0
    %641 = vmatpush1.msra.mxu0 1.0
    %642 = vmatprep.subr.mxu0 0.0
    %643 = vmatpush1.msra.mxu0 1.0
    %644 = vmatprep.subr.mxu0 0.0
    %645 = vmatpush1.msra.mxu0 1.0
    %646 = vmatprep.subr.mxu0 0.0
    %647 = vmatpush1.msra.mxu0 1.0
    %648 = vmatprep.subr.mxu0 0.0
    %649 = vmatpush1.msra.mxu0 1.0
    %650 = vmatprep.subr.mxu0 0.0
    %651 = vmatpush1.msra.mxu0 1.0
    %652 = vmatprep.subr.mxu0 0.0
    %653 = vmatpush1.msra.mxu0 1.0
    %654 = vmatprep.subr.mxu0 0.0
    %655 = vmatpush1.msra.mxu0 1.0
    %656 = vmatprep.subr.mxu0 0.0
    %657 = vmatpush1.msra.mxu0 1.0
    %658 = vmatprep.subr.mxu0 0.0
    %659 = vmatpush1.msra.mxu0 1.0
    %660 = vmatprep.subr.mxu0 0.0
    %661 = vmatpush1.msra.mxu0 1.0
    %662 = vmatprep.subr.mxu0 0.0
    %663 = vmatpush1.msra.mxu0 1.0
    %664 = vmatprep.subr.mxu0 0.0
    %665 = vmatpush1.msra.mxu0 1.0
    %666 = vmatprep.mubr.f32.mxu0 %v599
    %667 = vmatmul.mubr.f32.gmra.mrb[0].mxu0 %v598
    %v668 = vpop.f32.mrb[0].mxu0
    %v669 = vadd.f32 0.0, %v668
    %v670 = vpop.f32.mrb[0].mxu0
    %671 = vdwg.mxu0
    %672 = vmatprep.subr.mxu0 0.0
    %673 = vmatpush1.msra.mxu0 1.0
    %674 = vmatprep.subr.mxu0 0.0
    %675 = vmatpush1.msra.mxu0 1.0
    %676 = vmatprep.subr.mxu0 0.0
    %677 = vmatpush1.msra.mxu0 1.0
    %678 = vmatprep.subr.mxu0 0.0
    %679 = vmatpush1.msra.mxu0 1.0
    %680 = vmatprep.subr.mxu0 0.0
    %681 = vmatpush1.msra.mxu0 1.0
    %682 = vmatprep.subr.mxu0 0.0
    %683 = vmatpush1.msra.mxu0 1.0
    %684 = vmatprep.subr.mxu0 0.0
    %685 = vmatpush1.msra.mxu0 1.0
    %686 = vmatprep.subr.mxu0 0.0
    %687 = vmatpush1.msra.mxu0 1.0
    %688 = vmatprep.subr.mxu0 0.0
    %689 = vmatpush1.msra.mxu0 1.0
    %690 = vmatprep.subr.mxu0 0.0
    %691 = vmatpush1.msra.mxu0 1.0
    %692 = vmatprep.subr.mxu0 0.0
    %693 = vmatpush1.msra.mxu0 1.0
    %694 = vmatprep.subr.mxu0 0.0
    %695 = vmatpush1.msra.mxu0 1.0
    %696 = vmatprep.subr.mxu0 0.0
    %697 = vmatpush1.msra.mxu0 1.0
    %698 = vmatprep.subr.mxu0 0.0
    %699 = vmatpush1.msra.mxu0 1.0
    %700 = vmatprep.subr.mxu0 0.0
    %701 = vmatpush1.msra.mxu0 1.0
    %702 = vmatprep.subr.mxu0 0.0
    %703 = vmatpush1.msra.mxu0 1.0
    %704 = vmatprep.subr.mxu0 0.0
    %705 = vmatpush1.msra.mxu0 1.0
    %706 = vmatprep.subr.mxu0 0.0
    %707 = vmatpush1.msra.mxu0 1.0
    %708 = vmatprep.subr.mxu0 0.0
    %709 = vmatpush1.msra.mxu0 1.0
    %710 = vmatprep.subr.mxu0 0.0
    %711 = vmatpush1.msra.mxu0 1.0
    %712 = vmatprep.subr.mxu0 0.0
    %713 = vmatpush1.msra.mxu0 1.0
    %714 = vmatprep.subr.mxu0 0.0
    %715 = vmatpush1.msra.mxu0 1.0
    %716 = vmatprep.subr.mxu0 0.0
    %717 = vmatpush1.msra.mxu0 1.0
    %718 = vmatprep.subr.mxu0 0.0
    %719 = vmatpush1.msra.mxu0 1.0
    %720 = vmatprep.subr.mxu0 0.0
    %721 = vmatpush1.msra.mxu0 1.0
    %722 = vmatprep.subr.mxu0 0.0
    %723 = vmatpush1.msra.mxu0 1.0
    %724 = vmatprep.subr.mxu0 0.0
    %725 = vmatpush1.msra.mxu0 1.0
    %726 = vmatprep.subr.mxu0 0.0
    %727 = vmatpush1.msra.mxu0 1.0
    %728 = vmatprep.subr.mxu0 0.0
    %729 = vmatpush1.msra.mxu0 1.0
    %730 = vmatprep.subr.mxu0 0.0
    %731 = vmatpush1.msra.mxu0 1.0
    %732 = vmatprep.subr.mxu0 0.0
    %733 = vmatpush1.msra.mxu0 1.0
    %734 = vmatprep.subr.mxu0 0.0
    %735 = vmatpush1.msra.mxu0 1.0
    %736 = vmatprep.mubr.f32.mxu0 %v601
    %737 = vmatmul.mubr.f32.gmra.mrb[0].mxu0 %v600
    %v738 = vpop.f32.mrb[0].mxu0
    %v739 = vadd.f32 %v669, %v738
    %v740 = vpop.f32.mrb[0].mxu0
    %741 = vdwg.mxu0
    %v742 = vmul.f32 %v739, 0.001953125
    %744 = vset.pattern.permute.xlu0 0
    %745 = vperm.xlu0 %744, %v742
    %v746 = vpop.permute.xlu0 %745
    %v748 = vsub.f32 %v598, %v746
    %v749 = vsub.f32 %v599, %v746
    %v750 = vsub.f32 %v600, %v746
    %v751 = vsub.f32 %v601, %v746
    %v752 = vmul.f32 %v748, %v748
    %v753 = vmul.f32 %v749, %v749
    %v754 = vmul.f32 %v750, %v750
    %v755 = vmul.f32 %v751, %v751
    %756 = vmatprep.subr.mxu0 0.0
    %757 = vmatpush1.msra.mxu0 1.0
    %758 = vmatprep.subr.mxu0 0.0
    %759 = vmatpush1.msra.mxu0 1.0
    %760 = vmatprep.subr.mxu0 0.0
    %761 = vmatpush1.msra.mxu0 1.0
    %762 = vmatprep.subr.mxu0 0.0
    %763 = vmatpush1.msra.mxu0 1.0
    %764 = vmatprep.subr.mxu0 0.0
    %765 = vmatpush1.msra.mxu0 1.0
    %766 = vmatprep.subr.mxu0 0.0
    %767 = vmatpush1.msra.mxu0 1.0
    %768 = vmatprep.subr.mxu0 0.0
    %769 = vmatpush1.msra.mxu0 1.0
    %770 = vmatprep.subr.mxu0 0.0
    %771 = vmatpush1.msra.mxu0 1.0
    %772 = vmatprep.subr.mxu0 0.0
    %773 = vmatpush1.msra.mxu0 1.0
    %774 = vmatprep.subr.mxu0 0.0
    %775 = vmatpush1.msra.mxu0 1.0
    %776 = vmatprep.subr.mxu0 0.0
    %777 = vmatpush1.msra.mxu0 1.0
    %778 = vmatprep.subr.mxu0 0.0
    %779 = vmatpush1.msra.mxu0 1.0
    %780 = vmatprep.subr.mxu0 0.0
    %781 = vmatpush1.msra.mxu0 1.0
    %782 = vmatprep.subr.mxu0 0.0
    %783 = vmatpush1.msra.mxu0 1.0
    %784 = vmatprep.subr.mxu0 0.0
    %785 = vmatpush1.msra.mxu0 1.0
    %786 = vmatprep.subr.mxu0 0.0
    %787 = vmatpush1.msra.mxu0 1.0
    %788 = vmatprep.subr.mxu0 0.0
    %789 = vmatpush1.msra.mxu0 1.0
    %790 = vmatprep.subr.mxu0 0.0
    %791 = vmatpush1.msra.mxu0 1.0
    %792 = vmatprep.subr.mxu0 0.0
    %793 = vmatpush1.msra.mxu0 1.0
    %794 = vmatprep.subr.mxu0 0.0
    %795 = vmatpush1.msra.mxu0 1.0
    %796 = vmatprep.subr.mxu0 0.0
    %797 = vmatpush1.msra.mxu0 1.0
    %798 = vmatprep.subr.mxu0 0.0
    %799 = vmatpush1.msra.mxu0 1.0
    %800 = vmatprep.subr.mxu0 0.0
    %801 = vmatpush1.msra.mxu0 1.0
    %802 = vmatprep.subr.mxu0 0.0
    %803 = vmatpush1.msra.mxu0 1.0
    %804 = vmatprep.subr.mxu0 0.0
    %805 = vmatpush1.msra.mxu0 1.0
    %806 = vmatprep.subr.mxu0 0.0
    %807 = vmatpush1.msra.mxu0 1.0
    %808 = vmatprep.subr.mxu0 0.0
    %809 = vmatpush1.msra.mxu0 1.0
    %810 = vmatprep.subr.mxu0 0.0
    %811 = vmatpush1.msra.mxu0 1.0
    %812 = vmatprep.subr.mxu0 0.0
    %813 = vmatpush1.msra.mxu0 1.0
    %814 = vmatprep.subr.mxu0 0.0
    %815 = vmatpush1.msra.mxu0 1.0
    %816 = vmatprep.subr.mxu0 0.0
    %817 = vmatpush1.msra.mxu0 1.0
    %818 = vmatprep.subr.mxu0 0.0
    %819 = vmatpush1.msra.mxu0 1.0
    %820 = vmatprep.mubr.f32.mxu0 %v753
    %821 = vmatmul.mubr.f32.gmra.mrb[0].mxu0 %v752
    %v822 = vpop.f32.mrb[0].mxu0
    %v823 = vadd.f32 0.0, %v822
    %v824 = vpop.f32.mrb[0].mxu0
    %825 = vdwg.mxu0
    %826 = vmatprep.subr.mxu0 0.0
    %827 = vmatpush1.msra.mxu0 1.0
    %828 = vmatprep.subr.mxu0 0.0
    %829 = vmatpush1.msra.mxu0 1.0
    %830 = vmatprep.subr.mxu0 0.0
    %831 = vmatpush1.msra.mxu0 1.0
    %832 = vmatprep.subr.mxu0 0.0
    %833 = vmatpush1.msra.mxu0 1.0
    %834 = vmatprep.subr.mxu0 0.0
    %835 = vmatpush1.msra.mxu0 1.0
    %836 = vmatprep.subr.mxu0 0.0
    %837 = vmatpush1.msra.mxu0 1.0
    %838 = vmatprep.subr.mxu0 0.0
    %839 = vmatpush1.msra.mxu0 1.0
    %840 = vmatprep.subr.mxu0 0.0
    %841 = vmatpush1.msra.mxu0 1.0
    %842 = vmatprep.subr.mxu0 0.0
    %843 = vmatpush1.msra.mxu0 1.0
    %844 = vmatprep.subr.mxu0 0.0
    %845 = vmatpush1.msra.mxu0 1.0
    %846 = vmatprep.subr.mxu0 0.0
    %847 = vmatpush1.msra.mxu0 1.0
    %848 = vmatprep.subr.mxu0 0.0
    %849 = vmatpush1.msra.mxu0 1.0
    %850 = vmatprep.subr.mxu0 0.0
    %851 = vmatpush1.msra.mxu0 1.0
    %852 = vmatprep.subr.mxu0 0.0
    %853 = vmatpush1.msra.mxu0 1.0
    %854 = vmatprep.subr.mxu0 0.0
    %855 = vmatpush1.msra.mxu0 1.0
    %856 = vmatprep.subr.mxu0 0.0
    %857 = vmatpush1.msra.mxu0 1.0
    %858 = vmatprep.subr.mxu0 0.0
    %859 = vmatpush1.msra.mxu0 1.0
    %860 = vmatprep.subr.mxu0 0.0
    %861 = vmatpush1.msra.mxu0 1.0
    %862 = vmatprep.subr.mxu0 0.0
    %863 = vmatpush1.msra.mxu0 1.0
    %864 = vmatprep.subr.mxu0 0.0
    %865 = vmatpush1.msra.mxu0 1.0
    %866 = vmatprep.subr.mxu0 0.0
    %867 = vmatpush1.msra.mxu0 1.0
    %868 = vmatprep.subr.mxu0 0.0
    %869 = vmatpush1.msra.mxu0 1.0
    %870 = vmatprep.subr.mxu0 0.0
    %871 = vmatpush1.msra.mxu0 1.0
    %872 = vmatprep.subr.mxu0 0.0
    %873 = vmatpush1.msra.mxu0 1.0
    %874 = vmatprep.subr.mxu0 0.0
    %875 = vmatpush1.msra.mxu0 1.0
    %876 = vmatprep.subr.mxu0 0.0
    %877 = vmatpush1.msra.mxu0 1.0
    %878 = vmatprep.subr.mxu0 0.0
    %879 = vmatpush1.msra.mxu0 1.0
    %880 = vmatprep.subr.mxu0 0.0
    %881 = vmatpush1.msra.mxu0 1.0
    %882 = vmatprep.subr.mxu0 0.0
    %883 = vmatpush1.msra.mxu0 1.0
    %884 = vmatprep.subr.mxu0 0.0
    %885 = vmatpush1.msra.mxu0 1.0
    %886 = vmatprep.subr.mxu0 0.0
    %887 = vmatpush1.msra.mxu0 1.0
    %888 = vmatprep.subr.mxu0 0.0
    %889 = vmatpush1.msra.mxu0 1.0
    %890 = vmatprep.mubr.f32.mxu0 %v755
    %891 = vmatmul.mubr.f32.gmra.mrb[0].mxu0 %v754
    %v892 = vpop.f32.mrb[0].mxu0
    %v893 = vadd.f32 %v823, %v892
    %v894 = vpop.f32.mrb[0].mxu0
    %895 = vdwg.mxu0
    %v896 = vmul.f32 %v893, 0.001953125
    %v897 = vadd.f32 %v896, 1e-05
    %v898 = vrsqrt.pop %v897
    %900 = vrot.lane.b32.xlu0 %v898, 1
    %v901 = vpop.permute.xlu0 %900
    %v903 = vmul.f32 %v173, %v901
    %905 = vset.pattern.permute.xlu0 1
    %906 = vperm.xlu0 %905, %v903
    %v907 = vpop.permute.xlu0 %906
    %v909 = vmul.f32 %v748, %v907
    %v910 = vmul.f32 %v749, %v907
    %v911 = vmul.f32 %v750, %v907
    %v912 = vmul.f32 %v751, %v907
    %913 = vset.pattern.permute.xlu0 2
    %914 = vperm.xlu0 %913, %v173
    %v915 = vpop.permute.xlu0 %914
    %v917 = vadd.f32 %v909, %v915
    %v918 = vadd.f32 %v910, %v915
    %v919 = vadd.f32 %v911, %v915
    %v920 = vadd.f32 %v912, %v915
    %v921 = vmax.f32 %v917, 0.0
    %v922 = vmax.f32 %v918, 0.0
    %v923 = vmax.f32 %v919, 0.0
    %v924 = vmax.f32 %v920, 0.0
    %v925 = vld [vmem:[%s4] sm:$0xff]
    %v926 = vld [vmem:[%s4 + $0x8] sm:$0xff]
    %927 = vrot.lane.b32.xlu0 %v921, 17
    %v928 = vpop.permute.xlu0 %927
    %929 = vrot.lane.b32.xlu0 %v922, 17
    %v930 = vpop.permute.xlu0 %929
    %931 = vrot.lane.b32.xlu0 %v923, 17
    %v932 = vpop.permute.xlu0 %931
    %933 = vrot.lane.b32.xlu0 %v924, 17
    %v934 = vpop.permute.xlu0 %933
    %v935 = vsel %vm203, %v932, %v934
    %v936 = vsel %vm203, %v930, %v932
    %v937 = vsel %vm203, %v928, %v930
    %v938 = vsel %vm203, %v934, %v928
    %v939 = vmul.f32 %v938, %v140
    %v940 = vmul.f32 %v937, %v141
    %v941 = vmul.f32 %v936, %v142
    %v942 = vmul.f32 %v935, %v143
    %v943 = vld [vmem:[#allocation4] sm:$0xff]
    %v944 = vld [vmem:[#allocation4 + $0x8] sm:$0xff]
    %945 = vrot.lane.b32.xlu0 %v921, 16
    %v946 = vpop.permute.xlu0 %945
    %947 = vrot.lane.b32.xlu0 %v922, 16
    %v948 = vpop.permute.xlu0 %947
    %949 = vrot.lane.b32.xlu0 %v923, 16
    %v950 = vpop.permute.xlu0 %949
    %951 = vrot.lane.b32.xlu0 %v924, 16
    %v952 = vpop.permute.xlu0 %951
    %v953 = vsel %vm250, %v950, %v952
    %v954 = vsel %vm250, %v948, %v950
    %v955 = vsel %vm250, %v946, %v948
    %v956 = vsel %vm250, %v952, %v946
    %v957 = vmul.f32 %v956, %v100
    %v958 = vmul.f32 %v955, %v101
    %v959 = vmul.f32 %v954, %v102
    %v960 = vmul.f32 %v953, %v103
    %s961 = scalar_lea.vmem [#allocation4], 16
    %v962 = vld [vmem:[%s961] sm:$0xff]
    %v963 = vld [vmem:[%s961 + $0x8] sm:$0xff]
    %vm964 = vcmask 64512
    %v966 = vsel %vm964, %v962, 0
    %v969 = vsel %vm964, %v963, 0
    %971 = vmatprep.subr.mxu0 %v958
    %972 = vmatpush1.msra.mxu0 %v957
    %973 = vmatprep.subr.mxu0 0.0
    %974 = vmatpush1.msra.mxu0 0.0
    %975 = vmatprep.subr.mxu0 0.0
    %976 = vmatpush1.msra.mxu0 0.0
    %977 = vmatprep.subr.mxu0 0.0
    %978 = vmatpush1.msra.mxu0 0.0
    %979 = vmatprep.subr.mxu0 0.0
    %980 = vmatpush1.msra.mxu0 0.0
    %981 = vmatprep.subr.mxu0 0.0
    %982 = vmatpush1.msra.mxu0 0.0
    %983 = vmatprep.subr.mxu0 0.0
    %984 = vmatpush1.msra.mxu0 0.0
    %985 = vmatprep.subr.mxu0 0.0
    %986 = vmatpush1.msra.mxu0 0.0
    %987 = vmatprep.subr.mxu0 0.0
    %988 = vmatpush1.msra.mxu0 0.0
    %989 = vmatprep.subr.mxu0 0.0
    %990 = vmatpush1.msra.mxu0 0.0
    %991 = vmatprep.subr.mxu0 0.0
    %992 = vmatpush1.msra.mxu0 0.0
    %993 = vmatprep.subr.mxu0 0.0
    %994 = vmatpush1.msra.mxu0 0.0
    %995 = vmatprep.subr.mxu0 0.0
    %996 = vmatpush1.msra.mxu0 0.0
    %997 = vmatprep.subr.mxu0 0.0
    %998 = vmatpush1.msra.mxu0 0.0
    %999 = vmatprep.subr.mxu0 0.0
    %1000 = vmatpush1.msra.mxu0 0.0
    %1001 = vmatprep.subr.mxu0 0.0
    %1002 = vmatpush1.msra.mxu0 0.0
    %1003 = vmatprep.subr.mxu0 0.0
    %1004 = vmatpush1.msra.mxu0 0.0
    %1005 = vmatprep.subr.mxu0 0.0
    %1006 = vmatpush1.msra.mxu0 0.0
    %1007 = vmatprep.subr.mxu0 0.0
    %1008 = vmatpush1.msra.mxu0 0.0
    %1009 = vmatprep.subr.mxu0 0.0
    %1010 = vmatpush1.msra.mxu0 0.0
    %1011 = vmatprep.subr.mxu0 0.0
    %1012 = vmatpush1.msra.mxu0 0.0
    %1013 = vmatprep.subr.mxu0 0.0
    %1014 = vmatpush1.msra.mxu0 0.0
    %1015 = vmatprep.subr.mxu0 0.0
    %1016 = vmatpush1.msra.mxu0 0.0
    %1017 = vmatprep.subr.mxu0 0.0
    %1018 = vmatpush1.msra.mxu0 0.0
    %1019 = vmatprep.subr.mxu0 0.0
    %1020 = vmatpush1.msra.mxu0 0.0
    %1021 = vmatprep.subr.mxu0 0.0
    %1022 = vmatpush1.msra.mxu0 0.0
    %1023 = vmatprep.subr.mxu0 0.0
    %1024 = vmatpush1.msra.mxu0 0.0
    %1025 = vmatprep.subr.mxu0 0.0
    %1026 = vmatpush1.msra.mxu0 0.0
    %1027 = vmatprep.subr.mxu0 0.0
    %1028 = vmatpush1.msra.mxu0 0.0
    %1029 = vmatprep.subr.mxu0 0.0
    %1030 = vmatpush1.msra.mxu0 0.0
    %1031 = vmatprep.subr.mxu0 0.0
    %1032 = vmatpush1.msra.mxu0 0.0
    %1033 = vmatprep.subr.mxu0 0.0
    %1034 = vmatpush1.msra.mxu0 0.0
    %1035 = vmatprep.mubr.f32.mxu0 0.0
    %1036 = vmatmul.mubr.f32.gmra.mrb[0].mxu0 %v966
    %v1037 = vpop.f32.mrb[0].mxu0
    %v1038 = vadd.f32 0.0, %v1037
    %v1039 = vpop.f32.mrb[0].mxu0
    %v1040 = vadd.f32 0.0, %v1039
    %1041 = vmatprep.mubr.f32.mxu0 0.0
    %1042 = vmatmul.mubr.f32.gmra.mrb[0].mxu0 %v969
    %v1043 = vpop.f32.mrb[0].mxu0
    %v1044 = vadd.f32 0.0, %v1043
    %v1045 = vpop.f32.mrb[0].mxu0
    %v1046 = vadd.f32 0.0, %v1045
    %1047 = vdwg.mxu0
    %1048 = vmatprep.subr.mxu0 %v960
    %1049 = vmatpush1.msra.mxu0 %v959
    %1050 = vmatprep.subr.mxu0 0.0
    %1051 = vmatpush1.msra.mxu0 0.0
    %1052 = vmatprep.subr.mxu0 0.0
    %1053 = vmatpush1.msra.mxu0 0.0
    %1054 = vmatprep.subr.mxu0 0.0
    %1055 = vmatpush1.msra.mxu0 0.0
    %1056 = vmatprep.subr.mxu0 0.0
    %1057 = vmatpush1.msra.mxu0 0.0
    %1058 = vmatprep.subr.mxu0 0.0
    %1059 = vmatpush1.msra.mxu0 0.0
    %1060 = vmatprep.subr.mxu0 0.0
    %1061 = vmatpush1.msra.mxu0 0.0
    %1062 = vmatprep.subr.mxu0 0.0
    %1063 = vmatpush1.msra.mxu0 0.0
    %1064 = vmatprep.subr.mxu0 0.0
    %1065 = vmatpush1.msra.mxu0 0.0
    %1066 = vmatprep.subr.mxu0 0.0
    %1067 = vmatpush1.msra.mxu0 0.0
    %1068 = vmatprep.subr.mxu0 0.0
    %1069 = vmatpush1.msra.mxu0 0.0
    %1070 = vmatprep.subr.mxu0 0.0
    %1071 = vmatpush1.msra.mxu0 0.0
    %1072 = vmatprep.subr.mxu0 0.0
    %1073 = vmatpush1.msra.mxu0 0.0
    %1074 = vmatprep.subr.mxu0 0.0
    %1075 = vmatpush1.msra.mxu0 0.0
    %1076 = vmatprep.subr.mxu0 0.0
    %1077 = vmatpush1.msra.mxu0 0.0
    %1078 = vmatprep.subr.mxu0 0.0
    %1079 = vmatpush1.msra.mxu0 0.0
    %1080 = vmatprep.subr.mxu0 0.0
    %1081 = vmatpush1.msra.mxu0 0.0
    %1082 = vmatprep.subr.mxu0 0.0
    %1083 = vmatpush1.msra.mxu0 0.0
    %1084 = vmatprep.subr.mxu0 0.0
    %1085 = vmatpush1.msra.mxu0 0.0
    %1086 = vmatprep.subr.mxu0 0.0
    %1087 = vmatpush1.msra.mxu0 0.0
    %1088 = vmatprep.subr.mxu0 0.0
    %1089 = vmatpush1.msra.mxu0 0.0
    %1090 = vmatprep.subr.mxu0 0.0
    %1091 = vmatpush1.msra.mxu0 0.0
    %1092 = vmatprep.subr.mxu0 0.0
    %1093 = vmatpush1.msra.mxu0 0.0
    %1094 = vmatprep.subr.mxu0 0.0
    %1095 = vmatpush1.msra.mxu0 0.0
    %1096 = vmatprep.subr.mxu0 0.0
    %1097 = vmatpush1.msra.mxu0 0.0
    %1098 = vmatprep.subr.mxu0 0.0
    %1099 = vmatpush1.msra.mxu0 0.0
    %1100 = vmatprep.subr.mxu0 0.0
    %1101 = vmatpush1.msra.mxu0 0.0
    %1102 = vmatprep.subr.mxu0 0.0
    %1103 = vmatpush1.msra.mxu0 0.0
    %1104 = vmatprep.subr.mxu0 0.0
    %1105 = vmatpush1.msra.mxu0 0.0
    %1106 = vmatprep.subr.mxu0 0.0
    %1107 = vmatpush1.msra.mxu0 0.0
    %1108 = vmatprep.subr.mxu0 0.0
    %1109 = vmatpush1.msra.mxu0 0.0
    %1110 = vmatprep.subr.mxu0 0.0
    %1111 = vmatpush1.msra.mxu0 0.0
    %1112 = vmatprep.mubr.f32.mxu0 0.0
    %1113 = vmatmul.mubr.f32.gmra.mrb[0].mxu0 %v966
    %v1114 = vpop.f32.mrb[0].mxu0
    %v1115 = vadd.f32 0.0, %v1114
    %v1116 = vpop.f32.mrb[0].mxu0
    %v1117 = vadd.f32 0.0, %v1116
    %1118 = vmatprep.mubr.f32.mxu0 0.0
    %1119 = vmatmul.mubr.f32.gmra.mrb[0].mxu0 %v969
    %v1120 = vpop.f32.mrb[0].mxu0
    %v1121 = vadd.f32 0.0, %v1120
    %v1122 = vpop.f32.mrb[0].mxu0
    %v1123 = vadd.f32 0.0, %v1122
    %1124 = vdwg.mxu0
    %v1126 = vsel %vm964, %v943, 0
    %v1129 = vsel %vm964, %v944, 0
    %1131 = vmatprep.subr.mxu0 %v940
    %1132 = vmatpush1.msra.mxu0 %v939
    %1133 = vmatprep.subr.mxu0 0.0
    %1134 = vmatpush1.msra.mxu0 0.0
    %1135 = vmatprep.subr.mxu0 0.0
    %1136 = vmatpush1.msra.mxu0 0.0
    %1137 = vmatprep.subr.mxu0 0.0
    %1138 = vmatpush1.msra.mxu0 0.0
    %1139 = vmatprep.subr.mxu0 0.0
    %1140 = vmatpush1.msra.mxu0 0.0
    %1141 = vmatprep.subr.mxu0 0.0
    %1142 = vmatpush1.msra.mxu0 0.0
    %1143 = vmatprep.subr.mxu0 0.0
    %1144 = vmatpush1.msra.mxu0 0.0
    %1145 = vmatprep.subr.mxu0 0.0
    %1146 = vmatpush1.msra.mxu0 0.0
    %1147 = vmatprep.subr.mxu0 0.0
    %1148 = vmatpush1.msra.mxu0 0.0
    %1149 = vmatprep.subr.mxu0 0.0
    %1150 = vmatpush1.msra.mxu0 0.0
    %1151 = vmatprep.subr.mxu0 0.0
    %1152 = vmatpush1.msra.mxu0 0.0
    %1153 = vmatprep.subr.mxu0 0.0
    %1154 = vmatpush1.msra.mxu0 0.0
    %1155 = vmatprep.subr.mxu0 0.0
    %1156 = vmatpush1.msra.mxu0 0.0
    %1157 = vmatprep.subr.mxu0 0.0
    %1158 = vmatpush1.msra.mxu0 0.0
    %1159 = vmatprep.subr.mxu0 0.0
    %1160 = vmatpush1.msra.mxu0 0.0
    %1161 = vmatprep.subr.mxu0 0.0
    %1162 = vmatpush1.msra.mxu0 0.0
    %1163 = vmatprep.subr.mxu0 0.0
    %1164 = vmatpush1.msra.mxu0 0.0
    %1165 = vmatprep.subr.mxu0 0.0
    %1166 = vmatpush1.msra.mxu0 0.0
    %1167 = vmatprep.subr.mxu0 0.0
    %1168 = vmatpush1.msra.mxu0 0.0
    %1169 = vmatprep.subr.mxu0 0.0
    %1170 = vmatpush1.msra.mxu0 0.0
    %1171 = vmatprep.subr.mxu0 0.0
    %1172 = vmatpush1.msra.mxu0 0.0
    %1173 = vmatprep.subr.mxu0 0.0
    %1174 = vmatpush1.msra.mxu0 0.0
    %1175 = vmatprep.subr.mxu0 0.0
    %1176 = vmatpush1.msra.mxu0 0.0
    %1177 = vmatprep.subr.mxu0 0.0
    %1178 = vmatpush1.msra.mxu0 0.0
    %1179 = vmatprep.subr.mxu0 0.0
    %1180 = vmatpush1.msra.mxu0 0.0
    %1181 = vmatprep.subr.mxu0 0.0
    %1182 = vmatpush1.msra.mxu0 0.0
    %1183 = vmatprep.subr.mxu0 0.0
    %1184 = vmatpush1.msra.mxu0 0.0
    %1185 = vmatprep.subr.mxu0 0.0
    %1186 = vmatpush1.msra.mxu0 0.0
    %1187 = vmatprep.subr.mxu0 0.0
    %1188 = vmatpush1.msra.mxu0 0.0
    %1189 = vmatprep.subr.mxu0 0.0
    %1190 = vmatpush1.msra.mxu0 0.0
    %1191 = vmatprep.subr.mxu0 0.0
    %1192 = vmatpush1.msra.mxu0 0.0
    %1193 = vmatprep.subr.mxu0 0.0
    %1194 = vmatpush1.msra.mxu0 0.0
    %1195 = vmatprep.mubr.f32.mxu0 0.0
    %1196 = vmatmul.mubr.f32.gmra.mrb[0].mxu0 %v1126
    %v1197 = vpop.f32.mrb[0].mxu0
    %v1198 = vadd.f32 %v1038, %v1197
    %v1199 = vpop.f32.mrb[0].mxu0
    %v1200 = vadd.f32 %v1040, %v1199
    %1201 = vmatprep.mubr.f32.mxu0 0.0
    %1202 = vmatmul.mubr.f32.gmra.mrb[0].mxu0 %v1129
    %v1203 = vpop.f32.mrb[0].mxu0
    %v1204 = vadd.f32 %v1044, %v1203
    %v1205 = vpop.f32.mrb[0].mxu0
    %v1206 = vadd.f32 %v1046, %v1205
    %1207 = vdwg.mxu0
    %1208 = vmatprep.subr.mxu0 %v942
    %1209 = vmatpush1.msra.mxu0 %v941
    %1210 = vmatprep.subr.mxu0 0.0
    %1211 = vmatpush1.msra.mxu0 0.0
    %1212 = vmatprep.subr.mxu0 0.0
    %1213 = vmatpush1.msra.mxu0 0.0
    %1214 = vmatprep.subr.mxu0 0.0
    %1215 = vmatpush1.msra.mxu0 0.0
    %1216 = vmatprep.subr.mxu0 0.0
    %1217 = vmatpush1.msra.mxu0 0.0
    %1218 = vmatprep.subr.mxu0 0.0
    %1219 = vmatpush1.msra.mxu0 0.0
    %1220 = vmatprep.subr.mxu0 0.0
    %1221 = vmatpush1.msra.mxu0 0.0
    %1222 = vmatprep.subr.mxu0 0.0
    %1223 = vmatpush1.msra.mxu0 0.0
    %1224 = vmatprep.subr.mxu0 0.0
    %1225 = vmatpush1.msra.mxu0 0.0
    %1226 = vmatprep.subr.mxu0 0.0
    %1227 = vmatpush1.msra.mxu0 0.0
    %1228 = vmatprep.subr.mxu0 0.0
    %1229 = vmatpush1.msra.mxu0 0.0
    %1230 = vmatprep.subr.mxu0 0.0
    %1231 = vmatpush1.msra.mxu0 0.0
    %1232 = vmatprep.subr.mxu0 0.0
    %1233 = vmatpush1.msra.mxu0 0.0
    %1234 = vmatprep.subr.mxu0 0.0
    %1235 = vmatpush1.msra.mxu0 0.0
    %1236 = vmatprep.subr.mxu0 0.0
    %1237 = vmatpush1.msra.mxu0 0.0
    %1238 = vmatprep.subr.mxu0 0.0
    %1239 = vmatpush1.msra.mxu0 0.0
    %1240 = vmatprep.subr.mxu0 0.0
    %1241 = vmatpush1.msra.mxu0 0.0
    %1242 = vmatprep.subr.mxu0 0.0
    %1243 = vmatpush1.msra.mxu0 0.0
    %1244 = vmatprep.subr.mxu0 0.0
    %1245 = vmatpush1.msra.mxu0 0.0
    %1246 = vmatprep.subr.mxu0 0.0
    %1247 = vmatpush1.msra.mxu0 0.0
    %1248 = vmatprep.subr.mxu0 0.0
    %1249 = vmatpush1.msra.mxu0 0.0
    %1250 = vmatprep.subr.mxu0 0.0
    %1251 = vmatpush1.msra.mxu0 0.0
    %1252 = vmatprep.subr.mxu0 0.0
    %1253 = vmatpush1.msra.mxu0 0.0
    %1254 = vmatprep.subr.mxu0 0.0
    %1255 = vmatpush1.msra.mxu0 0.0
    %1256 = vmatprep.subr.mxu0 0.0
    %1257 = vmatpush1.msra.mxu0 0.0
    %1258 = vmatprep.subr.mxu0 0.0
    %1259 = vmatpush1.msra.mxu0 0.0
    %1260 = vmatprep.subr.mxu0 0.0
    %1261 = vmatpush1.msra.mxu0 0.0
    %1262 = vmatprep.subr.mxu0 0.0
    %1263 = vmatpush1.msra.mxu0 0.0
    %1264 = vmatprep.subr.mxu0 0.0
    %1265 = vmatpush1.msra.mxu0 0.0
    %1266 = vmatprep.subr.mxu0 0.0
    %1267 = vmatpush1.msra.mxu0 0.0
    %1268 = vmatprep.subr.mxu0 0.0
    %1269 = vmatpush1.msra.mxu0 0.0
    %1270 = vmatprep.subr.mxu0 0.0
    %1271 = vmatpush1.msra.mxu0 0.0
    %1272 = vmatprep.mubr.f32.mxu0 0.0
    %1273 = vmatmul.mubr.f32.gmra.mrb[0].mxu0 %v1126
    %v1274 = vpop.f32.mrb[0].mxu0
    %v1275 = vadd.f32 %v1115, %v1274
    %v1276 = vpop.f32.mrb[0].mxu0
    %v1277 = vadd.f32 %v1117, %v1276
    %1278 = vmatprep.mubr.f32.mxu0 0.0
    %1279 = vmatmul.mubr.f32.gmra.mrb[0].mxu0 %v1129
    %v1280 = vpop.f32.mrb[0].mxu0
    %v1281 = vadd.f32 %v1121, %v1280
    %v1282 = vpop.f32.mrb[0].mxu0
    %v1283 = vadd.f32 %v1123, %v1282
    %1284 = vdwg.mxu0
    %1285 = vrot.lane.b32.xlu0 %v921, 15
    %v1286 = vpop.permute.xlu0 %1285
    %1287 = vrot.lane.b32.xlu0 %v922, 15
    %v1288 = vpop.permute.xlu0 %1287
    %1289 = vrot.lane.b32.xlu0 %v923, 15
    %v1290 = vpop.permute.xlu0 %1289
    %1291 = vrot.lane.b32.xlu0 %v924, 15
    %v1292 = vpop.permute.xlu0 %1291
    %v1293 = vsel %vm298, %v1290, %v1292
    %v1294 = vsel %vm298, %v1288, %v1290
    %v1295 = vsel %vm298, %v1286, %v1288
    %v1296 = vsel %vm298, %v1292, %v1286
    %v1297 = vmul.f32 %v1296, %v144
    %v1298 = vmul.f32 %v1295, %v145
    %v1299 = vmul.f32 %v1294, %v146
    %v1300 = vmul.f32 %v1293, %v147
    %s1301 = scalar_lea.vmem [#allocation4], 32
    %v1302 = vld [vmem:[%s1301] sm:$0xff]
    %v1303 = vld [vmem:[%s1301 + $0x8] sm:$0xff]
    %v1305 = vsel %vm964, %v1302, 0
    %v1308 = vsel %vm964, %v1303, 0
    %1310 = vmatprep.subr.mxu0 %v1298
    %1311 = vmatpush1.msra.mxu0 %v1297
    %1312 = vmatprep.subr.mxu0 0.0
    %1313 = vmatpush1.msra.mxu0 0.0
    %1314 = vmatprep.subr.mxu0 0.0
    %1315 = vmatpush1.msra.mxu0 0.0
    %1316 = vmatprep.subr.mxu0 0.0
    %1317 = vmatpush1.msra.mxu0 0.0
    %1318 = vmatprep.subr.mxu0 0.0
    %1319 = vmatpush1.msra.mxu0 0.0
    %1320 = vmatprep.subr.mxu0 0.0
    %1321 = vmatpush1.msra.mxu0 0.0
    %1322 = vmatprep.subr.mxu0 0.0
    %1323 = vmatpush1.msra.mxu0 0.0
    %1324 = vmatprep.subr.mxu0 0.0
    %1325 = vmatpush1.msra.mxu0 0.0
    %1326 = vmatprep.subr.mxu0 0.0
    %1327 = vmatpush1.msra.mxu0 0.0
    %1328 = vmatprep.subr.mxu0 0.0
    %1329 = vmatpush1.msra.mxu0 0.0
    %1330 = vmatprep.subr.mxu0 0.0
    %1331 = vmatpush1.msra.mxu0 0.0
    %1332 = vmatprep.subr.mxu0 0.0
    %1333 = vmatpush1.msra.mxu0 0.0
    %1334 = vmatprep.subr.mxu0 0.0
    %1335 = vmatpush1.msra.mxu0 0.0
    %1336 = vmatprep.subr.mxu0 0.0
    %1337 = vmatpush1.msra.mxu0 0.0
    %1338 = vmatprep.subr.mxu0 0.0
    %1339 = vmatpush1.msra.mxu0 0.0
    %1340 = vmatprep.subr.mxu0 0.0
    %1341 = vmatpush1.msra.mxu0 0.0
    %1342 = vmatprep.subr.mxu0 0.0
    %1343 = vmatpush1.msra.mxu0 0.0
    %1344 = vmatprep.subr.mxu0 0.0
    %1345 = vmatpush1.msra.mxu0 0.0
    %1346 = vmatprep.subr.mxu0 0.0
    %1347 = vmatpush1.msra.mxu0 0.0
    %1348 = vmatprep.subr.mxu0 0.0
    %1349 = vmatpush1.msra.mxu0 0.0
    %1350 = vmatprep.subr.mxu0 0.0
    %1351 = vmatpush1.msra.mxu0 0.0
    %1352 = vmatprep.subr.mxu0 0.0
    %1353 = vmatpush1.msra.mxu0 0.0
    %1354 = vmatprep.subr.mxu0 0.0
    %1355 = vmatpush1.msra.mxu0 0.0
    %1356 = vmatprep.subr.mxu0 0.0
    %1357 = vmatpush1.msra.mxu0 0.0
    %1358 = vmatprep.subr.mxu0 0.0
    %1359 = vmatpush1.msra.mxu0 0.0
    %1360 = vmatprep.subr.mxu0 0.0
    %1361 = vmatpush1.msra.mxu0 0.0
    %1362 = vmatprep.subr.mxu0 0.0
    %1363 = vmatpush1.msra.mxu0 0.0
    %1364 = vmatprep.subr.mxu0 0.0
    %1365 = vmatpush1.msra.mxu0 0.0
    %1366 = vmatprep.subr.mxu0 0.0
    %1367 = vmatpush1.msra.mxu0 0.0
    %1368 = vmatprep.subr.mxu0 0.0
    %1369 = vmatpush1.msra.mxu0 0.0
    %1370 = vmatprep.subr.mxu0 0.0
    %1371 = vmatpush1.msra.mxu0 0.0
    %1372 = vmatprep.subr.mxu0 0.0
    %1373 = vmatpush1.msra.mxu0 0.0
    %1374 = vmatprep.mubr.f32.mxu0 0.0
    %1375 = vmatmul.mubr.f32.gmra.mrb[0].mxu0 %v1305
    %v1376 = vpop.f32.mrb[0].mxu0
    %v1377 = vadd.f32 0.0, %v1376
    %v1378 = vpop.f32.mrb[0].mxu0
    %v1379 = vadd.f32 0.0, %v1378
    %1380 = vmatprep.mubr.f32.mxu0 0.0
    %1381 = vmatmul.mubr.f32.gmra.mrb[0].mxu0 %v1308
    %v1382 = vpop.f32.mrb[0].mxu0
    %v1383 = vadd.f32 0.0, %v1382
    %v1384 = vpop.f32.mrb[0].mxu0
    %v1385 = vadd.f32 0.0, %v1384
    %1386 = vdwg.mxu0
    %1387 = vmatprep.subr.mxu0 %v1300
    %1388 = vmatpush1.msra.mxu0 %v1299
    %1389 = vmatprep.subr.mxu0 0.0
    %1390 = vmatpush1.msra.mxu0 0.0
    %1391 = vmatprep.subr.mxu0 0.0
    %1392 = vmatpush1.msra.mxu0 0.0
    %1393 = vmatprep.subr.mxu0 0.0
    %1394 = vmatpush1.msra.mxu0 0.0
    %1395 = vmatprep.subr.mxu0 0.0
    %1396 = vmatpush1.msra.mxu0 0.0
    %1397 = vmatprep.subr.mxu0 0.0
    %1398 = vmatpush1.msra.mxu0 0.0
    %1399 = vmatprep.subr.mxu0 0.0
    %1400 = vmatpush1.msra.mxu0 0.0
    %1401 = vmatprep.subr.mxu0 0.0
    %1402 = vmatpush1.msra.mxu0 0.0
    %1403 = vmatprep.subr.mxu0 0.0
    %1404 = vmatpush1.msra.mxu0 0.0
    %1405 = vmatprep.subr.mxu0 0.0
    %1406 = vmatpush1.msra.mxu0 0.0
    %1407 = vmatprep.subr.mxu0 0.0
    %1408 = vmatpush1.msra.mxu0 0.0
    %1409 = vmatprep.subr.mxu0 0.0
    %1410 = vmatpush1.msra.mxu0 0.0
    %1411 = vmatprep.subr.mxu0 0.0
    %1412 = vmatpush1.msra.mxu0 0.0
    %1413 = vmatprep.subr.mxu0 0.0
    %1414 = vmatpush1.msra.mxu0 0.0
    %1415 = vmatprep.subr.mxu0 0.0
    %1416 = vmatpush1.msra.mxu0 0.0
    %1417 = vmatprep.subr.mxu0 0.0
    %1418 = vmatpush1.msra.mxu0 0.0
    %1419 = vmatprep.subr.mxu0 0.0
    %1420 = vmatpush1.msra.mxu0 0.0
    %1421 = vmatprep.subr.mxu0 0.0
    %1422 = vmatpush1.msra.mxu0 0.0
    %1423 = vmatprep.subr.mxu0 0.0
    %1424 = vmatpush1.msra.mxu0 0.0
    %1425 = vmatprep.subr.mxu0 0.0
    %1426 = vmatpush1.msra.mxu0 0.0
    %1427 = vmatprep.subr.mxu0 0.0
    %1428 = vmatpush1.msra.mxu0 0.0
    %1429 = vmatprep.subr.mxu0 0.0
    %1430 = vmatpush1.msra.mxu0 0.0
    %1431 = vmatprep.subr.mxu0 0.0
    %1432 = vmatpush1.msra.mxu0 0.0
    %1433 = vmatprep.subr.mxu0 0.0
    %1434 = vmatpush1.msra.mxu0 0.0
    %1435 = vmatprep.subr.mxu0 0.0
    %1436 = vmatpush1.msra.mxu0 0.0
    %1437 = vmatprep.subr.mxu0 0.0
    %1438 = vmatpush1.msra.mxu0 0.0
    %1439 = vmatprep.subr.mxu0 0.0
    %1440 = vmatpush1.msra.mxu0 0.0
    %1441 = vmatprep.subr.mxu0 0.0
    %1442 = vmatpush1.msra.mxu0 0.0
    %1443 = vmatprep.subr.mxu0 0.0
    %1444 = vmatpush1.msra.mxu0 0.0
    %1445 = vmatprep.subr.mxu0 0.0
    %1446 = vmatpush1.msra.mxu0 0.0
    %1447 = vmatprep.subr.mxu0 0.0
    %1448 = vmatpush1.msra.mxu0 0.0
    %1449 = vmatprep.subr.mxu0 0.0
    %1450 = vmatpush1.msra.mxu0 0.0
    %1451 = vmatprep.mubr.f32.mxu0 0.0
    %1452 = vmatmul.mubr.f32.gmra.mrb[0].mxu0 %v1305
    %v1453 = vpop.f32.mrb[0].mxu0
    %v1454 = vadd.f32 0.0, %v1453
    %v1455 = vpop.f32.mrb[0].mxu0
    %v1456 = vadd.f32 0.0, %v1455
    %1457 = vmatprep.mubr.f32.mxu0 0.0
    %1458 = vmatmul.mubr.f32.gmra.mrb[0].mxu0 %v1308
    %v1459 = vpop.f32.mrb[0].mxu0
    %v1460 = vadd.f32 0.0, %v1459
    %v1461 = vpop.f32.mrb[0].mxu0
    %v1462 = vadd.f32 0.0, %v1461
    %1463 = vdwg.mxu0
    %v1464 = vadd.f32 %v1198, %v1377
    %v1465 = vadd.f32 %v1200, %v1379
    %v1466 = vadd.f32 %v1275, %v1454
    %v1467 = vadd.f32 %v1277, %v1456
    %v1468 = vadd.f32 %v1204, %v1383
    %v1469 = vadd.f32 %v1206, %v1385
    %v1470 = vadd.f32 %v1281, %v1460
    %v1471 = vadd.f32 %v1283, %v1462
    %1472 = vrot.lane.b32.xlu0 %v921, 1
    %v1473 = vpop.permute.xlu0 %1472
    %1474 = vrot.lane.b32.xlu0 %v922, 1
    %v1475 = vpop.permute.xlu0 %1474
    %1476 = vrot.lane.b32.xlu0 %v923, 1
    %v1477 = vpop.permute.xlu0 %1476
    %1478 = vrot.lane.b32.xlu0 %v924, 1
    %v1479 = vpop.permute.xlu0 %1478
    %v1480 = vsel %vm346, %v1477, %v1479
    %v1481 = vsel %vm346, %v1475, %v1477
    %v1482 = vsel %vm346, %v1473, %v1475
    %v1483 = vsel %vm346, %v1479, %v1473
    %v1484 = vmul.f32 %v1483, %v124
    %v1485 = vmul.f32 %v1482, %v125
    %v1486 = vmul.f32 %v1481, %v126
    %v1487 = vmul.f32 %v1480, %v127
    %s1488 = scalar_lea.vmem [#allocation4], 48
    %v1489 = vld [vmem:[%s1488] sm:$0xff]
    %v1490 = vld [vmem:[%s1488 + $0x8] sm:$0xff]
    %v1492 = vsel %vm964, %v1489, 0
    %v1495 = vsel %vm964, %v1490, 0
    %1497 = vmatprep.subr.mxu0 %v1485
    %1498 = vmatpush1.msra.mxu0 %v1484
    %1499 = vmatprep.subr.mxu0 0.0
    %1500 = vmatpush1.msra.mxu0 0.0
    %1501 = vmatprep.subr.mxu0 0.0
    %1502 = vmatpush1.msra.mxu0 0.0
    %1503 = vmatprep.subr.mxu0 0.0
    %1504 = vmatpush1.msra.mxu0 0.0
    %1505 = vmatprep.subr.mxu0 0.0
    %1506 = vmatpush1.msra.mxu0 0.0
    %1507 = vmatprep.subr.mxu0 0.0
    %1508 = vmatpush1.msra.mxu0 0.0
    %1509 = vmatprep.subr.mxu0 0.0
    %1510 = vmatpush1.msra.mxu0 0.0
    %1511 = vmatprep.subr.mxu0 0.0
    %1512 = vmatpush1.msra.mxu0 0.0
    %1513 = vmatprep.subr.mxu0 0.0
    %1514 = vmatpush1.msra.mxu0 0.0
    %1515 = vmatprep.subr.mxu0 0.0
    %1516 = vmatpush1.msra.mxu0 0.0
    %1517 = vmatprep.subr.mxu0 0.0
    %1518 = vmatpush1.msra.mxu0 0.0
    %1519 = vmatprep.subr.mxu0 0.0
    %1520 = vmatpush1.msra.mxu0 0.0
    %1521 = vmatprep.subr.mxu0 0.0
    %1522 = vmatpush1.msra.mxu0 0.0
    %1523 = vmatprep.subr.mxu0 0.0
    %1524 = vmatpush1.msra.mxu0 0.0
    %1525 = vmatprep.subr.mxu0 0.0
    %1526 = vmatpush1.msra.mxu0 0.0
    %1527 = vmatprep.subr.mxu0 0.0
    %1528 = vmatpush1.msra.mxu0 0.0
    %1529 = vmatprep.subr.mxu0 0.0
    %1530 = vmatpush1.msra.mxu0 0.0
    %1531 = vmatprep.subr.mxu0 0.0
    %1532 = vmatpush1.msra.mxu0 0.0
    %1533 = vmatprep.subr.mxu0 0.0
    %1534 = vmatpush1.msra.mxu0 0.0
    %1535 = vmatprep.subr.mxu0 0.0
    %1536 = vmatpush1.msra.mxu0 0.0
    %1537 = vmatprep.subr.mxu0 0.0
    %1538 = vmatpush1.msra.mxu0 0.0
    %1539 = vmatprep.subr.mxu0 0.0
    %1540 = vmatpush1.msra.mxu0 0.0
    %1541 = vmatprep.subr.mxu0 0.0
    %1542 = vmatpush1.msra.mxu0 0.0
    %1543 = vmatprep.subr.mxu0 0.0
    %1544 = vmatpush1.msra.mxu0 0.0
    %1545 = vmatprep.subr.mxu0 0.0
    %1546 = vmatpush1.msra.mxu0 0.0
    %1547 = vmatprep.subr.mxu0 0.0
    %1548 = vmatpush1.msra.mxu0 0.0
    %1549 = vmatprep.subr.mxu0 0.0
    %1550 = vmatpush1.msra.mxu0 0.0
    %1551 = vmatprep.subr.mxu0 0.0
    %1552 = vmatpush1.msra.mxu0 0.0
    %1553 = vmatprep.subr.mxu0 0.0
    %1554 = vmatpush1.msra.mxu0 0.0
    %1555 = vmatprep.subr.mxu0 0.0
    %1556 = vmatpush1.msra.mxu0 0.0
    %1557 = vmatprep.subr.mxu0 0.0
    %1558 = vmatpush1.msra.mxu0 0.0
    %1559 = vmatprep.subr.mxu0 0.0
    %1560 = vmatpush1.msra.mxu0 0.0
    %1561 = vmatprep.mubr.f32.mxu0 0.0
    %1562 = vmatmul.mubr.f32.gmra.mrb[0].mxu0 %v1492
    %v1563 = vpop.f32.mrb[0].mxu0
    %v1564 = vadd.f32 0.0, %v1563
    %v1565 = vpop.f32.mrb[0].mxu0
    %v1566 = vadd.f32 0.0, %v1565
    %1567 = vmatprep.mubr.f32.mxu0 0.0
    %1568 = vmatmul.mubr.f32.gmra.mrb[0].mxu0 %v1495
    %v1569 = vpop.f32.mrb[0].mxu0
    %v1570 = vadd.f32 0.0, %v1569
    %v1571 = vpop.f32.mrb[0].mxu0
    %v1572 = vadd.f32 0.0, %v1571
    %1573 = vdwg.mxu0
    %1574 = vmatprep.subr.mxu0 %v1487
    %1575 = vmatpush1.msra.mxu0 %v1486
    %1576 = vmatprep.subr.mxu0 0.0
    %1577 = vmatpush1.msra.mxu0 0.0
    %1578 = vmatprep.subr.mxu0 0.0
    %1579 = vmatpush1.msra.mxu0 0.0
    %1580 = vmatprep.subr.mxu0 0.0
    %1581 = vmatpush1.msra.mxu0 0.0
    %1582 = vmatprep.subr.mxu0 0.0
    %1583 = vmatpush1.msra.mxu0 0.0
    %1584 = vmatprep.subr.mxu0 0.0
    %1585 = vmatpush1.msra.mxu0 0.0
    %1586 = vmatprep.subr.mxu0 0.0
    %1587 = vmatpush1.msra.mxu0 0.0
    %1588 = vmatprep.subr.mxu0 0.0
    %1589 = vmatpush1.msra.mxu0 0.0
    %1590 = vmatprep.subr.mxu0 0.0
    %1591 = vmatpush1.msra.mxu0 0.0
    %1592 = vmatprep.subr.mxu0 0.0
    %1593 = vmatpush1.msra.mxu0 0.0
    %1594 = vmatprep.subr.mxu0 0.0
    %1595 = vmatpush1.msra.mxu0 0.0
    %1596 = vmatprep.subr.mxu0 0.0
    %1597 = vmatpush1.msra.mxu0 0.0
    %1598 = vmatprep.subr.mxu0 0.0
    %1599 = vmatpush1.msra.mxu0 0.0
    %1600 = vmatprep.subr.mxu0 0.0
    %1601 = vmatpush1.msra.mxu0 0.0
    %1602 = vmatprep.subr.mxu0 0.0
    %1603 = vmatpush1.msra.mxu0 0.0
    %1604 = vmatprep.subr.mxu0 0.0
    %1605 = vmatpush1.msra.mxu0 0.0
    %1606 = vmatprep.subr.mxu0 0.0
    %1607 = vmatpush1.msra.mxu0 0.0
    %1608 = vmatprep.subr.mxu0 0.0
    %1609 = vmatpush1.msra.mxu0 0.0
    %1610 = vmatprep.subr.mxu0 0.0
    %1611 = vmatpush1.msra.mxu0 0.0
    %1612 = vmatprep.subr.mxu0 0.0
    %1613 = vmatpush1.msra.mxu0 0.0
    %1614 = vmatprep.subr.mxu0 0.0
    %1615 = vmatpush1.msra.mxu0 0.0
    %1616 = vmatprep.subr.mxu0 0.0
    %1617 = vmatpush1.msra.mxu0 0.0
    %1618 = vmatprep.subr.mxu0 0.0
    %1619 = vmatpush1.msra.mxu0 0.0
    %1620 = vmatprep.subr.mxu0 0.0
    %1621 = vmatpush1.msra.mxu0 0.0
    %1622 = vmatprep.subr.mxu0 0.0
    %1623 = vmatpush1.msra.mxu0 0.0
    %1624 = vmatprep.subr.mxu0 0.0
    %1625 = vmatpush1.msra.mxu0 0.0
    %1626 = vmatprep.subr.mxu0 0.0
    %1627 = vmatpush1.msra.mxu0 0.0
    %1628 = vmatprep.subr.mxu0 0.0
    %1629 = vmatpush1.msra.mxu0 0.0
    %1630 = vmatprep.subr.mxu0 0.0
    %1631 = vmatpush1.msra.mxu0 0.0
    %1632 = vmatprep.subr.mxu0 0.0
    %1633 = vmatpush1.msra.mxu0 0.0
    %1634 = vmatprep.subr.mxu0 0.0
    %1635 = vmatpush1.msra.mxu0 0.0
    %1636 = vmatprep.subr.mxu0 0.0
    %1637 = vmatpush1.msra.mxu0 0.0
    %1638 = vmatprep.mubr.f32.mxu0 0.0
    %1639 = vmatmul.mubr.f32.gmra.mrb[0].mxu0 %v1492
    %v1640 = vpop.f32.mrb[0].mxu0
    %v1641 = vadd.f32 0.0, %v1640
    %v1642 = vpop.f32.mrb[0].mxu0
    %v1643 = vadd.f32 0.0, %v1642
    %1644 = vmatprep.mubr.f32.mxu0 0.0
    %1645 = vmatmul.mubr.f32.gmra.mrb[0].mxu0 %v1495
    %v1646 = vpop.f32.mrb[0].mxu0
    %v1647 = vadd.f32 0.0, %v1646
    %v1648 = vpop.f32.mrb[0].mxu0
    %v1649 = vadd.f32 0.0, %v1648
    %1650 = vdwg.mxu0
    %v1651 = vadd.f32 %v1464, %v1564
    %v1652 = vadd.f32 %v1465, %v1566
    %v1653 = vadd.f32 %v1466, %v1641
    %v1654 = vadd.f32 %v1467, %v1643
    %v1655 = vadd.f32 %v1468, %v1570
    %v1656 = vadd.f32 %v1469, %v1572
    %v1657 = vadd.f32 %v1470, %v1647
    %v1658 = vadd.f32 %v1471, %v1649
    %s1659 = scalar_lea.vmem [#allocation4], 64
    %v1660 = vld [vmem:[%s1659] sm:$0xff]
    %v1661 = vld [vmem:[%s1659 + $0x8] sm:$0xff]
    %v1663 = vsel %vm964, %v1660, 0
    %v1666 = vsel %vm964, %v1661, 0
    %1668 = vmatprep.subr.mxu0 %v922
    %1669 = vmatpush1.msra.mxu0 %v921
    %1670 = vmatprep.subr.mxu0 0.0
    %1671 = vmatpush1.msra.mxu0 0.0
    %1672 = vmatprep.subr.mxu0 0.0
    %1673 = vmatpush1.msra.mxu0 0.0
    %1674 = vmatprep.subr.mxu0 0.0
    %1675 = vmatpush1.msra.mxu0 0.0
    %1676 = vmatprep.subr.mxu0 0.0
    %1677 = vmatpush1.msra.mxu0 0.0
    %1678 = vmatprep.subr.mxu0 0.0
    %1679 = vmatpush1.msra.mxu0 0.0
    %1680 = vmatprep.subr.mxu0 0.0
    %1681 = vmatpush1.msra.mxu0 0.0
    %1682 = vmatprep.subr.mxu0 0.0
    %1683 = vmatpush1.msra.mxu0 0.0
    %1684 = vmatprep.subr.mxu0 0.0
    %1685 = vmatpush1.msra.mxu0 0.0
    %1686 = vmatprep.subr.mxu0 0.0
    %1687 = vmatpush1.msra.mxu0 0.0
    %1688 = vmatprep.subr.mxu0 0.0
    %1689 = vmatpush1.msra.mxu0 0.0
    %1690 = vmatprep.subr.mxu0 0.0
    %1691 = vmatpush1.msra.mxu0 0.0
    %1692 = vmatprep.subr.mxu0 0.0
    %1693 = vmatpush1.msra.mxu0 0.0
    %1694 = vmatprep.subr.mxu0 0.0
    %1695 = vmatpush1.msra.mxu0 0.0
    %1696 = vmatprep.subr.mxu0 0.0
    %1697 = vmatpush1.msra.mxu0 0.0
    %1698 = vmatprep.subr.mxu0 0.0
    %1699 = vmatpush1.msra.mxu0 0.0
    %1700 = vmatprep.subr.mxu0 0.0
    %1701 = vmatpush1.msra.mxu0 0.0
    %1702 = vmatprep.subr.mxu0 0.0
    %1703 = vmatpush1.msra.mxu0 0.0
    %1704 = vmatprep.subr.mxu0 0.0
    %1705 = vmatpush1.msra.mxu0 0.0
    %1706 = vmatprep.subr.mxu0 0.0
    %1707 = vmatpush1.msra.mxu0 0.0
    %1708 = vmatprep.subr.mxu0 0.0
    %1709 = vmatpush1.msra.mxu0 0.0
    %1710 = vmatprep.subr.mxu0 0.0
    %1711 = vmatpush1.msra.mxu0 0.0
    %1712 = vmatprep.subr.mxu0 0.0
    %1713 = vmatpush1.msra.mxu0 0.0
    %1714 = vmatprep.subr.mxu0 0.0
    %1715 = vmatpush1.msra.mxu0 0.0
    %1716 = vmatprep.subr.mxu0 0.0
    %1717 = vmatpush1.msra.mxu0 0.0
    %1718 = vmatprep.subr.mxu0 0.0
    %1719 = vmatpush1.msra.mxu0 0.0
    %1720 = vmatprep.subr.mxu0 0.0
    %1721 = vmatpush1.msra.mxu0 0.0
    %1722 = vmatprep.subr.mxu0 0.0
    %1723 = vmatpush1.msra.mxu0 0.0
    %1724 = vmatprep.subr.mxu0 0.0
    %1725 = vmatpush1.msra.mxu0 0.0
    %1726 = vmatprep.subr.mxu0 0.0
    %1727 = vmatpush1.msra.mxu0 0.0
    %1728 = vmatprep.subr.mxu0 0.0
    %1729 = vmatpush1.msra.mxu0 0.0
    %1730 = vmatprep.subr.mxu0 0.0
    %1731 = vmatpush1.msra.mxu0 0.0
    %1732 = vmatprep.mubr.f32.mxu0 0.0
    %1733 = vmatmul.mubr.f32.gmra.mrb[0].mxu0 %v1663
    %v1734 = vpop.f32.mrb[0].mxu0
    %v1735 = vadd.f32 0.0, %v1734
    %v1736 = vpop.f32.mrb[0].mxu0
    %v1737 = vadd.f32 0.0, %v1736
    %1738 = vmatprep.mubr.f32.mxu0 0.0
    %1739 = vmatmul.mubr.f32.gmra.mrb[0].mxu0 %v1666
    %v1740 = vpop.f32.mrb[0].mxu0
    %v1741 = vadd.f32 0.0, %v1740
    %v1742 = vpop.f32.mrb[0].mxu0
    %v1743 = vadd.f32 0.0, %v1742
    %1744 = vdwg.mxu0
    %1745 = vmatprep.subr.mxu0 %v924
    %1746 = vmatpush1.msra.mxu0 %v923
    %1747 = vmatprep.subr.mxu0 0.0
    %1748 = vmatpush1.msra.mxu0 0.0
    %1749 = vmatprep.subr.mxu0 0.0
    %1750 = vmatpush1.msra.mxu0 0.0
    %1751 = vmatprep.subr.mxu0 0.0
    %1752 = vmatpush1.msra.mxu0 0.0
    %1753 = vmatprep.subr.mxu0 0.0
    %1754 = vmatpush1.msra.mxu0 0.0
    %1755 = vmatprep.subr.mxu0 0.0
    %1756 = vmatpush1.msra.mxu0 0.0
    %1757 = vmatprep.subr.mxu0 0.0
    %1758 = vmatpush1.msra.mxu0 0.0
    %1759 = vmatprep.subr.mxu0 0.0
    %1760 = vmatpush1.msra.mxu0 0.0
    %1761 = vmatprep.subr.mxu0 0.0
    %1762 = vmatpush1.msra.mxu0 0.0
    %1763 = vmatprep.subr.mxu0 0.0
    %1764 = vmatpush1.msra.mxu0 0.0
    %1765 = vmatprep.subr.mxu0 0.0
    %1766 = vmatpush1.msra.mxu0 0.0
    %1767 = vmatprep.subr.mxu0 0.0
    %1768 = vmatpush1.msra.mxu0 0.0
    %1769 = vmatprep.subr.mxu0 0.0
    %1770 = vmatpush1.msra.mxu0 0.0
    %1771 = vmatprep.subr.mxu0 0.0
    %1772 = vmatpush1.msra.mxu0 0.0
    %1773 = vmatprep.subr.mxu0 0.0
    %1774 = vmatpush1.msra.mxu0 0.0
    %1775 = vmatprep.subr.mxu0 0.0
    %1776 = vmatpush1.msra.mxu0 0.0
    %1777 = vmatprep.subr.mxu0 0.0
    %1778 = vmatpush1.msra.mxu0 0.0
    %1779 = vmatprep.subr.mxu0 0.0
    %1780 = vmatpush1.msra.mxu0 0.0
    %1781 = vmatprep.subr.mxu0 0.0
    %1782 = vmatpush1.msra.mxu0 0.0
    %1783 = vmatprep.subr.mxu0 0.0
    %1784 = vmatpush1.msra.mxu0 0.0
    %1785 = vmatprep.subr.mxu0 0.0
    %1786 = vmatpush1.msra.mxu0 0.0
    %1787 = vmatprep.subr.mxu0 0.0
    %1788 = vmatpush1.msra.mxu0 0.0
    %1789 = vmatprep.subr.mxu0 0.0
    %1790 = vmatpush1.msra.mxu0 0.0
    %1791 = vmatprep.subr.mxu0 0.0
    %1792 = vmatpush1.msra.mxu0 0.0
    %1793 = vmatprep.subr.mxu0 0.0
    %1794 = vmatpush1.msra.mxu0 0.0
    %1795 = vmatprep.subr.mxu0 0.0
    %1796 = vmatpush1.msra.mxu0 0.0
    %1797 = vmatprep.subr.mxu0 0.0
    %1798 = vmatpush1.msra.mxu0 0.0
    %1799 = vmatprep.subr.mxu0 0.0
    %1800 = vmatpush1.msra.mxu0 0.0
    %1801 = vmatprep.subr.mxu0 0.0
    %1802 = vmatpush1.msra.mxu0 0.0
    %1803 = vmatprep.subr.mxu0 0.0
    %1804 = vmatpush1.msra.mxu0 0.0
    %1805 = vmatprep.subr.mxu0 0.0
    %1806 = vmatpush1.msra.mxu0 0.0
    %1807 = vmatprep.subr.mxu0 0.0
    %1808 = vmatpush1.msra.mxu0 0.0
    %1809 = vmatprep.mubr.f32.mxu0 0.0
    %1810 = vmatmul.mubr.f32.gmra.mrb[0].mxu0 %v1663
    %v1811 = vpop.f32.mrb[0].mxu0
    %v1812 = vadd.f32 0.0, %v1811
    %v1813 = vpop.f32.mrb[0].mxu0
    %v1814 = vadd.f32 0.0, %v1813
    %1815 = vmatprep.mubr.f32.mxu0 0.0
    %1816 = vmatmul.mubr.f32.gmra.mrb[0].mxu0 %v1666
    %v1817 = vpop.f32.mrb[0].mxu0
    %v1818 = vadd.f32 0.0, %v1817
    %v1819 = vpop.f32.mrb[0].mxu0
    %v1820 = vadd.f32 0.0, %v1819
    %1821 = vdwg.mxu0
    %v1822 = vadd.f32 %v1651, %v1735
    %v1823 = vadd.f32 %v1652, %v1737
    %v1824 = vadd.f32 %v1653, %v1812
    %v1825 = vadd.f32 %v1654, %v1814
    %v1826 = vadd.f32 %v1655, %v1741
    %v1827 = vadd.f32 %v1656, %v1743
    %v1828 = vadd.f32 %v1657, %v1818
    %v1829 = vadd.f32 %v1658, %v1820
    %1830 = vrot.lane.b32.xlu0 %v921, 127
    %v1831 = vpop.permute.xlu0 %1830
    %1832 = vrot.lane.b32.xlu0 %v922, 127
    %v1833 = vpop.permute.xlu0 %1832
    %1834 = vrot.lane.b32.xlu0 %v923, 127
    %v1835 = vpop.permute.xlu0 %1834
    %1836 = vrot.lane.b32.xlu0 %v924, 127
    %v1837 = vpop.permute.xlu0 %1836
    %v1838 = vsel %vm409, %v1835, %v1837
    %v1839 = vsel %vm409, %v1833, %v1835
    %v1840 = vsel %vm409, %v1831, %v1833
    %v1841 = vsel %vm409, %v1837, %v1831
    %v1842 = vmul.f32 %v1840, %v136
    %v1843 = vmul.f32 %v1839, %v137
    %v1844 = vmul.f32 %v1838, %v138
    %v1845 = vmul.f32 %v1841, %v139
    %s1846 = scalar_lea.vmem [#allocation4], 80
    %v1847 = vld [vmem:[%s1846] sm:$0xff]
    %v1848 = vld [vmem:[%s1846 + $0x8] sm:$0xff]
    %v1850 = vsel %vm964, %v1847, 0
    %v1853 = vsel %vm964, %v1848, 0
    %1855 = vmatprep.subr.mxu0 %v1843
    %1856 = vmatpush1.msra.mxu0 %v1842
    %1857 = vmatprep.subr.mxu0 0.0
    %1858 = vmatpush1.msra.mxu0 0.0
    %1859 = vmatprep.subr.mxu0 0.0
    %1860 = vmatpush1.msra.mxu0 0.0
    %1861 = vmatprep.subr.mxu0 0.0
    %1862 = vmatpush1.msra.mxu0 0.0
    %1863 = vmatprep.subr.mxu0 0.0
    %1864 = vmatpush1.msra.mxu0 0.0
    %1865 = vmatprep.subr.mxu0 0.0
    %1866 = vmatpush1.msra.mxu0 0.0
    %1867 = vmatprep.subr.mxu0 0.0
    %1868 = vmatpush1.msra.mxu0 0.0
    %1869 = vmatprep.subr.mxu0 0.0
    %1870 = vmatpush1.msra.mxu0 0.0
    %1871 = vmatprep.subr.mxu0 0.0
    %1872 = vmatpush1.msra.mxu0 0.0
    %1873 = vmatprep.subr.mxu0 0.0
    %1874 = vmatpush1.msra.mxu0 0.0
    %1875 = vmatprep.subr.mxu0 0.0
    %1876 = vmatpush1.msra.mxu0 0.0
    %1877 = vmatprep.subr.mxu0 0.0
    %1878 = vmatpush1.msra.mxu0 0.0
    %1879 = vmatprep.subr.mxu0 0.0
    %1880 = vmatpush1.msra.mxu0 0.0
    %1881 = vmatprep.subr.mxu0 0.0
    %1882 = vmatpush1.msra.mxu0 0.0
    %1883 = vmatprep.subr.mxu0 0.0
    %1884 = vmatpush1.msra.mxu0 0.0
    %1885 = vmatprep.subr.mxu0 0.0
    %1886 = vmatpush1.msra.mxu0 0.0
    %1887 = vmatprep.subr.mxu0 0.0
    %1888 = vmatpush1.msra.mxu0 0.0
    %1889 = vmatprep.subr.mxu0 0.0
    %1890 = vmatpush1.msra.mxu0 0.0
    %1891 = vmatprep.subr.mxu0 0.0
    %1892 = vmatpush1.msra.mxu0 0.0
    %1893 = vmatprep.subr.mxu0 0.0
    %1894 = vmatpush1.msra.mxu0 0.0
    %1895 = vmatprep.subr.mxu0 0.0
    %1896 = vmatpush1.msra.mxu0 0.0
    %1897 = vmatprep.subr.mxu0 0.0
    %1898 = vmatpush1.msra.mxu0 0.0
    %1899 = vmatprep.subr.mxu0 0.0
    %1900 = vmatpush1.msra.mxu0 0.0
    %1901 = vmatprep.subr.mxu0 0.0
    %1902 = vmatpush1.msra.mxu0 0.0
    %1903 = vmatprep.subr.mxu0 0.0
    %1904 = vmatpush1.msra.mxu0 0.0
    %1905 = vmatprep.subr.mxu0 0.0
    %1906 = vmatpush1.msra.mxu0 0.0
    %1907 = vmatprep.subr.mxu0 0.0
    %1908 = vmatpush1.msra.mxu0 0.0
    %1909 = vmatprep.subr.mxu0 0.0
    %1910 = vmatpush1.msra.mxu0 0.0
    %1911 = vmatprep.subr.mxu0 0.0
    %1912 = vmatpush1.msra.mxu0 0.0
    %1913 = vmatprep.subr.mxu0 0.0
    %1914 = vmatpush1.msra.mxu0 0.0
    %1915 = vmatprep.subr.mxu0 0.0
    %1916 = vmatpush1.msra.mxu0 0.0
    %1917 = vmatprep.subr.mxu0 0.0
    %1918 = vmatpush1.msra.mxu0 0.0
    %1919 = vmatprep.mubr.f32.mxu0 0.0
    %1920 = vmatmul.mubr.f32.gmra.mrb[0].mxu0 %v1850
    %v1921 = vpop.f32.mrb[0].mxu0
    %v1922 = vadd.f32 0.0, %v1921
    %v1923 = vpop.f32.mrb[0].mxu0
    %v1924 = vadd.f32 0.0, %v1923
    %1925 = vmatprep.mubr.f32.mxu0 0.0
    %1926 = vmatmul.mubr.f32.gmra.mrb[0].mxu0 %v1853
    %v1927 = vpop.f32.mrb[0].mxu0
    %v1928 = vadd.f32 0.0, %v1927
    %v1929 = vpop.f32.mrb[0].mxu0
    %v1930 = vadd.f32 0.0, %v1929
    %1931 = vdwg.mxu0
    %1932 = vmatprep.subr.mxu0 %v1845
    %1933 = vmatpush1.msra.mxu0 %v1844
    %1934 = vmatprep.subr.mxu0 0.0
    %1935 = vmatpush1.msra.mxu0 0.0
    %1936 = vmatprep.subr.mxu0 0.0
    %1937 = vmatpush1.msra.mxu0 0.0
    %1938 = vmatprep.subr.mxu0 0.0
    %1939 = vmatpush1.msra.mxu0 0.0
    %1940 = vmatprep.subr.mxu0 0.0
    %1941 = vmatpush1.msra.mxu0 0.0
    %1942 = vmatprep.subr.mxu0 0.0
    %1943 = vmatpush1.msra.mxu0 0.0
    %1944 = vmatprep.subr.mxu0 0.0
    %1945 = vmatpush1.msra.mxu0 0.0
    %1946 = vmatprep.subr.mxu0 0.0
    %1947 = vmatpush1.msra.mxu0 0.0
    %1948 = vmatprep.subr.mxu0 0.0
    %1949 = vmatpush1.msra.mxu0 0.0
    %1950 = vmatprep.subr.mxu0 0.0
    %1951 = vmatpush1.msra.mxu0 0.0
    %1952 = vmatprep.subr.mxu0 0.0
    %1953 = vmatpush1.msra.mxu0 0.0
    %1954 = vmatprep.subr.mxu0 0.0
    %1955 = vmatpush1.msra.mxu0 0.0
    %1956 = vmatprep.subr.mxu0 0.0
    %1957 = vmatpush1.msra.mxu0 0.0
    %1958 = vmatprep.subr.mxu0 0.0
    %1959 = vmatpush1.msra.mxu0 0.0
    %1960 = vmatprep.subr.mxu0 0.0
    %1961 = vmatpush1.msra.mxu0 0.0
    %1962 = vmatprep.subr.mxu0 0.0
    %1963 = vmatpush1.msra.mxu0 0.0
    %1964 = vmatprep.subr.mxu0 0.0
    %1965 = vmatpush1.msra.mxu0 0.0
    %1966 = vmatprep.subr.mxu0 0.0
    %1967 = vmatpush1.msra.mxu0 0.0
    %1968 = vmatprep.subr.mxu0 0.0
    %1969 = vmatpush1.msra.mxu0 0.0
    %1970 = vmatprep.subr.mxu0 0.0
    %1971 = vmatpush1.msra.mxu0 0.0
    %1972 = vmatprep.subr.mxu0 0.0
    %1973 = vmatpush1.msra.mxu0 0.0
    %1974 = vmatprep.subr.mxu0 0.0
    %1975 = vmatpush1.msra.mxu0 0.0
    %1976 = vmatprep.subr.mxu0 0.0
    %1977 = vmatpush1.msra.mxu0 0.0
    %1978 = vmatprep.subr.mxu0 0.0
    %1979 = vmatpush1.msra.mxu0 0.0
    %1980 = vmatprep.subr.mxu0 0.0
    %1981 = vmatpush1.msra.mxu0 0.0
    %1982 = vmatprep.subr.mxu0 0.0
    %1983 = vmatpush1.msra.mxu0 0.0
    %1984 = vmatprep.subr.mxu0 0.0
    %1985 = vmatpush1.msra.mxu0 0.0
    %1986 = vmatprep.subr.mxu0 0.0
    %1987 = vmatpush1.msra.mxu0 0.0
    %1988 = vmatprep.subr.mxu0 0.0
    %1989 = vmatpush1.msra.mxu0 0.0
    %1990 = vmatprep.subr.mxu0 0.0
    %1991 = vmatpush1.msra.mxu0 0.0
    %1992 = vmatprep.subr.mxu0 0.0
    %1993 = vmatpush1.msra.mxu0 0.0
    %1994 = vmatprep.subr.mxu0 0.0
    %1995 = vmatpush1.msra.mxu0 0.0
    %1996 = vmatprep.mubr.f32.mxu0 0.0
    %1997 = vmatmul.mubr.f32.gmra.mrb[0].mxu0 %v1850
    %v1998 = vpop.f32.mrb[0].mxu0
    %v1999 = vadd.f32 0.0, %v1998
    %v2000 = vpop.f32.mrb[0].mxu0
    %v2001 = vadd.f32 0.0, %v2000
    %2002 = vmatprep.mubr.f32.mxu0 0.0
    %2003 = vmatmul.mubr.f32.gmra.mrb[0].mxu0 %v1853
    %v2004 = vpop.f32.mrb[0].mxu0
    %v2005 = vadd.f32 0.0, %v2004
    %v2006 = vpop.f32.mrb[0].mxu0
    %v2007 = vadd.f32 0.0, %v2006
    %2008 = vdwg.mxu0
    %v2009 = vadd.f32 %v1822, %v1922
    %v2010 = vadd.f32 %v1823, %v1924
    %v2011 = vadd.f32 %v1824, %v1999
    %v2012 = vadd.f32 %v1825, %v2001
    %v2013 = vadd.f32 %v1826, %v1928
    %v2014 = vadd.f32 %v1827, %v1930
    %v2015 = vadd.f32 %v1828, %v2005
    %v2016 = vadd.f32 %v1829, %v2007
    %2017 = vrot.lane.b32.xlu0 %v921, 113
    %v2018 = vpop.permute.xlu0 %2017
    %2019 = vrot.lane.b32.xlu0 %v922, 113
    %v2020 = vpop.permute.xlu0 %2019
    %2021 = vrot.lane.b32.xlu0 %v923, 113
    %v2022 = vpop.permute.xlu0 %2021
    %2023 = vrot.lane.b32.xlu0 %v924, 113
    %v2024 = vpop.permute.xlu0 %2023
    %v2025 = vsel %vm457, %v2022, %v2024
    %v2026 = vsel %vm457, %v2020, %v2022
    %v2027 = vsel %vm457, %v2018, %v2020
    %v2028 = vsel %vm457, %v2024, %v2018
    %v2029 = vmul.f32 %v2027, %v148
    %v2030 = vmul.f32 %v2026, %v149
    %v2031 = vmul.f32 %v2025, %v150
    %v2032 = vmul.f32 %v2028, %v151
    %s2033 = scalar_lea.vmem [#allocation4], 96
    %v2034 = vld [vmem:[%s2033] sm:$0xff]
    %v2035 = vld [vmem:[%s2033 + $0x8] sm:$0xff]
    %v2037 = vsel %vm964, %v2034, 0
    %v2040 = vsel %vm964, %v2035, 0
    %2042 = vmatprep.subr.mxu0 %v2030
    %2043 = vmatpush1.msra.mxu0 %v2029
    %2044 = vmatprep.subr.mxu0 0.0
    %2045 = vmatpush1.msra.mxu0 0.0
    %2046 = vmatprep.subr.mxu0 0.0
    %2047 = vmatpush1.msra.mxu0 0.0
    %2048 = vmatprep.subr.mxu0 0.0
    %2049 = vmatpush1.msra.mxu0 0.0
    %2050 = vmatprep.subr.mxu0 0.0
    %2051 = vmatpush1.msra.mxu0 0.0
    %2052 = vmatprep.subr.mxu0 0.0
    %2053 = vmatpush1.msra.mxu0 0.0
    %2054 = vmatprep.subr.mxu0 0.0
    %2055 = vmatpush1.msra.mxu0 0.0
    %2056 = vmatprep.subr.mxu0 0.0
    %2057 = vmatpush1.msra.mxu0 0.0
    %2058 = vmatprep.subr.mxu0 0.0
    %2059 = vmatpush1.msra.mxu0 0.0
    %2060 = vmatprep.subr.mxu0 0.0
    %2061 = vmatpush1.msra.mxu0 0.0
    %2062 = vmatprep.subr.mxu0 0.0
    %2063 = vmatpush1.msra.mxu0 0.0
    %2064 = vmatprep.subr.mxu0 0.0
    %2065 = vmatpush1.msra.mxu0 0.0
    %2066 = vmatprep.subr.mxu0 0.0
    %2067 = vmatpush1.msra.mxu0 0.0
    %2068 = vmatprep.subr.mxu0 0.0
    %2069 = vmatpush1.msra.mxu0 0.0
    %2070 = vmatprep.subr.mxu0 0.0
    %2071 = vmatpush1.msra.mxu0 0.0
    %2072 = vmatprep.subr.mxu0 0.0
    %2073 = vmatpush1.msra.mxu0 0.0
    %2074 = vmatprep.subr.mxu0 0.0
    %2075 = vmatpush1.msra.mxu0 0.0
    %2076 = vmatprep.subr.mxu0 0.0
    %2077 = vmatpush1.msra.mxu0 0.0
    %2078 = vmatprep.subr.mxu0 0.0
    %2079 = vmatpush1.msra.mxu0 0.0
    %2080 = vmatprep.subr.mxu0 0.0
    %2081 = vmatpush1.msra.mxu0 0.0
    %2082 = vmatprep.subr.mxu0 0.0
    %2083 = vmatpush1.msra.mxu0 0.0
    %2084 = vmatprep.subr.mxu0 0.0
    %2085 = vmatpush1.msra.mxu0 0.0
    %2086 = vmatprep.subr.mxu0 0.0
    %2087 = vmatpush1.msra.mxu0 0.0
    %2088 = vmatprep.subr.mxu0 0.0
    %2089 = vmatpush1.msra.mxu0 0.0
    %2090 = vmatprep.subr.mxu0 0.0
    %2091 = vmatpush1.msra.mxu0 0.0
    %2092 = vmatprep.subr.mxu0 0.0
    %2093 = vmatpush1.msra.mxu0 0.0
    %2094 = vmatprep.subr.mxu0 0.0
    %2095 = vmatpush1.msra.mxu0 0.0
    %2096 = vmatprep.subr.mxu0 0.0
    %2097 = vmatpush1.msra.mxu0 0.0
    %2098 = vmatprep.subr.mxu0 0.0
    %2099 = vmatpush1.msra.mxu0 0.0
    %2100 = vmatprep.subr.mxu0 0.0
    %2101 = vmatpush1.msra.mxu0 0.0
    %2102 = vmatprep.subr.mxu0 0.0
    %2103 = vmatpush1.msra.mxu0 0.0
    %2104 = vmatprep.subr.mxu0 0.0
    %2105 = vmatpush1.msra.mxu0 0.0
    %2106 = vmatprep.mubr.f32.mxu0 0.0
    %2107 = vmatmul.mubr.f32.gmra.mrb[0].mxu0 %v2037
    %v2108 = vpop.f32.mrb[0].mxu0
    %v2109 = vadd.f32 0.0, %v2108
    %v2110 = vpop.f32.mrb[0].mxu0
    %v2111 = vadd.f32 0.0, %v2110
    %2112 = vmatprep.mubr.f32.mxu0 0.0
    %2113 = vmatmul.mubr.f32.gmra.mrb[0].mxu0 %v2040
    %v2114 = vpop.f32.mrb[0].mxu0
    %v2115 = vadd.f32 0.0, %v2114
    %v2116 = vpop.f32.mrb[0].mxu0
    %v2117 = vadd.f32 0.0, %v2116
    %2118 = vdwg.mxu0
    %2119 = vmatprep.subr.mxu0 %v2032
    %2120 = vmatpush1.msra.mxu0 %v2031
    %2121 = vmatprep.subr.mxu0 0.0
    %2122 = vmatpush1.msra.mxu0 0.0
    %2123 = vmatprep.subr.mxu0 0.0
    %2124 = vmatpush1.msra.mxu0 0.0
    %2125 = vmatprep.subr.mxu0 0.0
    %2126 = vmatpush1.msra.mxu0 0.0
    %2127 = vmatprep.subr.mxu0 0.0
    %2128 = vmatpush1.msra.mxu0 0.0
    %2129 = vmatprep.subr.mxu0 0.0
    %2130 = vmatpush1.msra.mxu0 0.0
    %2131 = vmatprep.subr.mxu0 0.0
    %2132 = vmatpush1.msra.mxu0 0.0
    %2133 = vmatprep.subr.mxu0 0.0
    %2134 = vmatpush1.msra.mxu0 0.0
    %2135 = vmatprep.subr.mxu0 0.0
    %2136 = vmatpush1.msra.mxu0 0.0
    %2137 = vmatprep.subr.mxu0 0.0
    %2138 = vmatpush1.msra.mxu0 0.0
    %2139 = vmatprep.subr.mxu0 0.0
    %2140 = vmatpush1.msra.mxu0 0.0
    %2141 = vmatprep.subr.mxu0 0.0
    %2142 = vmatpush1.msra.mxu0 0.0
    %2143 = vmatprep.subr.mxu0 0.0
    %2144 = vmatpush1.msra.mxu0 0.0
    %2145 = vmatprep.subr.mxu0 0.0
    %2146 = vmatpush1.msra.mxu0 0.0
    %2147 = vmatprep.subr.mxu0 0.0
    %2148 = vmatpush1.msra.mxu0 0.0
    %2149 = vmatprep.subr.mxu0 0.0
    %2150 = vmatpush1.msra.mxu0 0.0
    %2151 = vmatprep.subr.mxu0 0.0
    %2152 = vmatpush1.msra.mxu0 0.0
    %2153 = vmatprep.subr.mxu0 0.0
    %2154 = vmatpush1.msra.mxu0 0.0
    %2155 = vmatprep.subr.mxu0 0.0
    %2156 = vmatpush1.msra.mxu0 0.0
    %2157 = vmatprep.subr.mxu0 0.0
    %2158 = vmatpush1.msra.mxu0 0.0
    %2159 = vmatprep.subr.mxu0 0.0
    %2160 = vmatpush1.msra.mxu0 0.0
    %2161 = vmatprep.subr.mxu0 0.0
    %2162 = vmatpush1.msra.mxu0 0.0
    %2163 = vmatprep.subr.mxu0 0.0
    %2164 = vmatpush1.msra.mxu0 0.0
    %2165 = vmatprep.subr.mxu0 0.0
    %2166 = vmatpush1.msra.mxu0 0.0
    %2167 = vmatprep.subr.mxu0 0.0
    %2168 = vmatpush1.msra.mxu0 0.0
    %2169 = vmatprep.subr.mxu0 0.0
    %2170 = vmatpush1.msra.mxu0 0.0
    %2171 = vmatprep.subr.mxu0 0.0
    %2172 = vmatpush1.msra.mxu0 0.0
    %2173 = vmatprep.subr.mxu0 0.0
    %2174 = vmatpush1.msra.mxu0 0.0
    %2175 = vmatprep.subr.mxu0 0.0
    %2176 = vmatpush1.msra.mxu0 0.0
    %2177 = vmatprep.subr.mxu0 0.0
    %2178 = vmatpush1.msra.mxu0 0.0
    %2179 = vmatprep.subr.mxu0 0.0
    %2180 = vmatpush1.msra.mxu0 0.0
    %2181 = vmatprep.subr.mxu0 0.0
    %2182 = vmatpush1.msra.mxu0 0.0
    %2183 = vmatprep.mubr.f32.mxu0 0.0
    %2184 = vmatmul.mubr.f32.gmra.mrb[0].mxu0 %v2037
    %v2185 = vpop.f32.mrb[0].mxu0
    %v2186 = vadd.f32 0.0, %v2185
    %v2187 = vpop.f32.mrb[0].mxu0
    %v2188 = vadd.f32 0.0, %v2187
    %2189 = vmatprep.mubr.f32.mxu0 0.0
    %2190 = vmatmul.mubr.f32.gmra.mrb[0].mxu0 %v2040
    %v2191 = vpop.f32.mrb[0].mxu0
    %v2192 = vadd.f32 0.0, %v2191
    %v2193 = vpop.f32.mrb[0].mxu0
    %v2194 = vadd.f32 0.0, %v2193
    %2195 = vdwg.mxu0
    %v2196 = vadd.f32 %v2009, %v2109
    %v2197 = vadd.f32 %v2010, %v2111
    %v2198 = vadd.f32 %v2011, %v2186
    %v2199 = vadd.f32 %v2012, %v2188
    %v2200 = vadd.f32 %v2013, %v2115
    %v2201 = vadd.f32 %v2014, %v2117
    %v2202 = vadd.f32 %v2015, %v2192
    %v2203 = vadd.f32 %v2016, %v2194
    %2204 = vrot.lane.b32.xlu0 %v921, 112
    %v2205 = vpop.permute.xlu0 %2204
    %2206 = vrot.lane.b32.xlu0 %v922, 112
    %v2207 = vpop.permute.xlu0 %2206
    %2208 = vrot.lane.b32.xlu0 %v923, 112
    %v2209 = vpop.permute.xlu0 %2208
    %2210 = vrot.lane.b32.xlu0 %v924, 112
    %v2211 = vpop.permute.xlu0 %2210
    %v2212 = vsel %vm505, %v2209, %v2211
    %v2213 = vsel %vm505, %v2207, %v2209
    %v2214 = vsel %vm505, %v2205, %v2207
    %v2215 = vsel %vm505, %v2211, %v2205
    %v2216 = vmul.f32 %v2214, %v112
    %v2217 = vmul.f32 %v2213, %v113
    %v2218 = vmul.f32 %v2212, %v114
    %v2219 = vmul.f32 %v2215, %v115
    %s2220 = scalar_lea.vmem [#allocation4], 112
    %v2221 = vld [vmem:[%s2220] sm:$0xff]
    %v2222 = vld [vmem:[%s2220 + $0x8] sm:$0xff]
    %v2224 = vsel %vm964, %v2221, 0
    %v2227 = vsel %vm964, %v2222, 0
    %2229 = vmatprep.subr.mxu0 %v2217
    %2230 = vmatpush1.msra.mxu0 %v2216
    %2231 = vmatprep.subr.mxu0 0.0
    %2232 = vmatpush1.msra.mxu0 0.0
    %2233 = vmatprep.subr.mxu0 0.0
    %2234 = vmatpush1.msra.mxu0 0.0
    %2235 = vmatprep.subr.mxu0 0.0
    %2236 = vmatpush1.msra.mxu0 0.0
    %2237 = vmatprep.subr.mxu0 0.0
    %2238 = vmatpush1.msra.mxu0 0.0
    %2239 = vmatprep.subr.mxu0 0.0
    %2240 = vmatpush1.msra.mxu0 0.0
    %2241 = vmatprep.subr.mxu0 0.0
    %2242 = vmatpush1.msra.mxu0 0.0
    %2243 = vmatprep.subr.mxu0 0.0
    %2244 = vmatpush1.msra.mxu0 0.0
    %2245 = vmatprep.subr.mxu0 0.0
    %2246 = vmatpush1.msra.mxu0 0.0
    %2247 = vmatprep.subr.mxu0 0.0
    %2248 = vmatpush1.msra.mxu0 0.0
    %2249 = vmatprep.subr.mxu0 0.0
    %2250 = vmatpush1.msra.mxu0 0.0
    %2251 = vmatprep.subr.mxu0 0.0
    %2252 = vmatpush1.msra.mxu0 0.0
    %2253 = vmatprep.subr.mxu0 0.0
    %2254 = vmatpush1.msra.mxu0 0.0
    %2255 = vmatprep.subr.mxu0 0.0
    %2256 = vmatpush1.msra.mxu0 0.0
    %2257 = vmatprep.subr.mxu0 0.0
    %2258 = vmatpush1.msra.mxu0 0.0
    %2259 = vmatprep.subr.mxu0 0.0
    %2260 = vmatpush1.msra.mxu0 0.0
    %2261 = vmatprep.subr.mxu0 0.0
    %2262 = vmatpush1.msra.mxu0 0.0
    %2263 = vmatprep.subr.mxu0 0.0
    %2264 = vmatpush1.msra.mxu0 0.0
    %2265 = vmatprep.subr.mxu0 0.0
    %2266 = vmatpush1.msra.mxu0 0.0
    %2267 = vmatprep.subr.mxu0 0.0
    %2268 = vmatpush1.msra.mxu0 0.0
    %2269 = vmatprep.subr.mxu0 0.0
    %2270 = vmatpush1.msra.mxu0 0.0
    %2271 = vmatprep.subr.mxu0 0.0
    %2272 = vmatpush1.msra.mxu0 0.0
    %2273 = vmatprep.subr.mxu0 0.0
    %2274 = vmatpush1.msra.mxu0 0.0
    %2275 = vmatprep.subr.mxu0 0.0
    %2276 = vmatpush1.msra.mxu0 0.0
    %2277 = vmatprep.subr.mxu0 0.0
    %2278 = vmatpush1.msra.mxu0 0.0
    %2279 = vmatprep.subr.mxu0 0.0
    %2280 = vmatpush1.msra.mxu0 0.0
    %2281 = vmatprep.subr.mxu0 0.0
    %2282 = vmatpush1.msra.mxu0 0.0
    %2283 = vmatprep.subr.mxu0 0.0
    %2284 = vmatpush1.msra.mxu0 0.0
    %2285 = vmatprep.subr.mxu0 0.0
    %2286 = vmatpush1.msra.mxu0 0.0
    %2287 = vmatprep.subr.mxu0 0.0
    %2288 = vmatpush1.msra.mxu0 0.0
    %2289 = vmatprep.subr.mxu0 0.0
    %2290 = vmatpush1.msra.mxu0 0.0
    %2291 = vmatprep.subr.mxu0 0.0
    %2292 = vmatpush1.msra.mxu0 0.0
    %2293 = vmatprep.mubr.f32.mxu0 0.0
    %2294 = vmatmul.mubr.f32.gmra.mrb[0].mxu0 %v2224
    %v2295 = vpop.f32.mrb[0].mxu0
    %v2296 = vadd.f32 0.0, %v2295
    %v2297 = vpop.f32.mrb[0].mxu0
    %v2298 = vadd.f32 0.0, %v2297
    %2299 = vmatprep.mubr.f32.mxu0 0.0
    %2300 = vmatmul.mubr.f32.gmra.mrb[0].mxu0 %v2227
    %v2301 = vpop.f32.mrb[0].mxu0
    %v2302 = vadd.f32 0.0, %v2301
    %v2303 = vpop.f32.mrb[0].mxu0
    %v2304 = vadd.f32 0.0, %v2303
    %2305 = vdwg.mxu0
    %2306 = vmatprep.subr.mxu0 %v2219
    %2307 = vmatpush1.msra.mxu0 %v2218
    %2308 = vmatprep.subr.mxu0 0.0
    %2309 = vmatpush1.msra.mxu0 0.0
    %2310 = vmatprep.subr.mxu0 0.0
    %2311 = vmatpush1.msra.mxu0 0.0
    %2312 = vmatprep.subr.mxu0 0.0
    %2313 = vmatpush1.msra.mxu0 0.0
    %2314 = vmatprep.subr.mxu0 0.0
    %2315 = vmatpush1.msra.mxu0 0.0
    %2316 = vmatprep.subr.mxu0 0.0
    %2317 = vmatpush1.msra.mxu0 0.0
    %2318 = vmatprep.subr.mxu0 0.0
    %2319 = vmatpush1.msra.mxu0 0.0
    %2320 = vmatprep.subr.mxu0 0.0
    %2321 = vmatpush1.msra.mxu0 0.0
    %2322 = vmatprep.subr.mxu0 0.0
    %2323 = vmatpush1.msra.mxu0 0.0
    %2324 = vmatprep.subr.mxu0 0.0
    %2325 = vmatpush1.msra.mxu0 0.0
    %2326 = vmatprep.subr.mxu0 0.0
    %2327 = vmatpush1.msra.mxu0 0.0
    %2328 = vmatprep.subr.mxu0 0.0
    %2329 = vmatpush1.msra.mxu0 0.0
    %2330 = vmatprep.subr.mxu0 0.0
    %2331 = vmatpush1.msra.mxu0 0.0
    %2332 = vmatprep.subr.mxu0 0.0
    %2333 = vmatpush1.msra.mxu0 0.0
    %2334 = vmatprep.subr.mxu0 0.0
    %2335 = vmatpush1.msra.mxu0 0.0
    %2336 = vmatprep.subr.mxu0 0.0
    %2337 = vmatpush1.msra.mxu0 0.0
    %2338 = vmatprep.subr.mxu0 0.0
    %2339 = vmatpush1.msra.mxu0 0.0
    %2340 = vmatprep.subr.mxu0 0.0
    %2341 = vmatpush1.msra.mxu0 0.0
    %2342 = vmatprep.subr.mxu0 0.0
    %2343 = vmatpush1.msra.mxu0 0.0
    %2344 = vmatprep.subr.mxu0 0.0
    %2345 = vmatpush1.msra.mxu0 0.0
    %2346 = vmatprep.subr.mxu0 0.0
    %2347 = vmatpush1.msra.mxu0 0.0
    %2348 = vmatprep.subr.mxu0 0.0
    %2349 = vmatpush1.msra.mxu0 0.0
    %2350 = vmatprep.subr.mxu0 0.0
    %2351 = vmatpush1.msra.mxu0 0.0
    %2352 = vmatprep.subr.mxu0 0.0
    %2353 = vmatpush1.msra.mxu0 0.0
    %2354 = vmatprep.subr.mxu0 0.0
    %2355 = vmatpush1.msra.mxu0 0.0
    %2356 = vmatprep.subr.mxu0 0.0
    %2357 = vmatpush1.msra.mxu0 0.0
    %2358 = vmatprep.subr.mxu0 0.0
    %2359 = vmatpush1.msra.mxu0 0.0
    %2360 = vmatprep.subr.mxu0 0.0
    %2361 = vmatpush1.msra.mxu0 0.0
    %2362 = vmatprep.subr.mxu0 0.0
    %2363 = vmatpush1.msra.mxu0 0.0
    %2364 = vmatprep.subr.mxu0 0.0
    %2365 = vmatpush1.msra.mxu0 0.0
    %2366 = vmatprep.subr.mxu0 0.0
    %2367 = vmatpush1.msra.mxu0 0.0
    %2368 = vmatprep.subr.mxu0 0.0
    %2369 = vmatpush1.msra.mxu0 0.0
    %2370 = vmatprep.mubr.f32.mxu0 0.0
    %2371 = vmatmul.mubr.f32.gmra.mrb[0].mxu0 %v2224
    %v2372 = vpop.f32.mrb[0].mxu0
    %v2373 = vadd.f32 0.0, %v2372
    %v2374 = vpop.f32.mrb[0].mxu0
    %v2375 = vadd.f32 0.0, %v2374
    %2376 = vmatprep.mubr.f32.mxu0 0.0
    %2377 = vmatmul.mubr.f32.gmra.mrb[0].mxu0 %v2227
    %v2378 = vpop.f32.mrb[0].mxu0
    %v2379 = vadd.f32 0.0, %v2378
    %v2380 = vpop.f32.mrb[0].mxu0
    %v2381 = vadd.f32 0.0, %v2380
    %2382 = vdwg.mxu0
    %v2383 = vadd.f32 %v2196, %v2296
    %v2384 = vadd.f32 %v2197, %v2298
    %v2385 = vadd.f32 %v2198, %v2373
    %v2386 = vadd.f32 %v2199, %v2375
    %v2387 = vadd.f32 %v2200, %v2302
    %v2388 = vadd.f32 %v2201, %v2304
    %v2389 = vadd.f32 %v2202, %v2379
    %v2390 = vadd.f32 %v2203, %v2381
    %2391 = vrot.lane.b32.xlu0 %v921, 111
    %v2392 = vpop.permute.xlu0 %2391
    %2393 = vrot.lane.b32.xlu0 %v922, 111
    %v2394 = vpop.permute.xlu0 %2393
    %2395 = vrot.lane.b32.xlu0 %v923, 111
    %v2396 = vpop.permute.xlu0 %2395
    %2397 = vrot.lane.b32.xlu0 %v924, 111
    %v2398 = vpop.permute.xlu0 %2397
    %v2399 = vsel %vm553, %v2396, %v2398
    %v2400 = vsel %vm553, %v2394, %v2396
    %v2401 = vsel %vm553, %v2392, %v2394
    %v2402 = vsel %vm553, %v2398, %v2392
    %v2403 = vmul.f32 %v2401, %v152
    %v2404 = vmul.f32 %v2400, %v153
    %v2405 = vmul.f32 %v2399, %v154
    %v2406 = vmul.f32 %v2402, %v155
    %s2407 = scalar_lea.vmem [#allocation4], 128
    %v2408 = vld [vmem:[%s2407] sm:$0xff]
    %v2409 = vld [vmem:[%s2407 + $0x8] sm:$0xff]
    %v2411 = vsel %vm964, %v2408, 0
    %v2414 = vsel %vm964, %v2409, 0
    %2416 = vmatprep.subr.mxu0 %v2404
    %2417 = vmatpush1.msra.mxu0 %v2403
    %2418 = vmatprep.subr.mxu0 0.0
    %2419 = vmatpush1.msra.mxu0 0.0
    %2420 = vmatprep.subr.mxu0 0.0
    %2421 = vmatpush1.msra.mxu0 0.0
    %2422 = vmatprep.subr.mxu0 0.0
    %2423 = vmatpush1.msra.mxu0 0.0
    %2424 = vmatprep.subr.mxu0 0.0
    %2425 = vmatpush1.msra.mxu0 0.0
    %2426 = vmatprep.subr.mxu0 0.0
    %2427 = vmatpush1.msra.mxu0 0.0
    %2428 = vmatprep.subr.mxu0 0.0
    %2429 = vmatpush1.msra.mxu0 0.0
    %2430 = vmatprep.subr.mxu0 0.0
    %2431 = vmatpush1.msra.mxu0 0.0
    %2432 = vmatprep.subr.mxu0 0.0
    %2433 = vmatpush1.msra.mxu0 0.0
    %2434 = vmatprep.subr.mxu0 0.0
    %2435 = vmatpush1.msra.mxu0 0.0
    %2436 = vmatprep.subr.mxu0 0.0
    %2437 = vmatpush1.msra.mxu0 0.0
    %2438 = vmatprep.subr.mxu0 0.0
    %2439 = vmatpush1.msra.mxu0 0.0
    %2440 = vmatprep.subr.mxu0 0.0
    %2441 = vmatpush1.msra.mxu0 0.0
    %2442 = vmatprep.subr.mxu0 0.0
    %2443 = vmatpush1.msra.mxu0 0.0
    %2444 = vmatprep.subr.mxu0 0.0
    %2445 = vmatpush1.msra.mxu0 0.0
    %2446 = vmatprep.subr.mxu0 0.0
    %2447 = vmatpush1.msra.mxu0 0.0
    %2448 = vmatprep.subr.mxu0 0.0
    %2449 = vmatpush1.msra.mxu0 0.0
    %2450 = vmatprep.subr.mxu0 0.0
    %2451 = vmatpush1.msra.mxu0 0.0
    %2452 = vmatprep.subr.mxu0 0.0
    %2453 = vmatpush1.msra.mxu0 0.0
    %2454 = vmatprep.subr.mxu0 0.0
    %2455 = vmatpush1.msra.mxu0 0.0
    %2456 = vmatprep.subr.mxu0 0.0
    %2457 = vmatpush1.msra.mxu0 0.0
    %2458 = vmatprep.subr.mxu0 0.0
    %2459 = vmatpush1.msra.mxu0 0.0
    %2460 = vmatprep.subr.mxu0 0.0
    %2461 = vmatpush1.msra.mxu0 0.0
    %2462 = vmatprep.subr.mxu0 0.0
    %2463 = vmatpush1.msra.mxu0 0.0
    %2464 = vmatprep.subr.mxu0 0.0
    %2465 = vmatpush1.msra.mxu0 0.0
    %2466 = vmatprep.subr.mxu0 0.0
    %2467 = vmatpush1.msra.mxu0 0.0
    %2468 = vmatprep.subr.mxu0 0.0
    %2469 = vmatpush1.msra.mxu0 0.0
    %2470 = vmatprep.subr.mxu0 0.0
    %2471 = vmatpush1.msra.mxu0 0.0
    %2472 = vmatprep.subr.mxu0 0.0
    %2473 = vmatpush1.msra.mxu0 0.0
    %2474 = vmatprep.subr.mxu0 0.0
    %2475 = vmatpush1.msra.mxu0 0.0
    %2476 = vmatprep.subr.mxu0 0.0
    %2477 = vmatpush1.msra.mxu0 0.0
    %2478 = vmatprep.subr.mxu0 0.0
    %2479 = vmatpush1.msra.mxu0 0.0
    %2480 = vmatprep.mubr.f32.mxu0 0.0
    %2481 = vmatmul.mubr.f32.gmra.mrb[0].mxu0 %v2411
    %v2482 = vpop.f32.mrb[0].mxu0
    %v2483 = vadd.f32 0.0, %v2482
    %v2484 = vpop.f32.mrb[0].mxu0
    %v2485 = vadd.f32 0.0, %v2484
    %2486 = vmatprep.mubr.f32.mxu0 0.0
    %2487 = vmatmul.mubr.f32.gmra.mrb[0].mxu0 %v2414
    %v2488 = vpop.f32.mrb[0].mxu0
    %v2489 = vadd.f32 0.0, %v2488
    %v2490 = vpop.f32.mrb[0].mxu0
    %v2491 = vadd.f32 0.0, %v2490
    %2492 = vdwg.mxu0
    %2493 = vmatprep.subr.mxu0 %v2406
    %2494 = vmatpush1.msra.mxu0 %v2405
    %2495 = vmatprep.subr.mxu0 0.0
    %2496 = vmatpush1.msra.mxu0 0.0
    %2497 = vmatprep.subr.mxu0 0.0
    %2498 = vmatpush1.msra.mxu0 0.0
    %2499 = vmatprep.subr.mxu0 0.0
    %2500 = vmatpush1.msra.mxu0 0.0
    %2501 = vmatprep.subr.mxu0 0.0
    %2502 = vmatpush1.msra.mxu0 0.0
    %2503 = vmatprep.subr.mxu0 0.0
    %2504 = vmatpush1.msra.mxu0 0.0
    %2505 = vmatprep.subr.mxu0 0.0
    %2506 = vmatpush1.msra.mxu0 0.0
    %2507 = vmatprep.subr.mxu0 0.0
    %2508 = vmatpush1.msra.mxu0 0.0
    %2509 = vmatprep.subr.mxu0 0.0
    %2510 = vmatpush1.msra.mxu0 0.0
    %2511 = vmatprep.subr.mxu0 0.0
    %2512 = vmatpush1.msra.mxu0 0.0
    %2513 = vmatprep.subr.mxu0 0.0
    %2514 = vmatpush1.msra.mxu0 0.0
    %2515 = vmatprep.subr.mxu0 0.0
    %2516 = vmatpush1.msra.mxu0 0.0
    %2517 = vmatprep.subr.mxu0 0.0
    %2518 = vmatpush1.msra.mxu0 0.0
    %2519 = vmatprep.subr.mxu0 0.0
    %2520 = vmatpush1.msra.mxu0 0.0
    %2521 = vmatprep.subr.mxu0 0.0
    %2522 = vmatpush1.msra.mxu0 0.0
    %2523 = vmatprep.subr.mxu0 0.0
    %2524 = vmatpush1.msra.mxu0 0.0
    %2525 = vmatprep.subr.mxu0 0.0
    %2526 = vmatpush1.msra.mxu0 0.0
    %2527 = vmatprep.subr.mxu0 0.0
    %2528 = vmatpush1.msra.mxu0 0.0
    %2529 = vmatprep.subr.mxu0 0.0
    %2530 = vmatpush1.msra.mxu0 0.0
    %2531 = vmatprep.subr.mxu0 0.0
    %2532 = vmatpush1.msra.mxu0 0.0
    %2533 = vmatprep.subr.mxu0 0.0
    %2534 = vmatpush1.msra.mxu0 0.0
    %2535 = vmatprep.subr.mxu0 0.0
    %2536 = vmatpush1.msra.mxu0 0.0
    %2537 = vmatprep.subr.mxu0 0.0
    %2538 = vmatpush1.msra.mxu0 0.0
    %2539 = vmatprep.subr.mxu0 0.0
    %2540 = vmatpush1.msra.mxu0 0.0
    %2541 = vmatprep.subr.mxu0 0.0
    %2542 = vmatpush1.msra.mxu0 0.0
    %2543 = vmatprep.subr.mxu0 0.0
    %2544 = vmatpush1.msra.mxu0 0.0
    %2545 = vmatprep.subr.mxu0 0.0
    %2546 = vmatpush1.msra.mxu0 0.0
    %2547 = vmatprep.subr.mxu0 0.0
    %2548 = vmatpush1.msra.mxu0 0.0
    %2549 = vmatprep.subr.mxu0 0.0
    %2550 = vmatpush1.msra.mxu0 0.0
    %2551 = vmatprep.subr.mxu0 0.0
    %2552 = vmatpush1.msra.mxu0 0.0
    %2553 = vmatprep.subr.mxu0 0.0
    %2554 = vmatpush1.msra.mxu0 0.0
    %2555 = vmatprep.subr.mxu0 0.0
    %2556 = vmatpush1.msra.mxu0 0.0
    %2557 = vmatprep.mubr.f32.mxu0 0.0
    %2558 = vmatmul.mubr.f32.gmra.mrb[0].mxu0 %v2411
    %v2559 = vpop.f32.mrb[0].mxu0
    %v2560 = vadd.f32 0.0, %v2559
    %v2561 = vpop.f32.mrb[0].mxu0
    %v2562 = vadd.f32 0.0, %v2561
    %2563 = vmatprep.mubr.f32.mxu0 0.0
    %2564 = vmatmul.mubr.f32.gmra.mrb[0].mxu0 %v2414
    %v2565 = vpop.f32.mrb[0].mxu0
    %v2566 = vadd.f32 0.0, %v2565
    %v2567 = vpop.f32.mrb[0].mxu0
    %v2568 = vadd.f32 0.0, %v2567
    %2569 = vdwg.mxu0
    %v2570 = vadd.f32 %v2383, %v2483
    %v2571 = vadd.f32 %v2384, %v2485
    %v2572 = vadd.f32 %v2385, %v2560
    %v2573 = vadd.f32 %v2386, %v2562
    %v2574 = vadd.f32 %v2387, %v2489
    %v2575 = vadd.f32 %v2388, %v2491
    %v2576 = vadd.f32 %v2389, %v2566
    %v2577 = vadd.f32 %v2390, %v2568
    %2579 = vset.pattern.permute.xlu0 0
    %2580 = vperm.xlu0 %2579, %v925
    %v2581 = vpop.permute.xlu0 %2580
    %2584 = vset.pattern.permute.xlu0 0
    %2585 = vperm.xlu0 %2584, %v926
    %v2586 = vpop.permute.xlu0 %2585
    %v2588 = vadd.f32 %v2570, %v2581
    %v2589 = vadd.f32 %v2571, %v2581
    %v2590 = vadd.f32 %v2572, %v2581
    %v2591 = vadd.f32 %v2573, %v2581
    %v2592 = vadd.f32 %v2574, %v2586
    %v2593 = vadd.f32 %v2575, %v2586
    %v2594 = vadd.f32 %v2576, %v2586
    %v2595 = vadd.f32 %v2577, %v2586
    %2596 = vmatprep.subr.mxu0 0.0
    %2597 = vmatpush1.msra.mxu0 1.0
    %2598 = vmatprep.subr.mxu0 0.0
    %2599 = vmatpush1.msra.mxu0 1.0
    %2600 = vmatprep.subr.mxu0 0.0
    %2601 = vmatpush1.msra.mxu0 1.0
    %2602 = vmatprep.subr.mxu0 0.0
    %2603 = vmatpush1.msra.mxu0 1.0
    %2604 = vmatprep.subr.mxu0 0.0
    %2605 = vmatpush1.msra.mxu0 1.0
    %2606 = vmatprep.subr.mxu0 0.0
    %2607 = vmatpush1.msra.mxu0 1.0
    %2608 = vmatprep.subr.mxu0 0.0
    %2609 = vmatpush1.msra.mxu0 1.0
    %2610 = vmatprep.subr.mxu0 0.0
    %2611 = vmatpush1.msra.mxu0 1.0
    %2612 = vmatprep.subr.mxu0 0.0
    %2613 = vmatpush1.msra.mxu0 1.0
    %2614 = vmatprep.subr.mxu0 0.0
    %2615 = vmatpush1.msra.mxu0 1.0
    %2616 = vmatprep.subr.mxu0 0.0
    %2617 = vmatpush1.msra.mxu0 1.0
    %2618 = vmatprep.subr.mxu0 0.0
    %2619 = vmatpush1.msra.mxu0 1.0
    %2620 = vmatprep.subr.mxu0 0.0
    %2621 = vmatpush1.msra.mxu0 1.0
    %2622 = vmatprep.subr.mxu0 0.0
    %2623 = vmatpush1.msra.mxu0 1.0
    %2624 = vmatprep.subr.mxu0 0.0
    %2625 = vmatpush1.msra.mxu0 1.0
    %2626 = vmatprep.subr.mxu0 0.0
    %2627 = vmatpush1.msra.mxu0 1.0
    %2628 = vmatprep.subr.mxu0 0.0
    %2629 = vmatpush1.msra.mxu0 1.0
    %2630 = vmatprep.subr.mxu0 0.0
    %2631 = vmatpush1.msra.mxu0 1.0
    %2632 = vmatprep.subr.mxu0 0.0
    %2633 = vmatpush1.msra.mxu0 1.0
    %2634 = vmatprep.subr.mxu0 0.0
    %2635 = vmatpush1.msra.mxu0 1.0
    %2636 = vmatprep.subr.mxu0 0.0
    %2637 = vmatpush1.msra.mxu0 1.0
    %2638 = vmatprep.subr.mxu0 0.0
    %2639 = vmatpush1.msra.mxu0 1.0
    %2640 = vmatprep.subr.mxu0 0.0
    %2641 = vmatpush1.msra.mxu0 1.0
    %2642 = vmatprep.subr.mxu0 0.0
    %2643 = vmatpush1.msra.mxu0 1.0
    %2644 = vmatprep.subr.mxu0 0.0
    %2645 = vmatpush1.msra.mxu0 1.0
    %2646 = vmatprep.subr.mxu0 0.0
    %2647 = vmatpush1.msra.mxu0 1.0
    %2648 = vmatprep.subr.mxu0 0.0
    %2649 = vmatpush1.msra.mxu0 1.0
    %2650 = vmatprep.subr.mxu0 0.0
    %2651 = vmatpush1.msra.mxu0 1.0
    %2652 = vmatprep.subr.mxu0 0.0
    %2653 = vmatpush1.msra.mxu0 1.0
    %2654 = vmatprep.subr.mxu0 0.0
    %2655 = vmatpush1.msra.mxu0 1.0
    %2656 = vmatprep.subr.mxu0 0.0
    %2657 = vmatpush1.msra.mxu0 1.0
    %2658 = vmatprep.subr.mxu0 0.0
    %2659 = vmatpush1.msra.mxu0 1.0
    %2660 = vmatprep.mubr.f32.mxu0 %v2589
    %2661 = vmatmul.mubr.f32.gmra.mrb[0].mxu0 %v2588
    %v2662 = vpop.f32.mrb[0].mxu0
    %v2663 = vadd.f32 0.0, %v2662
    %v2664 = vpop.f32.mrb[0].mxu0
    %2665 = vmatprep.mubr.f32.mxu0 %v2593
    %2666 = vmatmul.mubr.f32.gmra.mrb[0].mxu0 %v2592
    %v2667 = vpop.f32.mrb[0].mxu0
    %v2668 = vadd.f32 0.0, %v2667
    %v2669 = vpop.f32.mrb[0].mxu0
    %2670 = vdwg.mxu0
    %2671 = vmatprep.subr.mxu0 0.0
    %2672 = vmatpush1.msra.mxu0 1.0
    %2673 = vmatprep.subr.mxu0 0.0
    %2674 = vmatpush1.msra.mxu0 1.0
    %2675 = vmatprep.subr.mxu0 0.0
    %2676 = vmatpush1.msra.mxu0 1.0
    %2677 = vmatprep.subr.mxu0 0.0
    %2678 = vmatpush1.msra.mxu0 1.0
    %2679 = vmatprep.subr.mxu0 0.0
    %2680 = vmatpush1.msra.mxu0 1.0
    %2681 = vmatprep.subr.mxu0 0.0
    %2682 = vmatpush1.msra.mxu0 1.0
    %2683 = vmatprep.subr.mxu0 0.0
    %2684 = vmatpush1.msra.mxu0 1.0
    %2685 = vmatprep.subr.mxu0 0.0
    %2686 = vmatpush1.msra.mxu0 1.0
    %2687 = vmatprep.subr.mxu0 0.0
    %2688 = vmatpush1.msra.mxu0 1.0
    %2689 = vmatprep.subr.mxu0 0.0
    %2690 = vmatpush1.msra.mxu0 1.0
    %2691 = vmatprep.subr.mxu0 0.0
    %2692 = vmatpush1.msra.mxu0 1.0
    %2693 = vmatprep.subr.mxu0 0.0
    %2694 = vmatpush1.msra.mxu0 1.0
    %2695 = vmatprep.subr.mxu0 0.0
    %2696 = vmatpush1.msra.mxu0 1.0
    %2697 = vmatprep.subr.mxu0 0.0
    %2698 = vmatpush1.msra.mxu0 1.0
    %2699 = vmatprep.subr.mxu0 0.0
    %2700 = vmatpush1.msra.mxu0 1.0
    %2701 = vmatprep.subr.mxu0 0.0
    %2702 = vmatpush1.msra.mxu0 1.0
    %2703 = vmatprep.subr.mxu0 0.0
    %2704 = vmatpush1.msra.mxu0 1.0
    %2705 = vmatprep.subr.mxu0 0.0
    %2706 = vmatpush1.msra.mxu0 1.0
    %2707 = vmatprep.subr.mxu0 0.0
    %2708 = vmatpush1.msra.mxu0 1.0
    %2709 = vmatprep.subr.mxu0 0.0
    %2710 = vmatpush1.msra.mxu0 1.0
    %2711 = vmatprep.subr.mxu0 0.0
    %2712 = vmatpush1.msra.mxu0 1.0
    %2713 = vmatprep.subr.mxu0 0.0
    %2714 = vmatpush1.msra.mxu0 1.0
    %2715 = vmatprep.subr.mxu0 0.0
    %2716 = vmatpush1.msra.mxu0 1.0
    %2717 = vmatprep.subr.mxu0 0.0
    %2718 = vmatpush1.msra.mxu0 1.0
    %2719 = vmatprep.subr.mxu0 0.0
    %2720 = vmatpush1.msra.mxu0 1.0
    %2721 = vmatprep.subr.mxu0 0.0
    %2722 = vmatpush1.msra.mxu0 1.0
    %2723 = vmatprep.subr.mxu0 0.0
    %2724 = vmatpush1.msra.mxu0 1.0
    %2725 = vmatprep.subr.mxu0 0.0
    %2726 = vmatpush1.msra.mxu0 1.0
    %2727 = vmatprep.subr.mxu0 0.0
    %2728 = vmatpush1.msra.mxu0 1.0
    %2729 = vmatprep.subr.mxu0 0.0
    %2730 = vmatpush1.msra.mxu0 1.0
    %2731 = vmatprep.subr.mxu0 0.0
    %2732 = vmatpush1.msra.mxu0 1.0
    %2733 = vmatprep.subr.mxu0 0.0
    %2734 = vmatpush1.msra.mxu0 1.0
    %2735 = vmatprep.mubr.f32.mxu0 %v2591
    %2736 = vmatmul.mubr.f32.gmra.mrb[0].mxu0 %v2590
    %v2737 = vpop.f32.mrb[0].mxu0
    %v2738 = vadd.f32 %v2663, %v2737
    %v2739 = vpop.f32.mrb[0].mxu0
    %2740 = vmatprep.mubr.f32.mxu0 %v2595
    %2741 = vmatmul.mubr.f32.gmra.mrb[0].mxu0 %v2594
    %v2742 = vpop.f32.mrb[0].mxu0
    %v2743 = vadd.f32 %v2668, %v2742
    %v2744 = vpop.f32.mrb[0].mxu0
    %2745 = vdwg.mxu0
    %v2746 = vmul.f32 %v2738, 0.001953125
    %v2747 = vmul.f32 %v2743, 0.001953125
    %2749 = vset.pattern.permute.xlu0 0
    %2750 = vperm.xlu0 %2749, %v2746
    %v2751 = vpop.permute.xlu0 %2750
    %2754 = vset.pattern.permute.xlu0 0
    %2755 = vperm.xlu0 %2754, %v2747
    %v2756 = vpop.permute.xlu0 %2755
    %v2758 = vsub.f32 %v2588, %v2751
    %v2759 = vsub.f32 %v2589, %v2751
    %v2760 = vsub.f32 %v2590, %v2751
    %v2761 = vsub.f32 %v2591, %v2751
    %v2762 = vsub.f32 %v2592, %v2756
    %v2763 = vsub.f32 %v2593, %v2756
    %v2764 = vsub.f32 %v2594, %v2756
    %v2765 = vsub.f32 %v2595, %v2756
    %v2766 = vmul.f32 %v2758, %v2758
    %v2767 = vmul.f32 %v2759, %v2759
    %v2768 = vmul.f32 %v2760, %v2760
    %v2769 = vmul.f32 %v2761, %v2761
    %v2770 = vmul.f32 %v2762, %v2762
    %v2771 = vmul.f32 %v2763, %v2763
    %v2772 = vmul.f32 %v2764, %v2764
    %v2773 = vmul.f32 %v2765, %v2765
    %2774 = vmatprep.subr.mxu0 0.0
    %2775 = vmatpush1.msra.mxu0 1.0
    %2776 = vmatprep.subr.mxu0 0.0
    %2777 = vmatpush1.msra.mxu0 1.0
    %2778 = vmatprep.subr.mxu0 0.0
    %2779 = vmatpush1.msra.mxu0 1.0
    %2780 = vmatprep.subr.mxu0 0.0
    %2781 = vmatpush1.msra.mxu0 1.0
    %2782 = vmatprep.subr.mxu0 0.0
    %2783 = vmatpush1.msra.mxu0 1.0
    %2784 = vmatprep.subr.mxu0 0.0
    %2785 = vmatpush1.msra.mxu0 1.0
    %2786 = vmatprep.subr.mxu0 0.0
    %2787 = vmatpush1.msra.mxu0 1.0
    %2788 = vmatprep.subr.mxu0 0.0
    %2789 = vmatpush1.msra.mxu0 1.0
    %2790 = vmatprep.subr.mxu0 0.0
    %2791 = vmatpush1.msra.mxu0 1.0
    %2792 = vmatprep.subr.mxu0 0.0
    %2793 = vmatpush1.msra.mxu0 1.0
    %2794 = vmatprep.subr.mxu0 0.0
    %2795 = vmatpush1.msra.mxu0 1.0
    %2796 = vmatprep.subr.mxu0 0.0
    %2797 = vmatpush1.msra.mxu0 1.0
    %2798 = vmatprep.subr.mxu0 0.0
    %2799 = vmatpush1.msra.mxu0 1.0
    %2800 = vmatprep.subr.mxu0 0.0
    %2801 = vmatpush1.msra.mxu0 1.0
    %2802 = vmatprep.subr.mxu0 0.0
    %2803 = vmatpush1.msra.mxu0 1.0
    %2804 = vmatprep.subr.mxu0 0.0
    %2805 = vmatpush1.msra.mxu0 1.0
    %2806 = vmatprep.subr.mxu0 0.0
    %2807 = vmatpush1.msra.mxu0 1.0
    %2808 = vmatprep.subr.mxu0 0.0
    %2809 = vmatpush1.msra.mxu0 1.0
    %2810 = vmatprep.subr.mxu0 0.0
    %2811 = vmatpush1.msra.mxu0 1.0
    %2812 = vmatprep.subr.mxu0 0.0
    %2813 = vmatpush1.msra.mxu0 1.0
    %2814 = vmatprep.subr.mxu0 0.0
    %2815 = vmatpush1.msra.mxu0 1.0
    %2816 = vmatprep.subr.mxu0 0.0
    %2817 = vmatpush1.msra.mxu0 1.0
    %2818 = vmatprep.subr.mxu0 0.0
    %2819 = vmatpush1.msra.mxu0 1.0
    %2820 = vmatprep.subr.mxu0 0.0
    %2821 = vmatpush1.msra.mxu0 1.0
    %2822 = vmatprep.subr.mxu0 0.0
    %2823 = vmatpush1.msra.mxu0 1.0
    %2824 = vmatprep.subr.mxu0 0.0
    %2825 = vmatpush1.msra.mxu0 1.0
    %2826 = vmatprep.subr.mxu0 0.0
    %2827 = vmatpush1.msra.mxu0 1.0
    %2828 = vmatprep.subr.mxu0 0.0
    %2829 = vmatpush1.msra.mxu0 1.0
    %2830 = vmatprep.subr.mxu0 0.0
    %2831 = vmatpush1.msra.mxu0 1.0
    %2832 = vmatprep.subr.mxu0 0.0
    %2833 = vmatpush1.msra.mxu0 1.0
    %2834 = vmatprep.subr.mxu0 0.0
    %2835 = vmatpush1.msra.mxu0 1.0
    %2836 = vmatprep.subr.mxu0 0.0
    %2837 = vmatpush1.msra.mxu0 1.0
    %2838 = vmatprep.mubr.f32.mxu0 %v2767
    %2839 = vmatmul.mubr.f32.gmra.mrb[0].mxu0 %v2766
    %v2840 = vpop.f32.mrb[0].mxu0
    %v2841 = vadd.f32 0.0, %v2840
    %v2842 = vpop.f32.mrb[0].mxu0
    %2843 = vmatprep.mubr.f32.mxu0 %v2771
    %2844 = vmatmul.mubr.f32.gmra.mrb[0].mxu0 %v2770
    %v2845 = vpop.f32.mrb[0].mxu0
    %v2846 = vadd.f32 0.0, %v2845
    %v2847 = vpop.f32.mrb[0].mxu0
    %2848 = vdwg.mxu0
    %2849 = vmatprep.subr.mxu0 0.0
    %2850 = vmatpush1.msra.mxu0 1.0
    %2851 = vmatprep.subr.mxu0 0.0
    %2852 = vmatpush1.msra.mxu0 1.0
    %2853 = vmatprep.subr.mxu0 0.0
    %2854 = vmatpush1.msra.mxu0 1.0
    %2855 = vmatprep.subr.mxu0 0.0
    %2856 = vmatpush1.msra.mxu0 1.0
    %2857 = vmatprep.subr.mxu0 0.0
    %2858 = vmatpush1.msra.mxu0 1.0
    %2859 = vmatprep.subr.mxu0 0.0
    %2860 = vmatpush1.msra.mxu0 1.0
    %2861 = vmatprep.subr.mxu0 0.0
    %2862 = vmatpush1.msra.mxu0 1.0
    %2863 = vmatprep.subr.mxu0 0.0
    %2864 = vmatpush1.msra.mxu0 1.0
    %2865 = vmatprep.subr.mxu0 0.0
    %2866 = vmatpush1.msra.mxu0 1.0
    %2867 = vmatprep.subr.mxu0 0.0
    %2868 = vmatpush1.msra.mxu0 1.0
    %2869 = vmatprep.subr.mxu0 0.0
    %2870 = vmatpush1.msra.mxu0 1.0
    %2871 = vmatprep.subr.mxu0 0.0
    %2872 = vmatpush1.msra.mxu0 1.0
    %2873 = vmatprep.subr.mxu0 0.0
    %2874 = vmatpush1.msra.mxu0 1.0
    %2875 = vmatprep.subr.mxu0 0.0
    %2876 = vmatpush1.msra.mxu0 1.0
    %2877 = vmatprep.subr.mxu0 0.0
    %2878 = vmatpush1.msra.mxu0 1.0
    %2879 = vmatprep.subr.mxu0 0.0
    %2880 = vmatpush1.msra.mxu0 1.0
    %2881 = vmatprep.subr.mxu0 0.0
    %2882 = vmatpush1.msra.mxu0 1.0
    %2883 = vmatprep.subr.mxu0 0.0
    %2884 = vmatpush1.msra.mxu0 1.0
    %2885 = vmatprep.subr.mxu0 0.0
    %2886 = vmatpush1.msra.mxu0 1.0
    %2887 = vmatprep.subr.mxu0 0.0
    %2888 = vmatpush1.msra.mxu0 1.0
    %2889 = vmatprep.subr.mxu0 0.0
    %2890 = vmatpush1.msra.mxu0 1.0
    %2891 = vmatprep.subr.mxu0 0.0
    %2892 = vmatpush1.msra.mxu0 1.0
    %2893 = vmatprep.subr.mxu0 0.0
    %2894 = vmatpush1.msra.mxu0 1.0
    %2895 = vmatprep.subr.mxu0 0.0
    %2896 = vmatpush1.msra.mxu0 1.0
    %2897 = vmatprep.subr.mxu0 0.0
    %2898 = vmatpush1.msra.mxu0 1.0
    %2899 = vmatprep.subr.mxu0 0.0
    %2900 = vmatpush1.msra.mxu0 1.0
    %2901 = vmatprep.subr.mxu0 0.0
    %2902 = vmatpush1.msra.mxu0 1.0
    %2903 = vmatprep.subr.mxu0 0.0
    %2904 = vmatpush1.msra.mxu0 1.0
    %2905 = vmatprep.subr.mxu0 0.0
    %2906 = vmatpush1.msra.mxu0 1.0
    %2907 = vmatprep.subr.mxu0 0.0
    %2908 = vmatpush1.msra.mxu0 1.0
    %2909 = vmatprep.subr.mxu0 0.0
    %2910 = vmatpush1.msra.mxu0 1.0
    %2911 = vmatprep.subr.mxu0 0.0
    %2912 = vmatpush1.msra.mxu0 1.0
    %2913 = vmatprep.mubr.f32.mxu0 %v2769
    %2914 = vmatmul.mubr.f32.gmra.mrb[0].mxu0 %v2768
    %v2915 = vpop.f32.mrb[0].mxu0
    %v2916 = vadd.f32 %v2841, %v2915
    %v2917 = vpop.f32.mrb[0].mxu0
    %2918 = vmatprep.mubr.f32.mxu0 %v2773
    %2919 = vmatmul.mubr.f32.gmra.mrb[0].mxu0 %v2772
    %v2920 = vpop.f32.mrb[0].mxu0
    %v2921 = vadd.f32 %v2846, %v2920
    %v2922 = vpop.f32.mrb[0].mxu0
    %2923 = vdwg.mxu0
    %v2924 = vmul.f32 %v2916, 0.001953125
    %v2925 = vmul.f32 %v2921, 0.001953125
    %v2926 = vadd.f32 %v2924, 1e-05
    %v2927 = vadd.f32 %v2925, 1e-05
    %v2928 = vrsqrt.pop %v2926
    %v2929 = vrsqrt.pop %v2927
    %2932 = vrot.lane.b32.xlu0 %v2928, 1
    %v2933 = vpop.permute.xlu0 %2932
    %2934 = vrot.lane.b32.xlu0 %v2929, 1
    %v2935 = vpop.permute.xlu0 %2934
    %v2938 = vmul.f32 %v925, %v2933
    %v2939 = vmul.f32 %v926, %v2935
    %2941 = vset.pattern.permute.xlu0 1
    %2942 = vperm.xlu0 %2941, %v2938
    %v2943 = vpop.permute.xlu0 %2942
    %2946 = vset.pattern.permute.xlu0 1
    %2947 = vperm.xlu0 %2946, %v2939
    %v2948 = vpop.permute.xlu0 %2947
    %v2950 = vmul.f32 %v2758, %v2943
    %v2951 = vmul.f32 %v2759, %v2943
    %v2952 = vmul.f32 %v2760, %v2943
    %v2953 = vmul.f32 %v2761, %v2943
    %v2954 = vmul.f32 %v2762, %v2948
    %v2955 = vmul.f32 %v2763, %v2948
    %v2956 = vmul.f32 %v2764, %v2948
    %v2957 = vmul.f32 %v2765, %v2948
    %2958 = vset.pattern.permute.xlu0 2
    %2959 = vperm.xlu0 %2958, %v925
    %v2960 = vpop.permute.xlu0 %2959
    %2962 = vset.pattern.permute.xlu0 2
    %2963 = vperm.xlu0 %2962, %v926
    %v2964 = vpop.permute.xlu0 %2963
    %v2966 = vadd.f32 %v2950, %v2960
    %v2967 = vadd.f32 %v2951, %v2960
    %v2968 = vadd.f32 %v2952, %v2960
    %v2969 = vadd.f32 %v2953, %v2960
    %v2970 = vadd.f32 %v2954, %v2964
    %v2971 = vadd.f32 %v2955, %v2964
    %v2972 = vadd.f32 %v2956, %v2964
    %v2973 = vadd.f32 %v2957, %v2964
    %v2974 = vmax.f32 %v2966, 0.0
    %v2975 = vmax.f32 %v2967, 0.0
    %v2976 = vmax.f32 %v2968, 0.0
    %v2977 = vmax.f32 %v2969, 0.0
    %v2978 = vmax.f32 %v2970, 0.0
    %v2979 = vmax.f32 %v2971, 0.0
    %v2980 = vmax.f32 %v2972, 0.0
    %v2981 = vmax.f32 %v2973, 0.0
    %2982 = vrot.lane.b32.xlu0 %v2974, 127
    %v2983 = vpop.permute.xlu0 %2982
    %2984 = vrot.lane.b32.xlu0 %v2978, 127
    %v2985 = vpop.permute.xlu0 %2984
    %2986 = vrot.lane.b32.xlu0 %v2975, 127
    %v2987 = vpop.permute.xlu0 %2986
    %2988 = vrot.lane.b32.xlu0 %v2979, 127
    %v2989 = vpop.permute.xlu0 %2988
    %2990 = vrot.lane.b32.xlu0 %v2976, 127
    %v2991 = vpop.permute.xlu0 %2990
    %2992 = vrot.lane.b32.xlu0 %v2980, 127
    %v2993 = vpop.permute.xlu0 %2992
    %2994 = vrot.lane.b32.xlu0 %v2977, 127
    %v2995 = vpop.permute.xlu0 %2994
    %2996 = vrot.lane.b32.xlu0 %v2981, 127
    %v2997 = vpop.permute.xlu0 %2996
    %v2998 = vsel %vm409, %v2991, %v2995
    %v2999 = vsel %vm409, %v2993, %v2997
    %v3000 = vsel %vm409, %v2987, %v2991
    %v3001 = vsel %vm409, %v2989, %v2993
    %v3002 = vsel %vm409, %v2983, %v2987
    %v3003 = vsel %vm409, %v2985, %v2989
    %v3004 = vsel %vm409, %v2995, %v2983
    %v3005 = vsel %vm409, %v2997, %v2985
    %3006 = vrot.lane.b32.xlu0 %v2974, 1
    %v3007 = vpop.permute.xlu0 %3006
    %3008 = vrot.lane.b32.xlu0 %v2978, 1
    %v3009 = vpop.permute.xlu0 %3008
    %3010 = vrot.lane.b32.xlu0 %v2975, 1
    %v3011 = vpop.permute.xlu0 %3010
    %3012 = vrot.lane.b32.xlu0 %v2979, 1
    %v3013 = vpop.permute.xlu0 %3012
    %3014 = vrot.lane.b32.xlu0 %v2976, 1
    %v3015 = vpop.permute.xlu0 %3014
    %3016 = vrot.lane.b32.xlu0 %v2980, 1
    %v3017 = vpop.permute.xlu0 %3016
    %3018 = vrot.lane.b32.xlu0 %v2977, 1
    %v3019 = vpop.permute.xlu0 %3018
    %3020 = vrot.lane.b32.xlu0 %v2981, 1
    %v3021 = vpop.permute.xlu0 %3020
    %v3022 = vsel %vm346, %v3015, %v3019
    %v3023 = vsel %vm346, %v3017, %v3021
    %v3024 = vsel %vm346, %v3011, %v3015
    %v3025 = vsel %vm346, %v3013, %v3017
    %v3026 = vsel %vm346, %v3007, %v3011
    %v3027 = vsel %vm346, %v3009, %v3013
    %v3028 = vsel %vm346, %v3019, %v3007
    %v3029 = vsel %vm346, %v3021, %v3009
    %v3030 = vsel %vm160, 1, 0
    %v3031 = vsel %vm161, 1, 0
    %v3032 = vsel %vm162, 1, 0
    %v3033 = vsel %vm163, 1, 0
    %vm3034 = vcmp.eq.s32.totalorder %v3030, 1
    %vm3035 = vcmp.eq.s32.totalorder %v3031, 1
    %vm3036 = vcmp.eq.s32.totalorder %v3032, 1
    %vm3037 = vcmp.eq.s32.totalorder %v3033, 1
    %v3038 = vsel %vm3034, %v3028, %v3002
    %v3039 = vsel %vm3035, %v3026, %v3000
    %v3040 = vsel %vm3036, %v3024, %v2998
    %v3041 = vsel %vm3037, %v3022, %v3004
    %v3042 = vsel %vm3034, %v3029, %v3003
    %v3043 = vsel %vm3035, %v3027, %v3001
    %v3044 = vsel %vm3036, %v3025, %v2999
    %v3045 = vsel %vm3037, %v3023, %v3005
    %v3046 = vmax.f32 %v2974, %v3038
    %v3047 = vmax.f32 %v2975, %v3039
    %v3048 = vmax.f32 %v2976, %v3040
    %v3049 = vmax.f32 %v2977, %v3041
    %v3050 = vmax.f32 %v2978, %v3042
    %v3051 = vmax.f32 %v2979, %v3043
    %v3052 = vmax.f32 %v2980, %v3044
    %v3053 = vmax.f32 %v2981, %v3045
    %3054 = vrot.lane.b32.xlu0 %v3046, 112
    %v3055 = vpop.permute.xlu0 %3054
    %3056 = vrot.lane.b32.xlu0 %v3050, 112
    %v3057 = vpop.permute.xlu0 %3056
    %3058 = vrot.lane.b32.xlu0 %v3047, 112
    %v3059 = vpop.permute.xlu0 %3058
    %3060 = vrot.lane.b32.xlu0 %v3051, 112
    %v3061 = vpop.permute.xlu0 %3060
    %3062 = vrot.lane.b32.xlu0 %v3048, 112
    %v3063 = vpop.permute.xlu0 %3062
    %3064 = vrot.lane.b32.xlu0 %v3052, 112
    %v3065 = vpop.permute.xlu0 %3064
    %3066 = vrot.lane.b32.xlu0 %v3049, 112
    %v3067 = vpop.permute.xlu0 %3066
    %3068 = vrot.lane.b32.xlu0 %v3053, 112
    %v3069 = vpop.permute.xlu0 %3068
    %v3070 = vsel %vm505, %v3063, %v3067
    %v3071 = vsel %vm505, %v3065, %v3069
    %v3072 = vsel %vm505, %v3059, %v3063
    %v3073 = vsel %vm505, %v3061, %v3065
    %v3074 = vsel %vm505, %v3055, %v3059
    %v3075 = vsel %vm505, %v3057, %v3061
    %v3076 = vsel %vm505, %v3067, %v3055
    %v3077 = vsel %vm505, %v3069, %v3057
    %3078 = vrot.lane.b32.xlu0 %v3046, 16
    %v3079 = vpop.permute.xlu0 %3078
    %3080 = vrot.lane.b32.xlu0 %v3050, 16
    %v3081 = vpop.permute.xlu0 %3080
    %3082 = vrot.lane.b32.xlu0 %v3047, 16
    %v3083 = vpop.permute.xlu0 %3082
    %3084 = vrot.lane.b32.xlu0 %v3051, 16
    %v3085 = vpop.permute.xlu0 %3084
    %3086 = vrot.lane.b32.xlu0 %v3048, 16
    %v3087 = vpop.permute.xlu0 %3086
    %3088 = vrot.lane.b32.xlu0 %v3052, 16
    %v3089 = vpop.permute.xlu0 %3088
    %3090 = vrot.lane.b32.xlu0 %v3049, 16
    %v3091 = vpop.permute.xlu0 %3090
    %3092 = vrot.lane.b32.xlu0 %v3053, 16
    %v3093 = vpop.permute.xlu0 %3092
    %v3094 = vsel %vm250, %v3087, %v3091
    %v3095 = vsel %vm250, %v3089, %v3093
    %v3096 = vsel %vm250, %v3083, %v3087
    %v3097 = vsel %vm250, %v3085, %v3089
    %v3098 = vsel %vm250, %v3079, %v3083
    %v3099 = vsel %vm250, %v3081, %v3085
    %v3100 = vsel %vm250, %v3091, %v3079
    %v3101 = vsel %vm250, %v3093, %v3081
    %v3102 = vsel %vm168, 1, 0
    %v3103 = vsel %vm169, 1, 0
    %v3104 = vsel %vm170, 1, 0
    %v3105 = vsel %vm171, 1, 0
    %vm3106 = vcmp.eq.s32.totalorder %v3102, 1
    %vm3107 = vcmp.eq.s32.totalorder %v3103, 1
    %vm3108 = vcmp.eq.s32.totalorder %v3104, 1
    %vm3109 = vcmp.eq.s32.totalorder %v3105, 1
    %v3110 = vsel %vm3106, %v3100, %v3074
    %v3111 = vsel %vm3107, %v3098, %v3072
    %v3112 = vsel %vm3108, %v3096, %v3070
    %v3113 = vsel %vm3109, %v3094, %v3076
    %v3114 = vsel %vm3106, %v3101, %v3075
    %v3115 = vsel %vm3107, %v3099, %v3073
    %v3116 = vsel %vm3108, %v3097, %v3071
    %v3117 = vsel %vm3109, %v3095, %v3077
    %v3118 = vmax.f32 %v3046, %v3110
    %v3119 = vmax.f32 %v3047, %v3111
    %v3120 = vmax.f32 %v3048, %v3112
    %v3121 = vmax.f32 %v3049, %v3113
    %v3122 = vmax.f32 %v3050, %v3114
    %v3123 = vmax.f32 %v3051, %v3115
    %v3124 = vmax.f32 %v3052, %v3116
    %v3125 = vmax.f32 %v3053, %v3117
    %3126 = vst [vmem:[%s9] sm:$0xff] %v3118
    %3127 = vst [vmem:[%s9 + $0x8] sm:$0xff] %v3119
    %3128 = vst [vmem:[%s9 + $0x10] sm:$0xff] %v3120
    %3129 = vst [vmem:[%s9 + $0x18] sm:$0xff] %v3121
    %3130 = vst [vmem:[%s9 + $0x20] sm:$0xff] %v3122
    %3131 = vst [vmem:[%s9 + $0x28] sm:$0xff] %v3123
    %3132 = vst [vmem:[%s9 + $0x30] sm:$0xff] %v3124
    %3133 = vst [vmem:[%s9 + $0x38] sm:$0xff] %v3125
    %v3134 = vld [vmem:[%s6] sm:$0xff]
    %3135 = vrot.lane.b32.xlu0 %v3118, 17
    %v3136 = vpop.permute.xlu0 %3135
    %3137 = vrot.lane.b32.xlu0 %v3122, 17
    %v3138 = vpop.permute.xlu0 %3137
    %3139 = vrot.lane.b32.xlu0 %v3119, 17
    %v3140 = vpop.permute.xlu0 %3139
    %3141 = vrot.lane.b32.xlu0 %v3123, 17
    %v3142 = vpop.permute.xlu0 %3141
    %3143 = vrot.lane.b32.xlu0 %v3120, 17
    %v3144 = vpop.permute.xlu0 %3143
    %3145 = vrot.lane.b32.xlu0 %v3124, 17
    %v3146 = vpop.permute.xlu0 %3145
    %3147 = vrot.lane.b32.xlu0 %v3121, 17
    %v3148 = vpop.permute.xlu0 %3147
    %3149 = vrot.lane.b32.xlu0 %v3125, 17
    %v3150 = vpop.permute.xlu0 %3149
    %v3151 = vsel %vm203, %v3144, %v3148
    %v3152 = vsel %vm203, %v3146, %v3150
    %v3153 = vsel %vm203, %v3140, %v3144
    %v3154 = vsel %vm203, %v3142, %v3146
    %v3155 = vsel %vm203, %v3136, %v3140
    %v3156 = vsel %vm203, %v3138, %v3142
    %v3157 = vsel %vm203, %v3148, %v3136
    %v3158 = vsel %vm203, %v3150, %v3138
    %v3159 = vmul.f32 %v3157, %v140
    %v3160 = vmul.f32 %v3155, %v141
    %v3161 = vmul.f32 %v3153, %v142
    %v3162 = vmul.f32 %v3151, %v143
    %v3163 = vmul.f32 %v3158, %v140
    %v3164 = vmul.f32 %v3156, %v141
    %v3165 = vmul.f32 %v3154, %v142
    %v3166 = vmul.f32 %v3152, %v143
    %v3167 = vld [vmem:[#allocation6] sm:$0xff]
    %3168 = vrot.lane.b32.xlu0 %v3118, 16
    %v3169 = vpop.permute.xlu0 %3168
    %3170 = vrot.lane.b32.xlu0 %v3122, 16
    %v3171 = vpop.permute.xlu0 %3170
    %3172 = vrot.lane.b32.xlu0 %v3119, 16
    %v3173 = vpop.permute.xlu0 %3172
    %3174 = vrot.lane.b32.xlu0 %v3123, 16
    %v3175 = vpop.permute.xlu0 %3174
    %3176 = vrot.lane.b32.xlu0 %v3120, 16
    %v3177 = vpop.permute.xlu0 %3176
    %3178 = vrot.lane.b32.xlu0 %v3124, 16
    %v3179 = vpop.permute.xlu0 %3178
    %3180 = vrot.lane.b32.xlu0 %v3121, 16
    %v3181 = vpop.permute.xlu0 %3180
    %3182 = vrot.lane.b32.xlu0 %v3125, 16
    %v3183 = vpop.permute.xlu0 %3182
    %v3184 = vsel %vm250, %v3177, %v3181
    %v3185 = vsel %vm250, %v3179, %v3183
    %v3186 = vsel %vm250, %v3173, %v3177
    %v3187 = vsel %vm250, %v3175, %v3179
    %v3188 = vsel %vm250, %v3169, %v3173
    %v3189 = vsel %vm250, %v3171, %v3175
    %v3190 = vsel %vm250, %v3181, %v3169
    %v3191 = vsel %vm250, %v3183, %v3171
    %v3192 = vmul.f32 %v3190, %v100
    %v3193 = vmul.f32 %v3188, %v101
    %v3194 = vmul.f32 %v3186, %v102
    %v3195 = vmul.f32 %v3184, %v103
    %v3196 = vmul.f32 %v3191, %v100
    %v3197 = vmul.f32 %v3189, %v101
    %v3198 = vmul.f32 %v3187, %v102
    %v3199 = vmul.f32 %v3185, %v103
    %s3200 = scalar_lea.vmem [#allocation6], 8
    %v3201 = vld [vmem:[%s3200] sm:$0xff]
    %vm3202 = vcmask 130048
    %v3204 = vsel %vm3202, %v3201, 0
    %3206 = vmatprep.subr.mxu0 %v3193
    %3207 = vmatpush1.msra.mxu0 %v3192
    %3208 = vmatprep.subr.mxu0 %v3197
    %3209 = vmatpush1.msra.mxu0 %v3196
    %3210 = vmatprep.subr.mxu0 0.0
    %3211 = vmatpush1.msra.mxu0 0.0
    %3212 = vmatprep.subr.mxu0 0.0
    %3213 = vmatpush1.msra.mxu0 0.0
    %3214 = vmatprep.subr.mxu0 0.0
    %3215 = vmatpush1.msra.mxu0 0.0
    %3216 = vmatprep.subr.mxu0 0.0
    %3217 = vmatpush1.msra.mxu0 0.0
    %3218 = vmatprep.subr.mxu0 0.0
    %3219 = vmatpush1.msra.mxu0 0.0
    %3220 = vmatprep.subr.mxu0 0.0
    %3221 = vmatpush1.msra.mxu0 0.0
    %3222 = vmatprep.subr.mxu0 0.0
    %3223 = vmatpush1.msra.mxu0 0.0
    %3224 = vmatprep.subr.mxu0 0.0
    %3225 = vmatpush1.msra.mxu0 0.0
    %3226 = vmatprep.subr.mxu0 0.0
    %3227 = vmatpush1.msra.mxu0 0.0
    %3228 = vmatprep.subr.mxu0 0.0
    %3229 = vmatpush1.msra.mxu0 0.0
    %3230 = vmatprep.subr.mxu0 0.0
    %3231 = vmatpush1.msra.mxu0 0.0
    %3232 = vmatprep.subr.mxu0 0.0
    %3233 = vmatpush1.msra.mxu0 0.0
    %3234 = vmatprep.subr.mxu0 0.0
    %3235 = vmatpush1.msra.mxu0 0.0
    %3236 = vmatprep.subr.mxu0 0.0
    %3237 = vmatpush1.msra.mxu0 0.0
    %3238 = vmatprep.subr.mxu0 0.0
    %3239 = vmatpush1.msra.mxu0 0.0
    %3240 = vmatprep.subr.mxu0 0.0
    %3241 = vmatpush1.msra.mxu0 0.0
    %3242 = vmatprep.subr.mxu0 0.0
    %3243 = vmatpush1.msra.mxu0 0.0
    %3244 = vmatprep.subr.mxu0 0.0
    %3245 = vmatpush1.msra.mxu0 0.0
    %3246 = vmatprep.subr.mxu0 0.0
    %3247 = vmatpush1.msra.mxu0 0.0
    %3248 = vmatprep.subr.mxu0 0.0
    %3249 = vmatpush1.msra.mxu0 0.0
    %3250 = vmatprep.subr.mxu0 0.0
    %3251 = vmatpush1.msra.mxu0 0.0
    %3252 = vmatprep.subr.mxu0 0.0
    %3253 = vmatpush1.msra.mxu0 0.0
    %3254 = vmatprep.subr.mxu0 0.0
    %3255 = vmatpush1.msra.mxu0 0.0
    %3256 = vmatprep.subr.mxu0 0.0
    %3257 = vmatpush1.msra.mxu0 0.0
    %3258 = vmatprep.subr.mxu0 0.0
    %3259 = vmatpush1.msra.mxu0 0.0
    %3260 = vmatprep.subr.mxu0 0.0
    %3261 = vmatpush1.msra.mxu0 0.0
    %3262 = vmatprep.subr.mxu0 0.0
    %3263 = vmatpush1.msra.mxu0 0.0
    %3264 = vmatprep.subr.mxu0 0.0
    %3265 = vmatpush1.msra.mxu0 0.0
    %3266 = vmatprep.subr.mxu0 0.0
    %3267 = vmatpush1.msra.mxu0 0.0
    %3268 = vmatprep.subr.mxu0 0.0
    %3269 = vmatpush1.msra.mxu0 0.0
    %3270 = vmatprep.mubr.f32.mxu0 0.0
    %3271 = vmatmul.mubr.f32.gmra.mrb[0].mxu0 %v3204
    %v3272 = vpop.f32.mrb[0].mxu0
    %v3273 = vadd.f32 0.0, %v3272
    %v3274 = vpop.f32.mrb[0].mxu0
    %v3275 = vadd.f32 0.0, %v3274
    %3276 = vdwg.mxu0
    %3277 = vmatprep.subr.mxu0 %v3195
    %3278 = vmatpush1.msra.mxu0 %v3194
    %3279 = vmatprep.subr.mxu0 %v3199
    %3280 = vmatpush1.msra.mxu0 %v3198
    %3281 = vmatprep.subr.mxu0 0.0
    %3282 = vmatpush1.msra.mxu0 0.0
    %3283 = vmatprep.subr.mxu0 0.0
    %3284 = vmatpush1.msra.mxu0 0.0
    %3285 = vmatprep.subr.mxu0 0.0
    %3286 = vmatpush1.msra.mxu0 0.0
    %3287 = vmatprep.subr.mxu0 0.0
    %3288 = vmatpush1.msra.mxu0 0.0
    %3289 = vmatprep.subr.mxu0 0.0
    %3290 = vmatpush1.msra.mxu0 0.0
    %3291 = vmatprep.subr.mxu0 0.0
    %3292 = vmatpush1.msra.mxu0 0.0
    %3293 = vmatprep.subr.mxu0 0.0
    %3294 = vmatpush1.msra.mxu0 0.0
    %3295 = vmatprep.subr.mxu0 0.0
    %3296 = vmatpush1.msra.mxu0 0.0
    %3297 = vmatprep.subr.mxu0 0.0
    %3298 = vmatpush1.msra.mxu0 0.0
    %3299 = vmatprep.subr.mxu0 0.0
    %3300 = vmatpush1.msra.mxu0 0.0
    %3301 = vmatprep.subr.mxu0 0.0
    %3302 = vmatpush1.msra.mxu0 0.0
    %3303 = vmatprep.subr.mxu0 0.0
    %3304 = vmatpush1.msra.mxu0 0.0
    %3305 = vmatprep.subr.mxu0 0.0
    %3306 = vmatpush1.msra.mxu0 0.0
    %3307 = vmatprep.subr.mxu0 0.0
    %3308 = vmatpush1.msra.mxu0 0.0
    %3309 = vmatprep.subr.mxu0 0.0
    %3310 = vmatpush1.msra.mxu0 0.0
    %3311 = vmatprep.subr.mxu0 0.0
    %3312 = vmatpush1.msra.mxu0 0.0
    %3313 = vmatprep.subr.mxu0 0.0
    %3314 = vmatpush1.msra.mxu0 0.0
    %3315 = vmatprep.subr.mxu0 0.0
    %3316 = vmatpush1.msra.mxu0 0.0
    %3317 = vmatprep.subr.mxu0 0.0
    %3318 = vmatpush1.msra.mxu0 0.0
    %3319 = vmatprep.subr.mxu0 0.0
    %3320 = vmatpush1.msra.mxu0 0.0
    %3321 = vmatprep.subr.mxu0 0.0
    %3322 = vmatpush1.msra.mxu0 0.0
    %3323 = vmatprep.subr.mxu0 0.0
    %3324 = vmatpush1.msra.mxu0 0.0
    %3325 = vmatprep.subr.mxu0 0.0
    %3326 = vmatpush1.msra.mxu0 0.0
    %3327 = vmatprep.subr.mxu0 0.0
    %3328 = vmatpush1.msra.mxu0 0.0
    %3329 = vmatprep.subr.mxu0 0.0
    %3330 = vmatpush1.msra.mxu0 0.0
    %3331 = vmatprep.subr.mxu0 0.0
    %3332 = vmatpush1.msra.mxu0 0.0
    %3333 = vmatprep.subr.mxu0 0.0
    %3334 = vmatpush1.msra.mxu0 0.0
    %3335 = vmatprep.subr.mxu0 0.0
    %3336 = vmatpush1.msra.mxu0 0.0
    %3337 = vmatprep.subr.mxu0 0.0
    %3338 = vmatpush1.msra.mxu0 0.0
    %3339 = vmatprep.subr.mxu0 0.0
    %3340 = vmatpush1.msra.mxu0 0.0
    %3341 = vmatprep.mubr.f32.mxu0 0.0
    %3342 = vmatmul.mubr.f32.gmra.mrb[0].mxu0 %v3204
    %v3343 = vpop.f32.mrb[0].mxu0
    %v3344 = vadd.f32 0.0, %v3343
    %v3345 = vpop.f32.mrb[0].mxu0
    %v3346 = vadd.f32 0.0, %v3345
    %3347 = vdwg.mxu0
    %v3349 = vsel %vm3202, %v3167, 0
    %3351 = vmatprep.subr.mxu0 %v3160
    %3352 = vmatpush1.msra.mxu0 %v3159
    %3353 = vmatprep.subr.mxu0 %v3164
    %3354 = vmatpush1.msra.mxu0 %v3163
    %3355 = vmatprep.subr.mxu0 0.0
    %3356 = vmatpush1.msra.mxu0 0.0
    %3357 = vmatprep.subr.mxu0 0.0
    %3358 = vmatpush1.msra.mxu0 0.0
    %3359 = vmatprep.subr.mxu0 0.0
    %3360 = vmatpush1.msra.mxu0 0.0
    %3361 = vmatprep.subr.mxu0 0.0
    %3362 = vmatpush1.msra.mxu0 0.0
    %3363 = vmatprep.subr.mxu0 0.0
    %3364 = vmatpush1.msra.mxu0 0.0
    %3365 = vmatprep.subr.mxu0 0.0
    %3366 = vmatpush1.msra.mxu0 0.0
    %3367 = vmatprep.subr.mxu0 0.0
    %3368 = vmatpush1.msra.mxu0 0.0
    %3369 = vmatprep.subr.mxu0 0.0
    %3370 = vmatpush1.msra.mxu0 0.0
    %3371 = vmatprep.subr.mxu0 0.0
    %3372 = vmatpush1.msra.mxu0 0.0
    %3373 = vmatprep.subr.mxu0 0.0
    %3374 = vmatpush1.msra.mxu0 0.0
    %3375 = vmatprep.subr.mxu0 0.0
    %3376 = vmatpush1.msra.mxu0 0.0
    %3377 = vmatprep.subr.mxu0 0.0
    %3378 = vmatpush1.msra.mxu0 0.0
    %3379 = vmatprep.subr.mxu0 0.0
    %3380 = vmatpush1.msra.mxu0 0.0
    %3381 = vmatprep.subr.mxu0 0.0
    %3382 = vmatpush1.msra.mxu0 0.0
    %3383 = vmatprep.subr.mxu0 0.0
    %3384 = vmatpush1.msra.mxu0 0.0
    %3385 = vmatprep.subr.mxu0 0.0
    %3386 = vmatpush1.msra.mxu0 0.0
    %3387 = vmatprep.subr.mxu0 0.0
    %3388 = vmatpush1.msra.mxu0 0.0
    %3389 = vmatprep.subr.mxu0 0.0
    %3390 = vmatpush1.msra.mxu0 0.0
    %3391 = vmatprep.subr.mxu0 0.0
    %3392 = vmatpush1.msra.mxu0 0.0
    %3393 = vmatprep.subr.mxu0 0.0
    %3394 = vmatpush1.msra.mxu0 0.0
    %3395 = vmatprep.subr.mxu0 0.0
    %3396 = vmatpush1.msra.mxu0 0.0
    %3397 = vmatprep.subr.mxu0 0.0
    %3398 = vmatpush1.msra.mxu0 0.0
    %3399 = vmatprep.subr.mxu0 0.0
    %3400 = vmatpush1.msra.mxu0 0.0
    %3401 = vmatprep.subr.mxu0 0.0
    %3402 = vmatpush1.msra.mxu0 0.0
    %3403 = vmatprep.subr.mxu0 0.0
    %3404 = vmatpush1.msra.mxu0 0.0
    %3405 = vmatprep.subr.mxu0 0.0
    %3406 = vmatpush1.msra.mxu0 0.0
    %3407 = vmatprep.subr.mxu0 0.0
    %3408 = vmatpush1.msra.mxu0 0.0
    %3409 = vmatprep.subr.mxu0 0.0
    %3410 = vmatpush1.msra.mxu0 0.0
    %3411 = vmatprep.subr.mxu0 0.0
    %3412 = vmatpush1.msra.mxu0 0.0
    %3413 = vmatprep.subr.mxu0 0.0
    %3414 = vmatpush1.msra.mxu0 0.0
    %3415 = vmatprep.mubr.f32.mxu0 0.0
    %3416 = vmatmul.mubr.f32.gmra.mrb[0].mxu0 %v3349
    %v3417 = vpop.f32.mrb[0].mxu0
    %v3418 = vadd.f32 %v3273, %v3417
    %v3419 = vpop.f32.mrb[0].mxu0
    %v3420 = vadd.f32 %v3275, %v3419
    %3421 = vdwg.mxu0
    %3422 = vmatprep.subr.mxu0 %v3162
    %3423 = vmatpush1.msra.mxu0 %v3161
    %3424 = vmatprep.subr.mxu0 %v3166
    %3425 = vmatpush1.msra.mxu0 %v3165
    %3426 = vmatprep.subr.mxu0 0.0
    %3427 = vmatpush1.msra.mxu0 0.0
    %3428 = vmatprep.subr.mxu0 0.0
    %3429 = vmatpush1.msra.mxu0 0.0
    %3430 = vmatprep.subr.mxu0 0.0
    %3431 = vmatpush1.msra.mxu0 0.0
    %3432 = vmatprep.subr.mxu0 0.0
    %3433 = vmatpush1.msra.mxu0 0.0
    %3434 = vmatprep.subr.mxu0 0.0
    %3435 = vmatpush1.msra.mxu0 0.0
    %3436 = vmatprep.subr.mxu0 0.0
    %3437 = vmatpush1.msra.mxu0 0.0
    %3438 = vmatprep.subr.mxu0 0.0
    %3439 = vmatpush1.msra.mxu0 0.0
    %3440 = vmatprep.subr.mxu0 0.0
    %3441 = vmatpush1.msra.mxu0 0.0
    %3442 = vmatprep.subr.mxu0 0.0
    %3443 = vmatpush1.msra.mxu0 0.0
    %3444 = vmatprep.subr.mxu0 0.0
    %3445 = vmatpush1.msra.mxu0 0.0
    %3446 = vmatprep.subr.mxu0 0.0
    %3447 = vmatpush1.msra.mxu0 0.0
    %3448 = vmatprep.subr.mxu0 0.0
    %3449 = vmatpush1.msra.mxu0 0.0
    %3450 = vmatprep.subr.mxu0 0.0
    %3451 = vmatpush1.msra.mxu0 0.0
    %3452 = vmatprep.subr.mxu0 0.0
    %3453 = vmatpush1.msra.mxu0 0.0
    %3454 = vmatprep.subr.mxu0 0.0
    %3455 = vmatpush1.msra.mxu0 0.0
    %3456 = vmatprep.subr.mxu0 0.0
    %3457 = vmatpush1.msra.mxu0 0.0
    %3458 = vmatprep.subr.mxu0 0.0
    %3459 = vmatpush1.msra.mxu0 0.0
    %3460 = vmatprep.subr.mxu0 0.0
    %3461 = vmatpush1.msra.mxu0 0.0
    %3462 = vmatprep.subr.mxu0 0.0
    %3463 = vmatpush1.msra.mxu0 0.0
    %3464 = vmatprep.subr.mxu0 0.0
    %3465 = vmatpush1.msra.mxu0 0.0
    %3466 = vmatprep.subr.mxu0 0.0
    %3467 = vmatpush1.msra.mxu0 0.0
    %3468 = vmatprep.subr.mxu0 0.0
    %3469 = vmatpush1.msra.mxu0 0.0
    %3470 = vmatprep.subr.mxu0 0.0
    %3471 = vmatpush1.msra.mxu0 0.0
    %3472 = vmatprep.subr.mxu0 0.0
    %3473 = vmatpush1.msra.mxu0 0.0
    %3474 = vmatprep.subr.mxu0 0.0
    %3475 = vmatpush1.msra.mxu0 0.0
    %3476 = vmatprep.subr.mxu0 0.0
    %3477 = vmatpush1.msra.mxu0 0.0
    %3478 = vmatprep.subr.mxu0 0.0
    %3479 = vmatpush1.msra.mxu0 0.0
    %3480 = vmatprep.subr.mxu0 0.0
    %3481 = vmatpush1.msra.mxu0 0.0
    %3482 = vmatprep.subr.mxu0 0.0
    %3483 = vmatpush1.msra.mxu0 0.0
    %3484 = vmatprep.subr.mxu0 0.0
    %3485 = vmatpush1.msra.mxu0 0.0
    %3486 = vmatprep.mubr.f32.mxu0 0.0
    %3487 = vmatmul.mubr.f32.gmra.mrb[0].mxu0 %v3349
    %v3488 = vpop.f32.mrb[0].mxu0
    %v3489 = vadd.f32 %v3344, %v3488
    %v3490 = vpop.f32.mrb[0].mxu0
    %v3491 = vadd.f32 %v3346, %v3490
    %3492 = vdwg.mxu0
    %3493 = vrot.lane.b32.xlu0 %v3118, 15
    %v3494 = vpop.permute.xlu0 %3493
    %3495 = vrot.lane.b32.xlu0 %v3122, 15
    %v3496 = vpop.permute.xlu0 %3495
    %3497 = vrot.lane.b32.xlu0 %v3119, 15
    %v3498 = vpop.permute.xlu0 %3497
    %3499 = vrot.lane.b32.xlu0 %v3123, 15
    %v3500 = vpop.permute.xlu0 %3499
    %3501 = vrot.lane.b32.xlu0 %v3120, 15
    %v3502 = vpop.permute.xlu0 %3501
    %3503 = vrot.lane.b32.xlu0 %v3124, 15
    %v3504 = vpop.permute.xlu0 %3503
    %3505 = vrot.lane.b32.xlu0 %v3121, 15
    %v3506 = vpop.permute.xlu0 %3505
    %3507 = vrot.lane.b32.xlu0 %v3125, 15
    %v3508 = vpop.permute.xlu0 %3507
    %v3509 = vsel %vm298, %v3502, %v3506
    %v3510 = vsel %vm298, %v3504, %v3508
    %v3511 = vsel %vm298, %v3498, %v3502
    %v3512 = vsel %vm298, %v3500, %v3504
    %v3513 = vsel %vm298, %v3494, %v3498
    %v3514 = vsel %vm298, %v3496, %v3500
    %v3515 = vsel %vm298, %v3506, %v3494
    %v3516 = vsel %vm298, %v3508, %v3496
    %v3517 = vmul.f32 %v3515, %v144
    %v3518 = vmul.f32 %v3513, %v145
    %v3519 = vmul.f32 %v3511, %v146
    %v3520 = vmul.f32 %v3509, %v147
    %v3521 = vmul.f32 %v3516, %v144
    %v3522 = vmul.f32 %v3514, %v145
    %v3523 = vmul.f32 %v3512, %v146
    %v3524 = vmul.f32 %v3510, %v147
    %s3525 = scalar_lea.vmem [#allocation6], 16
    %v3526 = vld [vmem:[%s3525] sm:$0xff]
    %v3528 = vsel %vm3202, %v3526, 0
    %3530 = vmatprep.subr.mxu0 %v3518
    %3531 = vmatpush1.msra.mxu0 %v3517
    %3532 = vmatprep.subr.mxu0 %v3522
    %3533 = vmatpush1.msra.mxu0 %v3521
    %3534 = vmatprep.subr.mxu0 0.0
    %3535 = vmatpush1.msra.mxu0 0.0
    %3536 = vmatprep.subr.mxu0 0.0
    %3537 = vmatpush1.msra.mxu0 0.0
    %3538 = vmatprep.subr.mxu0 0.0
    %3539 = vmatpush1.msra.mxu0 0.0
    %3540 = vmatprep.subr.mxu0 0.0
    %3541 = vmatpush1.msra.mxu0 0.0
    %3542 = vmatprep.subr.mxu0 0.0
    %3543 = vmatpush1.msra.mxu0 0.0
    %3544 = vmatprep.subr.mxu0 0.0
    %3545 = vmatpush1.msra.mxu0 0.0
    %3546 = vmatprep.subr.mxu0 0.0
    %3547 = vmatpush1.msra.mxu0 0.0
    %3548 = vmatprep.subr.mxu0 0.0
    %3549 = vmatpush1.msra.mxu0 0.0
    %3550 = vmatprep.subr.mxu0 0.0
    %3551 = vmatpush1.msra.mxu0 0.0
    %3552 = vmatprep.subr.mxu0 0.0
    %3553 = vmatpush1.msra.mxu0 0.0
    %3554 = vmatprep.subr.mxu0 0.0
    %3555 = vmatpush1.msra.mxu0 0.0
    %3556 = vmatprep.subr.mxu0 0.0
    %3557 = vmatpush1.msra.mxu0 0.0
    %3558 = vmatprep.subr.mxu0 0.0
    %3559 = vmatpush1.msra.mxu0 0.0
    %3560 = vmatprep.subr.mxu0 0.0
    %3561 = vmatpush1.msra.mxu0 0.0
    %3562 = vmatprep.subr.mxu0 0.0
    %3563 = vmatpush1.msra.mxu0 0.0
    %3564 = vmatprep.subr.mxu0 0.0
    %3565 = vmatpush1.msra.mxu0 0.0
    %3566 = vmatprep.subr.mxu0 0.0
    %3567 = vmatpush1.msra.mxu0 0.0
    %3568 = vmatprep.subr.mxu0 0.0
    %3569 = vmatpush1.msra.mxu0 0.0
    %3570 = vmatprep.subr.mxu0 0.0
    %3571 = vmatpush1.msra.mxu0 0.0
    %3572 = vmatprep.subr.mxu0 0.0
    %3573 = vmatpush1.msra.mxu0 0.0
    %3574 = vmatprep.subr.mxu0 0.0
    %3575 = vmatpush1.msra.mxu0 0.0
    %3576 = vmatprep.subr.mxu0 0.0
    %3577 = vmatpush1.msra.mxu0 0.0
    %3578 = vmatprep.subr.mxu0 0.0
    %3579 = vmatpush1.msra.mxu0 0.0
    %3580 = vmatprep.subr.mxu0 0.0
    %3581 = vmatpush1.msra.mxu0 0.0
    %3582 = vmatprep.subr.mxu0 0.0
    %3583 = vmatpush1.msra.mxu0 0.0
    %3584 = vmatprep.subr.mxu0 0.0
    %3585 = vmatpush1.msra.mxu0 0.0
    %3586 = vmatprep.subr.mxu0 0.0
    %3587 = vmatpush1.msra.mxu0 0.0
    %3588 = vmatprep.subr.mxu0 0.0
    %3589 = vmatpush1.msra.mxu0 0.0
    %3590 = vmatprep.subr.mxu0 0.0
    %3591 = vmatpush1.msra.mxu0 0.0
    %3592 = vmatprep.subr.mxu0 0.0
    %3593 = vmatpush1.msra.mxu0 0.0
    %3594 = vmatprep.mubr.f32.mxu0 0.0
    %3595 = vmatmul.mubr.f32.gmra.mrb[0].mxu0 %v3528
    %v3596 = vpop.f32.mrb[0].mxu0
    %v3597 = vadd.f32 0.0, %v3596
    %v3598 = vpop.f32.mrb[0].mxu0
    %v3599 = vadd.f32 0.0, %v3598
    %3600 = vdwg.mxu0
    %3601 = vmatprep.subr.mxu0 %v3520
    %3602 = vmatpush1.msra.mxu0 %v3519
    %3603 = vmatprep.subr.mxu0 %v3524
    %3604 = vmatpush1.msra.mxu0 %v3523
    %3605 = vmatprep.subr.mxu0 0.0
    %3606 = vmatpush1.msra.mxu0 0.0
    %3607 = vmatprep.subr.mxu0 0.0
    %3608 = vmatpush1.msra.mxu0 0.0
    %3609 = vmatprep.subr.mxu0 0.0
    %3610 = vmatpush1.msra.mxu0 0.0
    %3611 = vmatprep.subr.mxu0 0.0
    %3612 = vmatpush1.msra.mxu0 0.0
    %3613 = vmatprep.subr.mxu0 0.0
    %3614 = vmatpush1.msra.mxu0 0.0
    %3615 = vmatprep.subr.mxu0 0.0
    %3616 = vmatpush1.msra.mxu0 0.0
    %3617 = vmatprep.subr.mxu0 0.0
    %3618 = vmatpush1.msra.mxu0 0.0
    %3619 = vmatprep.subr.mxu0 0.0
    %3620 = vmatpush1.msra.mxu0 0.0
    %3621 = vmatprep.subr.mxu0 0.0
    %3622 = vmatpush1.msra.mxu0 0.0
    %3623 = vmatprep.subr.mxu0 0.0
    %3624 = vmatpush1.msra.mxu0 0.0
    %3625 = vmatprep.subr.mxu0 0.0
    %3626 = vmatpush1.msra.mxu0 0.0
    %3627 = vmatprep.subr.mxu0 0.0
    %3628 = vmatpush1.msra.mxu0 0.0
    %3629 = vmatprep.subr.mxu0 0.0
    %3630 = vmatpush1.msra.mxu0 0.0
    %3631 = vmatprep.subr.mxu0 0.0
    %3632 = vmatpush1.msra.mxu0 0.0
    %3633 = vmatprep.subr.mxu0 0.0
    %3634 = vmatpush1.msra.mxu0 0.0
    %3635 = vmatprep.subr.mxu0 0.0
    %3636 = vmatpush1.msra.mxu0 0.0
    %3637 = vmatprep.subr.mxu0 0.0
    %3638 = vmatpush1.msra.mxu0 0.0
    %3639 = vmatprep.subr.mxu0 0.0
    %3640 = vmatpush1.msra.mxu0 0.0
    %3641 = vmatprep.subr.mxu0 0.0
    %3642 = vmatpush1.msra.mxu0 0.0
    %3643 = vmatprep.subr.mxu0 0.0
    %3644 = vmatpush1.msra.mxu0 0.0
    %3645 = vmatprep.subr.mxu0 0.0
    %3646 = vmatpush1.msra.mxu0 0.0
    %3647 = vmatprep.subr.mxu0 0.0
    %3648 = vmatpush1.msra.mxu0 0.0
    %3649 = vmatprep.subr.mxu0 0.0
    %3650 = vmatpush1.msra.mxu0 0.0
    %3651 = vmatprep.subr.mxu0 0.0
    %3652 = vmatpush1.msra.mxu0 0.0
    %3653 = vmatprep.subr.mxu0 0.0
    %3654 = vmatpush1.msra.mxu0 0.0
    %3655 = vmatprep.subr.mxu0 0.0
    %3656 = vmatpush1.msra.mxu0 0.0
    %3657 = vmatprep.subr.mxu0 0.0
    %3658 = vmatpush1.msra.mxu0 0.0
    %3659 = vmatprep.subr.mxu0 0.0
    %3660 = vmatpush1.msra.mxu0 0.0
    %3661 = vmatprep.subr.mxu0 0.0
    %3662 = vmatpush1.msra.mxu0 0.0
    %3663 = vmatprep.subr.mxu0 0.0
    %3664 = vmatpush1.msra.mxu0 0.0
    %3665 = vmatprep.mubr.f32.mxu0 0.0
    %3666 = vmatmul.mubr.f32.gmra.mrb[0].mxu0 %v3528
    %v3667 = vpop.f32.mrb[0].mxu0
    %v3668 = vadd.f32 0.0, %v3667
    %v3669 = vpop.f32.mrb[0].mxu0
    %v3670 = vadd.f32 0.0, %v3669
    %3671 = vdwg.mxu0
    %v3672 = vadd.f32 %v3418, %v3597
    %v3673 = vadd.f32 %v3420, %v3599
    %v3674 = vadd.f32 %v3489, %v3668
    %v3675 = vadd.f32 %v3491, %v3670
    %3676 = vrot.lane.b32.xlu0 %v3118, 1
    %v3677 = vpop.permute.xlu0 %3676
    %3678 = vrot.lane.b32.xlu0 %v3122, 1
    %v3679 = vpop.permute.xlu0 %3678
    %3680 = vrot.lane.b32.xlu0 %v3119, 1
    %v3681 = vpop.permute.xlu0 %3680
    %3682 = vrot.lane.b32.xlu0 %v3123, 1
    %v3683 = vpop.permute.xlu0 %3682
    %3684 = vrot.lane.b32.xlu0 %v3120, 1
    %v3685 = vpop.permute.xlu0 %3684
    %3686 = vrot.lane.b32.xlu0 %v3124, 1
    %v3687 = vpop.permute.xlu0 %3686
    %3688 = vrot.lane.b32.xlu0 %v3121, 1
    %v3689 = vpop.permute.xlu0 %3688
    %3690 = vrot.lane.b32.xlu0 %v3125, 1
    %v3691 = vpop.permute.xlu0 %3690
    %v3692 = vsel %vm346, %v3685, %v3689
    %v3693 = vsel %vm346, %v3687, %v3691
    %v3694 = vsel %vm346, %v3681, %v3685
    %v3695 = vsel %vm346, %v3683, %v3687
    %v3696 = vsel %vm346, %v3677, %v3681
    %v3697 = vsel %vm346, %v3679, %v3683
    %v3698 = vsel %vm346, %v3689, %v3677
    %v3699 = vsel %vm346, %v3691, %v3679
    %v3700 = vmul.f32 %v3698, %v124
    %v3701 = vmul.f32 %v3696, %v125
    %v3702 = vmul.f32 %v3694, %v126
    %v3703 = vmul.f32 %v3692, %v127
    %v3704 = vmul.f32 %v3699, %v124
    %v3705 = vmul.f32 %v3697, %v125
    %v3706 = vmul.f32 %v3695, %v126
    %v3707 = vmul.f32 %v3693, %v127
    %s3708 = scalar_lea.vmem [#allocation6], 24
    %v3709 = vld [vmem:[%s3708] sm:$0xff]
    %v3711 = vsel %vm3202, %v3709, 0
    %3713 = vmatprep.subr.mxu0 %v3701
    %3714 = vmatpush1.msra.mxu0 %v3700
    %3715 = vmatprep.subr.mxu0 %v3705
    %3716 = vmatpush1.msra.mxu0 %v3704
    %3717 = vmatprep.subr.mxu0 0.0
    %3718 = vmatpush1.msra.mxu0 0.0
    %3719 = vmatprep.subr.mxu0 0.0
    %3720 = vmatpush1.msra.mxu0 0.0
    %3721 = vmatprep.subr.mxu0 0.0
    %3722 = vmatpush1.msra.mxu0 0.0
    %3723 = vmatprep.subr.mxu0 0.0
    %3724 = vmatpush1.msra.mxu0 0.0
    %3725 = vmatprep.subr.mxu0 0.0
    %3726 = vmatpush1.msra.mxu0 0.0
    %3727 = vmatprep.subr.mxu0 0.0
    %3728 = vmatpush1.msra.mxu0 0.0
    %3729 = vmatprep.subr.mxu0 0.0
    %3730 = vmatpush1.msra.mxu0 0.0
    %3731 = vmatprep.subr.mxu0 0.0
    %3732 = vmatpush1.msra.mxu0 0.0
    %3733 = vmatprep.subr.mxu0 0.0
    %3734 = vmatpush1.msra.mxu0 0.0
    %3735 = vmatprep.subr.mxu0 0.0
    %3736 = vmatpush1.msra.mxu0 0.0
    %3737 = vmatprep.subr.mxu0 0.0
    %3738 = vmatpush1.msra.mxu0 0.0
    %3739 = vmatprep.subr.mxu0 0.0
    %3740 = vmatpush1.msra.mxu0 0.0
    %3741 = vmatprep.subr.mxu0 0.0
    %3742 = vmatpush1.msra.mxu0 0.0
    %3743 = vmatprep.subr.mxu0 0.0
    %3744 = vmatpush1.msra.mxu0 0.0
    %3745 = vmatprep.subr.mxu0 0.0
    %3746 = vmatpush1.msra.mxu0 0.0
    %3747 = vmatprep.subr.mxu0 0.0
    %3748 = vmatpush1.msra.mxu0 0.0
    %3749 = vmatprep.subr.mxu0 0.0
    %3750 = vmatpush1.msra.mxu0 0.0
    %3751 = vmatprep.subr.mxu0 0.0
    %3752 = vmatpush1.msra.mxu0 0.0
    %3753 = vmatprep.subr.mxu0 0.0
    %3754 = vmatpush1.msra.mxu0 0.0
    %3755 = vmatprep.subr.mxu0 0.0
    %3756 = vmatpush1.msra.mxu0 0.0
    %3757 = vmatprep.subr.mxu0 0.0
    %3758 = vmatpush1.msra.mxu0 0.0
    %3759 = vmatprep.subr.mxu0 0.0
    %3760 = vmatpush1.msra.mxu0 0.0
    %3761 = vmatprep.subr.mxu0 0.0
    %3762 = vmatpush1.msra.mxu0 0.0
    %3763 = vmatprep.subr.mxu0 0.0
    %3764 = vmatpush1.msra.mxu0 0.0
    %3765 = vmatprep.subr.mxu0 0.0
    %3766 = vmatpush1.msra.mxu0 0.0
    %3767 = vmatprep.subr.mxu0 0.0
    %3768 = vmatpush1.msra.mxu0 0.0
    %3769 = vmatprep.subr.mxu0 0.0
    %3770 = vmatpush1.msra.mxu0 0.0
    %3771 = vmatprep.subr.mxu0 0.0
    %3772 = vmatpush1.msra.mxu0 0.0
    %3773 = vmatprep.subr.mxu0 0.0
    %3774 = vmatpush1.msra.mxu0 0.0
    %3775 = vmatprep.subr.mxu0 0.0
    %3776 = vmatpush1.msra.mxu0 0.0
    %3777 = vmatprep.mubr.f32.mxu0 0.0
    %3778 = vmatmul.mubr.f32.gmra.mrb[0].mxu0 %v3711
    %v3779 = vpop.f32.mrb[0].mxu0
    %v3780 = vadd.f32 0.0, %v3779
    %v3781 = vpop.f32.mrb[0].mxu0
    %v3782 = vadd.f32 0.0, %v3781
    %3783 = vdwg.mxu0
    %3784 = vmatprep.subr.mxu0 %v3703
    %3785 = vmatpush1.msra.mxu0 %v3702
    %3786 = vmatprep.subr.mxu0 %v3707
    %3787 = vmatpush1.msra.mxu0 %v3706
    %3788 = vmatprep.subr.mxu0 0.0
    %3789 = vmatpush1.msra.mxu0 0.0
    %3790 = vmatprep.subr.mxu0 0.0
    %3791 = vmatpush1.msra.mxu0 0.0
    %3792 = vmatprep.subr.mxu0 0.0
    %3793 = vmatpush1.msra.mxu0 0.0
    %3794 = vmatprep.subr.mxu0 0.0
    %3795 = vmatpush1.msra.mxu0 0.0
    %3796 = vmatprep.subr.mxu0 0.0
    %3797 = vmatpush1.msra.mxu0 0.0
    %3798 = vmatprep.subr.mxu0 0.0
    %3799 = vmatpush1.msra.mxu0 0.0
    %3800 = vmatprep.subr.mxu0 0.0
    %3801 = vmatpush1.msra.mxu0 0.0
    %3802 = vmatprep.subr.mxu0 0.0
    %3803 = vmatpush1.msra.mxu0 0.0
    %3804 = vmatprep.subr.mxu0 0.0
    %3805 = vmatpush1.msra.mxu0 0.0
    %3806 = vmatprep.subr.mxu0 0.0
    %3807 = vmatpush1.msra.mxu0 0.0
    %3808 = vmatprep.subr.mxu0 0.0
    %3809 = vmatpush1.msra.mxu0 0.0
    %3810 = vmatprep.subr.mxu0 0.0
    %3811 = vmatpush1.msra.mxu0 0.0
    %3812 = vmatprep.subr.mxu0 0.0
    %3813 = vmatpush1.msra.mxu0 0.0
    %3814 = vmatprep.subr.mxu0 0.0
    %3815 = vmatpush1.msra.mxu0 0.0
    %3816 = vmatprep.subr.mxu0 0.0
    %3817 = vmatpush1.msra.mxu0 0.0
    %3818 = vmatprep.subr.mxu0 0.0
    %3819 = vmatpush1.msra.mxu0 0.0
    %3820 = vmatprep.subr.mxu0 0.0
    %3821 = vmatpush1.msra.mxu0 0.0
    %3822 = vmatprep.subr.mxu0 0.0
    %3823 = vmatpush1.msra.mxu0 0.0
    %3824 = vmatprep.subr.mxu0 0.0
    %3825 = vmatpush1.msra.mxu0 0.0
    %3826 = vmatprep.subr.mxu0 0.0
    %3827 = vmatpush1.msra.mxu0 0.0
    %3828 = vmatprep.subr.mxu0 0.0
    %3829 = vmatpush1.msra.mxu0 0.0
    %3830 = vmatprep.subr.mxu0 0.0
    %3831 = vmatpush1.msra.mxu0 0.0
    %3832 = vmatprep.subr.mxu0 0.0
    %3833 = vmatpush1.msra.mxu0 0.0
    %3834 = vmatprep.subr.mxu0 0.0
    %3835 = vmatpush1.msra.mxu0 0.0
    %3836 = vmatprep.subr.mxu0 0.0
    %3837 = vmatpush1.msra.mxu0 0.0
    %3838 = vmatprep.subr.mxu0 0.0
    %3839 = vmatpush1.msra.mxu0 0.0
    %3840 = vmatprep.subr.mxu0 0.0
    %3841 = vmatpush1.msra.mxu0 0.0
    %3842 = vmatprep.subr.mxu0 0.0
    %3843 = vmatpush1.msra.mxu0 0.0
    %3844 = vmatprep.subr.mxu0 0.0
    %3845 = vmatpush1.msra.mxu0 0.0
    %3846 = vmatprep.subr.mxu0 0.0
    %3847 = vmatpush1.msra.mxu0 0.0
    %3848 = vmatprep.mubr.f32.mxu0 0.0
    %3849 = vmatmul.mubr.f32.gmra.mrb[0].mxu0 %v3711
    %v3850 = vpop.f32.mrb[0].mxu0
    %v3851 = vadd.f32 0.0, %v3850
    %v3852 = vpop.f32.mrb[0].mxu0
    %v3853 = vadd.f32 0.0, %v3852
    %3854 = vdwg.mxu0
    %v3855 = vadd.f32 %v3672, %v3780
    %v3856 = vadd.f32 %v3673, %v3782
    %v3857 = vadd.f32 %v3674, %v3851
    %v3858 = vadd.f32 %v3675, %v3853
    %s3859 = scalar_lea.vmem [#allocation6], 32
    %v3860 = vld [vmem:[%s3859] sm:$0xff]
    %v3862 = vsel %vm3202, %v3860, 0
    %3864 = vmatprep.subr.mxu0 %v3119
    %3865 = vmatpush1.msra.mxu0 %v3118
    %3866 = vmatprep.subr.mxu0 %v3123
    %3867 = vmatpush1.msra.mxu0 %v3122
    %3868 = vmatprep.subr.mxu0 0.0
    %3869 = vmatpush1.msra.mxu0 0.0
    %3870 = vmatprep.subr.mxu0 0.0
    %3871 = vmatpush1.msra.mxu0 0.0
    %3872 = vmatprep.subr.mxu0 0.0
    %3873 = vmatpush1.msra.mxu0 0.0
    %3874 = vmatprep.subr.mxu0 0.0
    %3875 = vmatpush1.msra.mxu0 0.0
    %3876 = vmatprep.subr.mxu0 0.0
    %3877 = vmatpush1.msra.mxu0 0.0
    %3878 = vmatprep.subr.mxu0 0.0
    %3879 = vmatpush1.msra.mxu0 0.0
    %3880 = vmatprep.subr.mxu0 0.0
    %3881 = vmatpush1.msra.mxu0 0.0
    %3882 = vmatprep.subr.mxu0 0.0
    %3883 = vmatpush1.msra.mxu0 0.0
    %3884 = vmatprep.subr.mxu0 0.0
    %3885 = vmatpush1.msra.mxu0 0.0
    %3886 = vmatprep.subr.mxu0 0.0
    %3887 = vmatpush1.msra.mxu0 0.0
    %3888 = vmatprep.subr.mxu0 0.0
    %3889 = vmatpush1.msra.mxu0 0.0
    %3890 = vmatprep.subr.mxu0 0.0
    %3891 = vmatpush1.msra.mxu0 0.0
    %3892 = vmatprep.subr.mxu0 0.0
    %3893 = vmatpush1.msra.mxu0 0.0
    %3894 = vmatprep.subr.mxu0 0.0
    %3895 = vmatpush1.msra.mxu0 0.0
    %3896 = vmatprep.subr.mxu0 0.0
    %3897 = vmatpush1.msra.mxu0 0.0
    %3898 = vmatprep.subr.mxu0 0.0
    %3899 = vmatpush1.msra.mxu0 0.0
    %3900 = vmatprep.subr.mxu0 0.0
    %3901 = vmatpush1.msra.mxu0 0.0
    %3902 = vmatprep.subr.mxu0 0.0
    %3903 = vmatpush1.msra.mxu0 0.0
    %3904 = vmatprep.subr.mxu0 0.0
    %3905 = vmatpush1.msra.mxu0 0.0
    %3906 = vmatprep.subr.mxu0 0.0
    %3907 = vmatpush1.msra.mxu0 0.0
    %3908 = vmatprep.subr.mxu0 0.0
    %3909 = vmatpush1.msra.mxu0 0.0
    %3910 = vmatprep.subr.mxu0 0.0
    %3911 = vmatpush1.msra.mxu0 0.0
    %3912 = vmatprep.subr.mxu0 0.0
    %3913 = vmatpush1.msra.mxu0 0.0
    %3914 = vmatprep.subr.mxu0 0.0
    %3915 = vmatpush1.msra.mxu0 0.0
    %3916 = vmatprep.subr.mxu0 0.0
    %3917 = vmatpush1.msra.mxu0 0.0
    %3918 = vmatprep.subr.mxu0 0.0
    %3919 = vmatpush1.msra.mxu0 0.0
    %3920 = vmatprep.subr.mxu0 0.0
    %3921 = vmatpush1.msra.mxu0 0.0
    %3922 = vmatprep.subr.mxu0 0.0
    %3923 = vmatpush1.msra.mxu0 0.0
    %3924 = vmatprep.subr.mxu0 0.0
    %3925 = vmatpush1.msra.mxu0 0.0
    %3926 = vmatprep.subr.mxu0 0.0
    %3927 = vmatpush1.msra.mxu0 0.0
    %3928 = vmatprep.mubr.f32.mxu0 0.0
    %3929 = vmatmul.mubr.f32.gmra.mrb[0].mxu0 %v3862
    %v3930 = vpop.f32.mrb[0].mxu0
    %v3931 = vadd.f32 0.0, %v3930
    %v3932 = vpop.f32.mrb[0].mxu0
    %v3933 = vadd.f32 0.0, %v3932
    %3934 = vdwg.mxu0
    %3935 = vmatprep.subr.mxu0 %v3121
    %3936 = vmatpush1.msra.mxu0 %v3120
    %3937 = vmatprep.subr.mxu0 %v3125
    %3938 = vmatpush1.msra.mxu0 %v3124
    %3939 = vmatprep.subr.mxu0 0.0
    %3940 = vmatpush1.msra.mxu0 0.0
    %3941 = vmatprep.subr.mxu0 0.0
    %3942 = vmatpush1.msra.mxu0 0.0
    %3943 = vmatprep.subr.mxu0 0.0
    %3944 = vmatpush1.msra.mxu0 0.0
    %3945 = vmatprep.subr.mxu0 0.0
    %3946 = vmatpush1.msra.mxu0 0.0
    %3947 = vmatprep.subr.mxu0 0.0
    %3948 = vmatpush1.msra.mxu0 0.0
    %3949 = vmatprep.subr.mxu0 0.0
    %3950 = vmatpush1.msra.mxu0 0.0
    %3951 = vmatprep.subr.mxu0 0.0
    %3952 = vmatpush1.msra.mxu0 0.0
    %3953 = vmatprep.subr.mxu0 0.0
    %3954 = vmatpush1.msra.mxu0 0.0
    %3955 = vmatprep.subr.mxu0 0.0
    %3956 = vmatpush1.msra.mxu0 0.0
    %3957 = vmatprep.subr.mxu0 0.0
    %3958 = vmatpush1.msra.mxu0 0.0
    %3959 = vmatprep.subr.mxu0 0.0
    %3960 = vmatpush1.msra.mxu0 0.0
    %3961 = vmatprep.subr.mxu0 0.0
    %3962 = vmatpush1.msra.mxu0 0.0
    %3963 = vmatprep.subr.mxu0 0.0
    %3964 = vmatpush1.msra.mxu0 0.0
    %3965 = vmatprep.subr.mxu0 0.0
    %3966 = vmatpush1.msra.mxu0 0.0
    %3967 = vmatprep.subr.mxu0 0.0
    %3968 = vmatpush1.msra.mxu0 0.0
    %3969 = vmatprep.subr.mxu0 0.0
    %3970 = vmatpush1.msra.mxu0 0.0
    %3971 = vmatprep.subr.mxu0 0.0
    %3972 = vmatpush1.msra.mxu0 0.0
    %3973 = vmatprep.subr.mxu0 0.0
    %3974 = vmatpush1.msra.mxu0 0.0
    %3975 = vmatprep.subr.mxu0 0.0
    %3976 = vmatpush1.msra.mxu0 0.0
    %3977 = vmatprep.subr.mxu0 0.0
    %3978 = vmatpush1.msra.mxu0 0.0
    %3979 = vmatprep.subr.mxu0 0.0
    %3980 = vmatpush1.msra.mxu0 0.0
    %3981 = vmatprep.subr.mxu0 0.0
    %3982 = vmatpush1.msra.mxu0 0.0
    %3983 = vmatprep.subr.mxu0 0.0
    %3984 = vmatpush1.msra.mxu0 0.0
    %3985 = vmatprep.subr.mxu0 0.0
    %3986 = vmatpush1.msra.mxu0 0.0
    %3987 = vmatprep.subr.mxu0 0.0
    %3988 = vmatpush1.msra.mxu0 0.0
    %3989 = vmatprep.subr.mxu0 0.0
    %3990 = vmatpush1.msra.mxu0 0.0
    %3991 = vmatprep.subr.mxu0 0.0
    %3992 = vmatpush1.msra.mxu0 0.0
    %3993 = vmatprep.subr.mxu0 0.0
    %3994 = vmatpush1.msra.mxu0 0.0
    %3995 = vmatprep.subr.mxu0 0.0
    %3996 = vmatpush1.msra.mxu0 0.0
    %3997 = vmatprep.subr.mxu0 0.0
    %3998 = vmatpush1.msra.mxu0 0.0
    %3999 = vmatprep.mubr.f32.mxu0 0.0
    %4000 = vmatmul.mubr.f32.gmra.mrb[0].mxu0 %v3862
    %v4001 = vpop.f32.mrb[0].mxu0
    %v4002 = vadd.f32 0.0, %v4001
    %v4003 = vpop.f32.mrb[0].mxu0
    %v4004 = vadd.f32 0.0, %v4003
    %4005 = vdwg.mxu0
    %v4006 = vadd.f32 %v3855, %v3931
    %v4007 = vadd.f32 %v3856, %v3933
    %v4008 = vadd.f32 %v3857, %v4002
    %v4009 = vadd.f32 %v3858, %v4004
    %4010 = vrot.lane.b32.xlu0 %v3118, 127
    %v4011 = vpop.permute.xlu0 %4010
    %4012 = vrot.lane.b32.xlu0 %v3122, 127
    %v4013 = vpop.permute.xlu0 %4012
    %4014 = vrot.lane.b32.xlu0 %v3119, 127
    %v4015 = vpop.permute.xlu0 %4014
    %4016 = vrot.lane.b32.xlu0 %v3123, 127
    %v4017 = vpop.permute.xlu0 %4016
    %4018 = vrot.lane.b32.xlu0 %v3120, 127
    %v4019 = vpop.permute.xlu0 %4018
    %4020 = vrot.lane.b32.xlu0 %v3124, 127
    %v4021 = vpop.permute.xlu0 %4020
    %4022 = vrot.lane.b32.xlu0 %v3121, 127
    %v4023 = vpop.permute.xlu0 %4022
    %4024 = vrot.lane.b32.xlu0 %v3125, 127
    %v4025 = vpop.permute.xlu0 %4024
    %v4026 = vsel %vm409, %v4019, %v4023
    %v4027 = vsel %vm409, %v4021, %v4025
    %v4028 = vsel %vm409, %v4015, %v4019
    %v4029 = vsel %vm409, %v4017, %v4021
    %v4030 = vsel %vm409, %v4011, %v4015
    %v4031 = vsel %vm409, %v4013, %v4017
    %v4032 = vsel %vm409, %v4023, %v4011
    %v4033 = vsel %vm409, %v4025, %v4013
    %v4034 = vmul.f32 %v4030, %v136
    %v4035 = vmul.f32 %v4028, %v137
    %v4036 = vmul.f32 %v4026, %v138
    %v4037 = vmul.f32 %v4032, %v139
    %v4038 = vmul.f32 %v4031, %v136
    %v4039 = vmul.f32 %v4029, %v137
    %v4040 = vmul.f32 %v4027, %v138
    %v4041 = vmul.f32 %v4033, %v139
    %s4042 = scalar_lea.vmem [#allocation6], 40
    %v4043 = vld [vmem:[%s4042] sm:$0xff]
    %v4045 = vsel %vm3202, %v4043, 0
    %4047 = vmatprep.subr.mxu0 %v4035
    %4048 = vmatpush1.msra.mxu0 %v4034
    %4049 = vmatprep.subr.mxu0 %v4039
    %4050 = vmatpush1.msra.mxu0 %v4038
    %4051 = vmatprep.subr.mxu0 0.0
    %4052 = vmatpush1.msra.mxu0 0.0
    %4053 = vmatprep.subr.mxu0 0.0
    %4054 = vmatpush1.msra.mxu0 0.0
    %4055 = vmatprep.subr.mxu0 0.0
    %4056 = vmatpush1.msra.mxu0 0.0
    %4057 = vmatprep.subr.mxu0 0.0
    %4058 = vmatpush1.msra.mxu0 0.0
    %4059 = vmatprep.subr.mxu0 0.0
    %4060 = vmatpush1.msra.mxu0 0.0
    %4061 = vmatprep.subr.mxu0 0.0
    %4062 = vmatpush1.msra.mxu0 0.0
    %4063 = vmatprep.subr.mxu0 0.0
    %4064 = vmatpush1.msra.mxu0 0.0
    %4065 = vmatprep.subr.mxu0 0.0
    %4066 = vmatpush1.msra.mxu0 0.0
    %4067 = vmatprep.subr.mxu0 0.0
    %4068 = vmatpush1.msra.mxu0 0.0
    %4069 = vmatprep.subr.mxu0 0.0
    %4070 = vmatpush1.msra.mxu0 0.0
    %4071 = vmatprep.subr.mxu0 0.0
    %4072 = vmatpush1.msra.mxu0 0.0
    %4073 = vmatprep.subr.mxu0 0.0
    %4074 = vmatpush1.msra.mxu0 0.0
    %4075 = vmatprep.subr.mxu0 0.0
    %4076 = vmatpush1.msra.mxu0 0.0
    %4077 = vmatprep.subr.mxu0 0.0
    %4078 = vmatpush1.msra.mxu0 0.0
    %4079 = vmatprep.subr.mxu0 0.0
    %4080 = vmatpush1.msra.mxu0 0.0
    %4081 = vmatprep.subr.mxu0 0.0
    %4082 = vmatpush1.msra.mxu0 0.0
    %4083 = vmatprep.subr.mxu0 0.0
    %4084 = vmatpush1.msra.mxu0 0.0
    %4085 = vmatprep.subr.mxu0 0.0
    %4086 = vmatpush1.msra.mxu0 0.0
    %4087 = vmatprep.subr.mxu0 0.0
    %4088 = vmatpush1.msra.mxu0 0.0
    %4089 = vmatprep.subr.mxu0 0.0
    %4090 = vmatpush1.msra.mxu0 0.0
    %4091 = vmatprep.subr.mxu0 0.0
    %4092 = vmatpush1.msra.mxu0 0.0
    %4093 = vmatprep.subr.mxu0 0.0
    %4094 = vmatpush1.msra.mxu0 0.0
    %4095 = vmatprep.subr.mxu0 0.0
    %4096 = vmatpush1.msra.mxu0 0.0
    %4097 = vmatprep.subr.mxu0 0.0
    %4098 = vmatpush1.msra.mxu0 0.0
    %4099 = vmatprep.subr.mxu0 0.0
    %4100 = vmatpush1.msra.mxu0 0.0
    %4101 = vmatprep.subr.mxu0 0.0
    %4102 = vmatpush1.msra.mxu0 0.0
    %4103 = vmatprep.subr.mxu0 0.0
    %4104 = vmatpush1.msra.mxu0 0.0
    %4105 = vmatprep.subr.mxu0 0.0
    %4106 = vmatpush1.msra.mxu0 0.0
    %4107 = vmatprep.subr.mxu0 0.0
    %4108 = vmatpush1.msra.mxu0 0.0
    %4109 = vmatprep.subr.mxu0 0.0
    %4110 = vmatpush1.msra.mxu0 0.0
    %4111 = vmatprep.mubr.f32.mxu0 0.0
    %4112 = vmatmul.mubr.f32.gmra.mrb[0].mxu0 %v4045
    %v4113 = vpop.f32.mrb[0].mxu0
    %v4114 = vadd.f32 0.0, %v4113
    %v4115 = vpop.f32.mrb[0].mxu0
    %v4116 = vadd.f32 0.0, %v4115
    %4117 = vdwg.mxu0
    %4118 = vmatprep.subr.mxu0 %v4037
    %4119 = vmatpush1.msra.mxu0 %v4036
    %4120 = vmatprep.subr.mxu0 %v4041
    %4121 = vmatpush1.msra.mxu0 %v4040
    %4122 = vmatprep.subr.mxu0 0.0
    %4123 = vmatpush1.msra.mxu0 0.0
    %4124 = vmatprep.subr.mxu0 0.0
    %4125 = vmatpush1.msra.mxu0 0.0
    %4126 = vmatprep.subr.mxu0 0.0
    %4127 = vmatpush1.msra.mxu0 0.0
    %4128 = vmatprep.subr.mxu0 0.0
    %4129 = vmatpush1.msra.mxu0 0.0
    %4130 = vmatprep.subr.mxu0 0.0
    %4131 = vmatpush1.msra.mxu0 0.0
    %4132 = vmatprep.subr.mxu0 0.0
    %4133 = vmatpush1.msra.mxu0 0.0
    %4134 = vmatprep.subr.mxu0 0.0
    %4135 = vmatpush1.msra.mxu0 0.0
    %4136 = vmatprep.subr.mxu0 0.0
    %4137 = vmatpush1.msra.mxu0 0.0
    %4138 = vmatprep.subr.mxu0 0.0
    %4139 = vmatpush1.msra.mxu0 0.0
    %4140 = vmatprep.subr.mxu0 0.0
    %4141 = vmatpush1.msra.mxu0 0.0
    %4142 = vmatprep.subr.mxu0 0.0
    %4143 = vmatpush1.msra.mxu0 0.0
    %4144 = vmatprep.subr.mxu0 0.0
    %4145 = vmatpush1.msra.mxu0 0.0
    %4146 = vmatprep.subr.mxu0 0.0
    %4147 = vmatpush1.msra.mxu0 0.0
    %4148 = vmatprep.subr.mxu0 0.0
    %4149 = vmatpush1.msra.mxu0 0.0
    %4150 = vmatprep.subr.mxu0 0.0
    %4151 = vmatpush1.msra.mxu0 0.0
    %4152 = vmatprep.subr.mxu0 0.0
    %4153 = vmatpush1.msra.mxu0 0.0
    %4154 = vmatprep.subr.mxu0 0.0
    %4155 = vmatpush1.msra.mxu0 0.0
    %4156 = vmatprep.subr.mxu0 0.0
    %4157 = vmatpush1.msra.mxu0 0.0
    %4158 = vmatprep.subr.mxu0 0.0
    %4159 = vmatpush1.msra.mxu0 0.0
    %4160 = vmatprep.subr.mxu0 0.0
    %4161 = vmatpush1.msra.mxu0 0.0
    %4162 = vmatprep.subr.mxu0 0.0
    %4163 = vmatpush1.msra.mxu0 0.0
    %4164 = vmatprep.subr.mxu0 0.0
    %4165 = vmatpush1.msra.mxu0 0.0
    %4166 = vmatprep.subr.mxu0 0.0
    %4167 = vmatpush1.msra.mxu0 0.0
    %4168 = vmatprep.subr.mxu0 0.0
    %4169 = vmatpush1.msra.mxu0 0.0
    %4170 = vmatprep.subr.mxu0 0.0
    %4171 = vmatpush1.msra.mxu0 0.0
    %4172 = vmatprep.subr.mxu0 0.0
    %4173 = vmatpush1.msra.mxu0 0.0
    %4174 = vmatprep.subr.mxu0 0.0
    %4175 = vmatpush1.msra.mxu0 0.0
    %4176 = vmatprep.subr.mxu0 0.0
    %4177 = vmatpush1.msra.mxu0 0.0
    %4178 = vmatprep.subr.mxu0 0.0
    %4179 = vmatpush1.msra.mxu0 0.0
    %4180 = vmatprep.subr.mxu0 0.0
    %4181 = vmatpush1.msra.mxu0 0.0
    %4182 = vmatprep.mubr.f32.mxu0 0.0
    %4183 = vmatmul.mubr.f32.gmra.mrb[0].mxu0 %v4045
    %v4184 = vpop.f32.mrb[0].mxu0
    %v4185 = vadd.f32 0.0, %v4184
    %v4186 = vpop.f32.mrb[0].mxu0
    %v4187 = vadd.f32 0.0, %v4186
    %4188 = vdwg.mxu0
    %v4189 = vadd.f32 %v4006, %v4114
    %v4190 = vadd.f32 %v4007, %v4116
    %v4191 = vadd.f32 %v4008, %v4185
    %v4192 = vadd.f32 %v4009, %v4187
    %4193 = vrot.lane.b32.xlu0 %v3118, 113
    %v4194 = vpop.permute.xlu0 %4193
    %4195 = vrot.lane.b32.xlu0 %v3122, 113
    %v4196 = vpop.permute.xlu0 %4195
    %4197 = vrot.lane.b32.xlu0 %v3119, 113
    %v4198 = vpop.permute.xlu0 %4197
    %4199 = vrot.lane.b32.xlu0 %v3123, 113
    %v4200 = vpop.permute.xlu0 %4199
    %4201 = vrot.lane.b32.xlu0 %v3120, 113
    %v4202 = vpop.permute.xlu0 %4201
    %4203 = vrot.lane.b32.xlu0 %v3124, 113
    %v4204 = vpop.permute.xlu0 %4203
    %4205 = vrot.lane.b32.xlu0 %v3121, 113
    %v4206 = vpop.permute.xlu0 %4205
    %4207 = vrot.lane.b32.xlu0 %v3125, 113
    %v4208 = vpop.permute.xlu0 %4207
    %v4209 = vsel %vm457, %v4202, %v4206
    %v4210 = vsel %vm457, %v4204, %v4208
    %v4211 = vsel %vm457, %v4198, %v4202
    %v4212 = vsel %vm457, %v4200, %v4204
    %v4213 = vsel %vm457, %v4194, %v4198
    %v4214 = vsel %vm457, %v4196, %v4200
    %v4215 = vsel %vm457, %v4206, %v4194
    %v4216 = vsel %vm457, %v4208, %v4196
    %v4217 = vmul.f32 %v4213, %v148
    %v4218 = vmul.f32 %v4211, %v149
    %v4219 = vmul.f32 %v4209, %v150
    %v4220 = vmul.f32 %v4215, %v151
    %v4221 = vmul.f32 %v4214, %v148
    %v4222 = vmul.f32 %v4212, %v149
    %v4223 = vmul.f32 %v4210, %v150
    %v4224 = vmul.f32 %v4216, %v151
    %s4225 = scalar_lea.vmem [#allocation6], 48
    %v4226 = vld [vmem:[%s4225] sm:$0xff]
    %v4228 = vsel %vm3202, %v4226, 0
    %4230 = vmatprep.subr.mxu0 %v4218
    %4231 = vmatpush1.msra.mxu0 %v4217
    %4232 = vmatprep.subr.mxu0 %v4222
    %4233 = vmatpush1.msra.mxu0 %v4221
    %4234 = vmatprep.subr.mxu0 0.0
    %4235 = vmatpush1.msra.mxu0 0.0
    %4236 = vmatprep.subr.mxu0 0.0
    %4237 = vmatpush1.msra.mxu0 0.0
    %4238 = vmatprep.subr.mxu0 0.0
    %4239 = vmatpush1.msra.mxu0 0.0
    %4240 = vmatprep.subr.mxu0 0.0
    %4241 = vmatpush1.msra.mxu0 0.0
    %4242 = vmatprep.subr.mxu0 0.0
    %4243 = vmatpush1.msra.mxu0 0.0
    %4244 = vmatprep.subr.mxu0 0.0
    %4245 = vmatpush1.msra.mxu0 0.0
    %4246 = vmatprep.subr.mxu0 0.0
    %4247 = vmatpush1.msra.mxu0 0.0
    %4248 = vmatprep.subr.mxu0 0.0
    %4249 = vmatpush1.msra.mxu0 0.0
    %4250 = vmatprep.subr.mxu0 0.0
    %4251 = vmatpush1.msra.mxu0 0.0
    %4252 = vmatprep.subr.mxu0 0.0
    %4253 = vmatpush1.msra.mxu0 0.0
    %4254 = vmatprep.subr.mxu0 0.0
    %4255 = vmatpush1.msra.mxu0 0.0
    %4256 = vmatprep.subr.mxu0 0.0
    %4257 = vmatpush1.msra.mxu0 0.0
    %4258 = vmatprep.subr.mxu0 0.0
    %4259 = vmatpush1.msra.mxu0 0.0
    %4260 = vmatprep.subr.mxu0 0.0
    %4261 = vmatpush1.msra.mxu0 0.0
    %4262 = vmatprep.subr.mxu0 0.0
    %4263 = vmatpush1.msra.mxu0 0.0
    %4264 = vmatprep.subr.mxu0 0.0
    %4265 = vmatpush1.msra.mxu0 0.0
    %4266 = vmatprep.subr.mxu0 0.0
    %4267 = vmatpush1.msra.mxu0 0.0
    %4268 = vmatprep.subr.mxu0 0.0
    %4269 = vmatpush1.msra.mxu0 0.0
    %4270 = vmatprep.subr.mxu0 0.0
    %4271 = vmatpush1.msra.mxu0 0.0
    %4272 = vmatprep.subr.mxu0 0.0
    %4273 = vmatpush1.msra.mxu0 0.0
    %4274 = vmatprep.subr.mxu0 0.0
    %4275 = vmatpush1.msra.mxu0 0.0
    %4276 = vmatprep.subr.mxu0 0.0
    %4277 = vmatpush1.msra.mxu0 0.0
    %4278 = vmatprep.subr.mxu0 0.0
    %4279 = vmatpush1.msra.mxu0 0.0
    %4280 = vmatprep.subr.mxu0 0.0
    %4281 = vmatpush1.msra.mxu0 0.0
    %4282 = vmatprep.subr.mxu0 0.0
    %4283 = vmatpush1.msra.mxu0 0.0
    %4284 = vmatprep.subr.mxu0 0.0
    %4285 = vmatpush1.msra.mxu0 0.0
    %4286 = vmatprep.subr.mxu0 0.0
    %4287 = vmatpush1.msra.mxu0 0.0
    %4288 = vmatprep.subr.mxu0 0.0
    %4289 = vmatpush1.msra.mxu0 0.0
    %4290 = vmatprep.subr.mxu0 0.0
    %4291 = vmatpush1.msra.mxu0 0.0
    %4292 = vmatprep.subr.mxu0 0.0
    %4293 = vmatpush1.msra.mxu0 0.0
    %4294 = vmatprep.mubr.f32.mxu0 0.0
    %4295 = vmatmul.mubr.f32.gmra.mrb[0].mxu0 %v4228
    %v4296 = vpop.f32.mrb[0].mxu0
    %v4297 = vadd.f32 0.0, %v4296
    %v4298 = vpop.f32.mrb[0].mxu0
    %v4299 = vadd.f32 0.0, %v4298
    %4300 = vdwg.mxu0
    %4301 = vmatprep.subr.mxu0 %v4220
    %4302 = vmatpush1.msra.mxu0 %v4219
    %4303 = vmatprep.subr.mxu0 %v4224
    %4304 = vmatpush1.msra.mxu0 %v4223
    %4305 = vmatprep.subr.mxu0 0.0
    %4306 = vmatpush1.msra.mxu0 0.0
    %4307 = vmatprep.subr.mxu0 0.0
    %4308 = vmatpush1.msra.mxu0 0.0
    %4309 = vmatprep.subr.mxu0 0.0
    %4310 = vmatpush1.msra.mxu0 0.0
    %4311 = vmatprep.subr.mxu0 0.0
    %4312 = vmatpush1.msra.mxu0 0.0
    %4313 = vmatprep.subr.mxu0 0.0
    %4314 = vmatpush1.msra.mxu0 0.0
    %4315 = vmatprep.subr.mxu0 0.0
    %4316 = vmatpush1.msra.mxu0 0.0
    %4317 = vmatprep.subr.mxu0 0.0
    %4318 = vmatpush1.msra.mxu0 0.0
    %4319 = vmatprep.subr.mxu0 0.0
    %4320 = vmatpush1.msra.mxu0 0.0
    %4321 = vmatprep.subr.mxu0 0.0
    %4322 = vmatpush1.msra.mxu0 0.0
    %4323 = vmatprep.subr.mxu0 0.0
    %4324 = vmatpush1.msra.mxu0 0.0
    %4325 = vmatprep.subr.mxu0 0.0
    %4326 = vmatpush1.msra.mxu0 0.0
    %4327 = vmatprep.subr.mxu0 0.0
    %4328 = vmatpush1.msra.mxu0 0.0
    %4329 = vmatprep.subr.mxu0 0.0
    %4330 = vmatpush1.msra.mxu0 0.0
    %4331 = vmatprep.subr.mxu0 0.0
    %4332 = vmatpush1.msra.mxu0 0.0
    %4333 = vmatprep.subr.mxu0 0.0
    %4334 = vmatpush1.msra.mxu0 0.0
    %4335 = vmatprep.subr.mxu0 0.0
    %4336 = vmatpush1.msra.mxu0 0.0
    %4337 = vmatprep.subr.mxu0 0.0
    %4338 = vmatpush1.msra.mxu0 0.0
    %4339 = vmatprep.subr.mxu0 0.0
    %4340 = vmatpush1.msra.mxu0 0.0
    %4341 = vmatprep.subr.mxu0 0.0
    %4342 = vmatpush1.msra.mxu0 0.0
    %4343 = vmatprep.subr.mxu0 0.0
    %4344 = vmatpush1.msra.mxu0 0.0
    %4345 = vmatprep.subr.mxu0 0.0
    %4346 = vmatpush1.msra.mxu0 0.0
    %4347 = vmatprep.subr.mxu0 0.0
    %4348 = vmatpush1.msra.mxu0 0.0
    %4349 = vmatprep.subr.mxu0 0.0
    %4350 = vmatpush1.msra.mxu0 0.0
    %4351 = vmatprep.subr.mxu0 0.0
    %4352 = vmatpush1.msra.mxu0 0.0
    %4353 = vmatprep.subr.mxu0 0.0
    %4354 = vmatpush1.msra.mxu0 0.0
    %4355 = vmatprep.subr.mxu0 0.0
    %4356 = vmatpush1.msra.mxu0 0.0
    %4357 = vmatprep.subr.mxu0 0.0
    %4358 = vmatpush1.msra.mxu0 0.0
    %4359 = vmatprep.subr.mxu0 0.0
    %4360 = vmatpush1.msra.mxu0 0.0
    %4361 = vmatprep.subr.mxu0 0.0
    %4362 = vmatpush1.msra.mxu0 0.0
    %4363 = vmatprep.subr.mxu0 0.0
    %4364 = vmatpush1.msra.mxu0 0.0
    %4365 = vmatprep.mubr.f32.mxu0 0.0
    %4366 = vmatmul.mubr.f32.gmra.mrb[0].mxu0 %v4228
    %v4367 = vpop.f32.mrb[0].mxu0
    %v4368 = vadd.f32 0.0, %v4367
    %v4369 = vpop.f32.mrb[0].mxu0
    %v4370 = vadd.f32 0.0, %v4369
    %4371 = vdwg.mxu0
    %v4372 = vadd.f32 %v4189, %v4297
    %v4373 = vadd.f32 %v4190, %v4299
    %v4374 = vadd.f32 %v4191, %v4368
    %v4375 = vadd.f32 %v4192, %v4370
    %4376 = vrot.lane.b32.xlu0 %v3118, 112
    %v4377 = vpop.permute.xlu0 %4376
    %4378 = vrot.lane.b32.xlu0 %v3122, 112
    %v4379 = vpop.permute.xlu0 %4378
    %4380 = vrot.lane.b32.xlu0 %v3119, 112
    %v4381 = vpop.permute.xlu0 %4380
    %4382 = vrot.lane.b32.xlu0 %v3123, 112
    %v4383 = vpop.permute.xlu0 %4382
    %4384 = vrot.lane.b32.xlu0 %v3120, 112
    %v4385 = vpop.permute.xlu0 %4384
    %4386 = vrot.lane.b32.xlu0 %v3124, 112
    %v4387 = vpop.permute.xlu0 %4386
    %4388 = vrot.lane.b32.xlu0 %v3121, 112
    %v4389 = vpop.permute.xlu0 %4388
    %4390 = vrot.lane.b32.xlu0 %v3125, 112
    %v4391 = vpop.permute.xlu0 %4390
    %v4392 = vsel %vm505, %v4385, %v4389
    %v4393 = vsel %vm505, %v4387, %v4391
    %v4394 = vsel %vm505, %v4381, %v4385
    %v4395 = vsel %vm505, %v4383, %v4387
    %v4396 = vsel %vm505, %v4377, %v4381
    %v4397 = vsel %vm505, %v4379, %v4383
    %v4398 = vsel %vm505, %v4389, %v4377
    %v4399 = vsel %vm505, %v4391, %v4379
    %v4400 = vmul.f32 %v4396, %v112
    %v4401 = vmul.f32 %v4394, %v113
    %v4402 = vmul.f32 %v4392, %v114
    %v4403 = vmul.f32 %v4398, %v115
    %v4404 = vmul.f32 %v4397, %v112
    %v4405 = vmul.f32 %v4395, %v113
    %v4406 = vmul.f32 %v4393, %v114
    %v4407 = vmul.f32 %v4399, %v115
    %s4408 = scalar_lea.vmem [#allocation6], 56
    %v4409 = vld [vmem:[%s4408] sm:$0xff]
    %v4411 = vsel %vm3202, %v4409, 0
    %4413 = vmatprep.subr.mxu0 %v4401
    %4414 = vmatpush1.msra.mxu0 %v4400
    %4415 = vmatprep.subr.mxu0 %v4405
    %4416 = vmatpush1.msra.mxu0 %v4404
    %4417 = vmatprep.subr.mxu0 0.0
    %4418 = vmatpush1.msra.mxu0 0.0
    %4419 = vmatprep.subr.mxu0 0.0
    %4420 = vmatpush1.msra.mxu0 0.0
    %4421 = vmatprep.subr.mxu0 0.0
    %4422 = vmatpush1.msra.mxu0 0.0
    %4423 = vmatprep.subr.mxu0 0.0
    %4424 = vmatpush1.msra.mxu0 0.0
    %4425 = vmatprep.subr.mxu0 0.0
    %4426 = vmatpush1.msra.mxu0 0.0
    %4427 = vmatprep.subr.mxu0 0.0
    %4428 = vmatpush1.msra.mxu0 0.0
    %4429 = vmatprep.subr.mxu0 0.0
    %4430 = vmatpush1.msra.mxu0 0.0
    %4431 = vmatprep.subr.mxu0 0.0
    %4432 = vmatpush1.msra.mxu0 0.0
    %4433 = vmatprep.subr.mxu0 0.0
    %4434 = vmatpush1.msra.mxu0 0.0
    %4435 = vmatprep.subr.mxu0 0.0
    %4436 = vmatpush1.msra.mxu0 0.0
    %4437 = vmatprep.subr.mxu0 0.0
    %4438 = vmatpush1.msra.mxu0 0.0
    %4439 = vmatprep.subr.mxu0 0.0
    %4440 = vmatpush1.msra.mxu0 0.0
    %4441 = vmatprep.subr.mxu0 0.0
    %4442 = vmatpush1.msra.mxu0 0.0
    %4443 = vmatprep.subr.mxu0 0.0
    %4444 = vmatpush1.msra.mxu0 0.0
    %4445 = vmatprep.subr.mxu0 0.0
    %4446 = vmatpush1.msra.mxu0 0.0
    %4447 = vmatprep.subr.mxu0 0.0
    %4448 = vmatpush1.msra.mxu0 0.0
    %4449 = vmatprep.subr.mxu0 0.0
    %4450 = vmatpush1.msra.mxu0 0.0
    %4451 = vmatprep.subr.mxu0 0.0
    %4452 = vmatpush1.msra.mxu0 0.0
    %4453 = vmatprep.subr.mxu0 0.0
    %4454 = vmatpush1.msra.mxu0 0.0
    %4455 = vmatprep.subr.mxu0 0.0
    %4456 = vmatpush1.msra.mxu0 0.0
    %4457 = vmatprep.subr.mxu0 0.0
    %4458 = vmatpush1.msra.mxu0 0.0
    %4459 = vmatprep.subr.mxu0 0.0
    %4460 = vmatpush1.msra.mxu0 0.0
    %4461 = vmatprep.subr.mxu0 0.0
    %4462 = vmatpush1.msra.mxu0 0.0
    %4463 = vmatprep.subr.mxu0 0.0
    %4464 = vmatpush1.msra.mxu0 0.0
    %4465 = vmatprep.subr.mxu0 0.0
    %4466 = vmatpush1.msra.mxu0 0.0
    %4467 = vmatprep.subr.mxu0 0.0
    %4468 = vmatpush1.msra.mxu0 0.0
    %4469 = vmatprep.subr.mxu0 0.0
    %4470 = vmatpush1.msra.mxu0 0.0
    %4471 = vmatprep.subr.mxu0 0.0
    %4472 = vmatpush1.msra.mxu0 0.0
    %4473 = vmatprep.subr.mxu0 0.0
    %4474 = vmatpush1.msra.mxu0 0.0
    %4475 = vmatprep.subr.mxu0 0.0
    %4476 = vmatpush1.msra.mxu0 0.0
    %4477 = vmatprep.mubr.f32.mxu0 0.0
    %4478 = vmatmul.mubr.f32.gmra.mrb[0].mxu0 %v4411
    %v4479 = vpop.f32.mrb[0].mxu0
    %v4480 = vadd.f32 0.0, %v4479
    %v4481 = vpop.f32.mrb[0].mxu0
    %v4482 = vadd.f32 0.0, %v4481
    %4483 = vdwg.mxu0
    %4484 = vmatprep.subr.mxu0 %v4403
    %4485 = vmatpush1.msra.mxu0 %v4402
    %4486 = vmatprep.subr.mxu0 %v4407
    %4487 = vmatpush1.msra.mxu0 %v4406
    %4488 = vmatprep.subr.mxu0 0.0
    %4489 = vmatpush1.msra.mxu0 0.0
    %4490 = vmatprep.subr.mxu0 0.0
    %4491 = vmatpush1.msra.mxu0 0.0
    %4492 = vmatprep.subr.mxu0 0.0
    %4493 = vmatpush1.msra.mxu0 0.0
    %4494 = vmatprep.subr.mxu0 0.0
    %4495 = vmatpush1.msra.mxu0 0.0
    %4496 = vmatprep.subr.mxu0 0.0
    %4497 = vmatpush1.msra.mxu0 0.0
    %4498 = vmatprep.subr.mxu0 0.0
    %4499 = vmatpush1.msra.mxu0 0.0
    %4500 = vmatprep.subr.mxu0 0.0
    %4501 = vmatpush1.msra.mxu0 0.0
    %4502 = vmatprep.subr.mxu0 0.0
    %4503 = vmatpush1.msra.mxu0 0.0
    %4504 = vmatprep.subr.mxu0 0.0
    %4505 = vmatpush1.msra.mxu0 0.0
    %4506 = vmatprep.subr.mxu0 0.0
    %4507 = vmatpush1.msra.mxu0 0.0
    %4508 = vmatprep.subr.mxu0 0.0
    %4509 = vmatpush1.msra.mxu0 0.0
    %4510 = vmatprep.subr.mxu0 0.0
    %4511 = vmatpush1.msra.mxu0 0.0
    %4512 = vmatprep.subr.mxu0 0.0
    %4513 = vmatpush1.msra.mxu0 0.0
    %4514 = vmatprep.subr.mxu0 0.0
    %4515 = vmatpush1.msra.mxu0 0.0
    %4516 = vmatprep.subr.mxu0 0.0
    %4517 = vmatpush1.msra.mxu0 0.0
    %4518 = vmatprep.subr.mxu0 0.0
    %4519 = vmatpush1.msra.mxu0 0.0
    %4520 = vmatprep.subr.mxu0 0.0
    %4521 = vmatpush1.msra.mxu0 0.0
    %4522 = vmatprep.subr.mxu0 0.0
    %4523 = vmatpush1.msra.mxu0 0.0
    %4524 = vmatprep.subr.mxu0 0.0
    %4525 = vmatpush1.msra.mxu0 0.0
    %4526 = vmatprep.subr.mxu0 0.0
    %4527 = vmatpush1.msra.mxu0 0.0
    %4528 = vmatprep.subr.mxu0 0.0
    %4529 = vmatpush1.msra.mxu0 0.0
    %4530 = vmatprep.subr.mxu0 0.0
    %4531 = vmatpush1.msra.mxu0 0.0
    %4532 = vmatprep.subr.mxu0 0.0
    %4533 = vmatpush1.msra.mxu0 0.0
    %4534 = vmatprep.subr.mxu0 0.0
    %4535 = vmatpush1.msra.mxu0 0.0
    %4536 = vmatprep.subr.mxu0 0.0
    %4537 = vmatpush1.msra.mxu0 0.0
    %4538 = vmatprep.subr.mxu0 0.0
    %4539 = vmatpush1.msra.mxu0 0.0
    %4540 = vmatprep.subr.mxu0 0.0
    %4541 = vmatpush1.msra.mxu0 0.0
    %4542 = vmatprep.subr.mxu0 0.0
    %4543 = vmatpush1.msra.mxu0 0.0
    %4544 = vmatprep.subr.mxu0 0.0
    %4545 = vmatpush1.msra.mxu0 0.0
    %4546 = vmatprep.subr.mxu0 0.0
    %4547 = vmatpush1.msra.mxu0 0.0
    %4548 = vmatprep.mubr.f32.mxu0 0.0
    %4549 = vmatmul.mubr.f32.gmra.mrb[0].mxu0 %v4411
    %v4550 = vpop.f32.mrb[0].mxu0
    %v4551 = vadd.f32 0.0, %v4550
    %v4552 = vpop.f32.mrb[0].mxu0
    %v4553 = vadd.f32 0.0, %v4552
    %4554 = vdwg.mxu0
    %v4555 = vadd.f32 %v4372, %v4480
    %v4556 = vadd.f32 %v4373, %v4482
    %v4557 = vadd.f32 %v4374, %v4551
    %v4558 = vadd.f32 %v4375, %v4553
    %4559 = vrot.lane.b32.xlu0 %v3118, 111
    %v4560 = vpop.permute.xlu0 %4559
    %4561 = vrot.lane.b32.xlu0 %v3122, 111
    %v4562 = vpop.permute.xlu0 %4561
    %4563 = vrot.lane.b32.xlu0 %v3119, 111
    %v4564 = vpop.permute.xlu0 %4563
    %4565 = vrot.lane.b32.xlu0 %v3123, 111
    %v4566 = vpop.permute.xlu0 %4565
    %4567 = vrot.lane.b32.xlu0 %v3120, 111
    %v4568 = vpop.permute.xlu0 %4567
    %4569 = vrot.lane.b32.xlu0 %v3124, 111
    %v4570 = vpop.permute.xlu0 %4569
    %4571 = vrot.lane.b32.xlu0 %v3121, 111
    %v4572 = vpop.permute.xlu0 %4571
    %4573 = vrot.lane.b32.xlu0 %v3125, 111
    %v4574 = vpop.permute.xlu0 %4573
    %v4575 = vsel %vm553, %v4568, %v4572
    %v4576 = vsel %vm553, %v4570, %v4574
    %v4577 = vsel %vm553, %v4564, %v4568
    %v4578 = vsel %vm553, %v4566, %v4570
    %v4579 = vsel %vm553, %v4560, %v4564
    %v4580 = vsel %vm553, %v4562, %v4566
    %v4581 = vsel %vm553, %v4572, %v4560
    %v4582 = vsel %vm553, %v4574, %v4562
    %v4583 = vmul.f32 %v4579, %v152
    %v4584 = vmul.f32 %v4577, %v153
    %v4585 = vmul.f32 %v4575, %v154
    %v4586 = vmul.f32 %v4581, %v155
    %v4587 = vmul.f32 %v4580, %v152
    %v4588 = vmul.f32 %v4578, %v153
    %v4589 = vmul.f32 %v4576, %v154
    %v4590 = vmul.f32 %v4582, %v155
    %s4591 = scalar_lea.vmem [#allocation6], 64
    %v4592 = vld [vmem:[%s4591] sm:$0xff]
    %v4594 = vsel %vm3202, %v4592, 0
    %4596 = vmatprep.subr.mxu0 %v4584
    %4597 = vmatpush1.msra.mxu0 %v4583
    %4598 = vmatprep.subr.mxu0 %v4588
    %4599 = vmatpush1.msra.mxu0 %v4587
    %4600 = vmatprep.subr.mxu0 0.0
    %4601 = vmatpush1.msra.mxu0 0.0
    %4602 = vmatprep.subr.mxu0 0.0
    %4603 = vmatpush1.msra.mxu0 0.0
    %4604 = vmatprep.subr.mxu0 0.0
    %4605 = vmatpush1.msra.mxu0 0.0
    %4606 = vmatprep.subr.mxu0 0.0
    %4607 = vmatpush1.msra.mxu0 0.0
    %4608 = vmatprep.subr.mxu0 0.0
    %4609 = vmatpush1.msra.mxu0 0.0
    %4610 = vmatprep.subr.mxu0 0.0
    %4611 = vmatpush1.msra.mxu0 0.0
    %4612 = vmatprep.subr.mxu0 0.0
    %4613 = vmatpush1.msra.mxu0 0.0
    %4614 = vmatprep.subr.mxu0 0.0
    %4615 = vmatpush1.msra.mxu0 0.0
    %4616 = vmatprep.subr.mxu0 0.0
    %4617 = vmatpush1.msra.mxu0 0.0
    %4618 = vmatprep.subr.mxu0 0.0
    %4619 = vmatpush1.msra.mxu0 0.0
    %4620 = vmatprep.subr.mxu0 0.0
    %4621 = vmatpush1.msra.mxu0 0.0
    %4622 = vmatprep.subr.mxu0 0.0
    %4623 = vmatpush1.msra.mxu0 0.0
    %4624 = vmatprep.subr.mxu0 0.0
    %4625 = vmatpush1.msra.mxu0 0.0
    %4626 = vmatprep.subr.mxu0 0.0
    %4627 = vmatpush1.msra.mxu0 0.0
    %4628 = vmatprep.subr.mxu0 0.0
    %4629 = vmatpush1.msra.mxu0 0.0
    %4630 = vmatprep.subr.mxu0 0.0
    %4631 = vmatpush1.msra.mxu0 0.0
    %4632 = vmatprep.subr.mxu0 0.0
    %4633 = vmatpush1.msra.mxu0 0.0
    %4634 = vmatprep.subr.mxu0 0.0
    %4635 = vmatpush1.msra.mxu0 0.0
    %4636 = vmatprep.subr.mxu0 0.0
    %4637 = vmatpush1.msra.mxu0 0.0
    %4638 = vmatprep.subr.mxu0 0.0
    %4639 = vmatpush1.msra.mxu0 0.0
    %4640 = vmatprep.subr.mxu0 0.0
    %4641 = vmatpush1.msra.mxu0 0.0
    %4642 = vmatprep.subr.mxu0 0.0
    %4643 = vmatpush1.msra.mxu0 0.0
    %4644 = vmatprep.subr.mxu0 0.0
    %4645 = vmatpush1.msra.mxu0 0.0
    %4646 = vmatprep.subr.mxu0 0.0
    %4647 = vmatpush1.msra.mxu0 0.0
    %4648 = vmatprep.subr.mxu0 0.0
    %4649 = vmatpush1.msra.mxu0 0.0
    %4650 = vmatprep.subr.mxu0 0.0
    %4651 = vmatpush1.msra.mxu0 0.0
    %4652 = vmatprep.subr.mxu0 0.0
    %4653 = vmatpush1.msra.mxu0 0.0
    %4654 = vmatprep.subr.mxu0 0.0
    %4655 = vmatpush1.msra.mxu0 0.0
    %4656 = vmatprep.subr.mxu0 0.0
    %4657 = vmatpush1.msra.mxu0 0.0
    %4658 = vmatprep.subr.mxu0 0.0
    %4659 = vmatpush1.msra.mxu0 0.0
    %4660 = vmatprep.mubr.f32.mxu0 0.0
    %4661 = vmatmul.mubr.f32.gmra.mrb[0].mxu0 %v4594
    %v4662 = vpop.f32.mrb[0].mxu0
    %v4663 = vadd.f32 0.0, %v4662
    %v4664 = vpop.f32.mrb[0].mxu0
    %v4665 = vadd.f32 0.0, %v4664
    %4666 = vdwg.mxu0
    %4667 = vmatprep.subr.mxu0 %v4586
    %4668 = vmatpush1.msra.mxu0 %v4585
    %4669 = vmatprep.subr.mxu0 %v4590
    %4670 = vmatpush1.msra.mxu0 %v4589
    %4671 = vmatprep.subr.mxu0 0.0
    %4672 = vmatpush1.msra.mxu0 0.0
    %4673 = vmatprep.subr.mxu0 0.0
    %4674 = vmatpush1.msra.mxu0 0.0
    %4675 = vmatprep.subr.mxu0 0.0
    %4676 = vmatpush1.msra.mxu0 0.0
    %4677 = vmatprep.subr.mxu0 0.0
    %4678 = vmatpush1.msra.mxu0 0.0
    %4679 = vmatprep.subr.mxu0 0.0
    %4680 = vmatpush1.msra.mxu0 0.0
    %4681 = vmatprep.subr.mxu0 0.0
    %4682 = vmatpush1.msra.mxu0 0.0
    %4683 = vmatprep.subr.mxu0 0.0
    %4684 = vmatpush1.msra.mxu0 0.0
    %4685 = vmatprep.subr.mxu0 0.0
    %4686 = vmatpush1.msra.mxu0 0.0
    %4687 = vmatprep.subr.mxu0 0.0
    %4688 = vmatpush1.msra.mxu0 0.0
    %4689 = vmatprep.subr.mxu0 0.0
    %4690 = vmatpush1.msra.mxu0 0.0
    %4691 = vmatprep.subr.mxu0 0.0
    %4692 = vmatpush1.msra.mxu0 0.0
    %4693 = vmatprep.subr.mxu0 0.0
    %4694 = vmatpush1.msra.mxu0 0.0
    %4695 = vmatprep.subr.mxu0 0.0
    %4696 = vmatpush1.msra.mxu0 0.0
    %4697 = vmatprep.subr.mxu0 0.0
    %4698 = vmatpush1.msra.mxu0 0.0
    %4699 = vmatprep.subr.mxu0 0.0
    %4700 = vmatpush1.msra.mxu0 0.0
    %4701 = vmatprep.subr.mxu0 0.0
    %4702 = vmatpush1.msra.mxu0 0.0
    %4703 = vmatprep.subr.mxu0 0.0
    %4704 = vmatpush1.msra.mxu0 0.0
    %4705 = vmatprep.subr.mxu0 0.0
    %4706 = vmatpush1.msra.mxu0 0.0
    %4707 = vmatprep.subr.mxu0 0.0
    %4708 = vmatpush1.msra.mxu0 0.0
    %4709 = vmatprep.subr.mxu0 0.0
    %4710 = vmatpush1.msra.mxu0 0.0
    %4711 = vmatprep.subr.mxu0 0.0
    %4712 = vmatpush1.msra.mxu0 0.0
    %4713 = vmatprep.subr.mxu0 0.0
    %4714 = vmatpush1.msra.mxu0 0.0
    %4715 = vmatprep.subr.mxu0 0.0
    %4716 = vmatpush1.msra.mxu0 0.0
    %4717 = vmatprep.subr.mxu0 0.0
    %4718 = vmatpush1.msra.mxu0 0.0
    %4719 = vmatprep.subr.mxu0 0.0
    %4720 = vmatpush1.msra.mxu0 0.0
    %4721 = vmatprep.subr.mxu0 0.0
    %4722 = vmatpush1.msra.mxu0 0.0
    %4723 = vmatprep.subr.mxu0 0.0
    %4724 = vmatpush1.msra.mxu0 0.0
    %4725 = vmatprep.subr.mxu0 0.0
    %4726 = vmatpush1.msra.mxu0 0.0
    %4727 = vmatprep.subr.mxu0 0.0
    %4728 = vmatpush1.msra.mxu0 0.0
    %4729 = vmatprep.subr.mxu0 0.0
    %4730 = vmatpush1.msra.mxu0 0.0
    %4731 = vmatprep.mubr.f32.mxu0 0.0
    %4732 = vmatmul.mubr.f32.gmra.mrb[0].mxu0 %v4594
    %v4733 = vpop.f32.mrb[0].mxu0
    %v4734 = vadd.f32 0.0, %v4733
    %v4735 = vpop.f32.mrb[0].mxu0
    %v4736 = vadd.f32 0.0, %v4735
    %4737 = vdwg.mxu0
    %v4738 = vadd.f32 %v4555, %v4663
    %v4739 = vadd.f32 %v4556, %v4665
    %v4740 = vadd.f32 %v4557, %v4734
    %v4741 = vadd.f32 %v4558, %v4736
    %4743 = vset.pattern.permute.xlu0 0
    %4744 = vperm.xlu0 %4743, %v3134
    %v4745 = vpop.permute.xlu0 %4744
    %v4747 = vadd.f32 %v4738, %v4745
    %v4748 = vadd.f32 %v4739, %v4745
    %v4749 = vadd.f32 %v4740, %v4745
    %v4750 = vadd.f32 %v4741, %v4745
    %4751 = vmatprep.subr.mxu0 0.0
    %4752 = vmatpush1.msra.mxu0 1.0
    %4753 = vmatprep.subr.mxu0 0.0
    %4754 = vmatpush1.msra.mxu0 1.0
    %4755 = vmatprep.subr.mxu0 0.0
    %4756 = vmatpush1.msra.mxu0 1.0
    %4757 = vmatprep.subr.mxu0 0.0
    %4758 = vmatpush1.msra.mxu0 1.0
    %4759 = vmatprep.subr.mxu0 0.0
    %4760 = vmatpush1.msra.mxu0 1.0
    %4761 = vmatprep.subr.mxu0 0.0
    %4762 = vmatpush1.msra.mxu0 1.0
    %4763 = vmatprep.subr.mxu0 0.0
    %4764 = vmatpush1.msra.mxu0 1.0
    %4765 = vmatprep.subr.mxu0 0.0
    %4766 = vmatpush1.msra.mxu0 1.0
    %4767 = vmatprep.subr.mxu0 0.0
    %4768 = vmatpush1.msra.mxu0 1.0
    %4769 = vmatprep.subr.mxu0 0.0
    %4770 = vmatpush1.msra.mxu0 1.0
    %4771 = vmatprep.subr.mxu0 0.0
    %4772 = vmatpush1.msra.mxu0 1.0
    %4773 = vmatprep.subr.mxu0 0.0
    %4774 = vmatpush1.msra.mxu0 1.0
    %4775 = vmatprep.subr.mxu0 0.0
    %4776 = vmatpush1.msra.mxu0 1.0
    %4777 = vmatprep.subr.mxu0 0.0
    %4778 = vmatpush1.msra.mxu0 1.0
    %4779 = vmatprep.subr.mxu0 0.0
    %4780 = vmatpush1.msra.mxu0 1.0
    %4781 = vmatprep.subr.mxu0 0.0
    %4782 = vmatpush1.msra.mxu0 1.0
    %4783 = vmatprep.subr.mxu0 0.0
    %4784 = vmatpush1.msra.mxu0 1.0
    %4785 = vmatprep.subr.mxu0 0.0
    %4786 = vmatpush1.msra.mxu0 1.0
    %4787 = vmatprep.subr.mxu0 0.0
    %4788 = vmatpush1.msra.mxu0 1.0
    %4789 = vmatprep.subr.mxu0 0.0
    %4790 = vmatpush1.msra.mxu0 1.0
    %4791 = vmatprep.subr.mxu0 0.0
    %4792 = vmatpush1.msra.mxu0 1.0
    %4793 = vmatprep.subr.mxu0 0.0
    %4794 = vmatpush1.msra.mxu0 1.0
    %4795 = vmatprep.subr.mxu0 0.0
    %4796 = vmatpush1.msra.mxu0 1.0
    %4797 = vmatprep.subr.mxu0 0.0
    %4798 = vmatpush1.msra.mxu0 1.0
    %4799 = vmatprep.subr.mxu0 0.0
    %4800 = vmatpush1.msra.mxu0 1.0
    %4801 = vmatprep.subr.mxu0 0.0
    %4802 = vmatpush1.msra.mxu0 1.0
    %4803 = vmatprep.subr.mxu0 0.0
    %4804 = vmatpush1.msra.mxu0 1.0
    %4805 = vmatprep.subr.mxu0 0.0
    %4806 = vmatpush1.msra.mxu0 1.0
    %4807 = vmatprep.subr.mxu0 0.0
    %4808 = vmatpush1.msra.mxu0 1.0
    %4809 = vmatprep.subr.mxu0 0.0
    %4810 = vmatpush1.msra.mxu0 1.0
    %4811 = vmatprep.subr.mxu0 0.0
    %4812 = vmatpush1.msra.mxu0 1.0
    %4813 = vmatprep.subr.mxu0 0.0
    %4814 = vmatpush1.msra.mxu0 1.0
    %4815 = vmatprep.mubr.f32.mxu0 %v4748
    %4816 = vmatmul.mubr.f32.gmra.mrb[0].mxu0 %v4747
    %v4817 = vpop.f32.mrb[0].mxu0
    %v4818 = vadd.f32 0.0, %v4817
    %v4819 = vpop.f32.mrb[0].mxu0
    %4820 = vdwg.mxu0
    %4821 = vmatprep.subr.mxu0 0.0
    %4822 = vmatpush1.msra.mxu0 1.0
    %4823 = vmatprep.subr.mxu0 0.0
    %4824 = vmatpush1.msra.mxu0 1.0
    %4825 = vmatprep.subr.mxu0 0.0
    %4826 = vmatpush1.msra.mxu0 1.0
    %4827 = vmatprep.subr.mxu0 0.0
    %4828 = vmatpush1.msra.mxu0 1.0
    %4829 = vmatprep.subr.mxu0 0.0
    %4830 = vmatpush1.msra.mxu0 1.0
    %4831 = vmatprep.subr.mxu0 0.0
    %4832 = vmatpush1.msra.mxu0 1.0
    %4833 = vmatprep.subr.mxu0 0.0
    %4834 = vmatpush1.msra.mxu0 1.0
    %4835 = vmatprep.subr.mxu0 0.0
    %4836 = vmatpush1.msra.mxu0 1.0
    %4837 = vmatprep.subr.mxu0 0.0
    %4838 = vmatpush1.msra.mxu0 1.0
    %4839 = vmatprep.subr.mxu0 0.0
    %4840 = vmatpush1.msra.mxu0 1.0
    %4841 = vmatprep.subr.mxu0 0.0
    %4842 = vmatpush1.msra.mxu0 1.0
    %4843 = vmatprep.subr.mxu0 0.0
    %4844 = vmatpush1.msra.mxu0 1.0
    %4845 = vmatprep.subr.mxu0 0.0
    %4846 = vmatpush1.msra.mxu0 1.0
    %4847 = vmatprep.subr.mxu0 0.0
    %4848 = vmatpush1.msra.mxu0 1.0
    %4849 = vmatprep.subr.mxu0 0.0
    %4850 = vmatpush1.msra.mxu0 1.0
    %4851 = vmatprep.subr.mxu0 0.0
    %4852 = vmatpush1.msra.mxu0 1.0
    %4853 = vmatprep.subr.mxu0 0.0
    %4854 = vmatpush1.msra.mxu0 1.0
    %4855 = vmatprep.subr.mxu0 0.0
    %4856 = vmatpush1.msra.mxu0 1.0
    %4857 = vmatprep.subr.mxu0 0.0
    %4858 = vmatpush1.msra.mxu0 1.0
    %4859 = vmatprep.subr.mxu0 0.0
    %4860 = vmatpush1.msra.mxu0 1.0
    %4861 = vmatprep.subr.mxu0 0.0
    %4862 = vmatpush1.msra.mxu0 1.0
    %4863 = vmatprep.subr.mxu0 0.0
    %4864 = vmatpush1.msra.mxu0 1.0
    %4865 = vmatprep.subr.mxu0 0.0
    %4866 = vmatpush1.msra.mxu0 1.0
    %4867 = vmatprep.subr.mxu0 0.0
    %4868 = vmatpush1.msra.mxu0 1.0
    %4869 = vmatprep.subr.mxu0 0.0
    %4870 = vmatpush1.msra.mxu0 1.0
    %4871 = vmatprep.subr.mxu0 0.0
    %4872 = vmatpush1.msra.mxu0 1.0
    %4873 = vmatprep.subr.mxu0 0.0
    %4874 = vmatpush1.msra.mxu0 1.0
    %4875 = vmatprep.subr.mxu0 0.0
    %4876 = vmatpush1.msra.mxu0 1.0
    %4877 = vmatprep.subr.mxu0 0.0
    %4878 = vmatpush1.msra.mxu0 1.0
    %4879 = vmatprep.subr.mxu0 0.0
    %4880 = vmatpush1.msra.mxu0 1.0
    %4881 = vmatprep.subr.mxu0 0.0
    %4882 = vmatpush1.msra.mxu0 1.0
    %4883 = vmatprep.subr.mxu0 0.0
    %4884 = vmatpush1.msra.mxu0 1.0
    %4885 = vmatprep.mubr.f32.mxu0 %v4750
    %4886 = vmatmul.mubr.f32.gmra.mrb[0].mxu0 %v4749
    %v4887 = vpop.f32.mrb[0].mxu0
    %v4888 = vadd.f32 %v4818, %v4887
    %v4889 = vpop.f32.mrb[0].mxu0
    %4890 = vdwg.mxu0
    %v4891 = vmul.f32 %v4888, 0.001953125
    %4893 = vset.pattern.permute.xlu0 0
    %4894 = vperm.xlu0 %4893, %v4891
    %v4895 = vpop.permute.xlu0 %4894
    %v4897 = vsub.f32 %v4747, %v4895
    %v4898 = vsub.f32 %v4748, %v4895
    %v4899 = vsub.f32 %v4749, %v4895
    %v4900 = vsub.f32 %v4750, %v4895
    %v4901 = vmul.f32 %v4897, %v4897
    %v4902 = vmul.f32 %v4898, %v4898
    %v4903 = vmul.f32 %v4899, %v4899
    %v4904 = vmul.f32 %v4900, %v4900
    %4905 = vmatprep.subr.mxu0 0.0
    %4906 = vmatpush1.msra.mxu0 1.0
    %4907 = vmatprep.subr.mxu0 0.0
    %4908 = vmatpush1.msra.mxu0 1.0
    %4909 = vmatprep.subr.mxu0 0.0
    %4910 = vmatpush1.msra.mxu0 1.0
    %4911 = vmatprep.subr.mxu0 0.0
    %4912 = vmatpush1.msra.mxu0 1.0
    %4913 = vmatprep.subr.mxu0 0.0
    %4914 = vmatpush1.msra.mxu0 1.0
    %4915 = vmatprep.subr.mxu0 0.0
    %4916 = vmatpush1.msra.mxu0 1.0
    %4917 = vmatprep.subr.mxu0 0.0
    %4918 = vmatpush1.msra.mxu0 1.0
    %4919 = vmatprep.subr.mxu0 0.0
    %4920 = vmatpush1.msra.mxu0 1.0
    %4921 = vmatprep.subr.mxu0 0.0
    %4922 = vmatpush1.msra.mxu0 1.0
    %4923 = vmatprep.subr.mxu0 0.0
    %4924 = vmatpush1.msra.mxu0 1.0
    %4925 = vmatprep.subr.mxu0 0.0
    %4926 = vmatpush1.msra.mxu0 1.0
    %4927 = vmatprep.subr.mxu0 0.0
    %4928 = vmatpush1.msra.mxu0 1.0
    %4929 = vmatprep.subr.mxu0 0.0
    %4930 = vmatpush1.msra.mxu0 1.0
    %4931 = vmatprep.subr.mxu0 0.0
    %4932 = vmatpush1.msra.mxu0 1.0
    %4933 = vmatprep.subr.mxu0 0.0
    %4934 = vmatpush1.msra.mxu0 1.0
    %4935 = vmatprep.subr.mxu0 0.0
    %4936 = vmatpush1.msra.mxu0 1.0
    %4937 = vmatprep.subr.mxu0 0.0
    %4938 = vmatpush1.msra.mxu0 1.0
    %4939 = vmatprep.subr.mxu0 0.0
    %4940 = vmatpush1.msra.mxu0 1.0
    %4941 = vmatprep.subr.mxu0 0.0
    %4942 = vmatpush1.msra.mxu0 1.0
    %4943 = vmatprep.subr.mxu0 0.0
    %4944 = vmatpush1.msra.mxu0 1.0
    %4945 = vmatprep.subr.mxu0 0.0
    %4946 = vmatpush1.msra.mxu0 1.0
    %4947 = vmatprep.subr.mxu0 0.0
    %4948 = vmatpush1.msra.mxu0 1.0
    %4949 = vmatprep.subr.mxu0 0.0
    %4950 = vmatpush1.msra.mxu0 1.0
    %4951 = vmatprep.subr.mxu0 0.0
    %4952 = vmatpush1.msra.mxu0 1.0
    %4953 = vmatprep.subr.mxu0 0.0
    %4954 = vmatpush1.msra.mxu0 1.0
    %4955 = vmatprep.subr.mxu0 0.0
    %4956 = vmatpush1.msra.mxu0 1.0
    %4957 = vmatprep.subr.mxu0 0.0
    %4958 = vmatpush1.msra.mxu0 1.0
    %4959 = vmatprep.subr.mxu0 0.0
    %4960 = vmatpush1.msra.mxu0 1.0
    %4961 = vmatprep.subr.mxu0 0.0
    %4962 = vmatpush1.msra.mxu0 1.0
    %4963 = vmatprep.subr.mxu0 0.0
    %4964 = vmatpush1.msra.mxu0 1.0
    %4965 = vmatprep.subr.mxu0 0.0
    %4966 = vmatpush1.msra.mxu0 1.0
    %4967 = vmatprep.subr.mxu0 0.0
    %4968 = vmatpush1.msra.mxu0 1.0
    %4969 = vmatprep.mubr.f32.mxu0 %v4902
    %4970 = vmatmul.mubr.f32.gmra.mrb[0].mxu0 %v4901
    %v4971 = vpop.f32.mrb[0].mxu0
    %v4972 = vadd.f32 0.0, %v4971
    %v4973 = vpop.f32.mrb[0].mxu0
    %4974 = vdwg.mxu0
    %4975 = vmatprep.subr.mxu0 0.0
    %4976 = vmatpush1.msra.mxu0 1.0
    %4977 = vmatprep.subr.mxu0 0.0
    %4978 = vmatpush1.msra.mxu0 1.0
    %4979 = vmatprep.subr.mxu0 0.0
    %4980 = vmatpush1.msra.mxu0 1.0
    %4981 = vmatprep.subr.mxu0 0.0
    %4982 = vmatpush1.msra.mxu0 1.0
    %4983 = vmatprep.subr.mxu0 0.0
    %4984 = vmatpush1.msra.mxu0 1.0
    %4985 = vmatprep.subr.mxu0 0.0
    %4986 = vmatpush1.msra.mxu0 1.0
    %4987 = vmatprep.subr.mxu0 0.0
    %4988 = vmatpush1.msra.mxu0 1.0
    %4989 = vmatprep.subr.mxu0 0.0
    %4990 = vmatpush1.msra.mxu0 1.0
    %4991 = vmatprep.subr.mxu0 0.0
    %4992 = vmatpush1.msra.mxu0 1.0
    %4993 = vmatprep.subr.mxu0 0.0
    %4994 = vmatpush1.msra.mxu0 1.0
    %4995 = vmatprep.subr.mxu0 0.0
    %4996 = vmatpush1.msra.mxu0 1.0
    %4997 = vmatprep.subr.mxu0 0.0
    %4998 = vmatpush1.msra.mxu0 1.0
    %4999 = vmatprep.subr.mxu0 0.0
    %5000 = vmatpush1.msra.mxu0 1.0
    %5001 = vmatprep.subr.mxu0 0.0
    %5002 = vmatpush1.msra.mxu0 1.0
    %5003 = vmatprep.subr.mxu0 0.0
    %5004 = vmatpush1.msra.mxu0 1.0
    %5005 = vmatprep.subr.mxu0 0.0
    %5006 = vmatpush1.msra.mxu0 1.0
    %5007 = vmatprep.subr.mxu0 0.0
    %5008 = vmatpush1.msra.mxu0 1.0
    %5009 = vmatprep.subr.mxu0 0.0
    %5010 = vmatpush1.msra.mxu0 1.0
    %5011 = vmatprep.subr.mxu0 0.0
    %5012 = vmatpush1.msra.mxu0 1.0
    %5013 = vmatprep.subr.mxu0 0.0
    %5014 = vmatpush1.msra.mxu0 1.0
    %5015 = vmatprep.subr.mxu0 0.0
    %5016 = vmatpush1.msra.mxu0 1.0
    %5017 = vmatprep.subr.mxu0 0.0
    %5018 = vmatpush1.msra.mxu0 1.0
    %5019 = vmatprep.subr.mxu0 0.0
    %5020 = vmatpush1.msra.mxu0 1.0
    %5021 = vmatprep.subr.mxu0 0.0
    %5022 = vmatpush1.msra.mxu0 1.0
    %5023 = vmatprep.subr.mxu0 0.0
    %5024 = vmatpush1.msra.mxu0 1.0
    %5025 = vmatprep.subr.mxu0 0.0
    %5026 = vmatpush1.msra.mxu0 1.0
    %5027 = vmatprep.subr.mxu0 0.0
    %5028 = vmatpush1.msra.mxu0 1.0
    %5029 = vmatprep.subr.mxu0 0.0
    %5030 = vmatpush1.msra.mxu0 1.0
    %5031 = vmatprep.subr.mxu0 0.0
    %5032 = vmatpush1.msra.mxu0 1.0
    %5033 = vmatprep.subr.mxu0 0.0
    %5034 = vmatpush1.msra.mxu0 1.0
    %5035 = vmatprep.subr.mxu0 0.0
    %5036 = vmatpush1.msra.mxu0 1.0
    %5037 = vmatprep.subr.mxu0 0.0
    %5038 = vmatpush1.msra.mxu0 1.0
    %5039 = vmatprep.mubr.f32.mxu0 %v4904
    %5040 = vmatmul.mubr.f32.gmra.mrb[0].mxu0 %v4903
    %v5041 = vpop.f32.mrb[0].mxu0
    %v5042 = vadd.f32 %v4972, %v5041
    %v5043 = vpop.f32.mrb[0].mxu0
    %5044 = vdwg.mxu0
    %v5045 = vmul.f32 %v5042, 0.001953125
    %v5046 = vadd.f32 %v5045, 1e-05
    %v5047 = vrsqrt.pop %v5046
    %5049 = vrot.lane.b32.xlu0 %v5047, 1
    %v5050 = vpop.permute.xlu0 %5049
    %v5052 = vmul.f32 %v3134, %v5050
    %5054 = vset.pattern.permute.xlu0 1
    %5055 = vperm.xlu0 %5054, %v5052
    %v5056 = vpop.permute.xlu0 %5055
    %v5058 = vmul.f32 %v4897, %v5056
    %v5059 = vmul.f32 %v4898, %v5056
    %v5060 = vmul.f32 %v4899, %v5056
    %v5061 = vmul.f32 %v4900, %v5056
    %5062 = vset.pattern.permute.xlu0 2
    %5063 = vperm.xlu0 %5062, %v3134
    %v5064 = vpop.permute.xlu0 %5063
    %v5066 = vadd.f32 %v5058, %v5064
    %v5067 = vadd.f32 %v5059, %v5064
    %v5068 = vadd.f32 %v5060, %v5064
    %v5069 = vadd.f32 %v5061, %v5064
    %v5070 = vmax.f32 %v5066, 0.0
    %v5071 = vmax.f32 %v5067, 0.0
    %v5072 = vmax.f32 %v5068, 0.0
    %v5073 = vmax.f32 %v5069, 0.0
    %v5074 = vld [vmem:[%s8] sm:$0x1]
    %5075 = vrot.lane.b32.xlu0 %v5070, 17
    %v5076 = vpop.permute.xlu0 %5075
    %5077 = vrot.lane.b32.xlu0 %v5071, 17
    %v5078 = vpop.permute.xlu0 %5077
    %5079 = vrot.lane.b32.xlu0 %v5072, 17
    %v5080 = vpop.permute.xlu0 %5079
    %5081 = vrot.lane.b32.xlu0 %v5073, 17
    %v5082 = vpop.permute.xlu0 %5081
    %v5083 = vsel %vm203, %v5080, %v5082
    %v5084 = vsel %vm203, %v5078, %v5080
    %v5085 = vsel %vm203, %v5076, %v5078
    %v5086 = vsel %vm203, %v5082, %v5076
    %v5087 = vmul.f32 %v5086, %v140
    %v5088 = vmul.f32 %v5085, %v141
    %v5089 = vmul.f32 %v5084, %v142
    %v5090 = vmul.f32 %v5083, %v143
    %v5091 = vld [vmem:[%s7] sm:$0x1]
    %5092 = vrot.lane.b32.xlu0 %v5070, 16
    %v5093 = vpop.permute.xlu0 %5092
    %5094 = vrot.lane.b32.xlu0 %v5071, 16
    %v5095 = vpop.permute.xlu0 %5094
    %5096 = vrot.lane.b32.xlu0 %v5072, 16
    %v5097 = vpop.permute.xlu0 %5096
    %5098 = vrot.lane.b32.xlu0 %v5073, 16
    %v5099 = vpop.permute.xlu0 %5098
    %v5100 = vsel %vm250, %v5097, %v5099
    %v5101 = vsel %vm250, %v5095, %v5097
    %v5102 = vsel %vm250, %v5093, %v5095
    %v5103 = vsel %vm250, %v5099, %v5093
    %v5104 = vmul.f32 %v5103, %v100
    %v5105 = vmul.f32 %v5102, %v101
    %v5106 = vmul.f32 %v5101, %v102
    %v5107 = vmul.f32 %v5100, %v103
    %s5108 = scalar_lea.vmem %s7, 1
    %v5109 = vld [vmem:[%s5108] sm:$0x1]
    %v5111 = vsel %vm964, %v5109, 0
    %5113 = vmatprep.subr.mxu0 %v5105
    %5114 = vmatpush1.msra.mxu0 %v5104
    %5115 = vmatprep.subr.mxu0 0.0
    %5116 = vmatpush1.msra.mxu0 0.0
    %5117 = vmatprep.subr.mxu0 0.0
    %5118 = vmatpush1.msra.mxu0 0.0
    %5119 = vmatprep.subr.mxu0 0.0
    %5120 = vmatpush1.msra.mxu0 0.0
    %5121 = vmatprep.subr.mxu0 0.0
    %5122 = vmatpush1.msra.mxu0 0.0
    %5123 = vmatprep.subr.mxu0 0.0
    %5124 = vmatpush1.msra.mxu0 0.0
    %5125 = vmatprep.subr.mxu0 0.0
    %5126 = vmatpush1.msra.mxu0 0.0
    %5127 = vmatprep.subr.mxu0 0.0
    %5128 = vmatpush1.msra.mxu0 0.0
    %5129 = vmatprep.subr.mxu0 0.0
    %5130 = vmatpush1.msra.mxu0 0.0
    %5131 = vmatprep.subr.mxu0 0.0
    %5132 = vmatpush1.msra.mxu0 0.0
    %5133 = vmatprep.subr.mxu0 0.0
    %5134 = vmatpush1.msra.mxu0 0.0
    %5135 = vmatprep.subr.mxu0 0.0
    %5136 = vmatpush1.msra.mxu0 0.0
    %5137 = vmatprep.subr.mxu0 0.0
    %5138 = vmatpush1.msra.mxu0 0.0
    %5139 = vmatprep.subr.mxu0 0.0
    %5140 = vmatpush1.msra.mxu0 0.0
    %5141 = vmatprep.subr.mxu0 0.0
    %5142 = vmatpush1.msra.mxu0 0.0
    %5143 = vmatprep.subr.mxu0 0.0
    %5144 = vmatpush1.msra.mxu0 0.0
    %5145 = vmatprep.subr.mxu0 0.0
    %5146 = vmatpush1.msra.mxu0 0.0
    %5147 = vmatprep.subr.mxu0 0.0
    %5148 = vmatpush1.msra.mxu0 0.0
    %5149 = vmatprep.subr.mxu0 0.0
    %5150 = vmatpush1.msra.mxu0 0.0
    %5151 = vmatprep.subr.mxu0 0.0
    %5152 = vmatpush1.msra.mxu0 0.0
    %5153 = vmatprep.subr.mxu0 0.0
    %5154 = vmatpush1.msra.mxu0 0.0
    %5155 = vmatprep.subr.mxu0 0.0
    %5156 = vmatpush1.msra.mxu0 0.0
    %5157 = vmatprep.subr.mxu0 0.0
    %5158 = vmatpush1.msra.mxu0 0.0
    %5159 = vmatprep.subr.mxu0 0.0
    %5160 = vmatpush1.msra.mxu0 0.0
    %5161 = vmatprep.subr.mxu0 0.0
    %5162 = vmatpush1.msra.mxu0 0.0
    %5163 = vmatprep.subr.mxu0 0.0
    %5164 = vmatpush1.msra.mxu0 0.0
    %5165 = vmatprep.subr.mxu0 0.0
    %5166 = vmatpush1.msra.mxu0 0.0
    %5167 = vmatprep.subr.mxu0 0.0
    %5168 = vmatpush1.msra.mxu0 0.0
    %5169 = vmatprep.subr.mxu0 0.0
    %5170 = vmatpush1.msra.mxu0 0.0
    %5171 = vmatprep.subr.mxu0 0.0
    %5172 = vmatpush1.msra.mxu0 0.0
    %5173 = vmatprep.subr.mxu0 0.0
    %5174 = vmatpush1.msra.mxu0 0.0
    %5175 = vmatprep.subr.mxu0 0.0
    %5176 = vmatpush1.msra.mxu0 0.0
    %5177 = vmatprep.mubr.f32.mxu0 0.0
    %5178 = vmatmul.mubr.f32.gmra.mrb[0].mxu0 %v5111
    %v5179 = vpop.f32.mrb[0].mxu0
    %v5180 = vadd.f32 0.0, %v5179
    %v5181 = vpop.f32.mrb[0].mxu0
    %v5182 = vadd.f32 0.0, %v5181
    %5183 = vdwg.mxu0
    %5184 = vmatprep.subr.mxu0 %v5107
    %5185 = vmatpush1.msra.mxu0 %v5106
    %5186 = vmatprep.subr.mxu0 0.0
    %5187 = vmatpush1.msra.mxu0 0.0
    %5188 = vmatprep.subr.mxu0 0.0
    %5189 = vmatpush1.msra.mxu0 0.0
    %5190 = vmatprep.subr.mxu0 0.0
    %5191 = vmatpush1.msra.mxu0 0.0
    %5192 = vmatprep.subr.mxu0 0.0
    %5193 = vmatpush1.msra.mxu0 0.0
    %5194 = vmatprep.subr.mxu0 0.0
    %5195 = vmatpush1.msra.mxu0 0.0
    %5196 = vmatprep.subr.mxu0 0.0
    %5197 = vmatpush1.msra.mxu0 0.0
    %5198 = vmatprep.subr.mxu0 0.0
    %5199 = vmatpush1.msra.mxu0 0.0
    %5200 = vmatprep.subr.mxu0 0.0
    %5201 = vmatpush1.msra.mxu0 0.0
    %5202 = vmatprep.subr.mxu0 0.0
    %5203 = vmatpush1.msra.mxu0 0.0
    %5204 = vmatprep.subr.mxu0 0.0
    %5205 = vmatpush1.msra.mxu0 0.0
    %5206 = vmatprep.subr.mxu0 0.0
    %5207 = vmatpush1.msra.mxu0 0.0
    %5208 = vmatprep.subr.mxu0 0.0
    %5209 = vmatpush1.msra.mxu0 0.0
    %5210 = vmatprep.subr.mxu0 0.0
    %5211 = vmatpush1.msra.mxu0 0.0
    %5212 = vmatprep.subr.mxu0 0.0
    %5213 = vmatpush1.msra.mxu0 0.0
    %5214 = vmatprep.subr.mxu0 0.0
    %5215 = vmatpush1.msra.mxu0 0.0
    %5216 = vmatprep.subr.mxu0 0.0
    %5217 = vmatpush1.msra.mxu0 0.0
    %5218 = vmatprep.subr.mxu0 0.0
    %5219 = vmatpush1.msra.mxu0 0.0
    %5220 = vmatprep.subr.mxu0 0.0
    %5221 = vmatpush1.msra.mxu0 0.0
    %5222 = vmatprep.subr.mxu0 0.0
    %5223 = vmatpush1.msra.mxu0 0.0
    %5224 = vmatprep.subr.mxu0 0.0
    %5225 = vmatpush1.msra.mxu0 0.0
    %5226 = vmatprep.subr.mxu0 0.0
    %5227 = vmatpush1.msra.mxu0 0.0
    %5228 = vmatprep.subr.mxu0 0.0
    %5229 = vmatpush1.msra.mxu0 0.0
    %5230 = vmatprep.subr.mxu0 0.0
    %5231 = vmatpush1.msra.mxu0 0.0
    %5232 = vmatprep.subr.mxu0 0.0
    %5233 = vmatpush1.msra.mxu0 0.0
    %5234 = vmatprep.subr.mxu0 0.0
    %5235 = vmatpush1.msra.mxu0 0.0
    %5236 = vmatprep.subr.mxu0 0.0
    %5237 = vmatpush1.msra.mxu0 0.0
    %5238 = vmatprep.subr.mxu0 0.0
    %5239 = vmatpush1.msra.mxu0 0.0
    %5240 = vmatprep.subr.mxu0 0.0
    %5241 = vmatpush1.msra.mxu0 0.0
    %5242 = vmatprep.subr.mxu0 0.0
    %5243 = vmatpush1.msra.mxu0 0.0
    %5244 = vmatprep.subr.mxu0 0.0
    %5245 = vmatpush1.msra.mxu0 0.0
    %5246 = vmatprep.subr.mxu0 0.0
    %5247 = vmatpush1.msra.mxu0 0.0
    %5248 = vmatprep.mubr.f32.mxu0 0.0
    %5249 = vmatmul.mubr.f32.gmra.mrb[0].mxu0 %v5111
    %v5250 = vpop.f32.mrb[0].mxu0
    %v5251 = vadd.f32 0.0, %v5250
    %v5252 = vpop.f32.mrb[0].mxu0
    %v5253 = vadd.f32 0.0, %v5252
    %5254 = vdwg.mxu0
    %v5256 = vsel %vm964, %v5091, 0
    %5258 = vmatprep.subr.mxu0 %v5088
    %5259 = vmatpush1.msra.mxu0 %v5087
    %5260 = vmatprep.subr.mxu0 0.0
    %5261 = vmatpush1.msra.mxu0 0.0
    %5262 = vmatprep.subr.mxu0 0.0
    %5263 = vmatpush1.msra.mxu0 0.0
    %5264 = vmatprep.subr.mxu0 0.0
    %5265 = vmatpush1.msra.mxu0 0.0
    %5266 = vmatprep.subr.mxu0 0.0
    %5267 = vmatpush1.msra.mxu0 0.0
    %5268 = vmatprep.subr.mxu0 0.0
    %5269 = vmatpush1.msra.mxu0 0.0
    %5270 = vmatprep.subr.mxu0 0.0
    %5271 = vmatpush1.msra.mxu0 0.0
    %5272 = vmatprep.subr.mxu0 0.0
    %5273 = vmatpush1.msra.mxu0 0.0
    %5274 = vmatprep.subr.mxu0 0.0
    %5275 = vmatpush1.msra.mxu0 0.0
    %5276 = vmatprep.subr.mxu0 0.0
    %5277 = vmatpush1.msra.mxu0 0.0
    %5278 = vmatprep.subr.mxu0 0.0
    %5279 = vmatpush1.msra.mxu0 0.0
    %5280 = vmatprep.subr.mxu0 0.0
    %5281 = vmatpush1.msra.mxu0 0.0
    %5282 = vmatprep.subr.mxu0 0.0
    %5283 = vmatpush1.msra.mxu0 0.0
    %5284 = vmatprep.subr.mxu0 0.0
    %5285 = vmatpush1.msra.mxu0 0.0
    %5286 = vmatprep.subr.mxu0 0.0
    %5287 = vmatpush1.msra.mxu0 0.0
    %5288 = vmatprep.subr.mxu0 0.0
    %5289 = vmatpush1.msra.mxu0 0.0
    %5290 = vmatprep.subr.mxu0 0.0
    %5291 = vmatpush1.msra.mxu0 0.0
    %5292 = vmatprep.subr.mxu0 0.0
    %5293 = vmatpush1.msra.mxu0 0.0
    %5294 = vmatprep.subr.mxu0 0.0
    %5295 = vmatpush1.msra.mxu0 0.0
    %5296 = vmatprep.subr.mxu0 0.0
    %5297 = vmatpush1.msra.mxu0 0.0
    %5298 = vmatprep.subr.mxu0 0.0
    %5299 = vmatpush1.msra.mxu0 0.0
    %5300 = vmatprep.subr.mxu0 0.0
    %5301 = vmatpush1.msra.mxu0 0.0
    %5302 = vmatprep.subr.mxu0 0.0
    %5303 = vmatpush1.msra.mxu0 0.0
    %5304 = vmatprep.subr.mxu0 0.0
    %5305 = vmatpush1.msra.mxu0 0.0
    %5306 = vmatprep.subr.mxu0 0.0
    %5307 = vmatpush1.msra.mxu0 0.0
    %5308 = vmatprep.subr.mxu0 0.0
    %5309 = vmatpush1.msra.mxu0 0.0
    %5310 = vmatprep.subr.mxu0 0.0
    %5311 = vmatpush1.msra.mxu0 0.0
    %5312 = vmatprep.subr.mxu0 0.0
    %5313 = vmatpush1.msra.mxu0 0.0
    %5314 = vmatprep.subr.mxu0 0.0
    %5315 = vmatpush1.msra.mxu0 0.0
    %5316 = vmatprep.subr.mxu0 0.0
    %5317 = vmatpush1.msra.mxu0 0.0
    %5318 = vmatprep.subr.mxu0 0.0
    %5319 = vmatpush1.msra.mxu0 0.0
    %5320 = vmatprep.subr.mxu0 0.0
    %5321 = vmatpush1.msra.mxu0 0.0
    %5322 = vmatprep.mubr.f32.mxu0 0.0
    %5323 = vmatmul.mubr.f32.gmra.mrb[0].mxu0 %v5256
    %v5324 = vpop.f32.mrb[0].mxu0
    %v5325 = vadd.f32 %v5180, %v5324
    %v5326 = vpop.f32.mrb[0].mxu0
    %v5327 = vadd.f32 %v5182, %v5326
    %5328 = vdwg.mxu0
    %5329 = vmatprep.subr.mxu0 %v5090
    %5330 = vmatpush1.msra.mxu0 %v5089
    %5331 = vmatprep.subr.mxu0 0.0
    %5332 = vmatpush1.msra.mxu0 0.0
    %5333 = vmatprep.subr.mxu0 0.0
    %5334 = vmatpush1.msra.mxu0 0.0
    %5335 = vmatprep.subr.mxu0 0.0
    %5336 = vmatpush1.msra.mxu0 0.0
    %5337 = vmatprep.subr.mxu0 0.0
    %5338 = vmatpush1.msra.mxu0 0.0
    %5339 = vmatprep.subr.mxu0 0.0
    %5340 = vmatpush1.msra.mxu0 0.0
    %5341 = vmatprep.subr.mxu0 0.0
    %5342 = vmatpush1.msra.mxu0 0.0
    %5343 = vmatprep.subr.mxu0 0.0
    %5344 = vmatpush1.msra.mxu0 0.0
    %5345 = vmatprep.subr.mxu0 0.0
    %5346 = vmatpush1.msra.mxu0 0.0
    %5347 = vmatprep.subr.mxu0 0.0
    %5348 = vmatpush1.msra.mxu0 0.0
    %5349 = vmatprep.subr.mxu0 0.0
    %5350 = vmatpush1.msra.mxu0 0.0
    %5351 = vmatprep.subr.mxu0 0.0
    %5352 = vmatpush1.msra.mxu0 0.0
    %5353 = vmatprep.subr.mxu0 0.0
    %5354 = vmatpush1.msra.mxu0 0.0
    %5355 = vmatprep.subr.mxu0 0.0
    %5356 = vmatpush1.msra.mxu0 0.0
    %5357 = vmatprep.subr.mxu0 0.0
    %5358 = vmatpush1.msra.mxu0 0.0
    %5359 = vmatprep.subr.mxu0 0.0
    %5360 = vmatpush1.msra.mxu0 0.0
    %5361 = vmatprep.subr.mxu0 0.0
    %5362 = vmatpush1.msra.mxu0 0.0
    %5363 = vmatprep.subr.mxu0 0.0
    %5364 = vmatpush1.msra.mxu0 0.0
    %5365 = vmatprep.subr.mxu0 0.0
    %5366 = vmatpush1.msra.mxu0 0.0
    %5367 = vmatprep.subr.mxu0 0.0
    %5368 = vmatpush1.msra.mxu0 0.0
    %5369 = vmatprep.subr.mxu0 0.0
    %5370 = vmatpush1.msra.mxu0 0.0
    %5371 = vmatprep.subr.mxu0 0.0
    %5372 = vmatpush1.msra.mxu0 0.0
    %5373 = vmatprep.subr.mxu0 0.0
    %5374 = vmatpush1.msra.mxu0 0.0
    %5375 = vmatprep.subr.mxu0 0.0
    %5376 = vmatpush1.msra.mxu0 0.0
    %5377 = vmatprep.subr.mxu0 0.0
    %5378 = vmatpush1.msra.mxu0 0.0
    %5379 = vmatprep.subr.mxu0 0.0
    %5380 = vmatpush1.msra.mxu0 0.0
    %5381 = vmatprep.subr.mxu0 0.0
    %5382 = vmatpush1.msra.mxu0 0.0
    %5383 = vmatprep.subr.mxu0 0.0
    %5384 = vmatpush1.msra.mxu0 0.0
    %5385 = vmatprep.subr.mxu0 0.0
    %5386 = vmatpush1.msra.mxu0 0.0
    %5387 = vmatprep.subr.mxu0 0.0
    %5388 = vmatpush1.msra.mxu0 0.0
    %5389 = vmatprep.subr.mxu0 0.0
    %5390 = vmatpush1.msra.mxu0 0.0
    %5391 = vmatprep.subr.mxu0 0.0
    %5392 = vmatpush1.msra.mxu0 0.0
    %5393 = vmatprep.mubr.f32.mxu0 0.0
    %5394 = vmatmul.mubr.f32.gmra.mrb[0].mxu0 %v5256
    %v5395 = vpop.f32.mrb[0].mxu0
    %v5396 = vadd.f32 %v5251, %v5395
    %v5397 = vpop.f32.mrb[0].mxu0
    %v5398 = vadd.f32 %v5253, %v5397
    %5399 = vdwg.mxu0
    %5400 = vrot.lane.b32.xlu0 %v5070, 15
    %v5401 = vpop.permute.xlu0 %5400
    %5402 = vrot.lane.b32.xlu0 %v5071, 15
    %v5403 = vpop.permute.xlu0 %5402
    %5404 = vrot.lane.b32.xlu0 %v5072, 15
    %v5405 = vpop.permute.xlu0 %5404
    %5406 = vrot.lane.b32.xlu0 %v5073, 15
    %v5407 = vpop.permute.xlu0 %5406
    %v5408 = vsel %vm298, %v5405, %v5407
    %v5409 = vsel %vm298, %v5403, %v5405
    %v5410 = vsel %vm298, %v5401, %v5403
    %v5411 = vsel %vm298, %v5407, %v5401
    %v5412 = vmul.f32 %v5411, %v144
    %v5413 = vmul.f32 %v5410, %v145
    %v5414 = vmul.f32 %v5409, %v146
    %v5415 = vmul.f32 %v5408, %v147
    %s5416 = scalar_lea.vmem %s7, 2
    %v5417 = vld [vmem:[%s5416] sm:$0x1]
    %v5419 = vsel %vm964, %v5417, 0
    %5421 = vmatprep.subr.mxu0 %v5413
    %5422 = vmatpush1.msra.mxu0 %v5412
    %5423 = vmatprep.subr.mxu0 0.0
    %5424 = vmatpush1.msra.mxu0 0.0
    %5425 = vmatprep.subr.mxu0 0.0
    %5426 = vmatpush1.msra.mxu0 0.0
    %5427 = vmatprep.subr.mxu0 0.0
    %5428 = vmatpush1.msra.mxu0 0.0
    %5429 = vmatprep.subr.mxu0 0.0
    %5430 = vmatpush1.msra.mxu0 0.0
    %5431 = vmatprep.subr.mxu0 0.0
    %5432 = vmatpush1.msra.mxu0 0.0
    %5433 = vmatprep.subr.mxu0 0.0
    %5434 = vmatpush1.msra.mxu0 0.0
    %5435 = vmatprep.subr.mxu0 0.0
    %5436 = vmatpush1.msra.mxu0 0.0
    %5437 = vmatprep.subr.mxu0 0.0
    %5438 = vmatpush1.msra.mxu0 0.0
    %5439 = vmatprep.subr.mxu0 0.0
    %5440 = vmatpush1.msra.mxu0 0.0
    %5441 = vmatprep.subr.mxu0 0.0
    %5442 = vmatpush1.msra.mxu0 0.0
    %5443 = vmatprep.subr.mxu0 0.0
    %5444 = vmatpush1.msra.mxu0 0.0
    %5445 = vmatprep.subr.mxu0 0.0
    %5446 = vmatpush1.msra.mxu0 0.0
    %5447 = vmatprep.subr.mxu0 0.0
    %5448 = vmatpush1.msra.mxu0 0.0
    %5449 = vmatprep.subr.mxu0 0.0
    %5450 = vmatpush1.msra.mxu0 0.0
    %5451 = vmatprep.subr.mxu0 0.0
    %5452 = vmatpush1.msra.mxu0 0.0
    %5453 = vmatprep.subr.mxu0 0.0
    %5454 = vmatpush1.msra.mxu0 0.0
    %5455 = vmatprep.subr.mxu0 0.0
    %5456 = vmatpush1.msra.mxu0 0.0
    %5457 = vmatprep.subr.mxu0 0.0
    %5458 = vmatpush1.msra.mxu0 0.0
    %5459 = vmatprep.subr.mxu0 0.0
    %5460 = vmatpush1.msra.mxu0 0.0
    %5461 = vmatprep.subr.mxu0 0.0
    %5462 = vmatpush1.msra.mxu0 0.0
    %5463 = vmatprep.subr.mxu0 0.0
    %5464 = vmatpush1.msra.mxu0 0.0
    %5465 = vmatprep.subr.mxu0 0.0
    %5466 = vmatpush1.msra.mxu0 0.0
    %5467 = vmatprep.subr.mxu0 0.0
    %5468 = vmatpush1.msra.mxu0 0.0
    %5469 = vmatprep.subr.mxu0 0.0
    %5470 = vmatpush1.msra.mxu0 0.0
    %5471 = vmatprep.subr.mxu0 0.0
    %5472 = vmatpush1.msra.mxu0 0.0
    %5473 = vmatprep.subr.mxu0 0.0
    %5474 = vmatpush1.msra.mxu0 0.0
    %5475 = vmatprep.subr.mxu0 0.0
    %5476 = vmatpush1.msra.mxu0 0.0
    %5477 = vmatprep.subr.mxu0 0.0
    %5478 = vmatpush1.msra.mxu0 0.0
    %5479 = vmatprep.subr.mxu0 0.0
    %5480 = vmatpush1.msra.mxu0 0.0
    %5481 = vmatprep.subr.mxu0 0.0
    %5482 = vmatpush1.msra.mxu0 0.0
    %5483 = vmatprep.subr.mxu0 0.0
    %5484 = vmatpush1.msra.mxu0 0.0
    %5485 = vmatprep.mubr.f32.mxu0 0.0
    %5486 = vmatmul.mubr.f32.gmra.mrb[0].mxu0 %v5419
    %v5487 = vpop.f32.mrb[0].mxu0
    %v5488 = vadd.f32 0.0, %v5487
    %v5489 = vpop.f32.mrb[0].mxu0
    %v5490 = vadd.f32 0.0, %v5489
    %5491 = vdwg.mxu0
    %5492 = vmatprep.subr.mxu0 %v5415
    %5493 = vmatpush1.msra.mxu0 %v5414
    %5494 = vmatprep.subr.mxu0 0.0
    %5495 = vmatpush1.msra.mxu0 0.0
    %5496 = vmatprep.subr.mxu0 0.0
    %5497 = vmatpush1.msra.mxu0 0.0
    %5498 = vmatprep.subr.mxu0 0.0
    %5499 = vmatpush1.msra.mxu0 0.0
    %5500 = vmatprep.subr.mxu0 0.0
    %5501 = vmatpush1.msra.mxu0 0.0
    %5502 = vmatprep.subr.mxu0 0.0
    %5503 = vmatpush1.msra.mxu0 0.0
    %5504 = vmatprep.subr.mxu0 0.0
    %5505 = vmatpush1.msra.mxu0 0.0
    %5506 = vmatprep.subr.mxu0 0.0
    %5507 = vmatpush1.msra.mxu0 0.0
    %5508 = vmatprep.subr.mxu0 0.0
    %5509 = vmatpush1.msra.mxu0 0.0
    %5510 = vmatprep.subr.mxu0 0.0
    %5511 = vmatpush1.msra.mxu0 0.0
    %5512 = vmatprep.subr.mxu0 0.0
    %5513 = vmatpush1.msra.mxu0 0.0
    %5514 = vmatprep.subr.mxu0 0.0
    %5515 = vmatpush1.msra.mxu0 0.0
    %5516 = vmatprep.subr.mxu0 0.0
    %5517 = vmatpush1.msra.mxu0 0.0
    %5518 = vmatprep.subr.mxu0 0.0
    %5519 = vmatpush1.msra.mxu0 0.0
    %5520 = vmatprep.subr.mxu0 0.0
    %5521 = vmatpush1.msra.mxu0 0.0
    %5522 = vmatprep.subr.mxu0 0.0
    %5523 = vmatpush1.msra.mxu0 0.0
    %5524 = vmatprep.subr.mxu0 0.0
    %5525 = vmatpush1.msra.mxu0 0.0
    %5526 = vmatprep.subr.mxu0 0.0
    %5527 = vmatpush1.msra.mxu0 0.0
    %5528 = vmatprep.subr.mxu0 0.0
    %5529 = vmatpush1.msra.mxu0 0.0
    %5530 = vmatprep.subr.mxu0 0.0
    %5531 = vmatpush1.msra.mxu0 0.0
    %5532 = vmatprep.subr.mxu0 0.0
    %5533 = vmatpush1.msra.mxu0 0.0
    %5534 = vmatprep.subr.mxu0 0.0
    %5535 = vmatpush1.msra.mxu0 0.0
    %5536 = vmatprep.subr.mxu0 0.0
    %5537 = vmatpush1.msra.mxu0 0.0
    %5538 = vmatprep.subr.mxu0 0.0
    %5539 = vmatpush1.msra.mxu0 0.0
    %5540 = vmatprep.subr.mxu0 0.0
    %5541 = vmatpush1.msra.mxu0 0.0
    %5542 = vmatprep.subr.mxu0 0.0
    %5543 = vmatpush1.msra.mxu0 0.0
    %5544 = vmatprep.subr.mxu0 0.0
    %5545 = vmatpush1.msra.mxu0 0.0
    %5546 = vmatprep.subr.mxu0 0.0
    %5547 = vmatpush1.msra.mxu0 0.0
    %5548 = vmatprep.subr.mxu0 0.0
    %5549 = vmatpush1.msra.mxu0 0.0
    %5550 = vmatprep.subr.mxu0 0.0
    %5551 = vmatpush1.msra.mxu0 0.0
    %5552 = vmatprep.subr.mxu0 0.0
    %5553 = vmatpush1.msra.mxu0 0.0
    %5554 = vmatprep.subr.mxu0 0.0
    %5555 = vmatpush1.msra.mxu0 0.0
    %5556 = vmatprep.mubr.f32.mxu0 0.0
    %5557 = vmatmul.mubr.f32.gmra.mrb[0].mxu0 %v5419
    %v5558 = vpop.f32.mrb[0].mxu0
    %v5559 = vadd.f32 0.0, %v5558
    %v5560 = vpop.f32.mrb[0].mxu0
    %v5561 = vadd.f32 0.0, %v5560
    %5562 = vdwg.mxu0
    %v5563 = vadd.f32 %v5325, %v5488
    %v5564 = vadd.f32 %v5327, %v5490
    %v5565 = vadd.f32 %v5396, %v5559
    %v5566 = vadd.f32 %v5398, %v5561
    %5567 = vrot.lane.b32.xlu0 %v5070, 1
    %v5568 = vpop.permute.xlu0 %5567
    %5569 = vrot.lane.b32.xlu0 %v5071, 1
    %v5570 = vpop.permute.xlu0 %5569
    %5571 = vrot.lane.b32.xlu0 %v5072, 1
    %v5572 = vpop.permute.xlu0 %5571
    %5573 = vrot.lane.b32.xlu0 %v5073, 1
    %v5574 = vpop.permute.xlu0 %5573
    %v5575 = vsel %vm346, %v5572, %v5574
    %v5576 = vsel %vm346, %v5570, %v5572
    %v5577 = vsel %vm346, %v5568, %v5570
    %v5578 = vsel %vm346, %v5574, %v5568
    %v5579 = vmul.f32 %v5578, %v124
    %v5580 = vmul.f32 %v5577, %v125
    %v5581 = vmul.f32 %v5576, %v126
    %v5582 = vmul.f32 %v5575, %v127
    %s5583 = scalar_lea.vmem %s7, 3
    %v5584 = vld [vmem:[%s5583] sm:$0x1]
    %v5586 = vsel %vm964, %v5584, 0
    %5588 = vmatprep.subr.mxu0 %v5580
    %5589 = vmatpush1.msra.mxu0 %v5579
    %5590 = vmatprep.subr.mxu0 0.0
    %5591 = vmatpush1.msra.mxu0 0.0
    %5592 = vmatprep.subr.mxu0 0.0
    %5593 = vmatpush1.msra.mxu0 0.0
    %5594 = vmatprep.subr.mxu0 0.0
    %5595 = vmatpush1.msra.mxu0 0.0
    %5596 = vmatprep.subr.mxu0 0.0
    %5597 = vmatpush1.msra.mxu0 0.0
    %5598 = vmatprep.subr.mxu0 0.0
    %5599 = vmatpush1.msra.mxu0 0.0
    %5600 = vmatprep.subr.mxu0 0.0
    %5601 = vmatpush1.msra.mxu0 0.0
    %5602 = vmatprep.subr.mxu0 0.0
    %5603 = vmatpush1.msra.mxu0 0.0
    %5604 = vmatprep.subr.mxu0 0.0
    %5605 = vmatpush1.msra.mxu0 0.0
    %5606 = vmatprep.subr.mxu0 0.0
    %5607 = vmatpush1.msra.mxu0 0.0
    %5608 = vmatprep.subr.mxu0 0.0
    %5609 = vmatpush1.msra.mxu0 0.0
    %5610 = vmatprep.subr.mxu0 0.0
    %5611 = vmatpush1.msra.mxu0 0.0
    %5612 = vmatprep.subr.mxu0 0.0
    %5613 = vmatpush1.msra.mxu0 0.0
    %5614 = vmatprep.subr.mxu0 0.0
    %5615 = vmatpush1.msra.mxu0 0.0
    %5616 = vmatprep.subr.mxu0 0.0
    %5617 = vmatpush1.msra.mxu0 0.0
    %5618 = vmatprep.subr.mxu0 0.0
    %5619 = vmatpush1.msra.mxu0 0.0
    %5620 = vmatprep.subr.mxu0 0.0
    %5621 = vmatpush1.msra.mxu0 0.0
    %5622 = vmatprep.subr.mxu0 0.0
    %5623 = vmatpush1.msra.mxu0 0.0
    %5624 = vmatprep.subr.mxu0 0.0
    %5625 = vmatpush1.msra.mxu0 0.0
    %5626 = vmatprep.subr.mxu0 0.0
    %5627 = vmatpush1.msra.mxu0 0.0
    %5628 = vmatprep.subr.mxu0 0.0
    %5629 = vmatpush1.msra.mxu0 0.0
    %5630 = vmatprep.subr.mxu0 0.0
    %5631 = vmatpush1.msra.mxu0 0.0
    %5632 = vmatprep.subr.mxu0 0.0
    %5633 = vmatpush1.msra.mxu0 0.0
    %5634 = vmatprep.subr.mxu0 0.0
    %5635 = vmatpush1.msra.mxu0 0.0
    %5636 = vmatprep.subr.mxu0 0.0
    %5637 = vmatpush1.msra.mxu0 0.0
    %5638 = vmatprep.subr.mxu0 0.0
    %5639 = vmatpush1.msra.mxu0 0.0
    %5640 = vmatprep.subr.mxu0 0.0
    %5641 = vmatpush1.msra.mxu0 0.0
    %5642 = vmatprep.subr.mxu0 0.0
    %5643 = vmatpush1.msra.mxu0 0.0
    %5644 = vmatprep.subr.mxu0 0.0
    %5645 = vmatpush1.msra.mxu0 0.0
    %5646 = vmatprep.subr.mxu0 0.0
    %5647 = vmatpush1.msra.mxu0 0.0
    %5648 = vmatprep.subr.mxu0 0.0
    %5649 = vmatpush1.msra.mxu0 0.0
    %5650 = vmatprep.subr.mxu0 0.0
    %5651 = vmatpush1.msra.mxu0 0.0
    %5652 = vmatprep.mubr.f32.mxu0 0.0
    %5653 = vmatmul.mubr.f32.gmra.mrb[0].mxu0 %v5586
    %v5654 = vpop.f32.mrb[0].mxu0
    %v5655 = vadd.f32 0.0, %v5654
    %v5656 = vpop.f32.mrb[0].mxu0
    %v5657 = vadd.f32 0.0, %v5656
    %5658 = vdwg.mxu0
    %5659 = vmatprep.subr.mxu0 %v5582
    %5660 = vmatpush1.msra.mxu0 %v5581
    %5661 = vmatprep.subr.mxu0 0.0
    %5662 = vmatpush1.msra.mxu0 0.0
    %5663 = vmatprep.subr.mxu0 0.0
    %5664 = vmatpush1.msra.mxu0 0.0
    %5665 = vmatprep.subr.mxu0 0.0
    %5666 = vmatpush1.msra.mxu0 0.0
    %5667 = vmatprep.subr.mxu0 0.0
    %5668 = vmatpush1.msra.mxu0 0.0
    %5669 = vmatprep.subr.mxu0 0.0
    %5670 = vmatpush1.msra.mxu0 0.0
    %5671 = vmatprep.subr.mxu0 0.0
    %5672 = vmatpush1.msra.mxu0 0.0
    %5673 = vmatprep.subr.mxu0 0.0
    %5674 = vmatpush1.msra.mxu0 0.0
    %5675 = vmatprep.subr.mxu0 0.0
    %5676 = vmatpush1.msra.mxu0 0.0
    %5677 = vmatprep.subr.mxu0 0.0
    %5678 = vmatpush1.msra.mxu0 0.0
    %5679 = vmatprep.subr.mxu0 0.0
    %5680 = vmatpush1.msra.mxu0 0.0
    %5681 = vmatprep.subr.mxu0 0.0
    %5682 = vmatpush1.msra.mxu0 0.0
    %5683 = vmatprep.subr.mxu0 0.0
    %5684 = vmatpush1.msra.mxu0 0.0
    %5685 = vmatprep.subr.mxu0 0.0
    %5686 = vmatpush1.msra.mxu0 0.0
    %5687 = vmatprep.subr.mxu0 0.0
    %5688 = vmatpush1.msra.mxu0 0.0
    %5689 = vmatprep.subr.mxu0 0.0
    %5690 = vmatpush1.msra.mxu0 0.0
    %5691 = vmatprep.subr.mxu0 0.0
    %5692 = vmatpush1.msra.mxu0 0.0
    %5693 = vmatprep.subr.mxu0 0.0
    %5694 = vmatpush1.msra.mxu0 0.0
    %5695 = vmatprep.subr.mxu0 0.0
    %5696 = vmatpush1.msra.mxu0 0.0
    %5697 = vmatprep.subr.mxu0 0.0
    %5698 = vmatpush1.msra.mxu0 0.0
    %5699 = vmatprep.subr.mxu0 0.0
    %5700 = vmatpush1.msra.mxu0 0.0
    %5701 = vmatprep.subr.mxu0 0.0
    %5702 = vmatpush1.msra.mxu0 0.0
    %5703 = vmatprep.subr.mxu0 0.0
    %5704 = vmatpush1.msra.mxu0 0.0
    %5705 = vmatprep.subr.mxu0 0.0
    %5706 = vmatpush1.msra.mxu0 0.0
    %5707 = vmatprep.subr.mxu0 0.0
    %5708 = vmatpush1.msra.mxu0 0.0
    %5709 = vmatprep.subr.mxu0 0.0
    %5710 = vmatpush1.msra.mxu0 0.0
    %5711 = vmatprep.subr.mxu0 0.0
    %5712 = vmatpush1.msra.mxu0 0.0
    %5713 = vmatprep.subr.mxu0 0.0
    %5714 = vmatpush1.msra.mxu0 0.0
    %5715 = vmatprep.subr.mxu0 0.0
    %5716 = vmatpush1.msra.mxu0 0.0
    %5717 = vmatprep.subr.mxu0 0.0
    %5718 = vmatpush1.msra.mxu0 0.0
    %5719 = vmatprep.subr.mxu0 0.0
    %5720 = vmatpush1.msra.mxu0 0.0
    %5721 = vmatprep.subr.mxu0 0.0
    %5722 = vmatpush1.msra.mxu0 0.0
    %5723 = vmatprep.mubr.f32.mxu0 0.0
    %5724 = vmatmul.mubr.f32.gmra.mrb[0].mxu0 %v5586
    %v5725 = vpop.f32.mrb[0].mxu0
    %v5726 = vadd.f32 0.0, %v5725
    %v5727 = vpop.f32.mrb[0].mxu0
    %v5728 = vadd.f32 0.0, %v5727
    %5729 = vdwg.mxu0
    %v5730 = vadd.f32 %v5563, %v5655
    %v5731 = vadd.f32 %v5564, %v5657
    %v5732 = vadd.f32 %v5565, %v5726
    %v5733 = vadd.f32 %v5566, %v5728
    %s5734 = scalar_lea.vmem %s7, 4
    %v5735 = vld [vmem:[%s5734] sm:$0x1]
    %v5737 = vsel %vm964, %v5735, 0
    %5739 = vmatprep.subr.mxu0 %v5071
    %5740 = vmatpush1.msra.mxu0 %v5070
    %5741 = vmatprep.subr.mxu0 0.0
    %5742 = vmatpush1.msra.mxu0 0.0
    %5743 = vmatprep.subr.mxu0 0.0
    %5744 = vmatpush1.msra.mxu0 0.0
    %5745 = vmatprep.subr.mxu0 0.0
    %5746 = vmatpush1.msra.mxu0 0.0
    %5747 = vmatprep.subr.mxu0 0.0
    %5748 = vmatpush1.msra.mxu0 0.0
    %5749 = vmatprep.subr.mxu0 0.0
    %5750 = vmatpush1.msra.mxu0 0.0
    %5751 = vmatprep.subr.mxu0 0.0
    %5752 = vmatpush1.msra.mxu0 0.0
    %5753 = vmatprep.subr.mxu0 0.0
    %5754 = vmatpush1.msra.mxu0 0.0
    %5755 = vmatprep.subr.mxu0 0.0
    %5756 = vmatpush1.msra.mxu0 0.0
    %5757 = vmatprep.subr.mxu0 0.0
    %5758 = vmatpush1.msra.mxu0 0.0
    %5759 = vmatprep.subr.mxu0 0.0
    %5760 = vmatpush1.msra.mxu0 0.0
    %5761 = vmatprep.subr.mxu0 0.0
    %5762 = vmatpush1.msra.mxu0 0.0
    %5763 = vmatprep.subr.mxu0 0.0
    %5764 = vmatpush1.msra.mxu0 0.0
    %5765 = vmatprep.subr.mxu0 0.0
    %5766 = vmatpush1.msra.mxu0 0.0
    %5767 = vmatprep.subr.mxu0 0.0
    %5768 = vmatpush1.msra.mxu0 0.0
    %5769 = vmatprep.subr.mxu0 0.0
    %5770 = vmatpush1.msra.mxu0 0.0
    %5771 = vmatprep.subr.mxu0 0.0
    %5772 = vmatpush1.msra.mxu0 0.0
    %5773 = vmatprep.subr.mxu0 0.0
    %5774 = vmatpush1.msra.mxu0 0.0
    %5775 = vmatprep.subr.mxu0 0.0
    %5776 = vmatpush1.msra.mxu0 0.0
    %5777 = vmatprep.subr.mxu0 0.0
    %5778 = vmatpush1.msra.mxu0 0.0
    %5779 = vmatprep.subr.mxu0 0.0
    %5780 = vmatpush1.msra.mxu0 0.0
    %5781 = vmatprep.subr.mxu0 0.0
    %5782 = vmatpush1.msra.mxu0 0.0
    %5783 = vmatprep.subr.mxu0 0.0
    %5784 = vmatpush1.msra.mxu0 0.0
    %5785 = vmatprep.subr.mxu0 0.0
    %5786 = vmatpush1.msra.mxu0 0.0
    %5787 = vmatprep.subr.mxu0 0.0
    %5788 = vmatpush1.msra.mxu0 0.0
    %5789 = vmatprep.subr.mxu0 0.0
    %5790 = vmatpush1.msra.mxu0 0.0
    %5791 = vmatprep.subr.mxu0 0.0
    %5792 = vmatpush1.msra.mxu0 0.0
    %5793 = vmatprep.subr.mxu0 0.0
    %5794 = vmatpush1.msra.mxu0 0.0
    %5795 = vmatprep.subr.mxu0 0.0
    %5796 = vmatpush1.msra.mxu0 0.0
    %5797 = vmatprep.subr.mxu0 0.0
    %5798 = vmatpush1.msra.mxu0 0.0
    %5799 = vmatprep.subr.mxu0 0.0
    %5800 = vmatpush1.msra.mxu0 0.0
    %5801 = vmatprep.subr.mxu0 0.0
    %5802 = vmatpush1.msra.mxu0 0.0
    %5803 = vmatprep.mubr.f32.mxu0 0.0
    %5804 = vmatmul.mubr.f32.gmra.mrb[0].mxu0 %v5737
    %v5805 = vpop.f32.mrb[0].mxu0
    %v5806 = vadd.f32 0.0, %v5805
    %v5807 = vpop.f32.mrb[0].mxu0
    %v5808 = vadd.f32 0.0, %v5807
    %5809 = vdwg.mxu0
    %5810 = vmatprep.subr.mxu0 %v5073
    %5811 = vmatpush1.msra.mxu0 %v5072
    %5812 = vmatprep.subr.mxu0 0.0
    %5813 = vmatpush1.msra.mxu0 0.0
    %5814 = vmatprep.subr.mxu0 0.0
    %5815 = vmatpush1.msra.mxu0 0.0
    %5816 = vmatprep.subr.mxu0 0.0
    %5817 = vmatpush1.msra.mxu0 0.0
    %5818 = vmatprep.subr.mxu0 0.0
    %5819 = vmatpush1.msra.mxu0 0.0
    %5820 = vmatprep.subr.mxu0 0.0
    %5821 = vmatpush1.msra.mxu0 0.0
    %5822 = vmatprep.subr.mxu0 0.0
    %5823 = vmatpush1.msra.mxu0 0.0
    %5824 = vmatprep.subr.mxu0 0.0
    %5825 = vmatpush1.msra.mxu0 0.0
    %5826 = vmatprep.subr.mxu0 0.0
    %5827 = vmatpush1.msra.mxu0 0.0
    %5828 = vmatprep.subr.mxu0 0.0
    %5829 = vmatpush1.msra.mxu0 0.0
    %5830 = vmatprep.subr.mxu0 0.0
    %5831 = vmatpush1.msra.mxu0 0.0
    %5832 = vmatprep.subr.mxu0 0.0
    %5833 = vmatpush1.msra.mxu0 0.0
    %5834 = vmatprep.subr.mxu0 0.0
    %5835 = vmatpush1.msra.mxu0 0.0
    %5836 = vmatprep.subr.mxu0 0.0
    %5837 = vmatpush1.msra.mxu0 0.0
    %5838 = vmatprep.subr.mxu0 0.0
    %5839 = vmatpush1.msra.mxu0 0.0
    %5840 = vmatprep.subr.mxu0 0.0
    %5841 = vmatpush1.msra.mxu0 0.0
    %5842 = vmatprep.subr.mxu0 0.0
    %5843 = vmatpush1.msra.mxu0 0.0
    %5844 = vmatprep.subr.mxu0 0.0
    %5845 = vmatpush1.msra.mxu0 0.0
    %5846 = vmatprep.subr.mxu0 0.0
    %5847 = vmatpush1.msra.mxu0 0.0
    %5848 = vmatprep.subr.mxu0 0.0
    %5849 = vmatpush1.msra.mxu0 0.0
    %5850 = vmatprep.subr.mxu0 0.0
    %5851 = vmatpush1.msra.mxu0 0.0
    %5852 = vmatprep.subr.mxu0 0.0
    %5853 = vmatpush1.msra.mxu0 0.0
    %5854 = vmatprep.subr.mxu0 0.0
    %5855 = vmatpush1.msra.mxu0 0.0
    %5856 = vmatprep.subr.mxu0 0.0
    %5857 = vmatpush1.msra.mxu0 0.0
    %5858 = vmatprep.subr.mxu0 0.0
    %5859 = vmatpush1.msra.mxu0 0.0
    %5860 = vmatprep.subr.mxu0 0.0
    %5861 = vmatpush1.msra.mxu0 0.0
    %5862 = vmatprep.subr.mxu0 0.0
    %5863 = vmatpush1.msra.mxu0 0.0
    %5864 = vmatprep.subr.mxu0 0.0
    %5865 = vmatpush1.msra.mxu0 0.0
    %5866 = vmatprep.subr.mxu0 0.0
    %5867 = vmatpush1.msra.mxu0 0.0
    %5868 = vmatprep.subr.mxu0 0.0
    %5869 = vmatpush1.msra.mxu0 0.0
    %5870 = vmatprep.subr.mxu0 0.0
    %5871 = vmatpush1.msra.mxu0 0.0
    %5872 = vmatprep.subr.mxu0 0.0
    %5873 = vmatpush1.msra.mxu0 0.0
    %5874 = vmatprep.mubr.f32.mxu0 0.0
    %5875 = vmatmul.mubr.f32.gmra.mrb[0].mxu0 %v5737
    %v5876 = vpop.f32.mrb[0].mxu0
    %v5877 = vadd.f32 0.0, %v5876
    %v5878 = vpop.f32.mrb[0].mxu0
    %v5879 = vadd.f32 0.0, %v5878
    %5880 = vdwg.mxu0
    %v5881 = vadd.f32 %v5730, %v5806
    %v5882 = vadd.f32 %v5731, %v5808
    %v5883 = vadd.f32 %v5732, %v5877
    %v5884 = vadd.f32 %v5733, %v5879
    %5885 = vrot.lane.b32.xlu0 %v5070, 127
    %v5886 = vpop.permute.xlu0 %5885
    %5887 = vrot.lane.b32.xlu0 %v5071, 127
    %v5888 = vpop.permute.xlu0 %5887
    %5889 = vrot.lane.b32.xlu0 %v5072, 127
    %v5890 = vpop.permute.xlu0 %5889
    %5891 = vrot.lane.b32.xlu0 %v5073, 127
    %v5892 = vpop.permute.xlu0 %5891
    %v5893 = vsel %vm409, %v5890, %v5892
    %v5894 = vsel %vm409, %v5888, %v5890
    %v5895 = vsel %vm409, %v5886, %v5888
    %v5896 = vsel %vm409, %v5892, %v5886
    %v5897 = vmul.f32 %v5895, %v136
    %v5898 = vmul.f32 %v5894, %v137
    %v5899 = vmul.f32 %v5893, %v138
    %v5900 = vmul.f32 %v5896, %v139
    %s5901 = scalar_lea.vmem %s7, 5
    %v5902 = vld [vmem:[%s5901] sm:$0x1]
    %v5904 = vsel %vm964, %v5902, 0
    %5906 = vmatprep.subr.mxu0 %v5898
    %5907 = vmatpush1.msra.mxu0 %v5897
    %5908 = vmatprep.subr.mxu0 0.0
    %5909 = vmatpush1.msra.mxu0 0.0
    %5910 = vmatprep.subr.mxu0 0.0
    %5911 = vmatpush1.msra.mxu0 0.0
    %5912 = vmatprep.subr.mxu0 0.0
    %5913 = vmatpush1.msra.mxu0 0.0
    %5914 = vmatprep.subr.mxu0 0.0
    %5915 = vmatpush1.msra.mxu0 0.0
    %5916 = vmatprep.subr.mxu0 0.0
    %5917 = vmatpush1.msra.mxu0 0.0
    %5918 = vmatprep.subr.mxu0 0.0
    %5919 = vmatpush1.msra.mxu0 0.0
    %5920 = vmatprep.subr.mxu0 0.0
    %5921 = vmatpush1.msra.mxu0 0.0
    %5922 = vmatprep.subr.mxu0 0.0
    %5923 = vmatpush1.msra.mxu0 0.0
    %5924 = vmatprep.subr.mxu0 0.0
    %5925 = vmatpush1.msra.mxu0 0.0
    %5926 = vmatprep.subr.mxu0 0.0
    %5927 = vmatpush1.msra.mxu0 0.0
    %5928 = vmatprep.subr.mxu0 0.0
    %5929 = vmatpush1.msra.mxu0 0.0
    %5930 = vmatprep.subr.mxu0 0.0
    %5931 = vmatpush1.msra.mxu0 0.0
    %5932 = vmatprep.subr.mxu0 0.0
    %5933 = vmatpush1.msra.mxu0 0.0
    %5934 = vmatprep.subr.mxu0 0.0
    %5935 = vmatpush1.msra.mxu0 0.0
    %5936 = vmatprep.subr.mxu0 0.0
    %5937 = vmatpush1.msra.mxu0 0.0
    %5938 = vmatprep.subr.mxu0 0.0
    %5939 = vmatpush1.msra.mxu0 0.0
    %5940 = vmatprep.subr.mxu0 0.0
    %5941 = vmatpush1.msra.mxu0 0.0
    %5942 = vmatprep.subr.mxu0 0.0
    %5943 = vmatpush1.msra.mxu0 0.0
    %5944 = vmatprep.subr.mxu0 0.0
    %5945 = vmatpush1.msra.mxu0 0.0
    %5946 = vmatprep.subr.mxu0 0.0
    %5947 = vmatpush1.msra.mxu0 0.0
    %5948 = vmatprep.subr.mxu0 0.0
    %5949 = vmatpush1.msra.mxu0 0.0
    %5950 = vmatprep.subr.mxu0 0.0
    %5951 = vmatpush1.msra.mxu0 0.0
    %5952 = vmatprep.subr.mxu0 0.0
    %5953 = vmatpush1.msra.mxu0 0.0
    %5954 = vmatprep.subr.mxu0 0.0
    %5955 = vmatpush1.msra.mxu0 0.0
    %5956 = vmatprep.subr.mxu0 0.0
    %5957 = vmatpush1.msra.mxu0 0.0
    %5958 = vmatprep.subr.mxu0 0.0
    %5959 = vmatpush1.msra.mxu0 0.0
    %5960 = vmatprep.subr.mxu0 0.0
    %5961 = vmatpush1.msra.mxu0 0.0
    %5962 = vmatprep.subr.mxu0 0.0
    %5963 = vmatpush1.msra.mxu0 0.0
    %5964 = vmatprep.subr.mxu0 0.0
    %5965 = vmatpush1.msra.mxu0 0.0
    %5966 = vmatprep.subr.mxu0 0.0
    %5967 = vmatpush1.msra.mxu0 0.0
    %5968 = vmatprep.subr.mxu0 0.0
    %5969 = vmatpush1.msra.mxu0 0.0
    %5970 = vmatprep.mubr.f32.mxu0 0.0
    %5971 = vmatmul.mubr.f32.gmra.mrb[0].mxu0 %v5904
    %v5972 = vpop.f32.mrb[0].mxu0
    %v5973 = vadd.f32 0.0, %v5972
    %v5974 = vpop.f32.mrb[0].mxu0
    %v5975 = vadd.f32 0.0, %v5974
    %5976 = vdwg.mxu0
    %5977 = vmatprep.subr.mxu0 %v5900
    %5978 = vmatpush1.msra.mxu0 %v5899
    %5979 = vmatprep.subr.mxu0 0.0
    %5980 = vmatpush1.msra.mxu0 0.0
    %5981 = vmatprep.subr.mxu0 0.0
    %5982 = vmatpush1.msra.mxu0 0.0
    %5983 = vmatprep.subr.mxu0 0.0
    %5984 = vmatpush1.msra.mxu0 0.0
    %5985 = vmatprep.subr.mxu0 0.0
    %5986 = vmatpush1.msra.mxu0 0.0
    %5987 = vmatprep.subr.mxu0 0.0
    %5988 = vmatpush1.msra.mxu0 0.0
    %5989 = vmatprep.subr.mxu0 0.0
    %5990 = vmatpush1.msra.mxu0 0.0
    %5991 = vmatprep.subr.mxu0 0.0
    %5992 = vmatpush1.msra.mxu0 0.0
    %5993 = vmatprep.subr.mxu0 0.0
    %5994 = vmatpush1.msra.mxu0 0.0
    %5995 = vmatprep.subr.mxu0 0.0
    %5996 = vmatpush1.msra.mxu0 0.0
    %5997 = vmatprep.subr.mxu0 0.0
    %5998 = vmatpush1.msra.mxu0 0.0
    %5999 = vmatprep.subr.mxu0 0.0
    %6000 = vmatpush1.msra.mxu0 0.0
    %6001 = vmatprep.subr.mxu0 0.0
    %6002 = vmatpush1.msra.mxu0 0.0
    %6003 = vmatprep.subr.mxu0 0.0
    %6004 = vmatpush1.msra.mxu0 0.0
    %6005 = vmatprep.subr.mxu0 0.0
    %6006 = vmatpush1.msra.mxu0 0.0
    %6007 = vmatprep.subr.mxu0 0.0
    %6008 = vmatpush1.msra.mxu0 0.0
    %6009 = vmatprep.subr.mxu0 0.0
    %6010 = vmatpush1.msra.mxu0 0.0
    %6011 = vmatprep.subr.mxu0 0.0
    %6012 = vmatpush1.msra.mxu0 0.0
    %6013 = vmatprep.subr.mxu0 0.0
    %6014 = vmatpush1.msra.mxu0 0.0
    %6015 = vmatprep.subr.mxu0 0.0
    %6016 = vmatpush1.msra.mxu0 0.0
    %6017 = vmatprep.subr.mxu0 0.0
    %6018 = vmatpush1.msra.mxu0 0.0
    %6019 = vmatprep.subr.mxu0 0.0
    %6020 = vmatpush1.msra.mxu0 0.0
    %6021 = vmatprep.subr.mxu0 0.0
    %6022 = vmatpush1.msra.mxu0 0.0
    %6023 = vmatprep.subr.mxu0 0.0
    %6024 = vmatpush1.msra.mxu0 0.0
    %6025 = vmatprep.subr.mxu0 0.0
    %6026 = vmatpush1.msra.mxu0 0.0
    %6027 = vmatprep.subr.mxu0 0.0
    %6028 = vmatpush1.msra.mxu0 0.0
    %6029 = vmatprep.subr.mxu0 0.0
    %6030 = vmatpush1.msra.mxu0 0.0
    %6031 = vmatprep.subr.mxu0 0.0
    %6032 = vmatpush1.msra.mxu0 0.0
    %6033 = vmatprep.subr.mxu0 0.0
    %6034 = vmatpush1.msra.mxu0 0.0
    %6035 = vmatprep.subr.mxu0 0.0
    %6036 = vmatpush1.msra.mxu0 0.0
    %6037 = vmatprep.subr.mxu0 0.0
    %6038 = vmatpush1.msra.mxu0 0.0
    %6039 = vmatprep.subr.mxu0 0.0
    %6040 = vmatpush1.msra.mxu0 0.0
    %6041 = vmatprep.mubr.f32.mxu0 0.0
    %6042 = vmatmul.mubr.f32.gmra.mrb[0].mxu0 %v5904
    %v6043 = vpop.f32.mrb[0].mxu0
    %v6044 = vadd.f32 0.0, %v6043
    %v6045 = vpop.f32.mrb[0].mxu0
    %v6046 = vadd.f32 0.0, %v6045
    %6047 = vdwg.mxu0
    %v6048 = vadd.f32 %v5881, %v5973
    %v6049 = vadd.f32 %v5882, %v5975
    %v6050 = vadd.f32 %v5883, %v6044
    %v6051 = vadd.f32 %v5884, %v6046
    %6052 = vrot.lane.b32.xlu0 %v5070, 113
    %v6053 = vpop.permute.xlu0 %6052
    %6054 = vrot.lane.b32.xlu0 %v5071, 113
    %v6055 = vpop.permute.xlu0 %6054
    %6056 = vrot.lane.b32.xlu0 %v5072, 113
    %v6057 = vpop.permute.xlu0 %6056
    %6058 = vrot.lane.b32.xlu0 %v5073, 113
    %v6059 = vpop.permute.xlu0 %6058
    %v6060 = vsel %vm457, %v6057, %v6059
    %v6061 = vsel %vm457, %v6055, %v6057
    %v6062 = vsel %vm457, %v6053, %v6055
    %v6063 = vsel %vm457, %v6059, %v6053
    %v6064 = vmul.f32 %v6062, %v148
    %v6065 = vmul.f32 %v6061, %v149
    %v6066 = vmul.f32 %v6060, %v150
    %v6067 = vmul.f32 %v6063, %v151
    %s6068 = scalar_lea.vmem %s7, 6
    %v6069 = vld [vmem:[%s6068] sm:$0x1]
    %v6071 = vsel %vm964, %v6069, 0
    %6073 = vmatprep.subr.mxu0 %v6065
    %6074 = vmatpush1.msra.mxu0 %v6064
    %6075 = vmatprep.subr.mxu0 0.0
    %6076 = vmatpush1.msra.mxu0 0.0
    %6077 = vmatprep.subr.mxu0 0.0
    %6078 = vmatpush1.msra.mxu0 0.0
    %6079 = vmatprep.subr.mxu0 0.0
    %6080 = vmatpush1.msra.mxu0 0.0
    %6081 = vmatprep.subr.mxu0 0.0
    %6082 = vmatpush1.msra.mxu0 0.0
    %6083 = vmatprep.subr.mxu0 0.0
    %6084 = vmatpush1.msra.mxu0 0.0
    %6085 = vmatprep.subr.mxu0 0.0
    %6086 = vmatpush1.msra.mxu0 0.0
    %6087 = vmatprep.subr.mxu0 0.0
    %6088 = vmatpush1.msra.mxu0 0.0
    %6089 = vmatprep.subr.mxu0 0.0
    %6090 = vmatpush1.msra.mxu0 0.0
    %6091 = vmatprep.subr.mxu0 0.0
    %6092 = vmatpush1.msra.mxu0 0.0
    %6093 = vmatprep.subr.mxu0 0.0
    %6094 = vmatpush1.msra.mxu0 0.0
    %6095 = vmatprep.subr.mxu0 0.0
    %6096 = vmatpush1.msra.mxu0 0.0
    %6097 = vmatprep.subr.mxu0 0.0
    %6098 = vmatpush1.msra.mxu0 0.0
    %6099 = vmatprep.subr.mxu0 0.0
    %6100 = vmatpush1.msra.mxu0 0.0
    %6101 = vmatprep.subr.mxu0 0.0
    %6102 = vmatpush1.msra.mxu0 0.0
    %6103 = vmatprep.subr.mxu0 0.0
    %6104 = vmatpush1.msra.mxu0 0.0
    %6105 = vmatprep.subr.mxu0 0.0
    %6106 = vmatpush1.msra.mxu0 0.0
    %6107 = vmatprep.subr.mxu0 0.0
    %6108 = vmatpush1.msra.mxu0 0.0
    %6109 = vmatprep.subr.mxu0 0.0
    %6110 = vmatpush1.msra.mxu0 0.0
    %6111 = vmatprep.subr.mxu0 0.0
    %6112 = vmatpush1.msra.mxu0 0.0
    %6113 = vmatprep.subr.mxu0 0.0
    %6114 = vmatpush1.msra.mxu0 0.0
    %6115 = vmatprep.subr.mxu0 0.0
    %6116 = vmatpush1.msra.mxu0 0.0
    %6117 = vmatprep.subr.mxu0 0.0
    %6118 = vmatpush1.msra.mxu0 0.0
    %6119 = vmatprep.subr.mxu0 0.0
    %6120 = vmatpush1.msra.mxu0 0.0
    %6121 = vmatprep.subr.mxu0 0.0
    %6122 = vmatpush1.msra.mxu0 0.0
    %6123 = vmatprep.subr.mxu0 0.0
    %6124 = vmatpush1.msra.mxu0 0.0
    %6125 = vmatprep.subr.mxu0 0.0
    %6126 = vmatpush1.msra.mxu0 0.0
    %6127 = vmatprep.subr.mxu0 0.0
    %6128 = vmatpush1.msra.mxu0 0.0
    %6129 = vmatprep.subr.mxu0 0.0
    %6130 = vmatpush1.msra.mxu0 0.0
    %6131 = vmatprep.subr.mxu0 0.0
    %6132 = vmatpush1.msra.mxu0 0.0
    %6133 = vmatprep.subr.mxu0 0.0
    %6134 = vmatpush1.msra.mxu0 0.0
    %6135 = vmatprep.subr.mxu0 0.0
    %6136 = vmatpush1.msra.mxu0 0.0
    %6137 = vmatprep.mubr.f32.mxu0 0.0
    %6138 = vmatmul.mubr.f32.gmra.mrb[0].mxu0 %v6071
    %v6139 = vpop.f32.mrb[0].mxu0
    %v6140 = vadd.f32 0.0, %v6139
    %v6141 = vpop.f32.mrb[0].mxu0
    %v6142 = vadd.f32 0.0, %v6141
    %6143 = vdwg.mxu0
    %6144 = vmatprep.subr.mxu0 %v6067
    %6145 = vmatpush1.msra.mxu0 %v6066
    %6146 = vmatprep.subr.mxu0 0.0
    %6147 = vmatpush1.msra.mxu0 0.0
    %6148 = vmatprep.subr.mxu0 0.0
    %6149 = vmatpush1.msra.mxu0 0.0
    %6150 = vmatprep.subr.mxu0 0.0
    %6151 = vmatpush1.msra.mxu0 0.0
    %6152 = vmatprep.subr.mxu0 0.0
    %6153 = vmatpush1.msra.mxu0 0.0
    %6154 = vmatprep.subr.mxu0 0.0
    %6155 = vmatpush1.msra.mxu0 0.0
    %6156 = vmatprep.subr.mxu0 0.0
    %6157 = vmatpush1.msra.mxu0 0.0
    %6158 = vmatprep.subr.mxu0 0.0
    %6159 = vmatpush1.msra.mxu0 0.0
    %6160 = vmatprep.subr.mxu0 0.0
    %6161 = vmatpush1.msra.mxu0 0.0
    %6162 = vmatprep.subr.mxu0 0.0
    %6163 = vmatpush1.msra.mxu0 0.0
    %6164 = vmatprep.subr.mxu0 0.0
    %6165 = vmatpush1.msra.mxu0 0.0
    %6166 = vmatprep.subr.mxu0 0.0
    %6167 = vmatpush1.msra.mxu0 0.0
    %6168 = vmatprep.subr.mxu0 0.0
    %6169 = vmatpush1.msra.mxu0 0.0
    %6170 = vmatprep.subr.mxu0 0.0
    %6171 = vmatpush1.msra.mxu0 0.0
    %6172 = vmatprep.subr.mxu0 0.0
    %6173 = vmatpush1.msra.mxu0 0.0
    %6174 = vmatprep.subr.mxu0 0.0
    %6175 = vmatpush1.msra.mxu0 0.0
    %6176 = vmatprep.subr.mxu0 0.0
    %6177 = vmatpush1.msra.mxu0 0.0
    %6178 = vmatprep.subr.mxu0 0.0
    %6179 = vmatpush1.msra.mxu0 0.0
    %6180 = vmatprep.subr.mxu0 0.0
    %6181 = vmatpush1.msra.mxu0 0.0
    %6182 = vmatprep.subr.mxu0 0.0
    %6183 = vmatpush1.msra.mxu0 0.0
    %6184 = vmatprep.subr.mxu0 0.0
    %6185 = vmatpush1.msra.mxu0 0.0
    %6186 = vmatprep.subr.mxu0 0.0
    %6187 = vmatpush1.msra.mxu0 0.0
    %6188 = vmatprep.subr.mxu0 0.0
    %6189 = vmatpush1.msra.mxu0 0.0
    %6190 = vmatprep.subr.mxu0 0.0
    %6191 = vmatpush1.msra.mxu0 0.0
    %6192 = vmatprep.subr.mxu0 0.0
    %6193 = vmatpush1.msra.mxu0 0.0
    %6194 = vmatprep.subr.mxu0 0.0
    %6195 = vmatpush1.msra.mxu0 0.0
    %6196 = vmatprep.subr.mxu0 0.0
    %6197 = vmatpush1.msra.mxu0 0.0
    %6198 = vmatprep.subr.mxu0 0.0
    %6199 = vmatpush1.msra.mxu0 0.0
    %6200 = vmatprep.subr.mxu0 0.0
    %6201 = vmatpush1.msra.mxu0 0.0
    %6202 = vmatprep.subr.mxu0 0.0
    %6203 = vmatpush1.msra.mxu0 0.0
    %6204 = vmatprep.subr.mxu0 0.0
    %6205 = vmatpush1.msra.mxu0 0.0
    %6206 = vmatprep.subr.mxu0 0.0
    %6207 = vmatpush1.msra.mxu0 0.0
    %6208 = vmatprep.mubr.f32.mxu0 0.0
    %6209 = vmatmul.mubr.f32.gmra.mrb[0].mxu0 %v6071
    %v6210 = vpop.f32.mrb[0].mxu0
    %v6211 = vadd.f32 0.0, %v6210
    %v6212 = vpop.f32.mrb[0].mxu0
    %v6213 = vadd.f32 0.0, %v6212
    %6214 = vdwg.mxu0
    %v6215 = vadd.f32 %v6048, %v6140
    %v6216 = vadd.f32 %v6049, %v6142
    %v6217 = vadd.f32 %v6050, %v6211
    %v6218 = vadd.f32 %v6051, %v6213
    %6219 = vrot.lane.b32.xlu0 %v5070, 112
    %v6220 = vpop.permute.xlu0 %6219
    %6221 = vrot.lane.b32.xlu0 %v5071, 112
    %v6222 = vpop.permute.xlu0 %6221
    %6223 = vrot.lane.b32.xlu0 %v5072, 112
    %v6224 = vpop.permute.xlu0 %6223
    %6225 = vrot.lane.b32.xlu0 %v5073, 112
    %v6226 = vpop.permute.xlu0 %6225
    %v6227 = vsel %vm505, %v6224, %v6226
    %v6228 = vsel %vm505, %v6222, %v6224
    %v6229 = vsel %vm505, %v6220, %v6222
    %v6230 = vsel %vm505, %v6226, %v6220
    %v6231 = vmul.f32 %v6229, %v112
    %v6232 = vmul.f32 %v6228, %v113
    %v6233 = vmul.f32 %v6227, %v114
    %v6234 = vmul.f32 %v6230, %v115
    %s6235 = scalar_lea.vmem %s7, 7
    %v6236 = vld [vmem:[%s6235] sm:$0x1]
    %v6238 = vsel %vm964, %v6236, 0
    %6240 = vmatprep.subr.mxu0 %v6232
    %6241 = vmatpush1.msra.mxu0 %v6231
    %6242 = vmatprep.subr.mxu0 0.0
    %6243 = vmatpush1.msra.mxu0 0.0
    %6244 = vmatprep.subr.mxu0 0.0
    %6245 = vmatpush1.msra.mxu0 0.0
    %6246 = vmatprep.subr.mxu0 0.0
    %6247 = vmatpush1.msra.mxu0 0.0
    %6248 = vmatprep.subr.mxu0 0.0
    %6249 = vmatpush1.msra.mxu0 0.0
    %6250 = vmatprep.subr.mxu0 0.0
    %6251 = vmatpush1.msra.mxu0 0.0
    %6252 = vmatprep.subr.mxu0 0.0
    %6253 = vmatpush1.msra.mxu0 0.0
    %6254 = vmatprep.subr.mxu0 0.0
    %6255 = vmatpush1.msra.mxu0 0.0
    %6256 = vmatprep.subr.mxu0 0.0
    %6257 = vmatpush1.msra.mxu0 0.0
    %6258 = vmatprep.subr.mxu0 0.0
    %6259 = vmatpush1.msra.mxu0 0.0
    %6260 = vmatprep.subr.mxu0 0.0
    %6261 = vmatpush1.msra.mxu0 0.0
    %6262 = vmatprep.subr.mxu0 0.0
    %6263 = vmatpush1.msra.mxu0 0.0
    %6264 = vmatprep.subr.mxu0 0.0
    %6265 = vmatpush1.msra.mxu0 0.0
    %6266 = vmatprep.subr.mxu0 0.0
    %6267 = vmatpush1.msra.mxu0 0.0
    %6268 = vmatprep.subr.mxu0 0.0
    %6269 = vmatpush1.msra.mxu0 0.0
    %6270 = vmatprep.subr.mxu0 0.0
    %6271 = vmatpush1.msra.mxu0 0.0
    %6272 = vmatprep.subr.mxu0 0.0
    %6273 = vmatpush1.msra.mxu0 0.0
    %6274 = vmatprep.subr.mxu0 0.0
    %6275 = vmatpush1.msra.mxu0 0.0
    %6276 = vmatprep.subr.mxu0 0.0
    %6277 = vmatpush1.msra.mxu0 0.0
    %6278 = vmatprep.subr.mxu0 0.0
    %6279 = vmatpush1.msra.mxu0 0.0
    %6280 = vmatprep.subr.mxu0 0.0
    %6281 = vmatpush1.msra.mxu0 0.0
    %6282 = vmatprep.subr.mxu0 0.0
    %6283 = vmatpush1.msra.mxu0 0.0
    %6284 = vmatprep.subr.mxu0 0.0
    %6285 = vmatpush1.msra.mxu0 0.0
    %6286 = vmatprep.subr.mxu0 0.0
    %6287 = vmatpush1.msra.mxu0 0.0
    %6288 = vmatprep.subr.mxu0 0.0
    %6289 = vmatpush1.msra.mxu0 0.0
    %6290 = vmatprep.subr.mxu0 0.0
    %6291 = vmatpush1.msra.mxu0 0.0
    %6292 = vmatprep.subr.mxu0 0.0
    %6293 = vmatpush1.msra.mxu0 0.0
    %6294 = vmatprep.subr.mxu0 0.0
    %6295 = vmatpush1.msra.mxu0 0.0
    %6296 = vmatprep.subr.mxu0 0.0
    %6297 = vmatpush1.msra.mxu0 0.0
    %6298 = vmatprep.subr.mxu0 0.0
    %6299 = vmatpush1.msra.mxu0 0.0
    %6300 = vmatprep.subr.mxu0 0.0
    %6301 = vmatpush1.msra.mxu0 0.0
    %6302 = vmatprep.subr.mxu0 0.0
    %6303 = vmatpush1.msra.mxu0 0.0
    %6304 = vmatprep.mubr.f32.mxu0 0.0
    %6305 = vmatmul.mubr.f32.gmra.mrb[0].mxu0 %v6238
    %v6306 = vpop.f32.mrb[0].mxu0
    %v6307 = vadd.f32 0.0, %v6306
    %v6308 = vpop.f32.mrb[0].mxu0
    %v6309 = vadd.f32 0.0, %v6308
    %6310 = vdwg.mxu0
    %6311 = vmatprep.subr.mxu0 %v6234
    %6312 = vmatpush1.msra.mxu0 %v6233
    %6313 = vmatprep.subr.mxu0 0.0
    %6314 = vmatpush1.msra.mxu0 0.0
    %6315 = vmatprep.subr.mxu0 0.0
    %6316 = vmatpush1.msra.mxu0 0.0
    %6317 = vmatprep.subr.mxu0 0.0
    %6318 = vmatpush1.msra.mxu0 0.0
    %6319 = vmatprep.subr.mxu0 0.0
    %6320 = vmatpush1.msra.mxu0 0.0
    %6321 = vmatprep.subr.mxu0 0.0
    %6322 = vmatpush1.msra.mxu0 0.0
    %6323 = vmatprep.subr.mxu0 0.0
    %6324 = vmatpush1.msra.mxu0 0.0
    %6325 = vmatprep.subr.mxu0 0.0
    %6326 = vmatpush1.msra.mxu0 0.0
    %6327 = vmatprep.subr.mxu0 0.0
    %6328 = vmatpush1.msra.mxu0 0.0
    %6329 = vmatprep.subr.mxu0 0.0
    %6330 = vmatpush1.msra.mxu0 0.0
    %6331 = vmatprep.subr.mxu0 0.0
    %6332 = vmatpush1.msra.mxu0 0.0
    %6333 = vmatprep.subr.mxu0 0.0
    %6334 = vmatpush1.msra.mxu0 0.0
    %6335 = vmatprep.subr.mxu0 0.0
    %6336 = vmatpush1.msra.mxu0 0.0
    %6337 = vmatprep.subr.mxu0 0.0
    %6338 = vmatpush1.msra.mxu0 0.0
    %6339 = vmatprep.subr.mxu0 0.0
    %6340 = vmatpush1.msra.mxu0 0.0
    %6341 = vmatprep.subr.mxu0 0.0
    %6342 = vmatpush1.msra.mxu0 0.0
    %6343 = vmatprep.subr.mxu0 0.0
    %6344 = vmatpush1.msra.mxu0 0.0
    %6345 = vmatprep.subr.mxu0 0.0
    %6346 = vmatpush1.msra.mxu0 0.0
    %6347 = vmatprep.subr.mxu0 0.0
    %6348 = vmatpush1.msra.mxu0 0.0
    %6349 = vmatprep.subr.mxu0 0.0
    %6350 = vmatpush1.msra.mxu0 0.0
    %6351 = vmatprep.subr.mxu0 0.0
    %6352 = vmatpush1.msra.mxu0 0.0
    %6353 = vmatprep.subr.mxu0 0.0
    %6354 = vmatpush1.msra.mxu0 0.0
    %6355 = vmatprep.subr.mxu0 0.0
    %6356 = vmatpush1.msra.mxu0 0.0
    %6357 = vmatprep.subr.mxu0 0.0
    %6358 = vmatpush1.msra.mxu0 0.0
    %6359 = vmatprep.subr.mxu0 0.0
    %6360 = vmatpush1.msra.mxu0 0.0
    %6361 = vmatprep.subr.mxu0 0.0
    %6362 = vmatpush1.msra.mxu0 0.0
    %6363 = vmatprep.subr.mxu0 0.0
    %6364 = vmatpush1.msra.mxu0 0.0
    %6365 = vmatprep.subr.mxu0 0.0
    %6366 = vmatpush1.msra.mxu0 0.0
    %6367 = vmatprep.subr.mxu0 0.0
    %6368 = vmatpush1.msra.mxu0 0.0
    %6369 = vmatprep.subr.mxu0 0.0
    %6370 = vmatpush1.msra.mxu0 0.0
    %6371 = vmatprep.subr.mxu0 0.0
    %6372 = vmatpush1.msra.mxu0 0.0
    %6373 = vmatprep.subr.mxu0 0.0
    %6374 = vmatpush1.msra.mxu0 0.0
    %6375 = vmatprep.mubr.f32.mxu0 0.0
    %6376 = vmatmul.mubr.f32.gmra.mrb[0].mxu0 %v6238
    %v6377 = vpop.f32.mrb[0].mxu0
    %v6378 = vadd.f32 0.0, %v6377
    %v6379 = vpop.f32.mrb[0].mxu0
    %v6380 = vadd.f32 0.0, %v6379
    %6381 = vdwg.mxu0
    %v6382 = vadd.f32 %v6215, %v6307
    %v6383 = vadd.f32 %v6216, %v6309
    %v6384 = vadd.f32 %v6217, %v6378
    %v6385 = vadd.f32 %v6218, %v6380
    %6386 = vrot.lane.b32.xlu0 %v5070, 111
    %v6387 = vpop.permute.xlu0 %6386
    %6388 = vrot.lane.b32.xlu0 %v5071, 111
    %v6389 = vpop.permute.xlu0 %6388
    %6390 = vrot.lane.b32.xlu0 %v5072, 111
    %v6391 = vpop.permute.xlu0 %6390
    %6392 = vrot.lane.b32.xlu0 %v5073, 111
    %v6393 = vpop.permute.xlu0 %6392
    %v6394 = vsel %vm553, %v6391, %v6393
    %v6395 = vsel %vm553, %v6389, %v6391
    %v6396 = vsel %vm553, %v6387, %v6389
    %v6397 = vsel %vm553, %v6393, %v6387
    %v6398 = vmul.f32 %v6396, %v152
    %v6399 = vmul.f32 %v6395, %v153
    %v6400 = vmul.f32 %v6394, %v154
    %v6401 = vmul.f32 %v6397, %v155
    %s6402 = scalar_lea.vmem %s7, 8
    %v6403 = vld [vmem:[%s6402] sm:$0x1]
    %v6405 = vsel %vm964, %v6403, 0
    %6407 = vmatprep.subr.mxu0 %v6399
    %6408 = vmatpush1.msra.mxu0 %v6398
    %6409 = vmatprep.subr.mxu0 0.0
    %6410 = vmatpush1.msra.mxu0 0.0
    %6411 = vmatprep.subr.mxu0 0.0
    %6412 = vmatpush1.msra.mxu0 0.0
    %6413 = vmatprep.subr.mxu0 0.0
    %6414 = vmatpush1.msra.mxu0 0.0
    %6415 = vmatprep.subr.mxu0 0.0
    %6416 = vmatpush1.msra.mxu0 0.0
    %6417 = vmatprep.subr.mxu0 0.0
    %6418 = vmatpush1.msra.mxu0 0.0
    %6419 = vmatprep.subr.mxu0 0.0
    %6420 = vmatpush1.msra.mxu0 0.0
    %6421 = vmatprep.subr.mxu0 0.0
    %6422 = vmatpush1.msra.mxu0 0.0
    %6423 = vmatprep.subr.mxu0 0.0
    %6424 = vmatpush1.msra.mxu0 0.0
    %6425 = vmatprep.subr.mxu0 0.0
    %6426 = vmatpush1.msra.mxu0 0.0
    %6427 = vmatprep.subr.mxu0 0.0
    %6428 = vmatpush1.msra.mxu0 0.0
    %6429 = vmatprep.subr.mxu0 0.0
    %6430 = vmatpush1.msra.mxu0 0.0
    %6431 = vmatprep.subr.mxu0 0.0
    %6432 = vmatpush1.msra.mxu0 0.0
    %6433 = vmatprep.subr.mxu0 0.0
    %6434 = vmatpush1.msra.mxu0 0.0
    %6435 = vmatprep.subr.mxu0 0.0
    %6436 = vmatpush1.msra.mxu0 0.0
    %6437 = vmatprep.subr.mxu0 0.0
    %6438 = vmatpush1.msra.mxu0 0.0
    %6439 = vmatprep.subr.mxu0 0.0
    %6440 = vmatpush1.msra.mxu0 0.0
    %6441 = vmatprep.subr.mxu0 0.0
    %6442 = vmatpush1.msra.mxu0 0.0
    %6443 = vmatprep.subr.mxu0 0.0
    %6444 = vmatpush1.msra.mxu0 0.0
    %6445 = vmatprep.subr.mxu0 0.0
    %6446 = vmatpush1.msra.mxu0 0.0
    %6447 = vmatprep.subr.mxu0 0.0
    %6448 = vmatpush1.msra.mxu0 0.0
    %6449 = vmatprep.subr.mxu0 0.0
    %6450 = vmatpush1.msra.mxu0 0.0
    %6451 = vmatprep.subr.mxu0 0.0
    %6452 = vmatpush1.msra.mxu0 0.0
    %6453 = vmatprep.subr.mxu0 0.0
    %6454 = vmatpush1.msra.mxu0 0.0
    %6455 = vmatprep.subr.mxu0 0.0
    %6456 = vmatpush1.msra.mxu0 0.0
    %6457 = vmatprep.subr.mxu0 0.0
    %6458 = vmatpush1.msra.mxu0 0.0
    %6459 = vmatprep.subr.mxu0 0.0
    %6460 = vmatpush1.msra.mxu0 0.0
    %6461 = vmatprep.subr.mxu0 0.0
    %6462 = vmatpush1.msra.mxu0 0.0
    %6463 = vmatprep.subr.mxu0 0.0
    %6464 = vmatpush1.msra.mxu0 0.0
    %6465 = vmatprep.subr.mxu0 0.0
    %6466 = vmatpush1.msra.mxu0 0.0
    %6467 = vmatprep.subr.mxu0 0.0
    %6468 = vmatpush1.msra.mxu0 0.0
    %6469 = vmatprep.subr.mxu0 0.0
    %6470 = vmatpush1.msra.mxu0 0.0
    %6471 = vmatprep.mubr.f32.mxu0 0.0
    %6472 = vmatmul.mubr.f32.gmra.mrb[0].mxu0 %v6405
    %v6473 = vpop.f32.mrb[0].mxu0
    %v6474 = vadd.f32 0.0, %v6473
    %v6475 = vpop.f32.mrb[0].mxu0
    %v6476 = vadd.f32 0.0, %v6475
    %6477 = vdwg.mxu0
    %6478 = vmatprep.subr.mxu0 %v6401
    %6479 = vmatpush1.msra.mxu0 %v6400
    %6480 = vmatprep.subr.mxu0 0.0
    %6481 = vmatpush1.msra.mxu0 0.0
    %6482 = vmatprep.subr.mxu0 0.0
    %6483 = vmatpush1.msra.mxu0 0.0
    %6484 = vmatprep.subr.mxu0 0.0
    %6485 = vmatpush1.msra.mxu0 0.0
    %6486 = vmatprep.subr.mxu0 0.0
    %6487 = vmatpush1.msra.mxu0 0.0
    %6488 = vmatprep.subr.mxu0 0.0
    %6489 = vmatpush1.msra.mxu0 0.0
    %6490 = vmatprep.subr.mxu0 0.0
    %6491 = vmatpush1.msra.mxu0 0.0
    %6492 = vmatprep.subr.mxu0 0.0
    %6493 = vmatpush1.msra.mxu0 0.0
    %6494 = vmatprep.subr.mxu0 0.0
    %6495 = vmatpush1.msra.mxu0 0.0
    %6496 = vmatprep.subr.mxu0 0.0
    %6497 = vmatpush1.msra.mxu0 0.0
    %6498 = vmatprep.subr.mxu0 0.0
    %6499 = vmatpush1.msra.mxu0 0.0
    %6500 = vmatprep.subr.mxu0 0.0
    %6501 = vmatpush1.msra.mxu0 0.0
    %6502 = vmatprep.subr.mxu0 0.0
    %6503 = vmatpush1.msra.mxu0 0.0
    %6504 = vmatprep.subr.mxu0 0.0
    %6505 = vmatpush1.msra.mxu0 0.0
    %6506 = vmatprep.subr.mxu0 0.0
    %6507 = vmatpush1.msra.mxu0 0.0
    %6508 = vmatprep.subr.mxu0 0.0
    %6509 = vmatpush1.msra.mxu0 0.0
    %6510 = vmatprep.subr.mxu0 0.0
    %6511 = vmatpush1.msra.mxu0 0.0
    %6512 = vmatprep.subr.mxu0 0.0
    %6513 = vmatpush1.msra.mxu0 0.0
    %6514 = vmatprep.subr.mxu0 0.0
    %6515 = vmatpush1.msra.mxu0 0.0
    %6516 = vmatprep.subr.mxu0 0.0
    %6517 = vmatpush1.msra.mxu0 0.0
    %6518 = vmatprep.subr.mxu0 0.0
    %6519 = vmatpush1.msra.mxu0 0.0
    %6520 = vmatprep.subr.mxu0 0.0
    %6521 = vmatpush1.msra.mxu0 0.0
    %6522 = vmatprep.subr.mxu0 0.0
    %6523 = vmatpush1.msra.mxu0 0.0
    %6524 = vmatprep.subr.mxu0 0.0
    %6525 = vmatpush1.msra.mxu0 0.0
    %6526 = vmatprep.subr.mxu0 0.0
    %6527 = vmatpush1.msra.mxu0 0.0
    %6528 = vmatprep.subr.mxu0 0.0
    %6529 = vmatpush1.msra.mxu0 0.0
    %6530 = vmatprep.subr.mxu0 0.0
    %6531 = vmatpush1.msra.mxu0 0.0
    %6532 = vmatprep.subr.mxu0 0.0
    %6533 = vmatpush1.msra.mxu0 0.0
    %6534 = vmatprep.subr.mxu0 0.0
    %6535 = vmatpush1.msra.mxu0 0.0
    %6536 = vmatprep.subr.mxu0 0.0
    %6537 = vmatpush1.msra.mxu0 0.0
    %6538 = vmatprep.subr.mxu0 0.0
    %6539 = vmatpush1.msra.mxu0 0.0
    %6540 = vmatprep.subr.mxu0 0.0
    %6541 = vmatpush1.msra.mxu0 0.0
    %6542 = vmatprep.mubr.f32.mxu0 0.0
    %6543 = vmatmul.mubr.f32.gmra.mrb[0].mxu0 %v6405
    %v6544 = vpop.f32.mrb[0].mxu0
    %v6545 = vadd.f32 0.0, %v6544
    %v6546 = vpop.f32.mrb[0].mxu0
    %v6547 = vadd.f32 0.0, %v6546
    %6548 = vdwg.mxu0
    %v6549 = vadd.f32 %v6382, %v6474
    %v6550 = vadd.f32 %v6383, %v6476
    %v6551 = vadd.f32 %v6384, %v6545
    %v6552 = vadd.f32 %v6385, %v6547
    %6554 = vset.pattern.permute.xlu0 0
    %6555 = vperm.xlu0 %6554, %v5074
    %v6556 = vpop.permute.xlu0 %6555
    %v6558 = vlaneseq
    %v6559 = vshrl.u32 %v6558, 7
    %v6560 = vsub.s32 0, %v6559
    %v6561 = vrot.slane %v6556, %v6560
    %v6562 = vadd.f32 %v6549, %v6561
    %v6563 = vadd.f32 %v6550, %v6561
    %v6564 = vadd.f32 %v6551, %v6561
    %v6565 = vadd.f32 %v6552, %v6561
    %vm6566 = vcmask 1040384
    %v6567 = vsel %vm6566, %v6562, 0.0
    %v6568 = vsel %vm6566, %v6563, 0.0
    %v6569 = vadd.f32 %v6567, %v6568
    %v6570 = vsel %vm6566, %v6564, 0.0
    %v6571 = vadd.f32 %v6569, %v6570
    %v6572 = vsel %vm6566, %v6565, 0.0
    %v6573 = vadd.f32 %v6571, %v6572
    %6574 = vadd.xlane.f32.xlu0 %v6573
    %v6575 = vpop.xlane.xlu0 %6574
    %v6576 = vmul.f32 %v6575, 0.001953125
    %v6577 = vsub.f32 %v6562, %v6576
    %v6578 = vsub.f32 %v6563, %v6576
    %v6579 = vsub.f32 %v6564, %v6576
    %v6580 = vsub.f32 %v6565, %v6576
    %v6581 = vmul.f32 %v6577, %v6577
    %v6582 = vmul.f32 %v6578, %v6578
    %v6583 = vmul.f32 %v6579, %v6579
    %v6584 = vmul.f32 %v6580, %v6580
    %v6585 = vsel %vm6566, %v6581, 0.0
    %v6586 = vsel %vm6566, %v6582, 0.0
    %v6587 = vadd.f32 %v6585, %v6586
    %v6588 = vsel %vm6566, %v6583, 0.0
    %v6589 = vadd.f32 %v6587, %v6588
    %v6590 = vsel %vm6566, %v6584, 0.0
    %v6591 = vadd.f32 %v6589, %v6590
    %6592 = vadd.xlane.f32.xlu0 %v6591
    %v6593 = vpop.xlane.xlu0 %6592
    %v6594 = vmul.f32 %v6593, 0.001953125
    %v6595 = vadd.f32 %v6594, 1e-05
    %v6596 = vrsqrt.pop %v6595
    %v6597 = vmul.f32 %v5074, %v6596
    %6599 = vset.pattern.permute.xlu0 1
    %6600 = vperm.xlu0 %6599, %v6597
    %v6601 = vpop.permute.xlu0 %6600
    %v6603 = vlaneseq
    %v6604 = vshrl.u32 %v6603, 7
    %v6605 = vsub.s32 0, %v6604
    %v6606 = vrot.slane %v6601, %v6605
    %v6607 = vmul.f32 %v6577, %v6606
    %v6608 = vmul.f32 %v6578, %v6606
    %v6609 = vmul.f32 %v6579, %v6606
    %v6610 = vmul.f32 %v6580, %v6606
    %6611 = vset.pattern.permute.xlu0 2
    %6612 = vperm.xlu0 %6611, %v5074
    %v6613 = vpop.permute.xlu0 %6612
    %v6615 = vlaneseq
    %v6616 = vshrl.u32 %v6615, 7
    %v6617 = vsub.s32 0, %v6616
    %v6618 = vrot.slane %v6613, %v6617
    %v6619 = vadd.f32 %v6607, %v6618
    %v6620 = vadd.f32 %v6608, %v6618
    %v6621 = vadd.f32 %v6609, %v6618
    %v6622 = vadd.f32 %v6610, %v6618
    %v6623 = vtanh.pop %v6619
    %v6624 = vtanh.pop %v6620
    %v6625 = vtanh.pop %v6621
    %v6626 = vtanh.pop %v6622
    %v6631 = vcombine.low %v6623, %v6624
    %v6632 = vcombine.low %v6625, %v6626
    %v6634 = vunpack.c.l.s4 1966171168
    %v6635 = vunpack.c.0.s8 %v6634
    %v6636 = vlaneseq
    %v6637 = vshrl.u32 %v6636, 7
    %v6638 = vsub.s32 %v6635, %v6637
    %v6639 = vrot.slane %v6631, %v6638
    %v6641 = vunpack.c.l.s4 1966171168
    %v6642 = vunpack.c.0.s8 %v6641
    %v6643 = vlaneseq
    %v6644 = vshrl.u32 %v6643, 7
    %v6645 = vsub.s32 %v6642, %v6644
    %v6646 = vrot.slane %v6632, %v6645
    %v6647 = vcombine.low %v6639, %v6646
    %v6649 = vunpack.c.l.s4 1966171168
    %v6650 = vunpack.c.0.s8 %v6649
    %v6651 = vlaneseq
    %v6652 = vshrl.u32 %v6651, 7
    %v6653 = vsub.s32 %v6650, %v6652
    %v6654 = vrot.slane %v6647, %v6653
    %v6656 = vlaneseq
    %vm6657 = vcmp.ge.s32.totalorder %v6656, 0
    %vm6658 = vcmp.lt.s32.totalorder %v6656, 512
    %vm6659 = vmand %vm6657, %vm6658
    %6660 = vst.msk [vmem:[%s10] sm:$0xf] %vm6659, %v6654
    // Predicated region
    $region50: #{_lambda_.1} parent=1 // pred_check
      _
    $region51: #{_lambda_.1} parent=1 // pred_check_branch
      %6662 = sbr.rel (0) target = $region53
    $region52: #{_lambda_.1} parent=1 // pred_region
      _
    $region53: #{_lambda_.1} parent=1 // pred_fallthru
      _
    // Predicated region
    $region54: #{_lambda_.1} parent=1 // pred_check
      _
    $region55: #{_lambda_.1} parent=1 // pred_check_branch
      %6664 = sbr.rel (0) target = $region57
    $region56: #{_lambda_.1} parent=1 // pred_region
      _
    $region57: #{_lambda_.1} parent=1 // pred_fallthru
      _
    // Predicated region
    $region58: #{_lambda_.1} parent=1 // pred_check
      _
    $region59: #{_lambda_.1} parent=1 // pred_check_branch
      %6666 = sbr.rel (0) target = $region61
    $region60: #{_lambda_.1} parent=1 // pred_region
      _
    $region61: #{_lambda_.1} parent=1 // pred_fallthru
      _
    // Predicated region
    $region62: #{_lambda_.1} parent=1 // pred_check
      _
    $region63: #{_lambda_.1} parent=1 // pred_check_branch
      %6668 = sbr.rel (0) target = $region65
    $region64: #{_lambda_.1} parent=1 // pred_region
      _
    $region65: #{_lambda_.1} parent=1 // pred_fallthru
      _
    %6669 = vsyncpa [#allocation3], 1
    %6670 = vsyncpa [#allocation5], 1

</llo_original>
